<compile_context>
chip_gen: v7x
topology: tpu7x:2x2x1
jax: 0.10.0
libtpu: 0.0.40
codegen_flags: <defaults>
</compile_context>

<pallas_src>
import functools

import jax
import jax.numpy as jnp
from jax import lax
from jax.experimental import pallas as pl
from jax.experimental.pallas import tpu as pltpu


# ----------------------------------------------------------------------------
# Fused GhostConv kernel:
#   cv1 (1x1 conv + BN [+ SiLU])  ->  cv2 (depthwise 5x5 + BN [+ SiLU])
#   and channel-offset writes of both concat halves (+ optional residual).
#
# refs (per grid step (n, hi)):
#   xt_ref : (1, 2,  W, C1)  top    2-row input halo (clamped, masked at edges)
#   xm_ref : (1, th, W, C1)  main row tile
#   xb_ref : (1, 2,  W, C1)  bottom 2-row input halo (clamped, masked at edges)
#   w1_ref : (C1, Cc)        pointwise weight
#   s1/b1  : (1, Cc)         folded BN scale / bias for cv1
#   w2_ref : (5, 5, Cc)      depthwise weight
#   s2/b2  : (1, Cc)         folded BN scale / bias for cv2
#   res_ref: (1, th, W, 2Cc) optional residual (added to the concat output)
#   out_ref: (1, th, W, 2Cc)
#   ypad   : VMEM scratch (th+4, W+4, Cc) f32 — zero-padded cv1 tile
# ----------------------------------------------------------------------------
def _ghost_conv_kernel(th, W, C1, Cc, act, has_res,
                       xt_ref, xm_ref, xb_ref,
                       w1_ref, s1_ref, b1_ref,
                       w2_ref, s2_ref, b2_ref,
                       *rest):
    if has_res:
        res_ref, out_ref, ypad_ref = rest
    else:
        res_ref = None
        out_ref, ypad_ref = rest

    f32 = jnp.float32
    hi = pl.program_id(1)
    n_hi = pl.num_programs(1)

    # Load constants once per grid step (hoisted out of all loops).
    w1 = w1_ref[...].astype(f32)          # (C1, Cc)
    s1 = s1_ref[...].astype(f32)          # (1, Cc)
    b1 = b1_ref[...].astype(f32)
    w2 = w2_ref[...].astype(f32)          # (5, 5, Cc)
    s2 = s2_ref[...].astype(f32)
    b2 = b2_ref[...].astype(f32)

    def cv1(x3, rows):
        # x3: (rows, W, C1) -> (rows, W, Cc); pointwise conv == MXU matmul.
        z = jnp.dot(x3.reshape(rows * W, C1).astype(f32), w1,
                    preferred_element_type=f32)
        z = z * s1 + b1
        if act:
            z = z * jax.nn.sigmoid(z)
        return z.reshape(rows, W, Cc)

    y_main = cv1(xm_ref[0], th)                       # (th, W, Cc)

    # Halo rows: recompute cv1 on 2 input rows each (nearly free); rows that
    # fall outside the image are masked to zero (== zero padding of y).
    vt = (hi > 0).astype(f32)
    vb = (hi < n_hi - 1).astype(f32)
    y_top = cv1(xt_ref[0], 2) * vt                    # (2, W, Cc)
    y_bot = cv1(xb_ref[0], 2) * vb                    # (2, W, Cc)

    # Zero-padded cv1 tile lives only in VMEM (no HBM jnp.pad).
    ypad_ref[...] = jnp.zeros_like(ypad_ref)
    ypad_ref[0:2, 2:W + 2, :] = y_top
    ypad_ref[2:2 + th, 2:W + 2, :] = y_main
    ypad_ref[2 + th:4 + th, 2:W + 2, :] = y_bot

    # Depthwise 5x5: 5 W-shifted copies built once, H shifts are cheap
    # outer-axis slices, weights already hoisted.
    yp = ypad_ref[...]                                # (th+4, W+4, Cc)
    shifted = [yp[:, dw:dw + W, :] for dw in range(5)]  # each (th+4, W, Cc)
    acc = jnp.zeros((th, W, Cc), f32)
    for dh in range(5):
        for dw in range(5):
            acc = acc + shifted[dw][dh:dh + th, :, :] * w2[dh, dw, :]
    z2 = acc * s2 + b2
    if act:
        z2 = z2 * jax.nn.sigmoid(z2)

    y_out = y_main
    if has_res:
        r = res_ref[0].astype(f32)                    # (th, W, 2Cc)
        y_out = y_out + r[:, :, 0:Cc]
        z2 = z2 + r[:, :, Cc:2 * Cc]

    # Channel-offset writes of both concat halves (no jnp.concatenate).
    out_ref[0, :, :, 0:Cc] = y_out.astype(out_ref.dtype)
    out_ref[0, :, :, Cc:2 * Cc] = z2.astype(out_ref.dtype)


def _pick_row_tile(H):
    # Small even row tile keeps the depthwise accumulator / shifted copies in
    # vregs and exposes (N, H/th) parallel grid steps for megacore sharding.
    for t in (8, 6, 4, 2):
        if H % t == 0:
            return t
    return H


def _ghost_conv_fused(x_nhwc, p, *, act, residual=None, row_tile=None):
    """Fused GhostConv in NHWC: returns (N, H, W, 2*Cc)."""
    N, H, W, C1 = x_nhwc.shape
    Cc = p["w1"].shape[1]
    th = row_tile if row_tile is not None else _pick_row_tile(H)
    assert H % th == 0, (H, th)
    n_h = H // th
    h2 = th // 2
    has_res = residual is not None

    kern = functools.partial(_ghost_conv_kernel, th, W, C1, Cc, act, has_res)

    in_specs = [
        # top 2-row halo of x (block index clamped; masked in-kernel at hi==0)
        pl.BlockSpec((1, 2, W, C1),
                     lambda n, hi: (n, jnp.maximum(hi * h2 - 1, 0), 0, 0)),
        # main row tile of x
        pl.BlockSpec((1, th, W, C1), lambda n, hi: (n, hi, 0, 0)),
        # bottom 2-row halo of x (clamped; masked in-kernel at the last tile)
        pl.BlockSpec((1, 2, W, C1),
                     lambda n, hi: (n, jnp.minimum(hi * h2 + h2, H // 2 - 1), 0, 0)),
        pl.BlockSpec((C1, Cc), lambda n, hi: (0, 0)),
        pl.BlockSpec((1, Cc), lambda n, hi: (0, 0)),
        pl.BlockSpec((1, Cc), lambda n, hi: (0, 0)),
        pl.BlockSpec((5, 5, Cc), lambda n, hi: (0, 0, 0)),
        pl.BlockSpec((1, Cc), lambda n, hi: (0, 0)),
        pl.BlockSpec((1, Cc), lambda n, hi: (0, 0)),
    ]
    args = [x_nhwc, x_nhwc, x_nhwc,
            p["w1"], p["scale1"], p["bias1"],
            p["w2"], p["scale2"], p["bias2"]]
    if has_res:
        in_specs.append(pl.BlockSpec((1, th, W, 2 * Cc),
                                     lambda n, hi: (n, hi, 0, 0)))
        args.append(residual)

    return pl.pallas_call(
        kern,
        out_shape=jax.ShapeDtypeStruct((N, H, W, 2 * Cc), x_nhwc.dtype),
        grid_spec=pltpu.PrefetchScalarGridSpec(
            num_scalar_prefetch=0,
            grid=(N, n_h),
            in_specs=in_specs,
            out_specs=pl.BlockSpec((1, th, W, 2 * Cc), lambda n, hi: (n, hi, 0, 0)),
            scratch_shapes=[pltpu.VMEM((th + 4, W + 4, Cc), jnp.float32)],
        ),
        compiler_params=pltpu.CompilerParams(
            dimension_semantics=("parallel", "parallel"),
            vmem_limit_bytes=32 * 1024 * 1024,
        ),
    )(*args)


# ----------------------------------------------------------------------------
# GhostBottleneck forward (k=3, s=1  ->  both DWConv branches are Identity)
# ----------------------------------------------------------------------------
def ghost_bottleneck_forward(x_nchw, params):
    # TODO(synk): the s=2 branch (stride-2 DWConv in the main path and the
    # DWConv + 1x1-Conv shortcut) is not implemented; with the module default
    # s=1 both reduce to nn.Identity, which is what is fused here.
    x_nhwc = jnp.transpose(x_nchw, (0, 2, 3, 1))          # single NCHW->NHWC pass
    u = _ghost_conv_fused(x_nhwc, params["gc1"], act=True)
    out = _ghost_conv_fused(u, params["gc2"], act=False, residual=x_nhwc)
    return jnp.transpose(out, (0, 3, 1, 2))               # single NHWC->NCHW pass


# ----------------------------------------------------------------------------
# Pure-JAX reference (NCHW, mirrors PyTorch semantics)
# ----------------------------------------------------------------------------
def _ghost_conv_ref(x_nchw, p, act):
    Cc = p["w1"].shape[1]
    w1 = jnp.transpose(p["w1"], (1, 0))[:, :, None, None]          # OIHW
    y = lax.conv_general_dilated(x_nchw, w1, (1, 1), "VALID",
                                 dimension_numbers=("NCHW", "OIHW", "NCHW"))
    y = y * p["scale1"].reshape(1, Cc, 1, 1) + p["bias1"].reshape(1, Cc, 1, 1)
    if act:
        y = y * jax.nn.sigmoid(y)
    w2 = jnp.transpose(p["w2"], (2, 0, 1))[:, None, :, :]          # OIHW, depthwise
    y2 = lax.conv_general_dilated(y, w2, (1, 1), ((2, 2), (2, 2)),
                                  dimension_numbers=("NCHW", "OIHW", "NCHW"),
                                  feature_group_count=Cc)
    y2 = y2 * p["scale2"].reshape(1, Cc, 1, 1) + p["bias2"].reshape(1, Cc, 1, 1)
    if act:
        y2 = y2 * jax.nn.sigmoid(y2)
    return jnp.concatenate([y, y2], axis=1)


def ghost_bottleneck_reference(x_nchw, params):
    u = _ghost_conv_ref(x_nchw, params["gc1"], True)
    v = _ghost_conv_ref(u, params["gc2"], False)
    return v + x_nchw


# ----------------------------------------------------------------------------
# Deterministic parameter construction (BN folded into scale/bias)
# ----------------------------------------------------------------------------
def make_ghostconv_params(key, cin, ch, dtype=jnp.float32):
    k1, k2, k3, k4, k5, k6 = jax.random.split(key, 6)
    eps = 1e-3  # YOLOv5 BatchNorm eps

    w1 = (0.1 * jax.random.normal(k1, (cin, ch), dtype)).astype(dtype)
    gamma1 = 1.0 + 0.1 * jax.random.normal(k2, (ch,), dtype)
    beta1 = 0.05 * jnp.arange(ch, dtype=dtype)
    mean1 = 0.02 * jnp.arange(ch, dtype=dtype)
    var1 = 1.0 + 0.1 * jnp.abs(jax.random.normal(k3, (ch,), dtype))
    scale1 = gamma1 / jnp.sqrt(var1 + eps)
    bias1 = beta1 - mean1 * scale1

    w2 = (0.1 * jax.random.normal(k4, (5, 5, ch), dtype)).astype(dtype)
    gamma2 = 1.0 + 0.1 * jax.random.normal(k5, (ch,), dtype)
    beta2 = -0.03 * jnp.arange(ch, dtype=dtype)
    mean2 = 0.01 * jnp.arange(ch, dtype=dtype)
    var2 = 1.0 + 0.1 * jnp.abs(jax.random.normal(k6, (ch,), dtype))
    scale2 = gamma2 / jnp.sqrt(var2 + eps)
    bias2 = beta2 - mean2 * scale2

    return {
        "w1": w1, "scale1": scale1.reshape(1, ch), "bias1": bias1.reshape(1, ch),
        "w2": w2, "scale2": scale2.reshape(1, ch), "bias2": bias2.reshape(1, ch),
    }


if __name__ == "__main__":
    key = jax.random.PRNGKey(0)
    kx, kp1, kp2 = jax.random.split(key, 3)

    # GhostBottleneck(c1=16, c2=16, k=3, s=1) on a small NCHW input.
    N, C, H, W = 2, 16, 16, 16
    c_ = C // 2
    x = jax.random.normal(kx, (N, C, H, W), jnp.float32)
    params = {
        "gc1": make_ghostconv_params(kp1, C, c_ // 2),   # GhostConv(c1, c_)
        "gc2": make_ghostconv_params(kp2, c_, C // 2),   # GhostConv(c_, c2)
    }

    fwd = jax.jit(ghost_bottleneck_forward)
    out = jax.block_until_ready(fwd(x, params))
    ref = jax.block_until_ready(ghost_bottleneck_reference(x, params))

    assert out.shape == (N, C, H, W), out.shape
    max_err = float(jnp.max(jnp.abs(out - ref)))
    assert jnp.allclose(out, ref, rtol=1e-4, atol=1e-4), max_err

    print("KERNEL_OK")
</pallas_src>

<mosaic_0001>
module attributes {stable_mosaic.version = 11 : i64} {
  func.func @_ghost_conv_kernel(%arg0: i32, %arg1: i32, %arg2: memref<1x2x16x16xf32, #tpu.memory_space<vmem>>, %arg3: memref<1x8x16x16xf32, #tpu.memory_space<vmem>>, %arg4: memref<1x2x16x16xf32, #tpu.memory_space<vmem>>, %arg5: memref<16x4xf32, #tpu.memory_space<vmem>>, %arg6: memref<1x4xf32, #tpu.memory_space<vmem>>, %arg7: memref<1x4xf32, #tpu.memory_space<vmem>>, %arg8: memref<5x5x4xf32, #tpu.memory_space<vmem>>, %arg9: memref<1x4xf32, #tpu.memory_space<vmem>>, %arg10: memref<1x4xf32, #tpu.memory_space<vmem>>, %arg11: memref<1x8x16x8xf32, #tpu.memory_space<vmem>>, %arg12: memref<12x20x4xf32, #tpu.memory_space<vmem>>) attributes {dimension_semantics = [#tpu.dimension_semantics<parallel>, #tpu.dimension_semantics<parallel>], iteration_bounds = array<i64: 2, 2>, scalar_prefetch = 0 : i64, scratch_operands = 1 : i64, tpu.core_type = #tpu.core_type<tc>, window_params = [{transform_indices = @transform_0, window_bounds = array<i64: 1, 2, 16, 16>}, {transform_indices = @transform_1, window_bounds = array<i64: 1, 8, 16, 16>}, {transform_indices = @transform_2, window_bounds = array<i64: 1, 2, 16, 16>}, {pipeline_mode = #tpu.pipeline_mode<synchronous>, transform_indices = @transform_3, window_bounds = array<i64: 16, 4>}, {pipeline_mode = #tpu.pipeline_mode<synchronous>, transform_indices = @transform_4, window_bounds = array<i64: 1, 4>}, {pipeline_mode = #tpu.pipeline_mode<synchronous>, transform_indices = @transform_5, window_bounds = array<i64: 1, 4>}, {pipeline_mode = #tpu.pipeline_mode<synchronous>, transform_indices = @transform_6, window_bounds = array<i64: 5, 5, 4>}, {pipeline_mode = #tpu.pipeline_mode<synchronous>, transform_indices = @transform_7, window_bounds = array<i64: 1, 4>}, {pipeline_mode = #tpu.pipeline_mode<synchronous>, transform_indices = @transform_8, window_bounds = array<i64: 1, 4>}, {transform_indices = @transform_9, window_bounds = array<i64: 1, 8, 16, 8>}]} {
    %c0 = arith.constant 0 : index
    %c0_0 = arith.constant 0 : index
    %0 = vector.load %arg5[%c0, %c0_0] : memref<16x4xf32, #tpu.memory_space<vmem>>, vector<16x4xf32>
    %c0_1 = arith.constant 0 : index
    %c0_2 = arith.constant 0 : index
    %1 = vector.load %arg6[%c0_1, %c0_2] : memref<1x4xf32, #tpu.memory_space<vmem>>, vector<1x4xf32>
    %c0_3 = arith.constant 0 : index
    %c0_4 = arith.constant 0 : index
    %2 = vector.load %arg7[%c0_3, %c0_4] : memref<1x4xf32, #tpu.memory_space<vmem>>, vector<1x4xf32>
    %c0_5 = arith.constant 0 : index
    %c0_6 = arith.constant 0 : index
    %c0_7 = arith.constant 0 : index
    %3 = vector.load %arg8[%c0_5, %c0_6, %c0_7] : memref<5x5x4xf32, #tpu.memory_space<vmem>>, vector<5x5x4xf32>
    %c0_8 = arith.constant 0 : index
    %c0_9 = arith.constant 0 : index
    %4 = vector.load %arg9[%c0_8, %c0_9] : memref<1x4xf32, #tpu.memory_space<vmem>>, vector<1x4xf32>
    %c0_10 = arith.constant 0 : index
    %c0_11 = arith.constant 0 : index
    %5 = vector.load %arg10[%c0_10, %c0_11] : memref<1x4xf32, #tpu.memory_space<vmem>>, vector<1x4xf32>
    %c0_12 = arith.constant 0 : index
    %c0_13 = arith.constant 0 : index
    %c0_14 = arith.constant 0 : index
    %c0_15 = arith.constant 0 : index
    %6 = vector.load %arg3[%c0_12, %c0_13, %c0_14, %c0_15] : memref<1x8x16x16xf32, #tpu.memory_space<vmem>>, vector<1x8x16x16xf32>
    %7 = vector.shape_cast %6 : vector<1x8x16x16xf32> to vector<8x16x16xf32>
    %8 = vector.shape_cast %7 : vector<8x16x16xf32> to vector<128x16xf32>
    %cst = arith.constant dense<0.000000e+00> : vector<128x4xf32>
    %9 = tpu.matmul %8, %0, %cst {dimension_numbers = #tpu.dot_dimension_numbers<[1], [0], [0], [1], [0, 0, 1, 1], [], []>} : vector<128x16xf32>, vector<16x4xf32>, vector<128x4xf32> -> vector<128x4xf32>
    %10 = vector.broadcast %1 : vector<1x4xf32> to vector<128x4xf32>
    %11 = arith.mulf %9, %10 : vector<128x4xf32>
    %12 = vector.broadcast %2 : vector<1x4xf32> to vector<128x4xf32>
    %13 = arith.addf %11, %12 : vector<128x4xf32>
    %14 = arith.negf %13 : vector<128x4xf32>
    %15 = math.exp %14 : vector<128x4xf32>
    %cst_16 = arith.constant 1.000000e+00 : f32
    %16 = vector.broadcast %cst_16 : f32 to vector<128x4xf32>
    %17 = arith.addf %16, %15 : vector<128x4xf32>
    %18 = arith.divf %16, %17 : vector<128x4xf32>
    %19 = arith.mulf %13, %18 : vector<128x4xf32>
    %20 = vector.shape_cast %19 : vector<128x4xf32> to vector<8x16x4xf32>
    %c0_i32 = arith.constant 0 : i32
    %21 = arith.cmpi sgt, %arg1, %c0_i32 : i32
    %22 = arith.extui %21 : i1 to i32
    %23 = arith.sitofp %22 : i32 to f32
    %c1_i32 = arith.constant 1 : i32
    %24 = arith.cmpi slt, %arg1, %c1_i32 : i32
    %25 = arith.extui %24 : i1 to i32
    %26 = arith.sitofp %25 : i32 to f32
    %c0_17 = arith.constant 0 : index
    %c0_18 = arith.constant 0 : index
    %c0_19 = arith.constant 0 : index
    %c0_20 = arith.constant 0 : index
    %27 = vector.load %arg2[%c0_17, %c0_18, %c0_19, %c0_20] : memref<1x2x16x16xf32, #tpu.memory_space<vmem>>, vector<1x2x16x16xf32>
    %28 = vector.shape_cast %27 : vector<1x2x16x16xf32> to vector<2x16x16xf32>
    %29 = vector.shape_cast %28 : vector<2x16x16xf32> to vector<32x16xf32>
    %cst_21 = arith.constant dense<0.000000e+00> : vector<32x4xf32>
    %30 = tpu.matmul %29, %0, %cst_21 {dimension_numbers = #tpu.dot_dimension_numbers<[1], [0], [0], [1], [0, 0, 1, 1], [], []>} : vector<32x16xf32>, vector<16x4xf32>, vector<32x4xf32> -> vector<32x4xf32>
    %31 = vector.broadcast %1 : vector<1x4xf32> to vector<32x4xf32>
    %32 = arith.mulf %30, %31 : vector<32x4xf32>
    %33 = vector.broadcast %2 : vector<1x4xf32> to vector<32x4xf32>
    %34 = arith.addf %32, %33 : vector<32x4xf32>
    %35 = arith.negf %34 : vector<32x4xf32>
    %36 = math.exp %35 : vector<32x4xf32>
    %cst_22 = arith.constant 1.000000e+00 : f32
    %37 = vector.broadcast %cst_22 : f32 to vector<32x4xf32>
    %38 = arith.addf %37, %36 : vector<32x4xf32>
    %39 = arith.divf %37, %38 : vector<32x4xf32>
    %40 = arith.mulf %34, %39 : vector<32x4xf32>
    %41 = vector.shape_cast %40 : vector<32x4xf32> to vector<2x16x4xf32>
    %42 = vector.broadcast %23 : f32 to vector<2x16x4xf32>
    %43 = arith.mulf %41, %42 : vector<2x16x4xf32>
    %c0_23 = arith.constant 0 : index
    %c0_24 = arith.constant 0 : index
    %c0_25 = arith.constant 0 : index
    %c0_26 = arith.constant 0 : index
    %44 = vector.load %arg4[%c0_23, %c0_24, %c0_25, %c0_26] : memref<1x2x16x16xf32, #tpu.memory_space<vmem>>, vector<1x2x16x16xf32>
    %45 = vector.shape_cast %44 : vector<1x2x16x16xf32> to vector<2x16x16xf32>
    %46 = vector.shape_cast %45 : vector<2x16x16xf32> to vector<32x16xf32>
    %cst_27 = arith.constant dense<0.000000e+00> : vector<32x4xf32>
    %47 = tpu.matmul %46, %0, %cst_27 {dimension_numbers = #tpu.dot_dimension_numbers<[1], [0], [0], [1], [0, 0, 1, 1], [], []>} : vector<32x16xf32>, vector<16x4xf32>, vector<32x4xf32> -> vector<32x4xf32>
    %48 = vector.broadcast %1 : vector<1x4xf32> to vector<32x4xf32>
    %49 = arith.mulf %47, %48 : vector<32x4xf32>
    %50 = vector.broadcast %2 : vector<1x4xf32> to vector<32x4xf32>
    %51 = arith.addf %49, %50 : vector<32x4xf32>
    %52 = arith.negf %51 : vector<32x4xf32>
    %53 = math.exp %52 : vector<32x4xf32>
    %cst_28 = arith.constant 1.000000e+00 : f32
    %54 = vector.broadcast %cst_28 : f32 to vector<32x4xf32>
    %55 = arith.addf %54, %53 : vector<32x4xf32>
    %56 = arith.divf %54, %55 : vector<32x4xf32>
    %57 = arith.mulf %51, %56 : vector<32x4xf32>
    %58 = vector.shape_cast %57 : vector<32x4xf32> to vector<2x16x4xf32>
    %59 = vector.broadcast %26 : f32 to vector<2x16x4xf32>
    %60 = arith.mulf %58, %59 : vector<2x16x4xf32>
    %cst_29 = arith.constant 0.000000e+00 : f32
    %61 = vector.broadcast %cst_29 : f32 to vector<12x20x4xf32>
    %c0_30 = arith.constant 0 : index
    %c0_31 = arith.constant 0 : index
    %c0_32 = arith.constant 0 : index
    %62 = vector.load %arg12[%c0_30, %c0_31, %c0_32] : memref<12x20x4xf32, #tpu.memory_space<vmem>>, vector<12x20x4xf32>
    tpu.vector_store %arg12[%c0_30, %c0_31, %c0_32], %61 {strides = array<i32>} : memref<12x20x4xf32, #tpu.memory_space<vmem>>, vector<12x20x4xf32>,
    %c0_33 = arith.constant 0 : index
    %c2 = arith.constant 2 : index
    %c0_34 = arith.constant 0 : index
    %63 = vector.load %arg12[%c0_33, %c2, %c0_34] : memref<12x20x4xf32, #tpu.memory_space<vmem>>, vector<2x16x4xf32>
    tpu.vector_store %arg12[%c0_33, %c2, %c0_34], %43 {strides = array<i32>} : memref<12x20x4xf32, #tpu.memory_space<vmem>>, vector<2x16x4xf32>,
    %c2_35 = arith.constant 2 : index
    %c2_36 = arith.constant 2 : index
    %c0_37 = arith.constant 0 : index
    %64 = vector.load %arg12[%c2_35, %c2_36, %c0_37] : memref<12x20x4xf32, #tpu.memory_space<vmem>>, vector<8x16x4xf32>
    tpu.vector_store %arg12[%c2_35, %c2_36, %c0_37], %20 {strides = array<i32>} : memref<12x20x4xf32, #tpu.memory_space<vmem>>, vector<8x16x4xf32>,
    %c10 = arith.constant 10 : index
    %c2_38 = arith.constant 2 : index
    %c0_39 = arith.constant 0 : index
    %65 = vector.load %arg12[%c10, %c2_38, %c0_39] : memref<12x20x4xf32, #tpu.memory_space<vmem>>, vector<2x16x4xf32>
    tpu.vector_store %arg12[%c10, %c2_38, %c0_39], %60 {strides = array<i32>} : memref<12x20x4xf32, #tpu.memory_space<vmem>>, vector<2x16x4xf32>,
    %c0_40 = arith.constant 0 : index
    %c0_41 = arith.constant 0 : index
    %c0_42 = arith.constant 0 : index
    %66 = vector.load %arg12[%c0_40, %c0_41, %c0_42] : memref<12x20x4xf32, #tpu.memory_space<vmem>>, vector<12x20x4xf32>
    %67 = vector.extract_strided_slice %66 {offsets = [0, 0, 0], sizes = [12, 16, 4], strides = [1, 1, 1]} : vector<12x20x4xf32> to vector<12x16x4xf32>
    %68 = vector.extract_strided_slice %66 {offsets = [0, 1, 0], sizes = [12, 16, 4], strides = [1, 1, 1]} : vector<12x20x4xf32> to vector<12x16x4xf32>
    %69 = vector.extract_strided_slice %66 {offsets = [0, 2, 0], sizes = [12, 16, 4], strides = [1, 1, 1]} : vector<12x20x4xf32> to vector<12x16x4xf32>
    %70 = vector.extract_strided_slice %66 {offsets = [0, 3, 0], sizes = [12, 16, 4], strides = [1, 1, 1]} : vector<12x20x4xf32> to vector<12x16x4xf32>
    %71 = vector.extract_strided_slice %66 {offsets = [0, 4, 0], sizes = [12, 16, 4], strides = [1, 1, 1]} : vector<12x20x4xf32> to vector<12x16x4xf32>
    %cst_43 = arith.constant 0.000000e+00 : f32
    %72 = vector.broadcast %cst_43 : f32 to vector<8x16x4xf32>
    %73 = vector.extract_strided_slice %67 {offsets = [0, 0, 0], sizes = [8, 16, 4], strides = [1, 1, 1]} : vector<12x16x4xf32> to vector<8x16x4xf32>
    %74 = vector.extract_strided_slice %3 {offsets = [0, 0, 0], sizes = [1, 1, 4], strides = [1, 1, 1]} : vector<5x5x4xf32> to vector<1x1x4xf32>
    %75 = vector.shape_cast %74 : vector<1x1x4xf32> to vector<4xf32>
    %76 = vector.shape_cast %75 : vector<4xf32> to vector<1x1x4xf32>
    %77 = vector.broadcast %76 : vector<1x1x4xf32> to vector<8x16x4xf32>
    %78 = arith.mulf %73, %77 : vector<8x16x4xf32>
    %79 = arith.addf %72, %78 : vector<8x16x4xf32>
    %80 = vector.extract_strided_slice %68 {offsets = [0, 0, 0], sizes = [8, 16, 4], strides = [1, 1, 1]} : vector<12x16x4xf32> to vector<8x16x4xf32>
    %81 = vector.extract_strided_slice %3 {offsets = [0, 1, 0], sizes = [1, 1, 4], strides = [1, 1, 1]} : vector<5x5x4xf32> to vector<1x1x4xf32>
    %82 = vector.shape_cast %81 : vector<1x1x4xf32> to vector<4xf32>
    %83 = vector.shape_cast %82 : vector<4xf32> to vector<1x1x4xf32>
    %84 = vector.broadcast %83 : vector<1x1x4xf32> to vector<8x16x4xf32>
    %85 = arith.mulf %80, %84 : vector<8x16x4xf32>
    %86 = arith.addf %79, %85 : vector<8x16x4xf32>
    %87 = vector.extract_strided_slice %69 {offsets = [0, 0, 0], sizes = [8, 16, 4], strides = [1, 1, 1]} : vector<12x16x4xf32> to vector<8x16x4xf32>
    %88 = vector.extract_strided_slice %3 {offsets = [0, 2, 0], sizes = [1, 1, 4], strides = [1, 1, 1]} : vector<5x5x4xf32> to vector<1x1x4xf32>
    %89 = vector.shape_cast %88 : vector<1x1x4xf32> to vector<4xf32>
    %90 = vector.shape_cast %89 : vector<4xf32> to vector<1x1x4xf32>
    %91 = vector.broadcast %90 : vector<1x1x4xf32> to vector<8x16x4xf32>
    %92 = arith.mulf %87, %91 : vector<8x16x4xf32>
    %93 = arith.addf %86, %92 : vector<8x16x4xf32>
    %94 = vector.extract_strided_slice %70 {offsets = [0, 0, 0], sizes = [8, 16, 4], strides = [1, 1, 1]} : vector<12x16x4xf32> to vector<8x16x4xf32>
    %95 = vector.extract_strided_slice %3 {offsets = [0, 3, 0], sizes = [1, 1, 4], strides = [1, 1, 1]} : vector<5x5x4xf32> to vector<1x1x4xf32>
    %96 = vector.shape_cast %95 : vector<1x1x4xf32> to vector<4xf32>
    %97 = vector.shape_cast %96 : vector<4xf32> to vector<1x1x4xf32>
    %98 = vector.broadcast %97 : vector<1x1x4xf32> to vector<8x16x4xf32>
    %99 = arith.mulf %94, %98 : vector<8x16x4xf32>
    %100 = arith.addf %93, %99 : vector<8x16x4xf32>
    %101 = vector.extract_strided_slice %71 {offsets = [0, 0, 0], sizes = [8, 16, 4], strides = [1, 1, 1]} : vector<12x16x4xf32> to vector<8x16x4xf32>
    %102 = vector.extract_strided_slice %3 {offsets = [0, 4, 0], sizes = [1, 1, 4], strides = [1, 1, 1]} : vector<5x5x4xf32> to vector<1x1x4xf32>
    %103 = vector.shape_cast %102 : vector<1x1x4xf32> to vector<4xf32>
    %104 = vector.shape_cast %103 : vector<4xf32> to vector<1x1x4xf32>
    %105 = vector.broadcast %104 : vector<1x1x4xf32> to vector<8x16x4xf32>
    %106 = arith.mulf %101, %105 : vector<8x16x4xf32>
    %107 = arith.addf %100, %106 : vector<8x16x4xf32>
    %108 = vector.extract_strided_slice %67 {offsets = [1, 0, 0], sizes = [8, 16, 4], strides = [1, 1, 1]} : vector<12x16x4xf32> to vector<8x16x4xf32>
    %109 = vector.extract_strided_slice %3 {offsets = [1, 0, 0], sizes = [1, 1, 4], strides = [1, 1, 1]} : vector<5x5x4xf32> to vector<1x1x4xf32>
    %110 = vector.shape_cast %109 : vector<1x1x4xf32> to vector<4xf32>
    %111 = vector.shape_cast %110 : vector<4xf32> to vector<1x1x4xf32>
    %112 = vector.broadcast %111 : vector<1x1x4xf32> to vector<8x16x4xf32>
    %113 = arith.mulf %108, %112 : vector<8x16x4xf32>
    %114 = arith.addf %107, %113 : vector<8x16x4xf32>
    %115 = vector.extract_strided_slice %68 {offsets = [1, 0, 0], sizes = [8, 16, 4], strides = [1, 1, 1]} : vector<12x16x4xf32> to vector<8x16x4xf32>
    %116 = vector.extract_strided_slice %3 {offsets = [1, 1, 0], sizes = [1, 1, 4], strides = [1, 1, 1]} : vector<5x5x4xf32> to vector<1x1x4xf32>
    %117 = vector.shape_cast %116 : vector<1x1x4xf32> to vector<4xf32>
    %118 = vector.shape_cast %117 : vector<4xf32> to vector<1x1x4xf32>
    %119 = vector.broadcast %118 : vector<1x1x4xf32> to vector<8x16x4xf32>
    %120 = arith.mulf %115, %119 : vector<8x16x4xf32>
    %121 = arith.addf %114, %120 : vector<8x16x4xf32>
    %122 = vector.extract_strided_slice %69 {offsets = [1, 0, 0], sizes = [8, 16, 4], strides = [1, 1, 1]} : vector<12x16x4xf32> to vector<8x16x4xf32>
    %123 = vector.extract_strided_slice %3 {offsets = [1, 2, 0], sizes = [1, 1, 4], strides = [1, 1, 1]} : vector<5x5x4xf32> to vector<1x1x4xf32>
    %124 = vector.shape_cast %123 : vector<1x1x4xf32> to vector<4xf32>
    %125 = vector.shape_cast %124 : vector<4xf32> to vector<1x1x4xf32>
    %126 = vector.broadcast %125 : vector<1x1x4xf32> to vector<8x16x4xf32>
    %127 = arith.mulf %122, %126 : vector<8x16x4xf32>
    %128 = arith.addf %121, %127 : vector<8x16x4xf32>
    %129 = vector.extract_strided_slice %70 {offsets = [1, 0, 0], sizes = [8, 16, 4], strides = [1, 1, 1]} : vector<12x16x4xf32> to vector<8x16x4xf32>
    %130 = vector.extract_strided_slice %3 {offsets = [1, 3, 0], sizes = [1, 1, 4], strides = [1, 1, 1]} : vector<5x5x4xf32> to vector<1x1x4xf32>
    %131 = vector.shape_cast %130 : vector<1x1x4xf32> to vector<4xf32>
    %132 = vector.shape_cast %131 : vector<4xf32> to vector<1x1x4xf32>
    %133 = vector.broadcast %132 : vector<1x1x4xf32> to vector<8x16x4xf32>
    %134 = arith.mulf %129, %133 : vector<8x16x4xf32>
    %135 = arith.addf %128, %134 : vector<8x16x4xf32>
    %136 = vector.extract_strided_slice %71 {offsets = [1, 0, 0], sizes = [8, 16, 4], strides = [1, 1, 1]} : vector<12x16x4xf32> to vector<8x16x4xf32>
    %137 = vector.extract_strided_slice %3 {offsets = [1, 4, 0], sizes = [1, 1, 4], strides = [1, 1, 1]} : vector<5x5x4xf32> to vector<1x1x4xf32>
    %138 = vector.shape_cast %137 : vector<1x1x4xf32> to vector<4xf32>
    %139 = vector.shape_cast %138 : vector<4xf32> to vector<1x1x4xf32>
    %140 = vector.broadcast %139 : vector<1x1x4xf32> to vector<8x16x4xf32>
    %141 = arith.mulf %136, %140 : vector<8x16x4xf32>
    %142 = arith.addf %135, %141 : vector<8x16x4xf32>
    %143 = vector.extract_strided_slice %67 {offsets = [2, 0, 0], sizes = [8, 16, 4], strides = [1, 1, 1]} : vector<12x16x4xf32> to vector<8x16x4xf32>
    %144 = vector.extract_strided_slice %3 {offsets = [2, 0, 0], sizes = [1, 1, 4], strides = [1, 1, 1]} : vector<5x5x4xf32> to vector<1x1x4xf32>
    %145 = vector.shape_cast %144 : vector<1x1x4xf32> to vector<4xf32>
    %146 = vector.shape_cast %145 : vector<4xf32> to vector<1x1x4xf32>
    %147 = vector.broadcast %146 : vector<1x1x4xf32> to vector<8x16x4xf32>
    %148 = arith.mulf %143, %147 : vector<8x16x4xf32>
    %149 = arith.addf %142, %148 : vector<8x16x4xf32>
    %150 = vector.extract_strided_slice %68 {offsets = [2, 0, 0], sizes = [8, 16, 4], strides = [1, 1, 1]} : vector<12x16x4xf32> to vector<8x16x4xf32>
    %151 = vector.extract_strided_slice %3 {offsets = [2, 1, 0], sizes = [1, 1, 4], strides = [1, 1, 1]} : vector<5x5x4xf32> to vector<1x1x4xf32>
    %152 = vector.shape_cast %151 : vector<1x1x4xf32> to vector<4xf32>
    %153 = vector.shape_cast %152 : vector<4xf32> to vector<1x1x4xf32>
    %154 = vector.broadcast %153 : vector<1x1x4xf32> to vector<8x16x4xf32>
    %155 = arith.mulf %150, %154 : vector<8x16x4xf32>
    %156 = arith.addf %149, %155 : vector<8x16x4xf32>
    %157 = vector.extract_strided_slice %69 {offsets = [2, 0, 0], sizes = [8, 16, 4], strides = [1, 1, 1]} : vector<12x16x4xf32> to vector<8x16x4xf32>
    %158 = vector.extract_strided_slice %3 {offsets = [2, 2, 0], sizes = [1, 1, 4], strides = [1, 1, 1]} : vector<5x5x4xf32> to vector<1x1x4xf32>
    %159 = vector.shape_cast %158 : vector<1x1x4xf32> to vector<4xf32>
    %160 = vector.shape_cast %159 : vector<4xf32> to vector<1x1x4xf32>
    %161 = vector.broadcast %160 : vector<1x1x4xf32> to vector<8x16x4xf32>
    %162 = arith.mulf %157, %161 : vector<8x16x4xf32>
    %163 = arith.addf %156, %162 : vector<8x16x4xf32>
    %164 = vector.extract_strided_slice %70 {offsets = [2, 0, 0], sizes = [8, 16, 4], strides = [1, 1, 1]} : vector<12x16x4xf32> to vector<8x16x4xf32>
    %165 = vector.extract_strided_slice %3 {offsets = [2, 3, 0], sizes = [1, 1, 4], strides = [1, 1, 1]} : vector<5x5x4xf32> to vector<1x1x4xf32>
    %166 = vector.shape_cast %165 : vector<1x1x4xf32> to vector<4xf32>
    %167 = vector.shape_cast %166 : vector<4xf32> to vector<1x1x4xf32>
    %168 = vector.broadcast %167 : vector<1x1x4xf32> to vector<8x16x4xf32>
    %169 = arith.mulf %164, %168 : vector<8x16x4xf32>
    %170 = arith.addf %163, %169 : vector<8x16x4xf32>
    %171 = vector.extract_strided_slice %71 {offsets = [2, 0, 0], sizes = [8, 16, 4], strides = [1, 1, 1]} : vector<12x16x4xf32> to vector<8x16x4xf32>
    %172 = vector.extract_strided_slice %3 {offsets = [2, 4, 0], sizes = [1, 1, 4], strides = [1, 1, 1]} : vector<5x5x4xf32> to vector<1x1x4xf32>
    %173 = vector.shape_cast %172 : vector<1x1x4xf32> to vector<4xf32>
    %174 = vector.shape_cast %173 : vector<4xf32> to vector<1x1x4xf32>
    %175 = vector.broadcast %174 : vector<1x1x4xf32> to vector<8x16x4xf32>
    %176 = arith.mulf %171, %175 : vector<8x16x4xf32>
    %177 = arith.addf %170, %176 : vector<8x16x4xf32>
    %178 = vector.extract_strided_slice %67 {offsets = [3, 0, 0], sizes = [8, 16, 4], strides = [1, 1, 1]} : vector<12x16x4xf32> to vector<8x16x4xf32>
    %179 = vector.extract_strided_slice %3 {offsets = [3, 0, 0], sizes = [1, 1, 4], strides = [1, 1, 1]} : vector<5x5x4xf32> to vector<1x1x4xf32>
    %180 = vector.shape_cast %179 : vector<1x1x4xf32> to vector<4xf32>
    %181 = vector.shape_cast %180 : vector<4xf32> to vector<1x1x4xf32>
    %182 = vector.broadcast %181 : vector<1x1x4xf32> to vector<8x16x4xf32>
    %183 = arith.mulf %178, %182 : vector<8x16x4xf32>
    %184 = arith.addf %177, %183 : vector<8x16x4xf32>
    %185 = vector.extract_strided_slice %68 {offsets = [3, 0, 0], sizes = [8, 16, 4], strides = [1, 1, 1]} : vector<12x16x4xf32> to vector<8x16x4xf32>
    %186 = vector.extract_strided_slice %3 {offsets = [3, 1, 0], sizes = [1, 1, 4], strides = [1, 1, 1]} : vector<5x5x4xf32> to vector<1x1x4xf32>
    %187 = vector.shape_cast %186 : vector<1x1x4xf32> to vector<4xf32>
    %188 = vector.shape_cast %187 : vector<4xf32> to vector<1x1x4xf32>
    %189 = vector.broadcast %188 : vector<1x1x4xf32> to vector<8x16x4xf32>
    %190 = arith.mulf %185, %189 : vector<8x16x4xf32>
    %191 = arith.addf %184, %190 : vector<8x16x4xf32>
    %192 = vector.extract_strided_slice %69 {offsets = [3, 0, 0], sizes = [8, 16, 4], strides = [1, 1, 1]} : vector<12x16x4xf32> to vector<8x16x4xf32>
    %193 = vector.extract_strided_slice %3 {offsets = [3, 2, 0], sizes = [1, 1, 4], strides = [1, 1, 1]} : vector<5x5x4xf32> to vector<1x1x4xf32>
    %194 = vector.shape_cast %193 : vector<1x1x4xf32> to vector<4xf32>
    %195 = vector.shape_cast %194 : vector<4xf32> to vector<1x1x4xf32>
    %196 = vector.broadcast %195 : vector<1x1x4xf32> to vector<8x16x4xf32>
    %197 = arith.mulf %192, %196 : vector<8x16x4xf32>
    %198 = arith.addf %191, %197 : vector<8x16x4xf32>
    %199 = vector.extract_strided_slice %70 {offsets = [3, 0, 0], sizes = [8, 16, 4], strides = [1, 1, 1]} : vector<12x16x4xf32> to vector<8x16x4xf32>
    %200 = vector.extract_strided_slice %3 {offsets = [3, 3, 0], sizes = [1, 1, 4], strides = [1, 1, 1]} : vector<5x5x4xf32> to vector<1x1x4xf32>
    %201 = vector.shape_cast %200 : vector<1x1x4xf32> to vector<4xf32>
    %202 = vector.shape_cast %201 : vector<4xf32> to vector<1x1x4xf32>
    %203 = vector.broadcast %202 : vector<1x1x4xf32> to vector<8x16x4xf32>
    %204 = arith.mulf %199, %203 : vector<8x16x4xf32>
    %205 = arith.addf %198, %204 : vector<8x16x4xf32>
    %206 = vector.extract_strided_slice %71 {offsets = [3, 0, 0], sizes = [8, 16, 4], strides = [1, 1, 1]} : vector<12x16x4xf32> to vector<8x16x4xf32>
    %207 = vector.extract_strided_slice %3 {offsets = [3, 4, 0], sizes = [1, 1, 4], strides = [1, 1, 1]} : vector<5x5x4xf32> to vector<1x1x4xf32>
    %208 = vector.shape_cast %207 : vector<1x1x4xf32> to vector<4xf32>
    %209 = vector.shape_cast %208 : vector<4xf32> to vector<1x1x4xf32>
    %210 = vector.broadcast %209 : vector<1x1x4xf32> to vector<8x16x4xf32>
    %211 = arith.mulf %206, %210 : vector<8x16x4xf32>
    %212 = arith.addf %205, %211 : vector<8x16x4xf32>
    %213 = vector.extract_strided_slice %67 {offsets = [4, 0, 0], sizes = [8, 16, 4], strides = [1, 1, 1]} : vector<12x16x4xf32> to vector<8x16x4xf32>
    %214 = vector.extract_strided_slice %3 {offsets = [4, 0, 0], sizes = [1, 1, 4], strides = [1, 1, 1]} : vector<5x5x4xf32> to vector<1x1x4xf32>
    %215 = vector.shape_cast %214 : vector<1x1x4xf32> to vector<4xf32>
    %216 = vector.shape_cast %215 : vector<4xf32> to vector<1x1x4xf32>
    %217 = vector.broadcast %216 : vector<1x1x4xf32> to vector<8x16x4xf32>
    %218 = arith.mulf %213, %217 : vector<8x16x4xf32>
    %219 = arith.addf %212, %218 : vector<8x16x4xf32>
    %220 = vector.extract_strided_slice %68 {offsets = [4, 0, 0], sizes = [8, 16, 4], strides = [1, 1, 1]} : vector<12x16x4xf32> to vector<8x16x4xf32>
    %221 = vector.extract_strided_slice %3 {offsets = [4, 1, 0], sizes = [1, 1, 4], strides = [1, 1, 1]} : vector<5x5x4xf32> to vector<1x1x4xf32>
    %222 = vector.shape_cast %221 : vector<1x1x4xf32> to vector<4xf32>
    %223 = vector.shape_cast %222 : vector<4xf32> to vector<1x1x4xf32>
    %224 = vector.broadcast %223 : vector<1x1x4xf32> to vector<8x16x4xf32>
    %225 = arith.mulf %220, %224 : vector<8x16x4xf32>
    %226 = arith.addf %219, %225 : vector<8x16x4xf32>
    %227 = vector.extract_strided_slice %69 {offsets = [4, 0, 0], sizes = [8, 16, 4], strides = [1, 1, 1]} : vector<12x16x4xf32> to vector<8x16x4xf32>
    %228 = vector.extract_strided_slice %3 {offsets = [4, 2, 0], sizes = [1, 1, 4], strides = [1, 1, 1]} : vector<5x5x4xf32> to vector<1x1x4xf32>
    %229 = vector.shape_cast %228 : vector<1x1x4xf32> to vector<4xf32>
    %230 = vector.shape_cast %229 : vector<4xf32> to vector<1x1x4xf32>
    %231 = vector.broadcast %230 : vector<1x1x4xf32> to vector<8x16x4xf32>
    %232 = arith.mulf %227, %231 : vector<8x16x4xf32>
    %233 = arith.addf %226, %232 : vector<8x16x4xf32>
    %234 = vector.extract_strided_slice %70 {offsets = [4, 0, 0], sizes = [8, 16, 4], strides = [1, 1, 1]} : vector<12x16x4xf32> to vector<8x16x4xf32>
    %235 = vector.extract_strided_slice %3 {offsets = [4, 3, 0], sizes = [1, 1, 4], strides = [1, 1, 1]} : vector<5x5x4xf32> to vector<1x1x4xf32>
    %236 = vector.shape_cast %235 : vector<1x1x4xf32> to vector<4xf32>
    %237 = vector.shape_cast %236 : vector<4xf32> to vector<1x1x4xf32>
    %238 = vector.broadcast %237 : vector<1x1x4xf32> to vector<8x16x4xf32>
    %239 = arith.mulf %234, %238 : vector<8x16x4xf32>
    %240 = arith.addf %233, %239 : vector<8x16x4xf32>
    %241 = vector.extract_strided_slice %71 {offsets = [4, 0, 0], sizes = [8, 16, 4], strides = [1, 1, 1]} : vector<12x16x4xf32> to vector<8x16x4xf32>
    %242 = vector.extract_strided_slice %3 {offsets = [4, 4, 0], sizes = [1, 1, 4], strides = [1, 1, 1]} : vector<5x5x4xf32> to vector<1x1x4xf32>
    %243 = vector.shape_cast %242 : vector<1x1x4xf32> to vector<4xf32>
    %244 = vector.shape_cast %243 : vector<4xf32> to vector<1x1x4xf32>
    %245 = vector.broadcast %244 : vector<1x1x4xf32> to vector<8x16x4xf32>
    %246 = arith.mulf %241, %245 : vector<8x16x4xf32>
    %247 = arith.addf %240, %246 : vector<8x16x4xf32>
    %248 = vector.shape_cast %4 : vector<1x4xf32> to vector<1x1x4xf32>
    %249 = vector.broadcast %248 : vector<1x1x4xf32> to vector<8x16x4xf32>
    %250 = arith.mulf %247, %249 : vector<8x16x4xf32>
    %251 = vector.shape_cast %5 : vector<1x4xf32> to vector<1x1x4xf32>
    %252 = vector.broadcast %251 : vector<1x1x4xf32> to vector<8x16x4xf32>
    %253 = arith.addf %250, %252 : vector<8x16x4xf32>
    %254 = arith.negf %253 : vector<8x16x4xf32>
    %255 = math.exp %254 : vector<8x16x4xf32>
    %cst_44 = arith.constant 1.000000e+00 : f32
    %256 = vector.broadcast %cst_44 : f32 to vector<8x16x4xf32>
    %257 = arith.addf %256, %255 : vector<8x16x4xf32>
    %258 = arith.divf %256, %257 : vector<8x16x4xf32>
    %259 = arith.mulf %253, %258 : vector<8x16x4xf32>
    %c0_45 = arith.constant 0 : index
    %c0_46 = arith.constant 0 : index
    %c0_47 = arith.constant 0 : index
    %c0_48 = arith.constant 0 : index
    %260 = vector.load %arg11[%c0_45, %c0_46, %c0_47, %c0_48] : memref<1x8x16x8xf32, #tpu.memory_space<vmem>>, vector<1x8x16x4xf32>
    %261 = vector.shape_cast %260 : vector<1x8x16x4xf32> to vector<8x16x4xf32>
    %262 = vector.shape_cast %20 : vector<8x16x4xf32> to vector<1x8x16x4xf32>
    tpu.vector_store %arg11[%c0_45, %c0_46, %c0_47, %c0_48], %262 {strides = array<i32>} : memref<1x8x16x8xf32, #tpu.memory_space<vmem>>, vector<1x8x16x4xf32>,
    %c0_49 = arith.constant 0 : index
    %c0_50 = arith.constant 0 : index
    %c0_51 = arith.constant 0 : index
    %c4 = arith.constant 4 : index
    %263 = vector.load %arg11[%c0_49, %c0_50, %c0_51, %c4] : memref<1x8x16x8xf32, #tpu.memory_space<vmem>>, vector<1x8x16x4xf32>
    %264 = vector.shape_cast %263 : vector<1x8x16x4xf32> to vector<8x16x4xf32>
    %265 = vector.shape_cast %259 : vector<8x16x4xf32> to vector<1x8x16x4xf32>
    tpu.vector_store %arg11[%c0_49, %c0_50, %c0_51, %c4], %265 {strides = array<i32>} : memref<1x8x16x8xf32, #tpu.memory_space<vmem>>, vector<1x8x16x4xf32>,
    return
  }
  func.func @transform_0(%arg0: i32, %arg1: i32) -> (i32, i32, i32, i32) {
    %c4_i32 = arith.constant 4 : i32
    %0 = arith.muli %arg1, %c4_i32 : i32
    %c1_i32 = arith.constant 1 : i32
    %1 = arith.subi %0, %c1_i32 : i32
    %c0_i32 = arith.constant 0 : i32
    %2 = arith.maxsi %1, %c0_i32 : i32
    %c0_i32_0 = arith.constant 0 : i32
    %c0_i32_1 = arith.constant 0 : i32
    %c0_i32_2 = arith.constant 0 : i32
    return %arg0, %2, %c0_i32_0, %c0_i32_1 : i32, i32, i32, i32
  }
  func.func @transform_1(%arg0: i32, %arg1: i32) -> (i32, i32, i32, i32) {
    %c0_i32 = arith.constant 0 : i32
    %c0_i32_0 = arith.constant 0 : i32
    %c0_i32_1 = arith.constant 0 : i32
    return %arg0, %arg1, %c0_i32, %c0_i32_0 : i32, i32, i32, i32
  }
  func.func @transform_2(%arg0: i32, %arg1: i32) -> (i32, i32, i32, i32) {
    %c4_i32 = arith.constant 4 : i32
    %0 = arith.muli %arg1, %c4_i32 : i32
    %c4_i32_0 = arith.constant 4 : i32
    %1 = arith.addi %0, %c4_i32_0 : i32
    %c7_i32 = arith.constant 7 : i32
    %2 = arith.minsi %1, %c7_i32 : i32
    %c0_i32 = arith.constant 0 : i32
    %c0_i32_1 = arith.constant 0 : i32
    %c0_i32_2 = arith.constant 0 : i32
    return %arg0, %2, %c0_i32, %c0_i32_1 : i32, i32, i32, i32
  }
  func.func @transform_3(%arg0: i32, %arg1: i32) -> (i32, i32) {
    %c0_i32 = arith.constant 0 : i32
    %c0_i32_0 = arith.constant 0 : i32
    %c0_i32_1 = arith.constant 0 : i32
    return %c0_i32, %c0_i32_0 : i32, i32
  }
  func.func @transform_4(%arg0: i32, %arg1: i32) -> (i32, i32) {
    %c0_i32 = arith.constant 0 : i32
    %c0_i32_0 = arith.constant 0 : i32
    %c0_i32_1 = arith.constant 0 : i32
    return %c0_i32, %c0_i32_0 : i32, i32
  }
  func.func @transform_5(%arg0: i32, %arg1: i32) -> (i32, i32) {
    %c0_i32 = arith.constant 0 : i32
    %c0_i32_0 = arith.constant 0 : i32
    %c0_i32_1 = arith.constant 0 : i32
    return %c0_i32, %c0_i32_0 : i32, i32
  }
  func.func @transform_6(%arg0: i32, %arg1: i32) -> (i32, i32, i32) {
    %c0_i32 = arith.constant 0 : i32
    %c0_i32_0 = arith.constant 0 : i32
    %c0_i32_1 = arith.constant 0 : i32
    %c0_i32_2 = arith.constant 0 : i32
    return %c0_i32, %c0_i32_0, %c0_i32_1 : i32, i32, i32
  }
  func.func @transform_7(%arg0: i32, %arg1: i32) -> (i32, i32) {
    %c0_i32 = arith.constant 0 : i32
    %c0_i32_0 = arith.constant 0 : i32
    %c0_i32_1 = arith.constant 0 : i32
    return %c0_i32, %c0_i32_0 : i32, i32
  }
  func.func @transform_8(%arg0: i32, %arg1: i32) -> (i32, i32) {
    %c0_i32 = arith.constant 0 : i32
    %c0_i32_0 = arith.constant 0 : i32
    %c0_i32_1 = arith.constant 0 : i32
    return %c0_i32, %c0_i32_0 : i32, i32
  }
  func.func @transform_9(%arg0: i32, %arg1: i32) -> (i32, i32, i32, i32) {
    %c0_i32 = arith.constant 0 : i32
    %c0_i32_0 = arith.constant 0 : i32
    %c0_i32_1 = arith.constant 0 : i32
    return %arg0, %arg1, %c0_i32, %c0_i32_0 : i32, i32, i32, i32
  }
}

module attributes {stable_mosaic.version = 11 : i64} {
  func.func @_ghost_conv_kernel(%arg0: i32, %arg1: i32, %arg2: memref<1x2x16x8xf32, #tpu.memory_space<vmem>>, %arg3: memref<1x8x16x8xf32, #tpu.memory_space<vmem>>, %arg4: memref<1x2x16x8xf32, #tpu.memory_space<vmem>>, %arg5: memref<8x8xf32, #tpu.memory_space<vmem>>, %arg6: memref<1x8xf32, #tpu.memory_space<vmem>>, %arg7: memref<1x8xf32, #tpu.memory_space<vmem>>, %arg8: memref<5x5x8xf32, #tpu.memory_space<vmem>>, %arg9: memref<1x8xf32, #tpu.memory_space<vmem>>, %arg10: memref<1x8xf32, #tpu.memory_space<vmem>>, %arg11: memref<1x8x16x16xf32, #tpu.memory_space<vmem>>, %arg12: memref<1x8x16x16xf32, #tpu.memory_space<vmem>>, %arg13: memref<12x20x8xf32, #tpu.memory_space<vmem>>) attributes {dimension_semantics = [#tpu.dimension_semantics<parallel>, #tpu.dimension_semantics<parallel>], iteration_bounds = array<i64: 2, 2>, scalar_prefetch = 0 : i64, scratch_operands = 1 : i64, tpu.core_type = #tpu.core_type<tc>, window_params = [{transform_indices = @transform_0, window_bounds = array<i64: 1, 2, 16, 8>}, {transform_indices = @transform_1, window_bounds = array<i64: 1, 8, 16, 8>}, {transform_indices = @transform_2, window_bounds = array<i64: 1, 2, 16, 8>}, {pipeline_mode = #tpu.pipeline_mode<synchronous>, transform_indices = @transform_3, window_bounds = array<i64: 8, 8>}, {pipeline_mode = #tpu.pipeline_mode<synchronous>, transform_indices = @transform_4, window_bounds = array<i64: 1, 8>}, {pipeline_mode = #tpu.pipeline_mode<synchronous>, transform_indices = @transform_5, window_bounds = array<i64: 1, 8>}, {pipeline_mode = #tpu.pipeline_mode<synchronous>, transform_indices = @transform_6, window_bounds = array<i64: 5, 5, 8>}, {pipeline_mode = #tpu.pipeline_mode<synchronous>, transform_indices = @transform_7, window_bounds = array<i64: 1, 8>}, {pipeline_mode = #tpu.pipeline_mode<synchronous>, transform_indices = @transform_8, window_bounds = array<i64: 1, 8>}, {transform_indices = @transform_9, window_bounds = array<i64: 1, 8, 16, 16>}, {transform_indices = @transform_10, window_bounds = array<i64: 1, 8, 16, 16>}]} {
    %c0 = arith.constant 0 : index
    %c0_0 = arith.constant 0 : index
    %0 = vector.load %arg5[%c0, %c0_0] : memref<8x8xf32, #tpu.memory_space<vmem>>, vector<8x8xf32>
    %c0_1 = arith.constant 0 : index
    %c0_2 = arith.constant 0 : index
    %1 = vector.load %arg6[%c0_1, %c0_2] : memref<1x8xf32, #tpu.memory_space<vmem>>, vector<1x8xf32>
    %c0_3 = arith.constant 0 : index
    %c0_4 = arith.constant 0 : index
    %2 = vector.load %arg7[%c0_3, %c0_4] : memref<1x8xf32, #tpu.memory_space<vmem>>, vector<1x8xf32>
    %c0_5 = arith.constant 0 : index
    %c0_6 = arith.constant 0 : index
    %c0_7 = arith.constant 0 : index
    %3 = vector.load %arg8[%c0_5, %c0_6, %c0_7] : memref<5x5x8xf32, #tpu.memory_space<vmem>>, vector<5x5x8xf32>
    %c0_8 = arith.constant 0 : index
    %c0_9 = arith.constant 0 : index
    %4 = vector.load %arg9[%c0_8, %c0_9] : memref<1x8xf32, #tpu.memory_space<vmem>>, vector<1x8xf32>
    %c0_10 = arith.constant 0 : index
    %c0_11 = arith.constant 0 : index
    %5 = vector.load %arg10[%c0_10, %c0_11] : memref<1x8xf32, #tpu.memory_space<vmem>>, vector<1x8xf32>
    %c0_12 = arith.constant 0 : index
    %c0_13 = arith.constant 0 : index
    %c0_14 = arith.constant 0 : index
    %c0_15 = arith.constant 0 : index
    %6 = vector.load %arg3[%c0_12, %c0_13, %c0_14, %c0_15] : memref<1x8x16x8xf32, #tpu.memory_space<vmem>>, vector<1x8x16x8xf32>
    %7 = vector.shape_cast %6 : vector<1x8x16x8xf32> to vector<8x16x8xf32>
    %8 = vector.shape_cast %7 : vector<8x16x8xf32> to vector<128x8xf32>
    %cst = arith.constant dense<0.000000e+00> : vector<128x8xf32>
    %9 = tpu.matmul %8, %0, %cst {dimension_numbers = #tpu.dot_dimension_numbers<[1], [0], [0], [1], [0, 0, 1, 1], [], []>} : vector<128x8xf32>, vector<8x8xf32>, vector<128x8xf32> -> vector<128x8xf32>
    %10 = vector.broadcast %1 : vector<1x8xf32> to vector<128x8xf32>
    %11 = arith.mulf %9, %10 : vector<128x8xf32>
    %12 = vector.broadcast %2 : vector<1x8xf32> to vector<128x8xf32>
    %13 = arith.addf %11, %12 : vector<128x8xf32>
    %14 = vector.shape_cast %13 : vector<128x8xf32> to vector<8x16x8xf32>
    %c0_i32 = arith.constant 0 : i32
    %15 = arith.cmpi sgt, %arg1, %c0_i32 : i32
    %16 = arith.extui %15 : i1 to i32
    %17 = arith.sitofp %16 : i32 to f32
    %c1_i32 = arith.constant 1 : i32
    %18 = arith.cmpi slt, %arg1, %c1_i32 : i32
    %19 = arith.extui %18 : i1 to i32
    %20 = arith.sitofp %19 : i32 to f32
    %c0_16 = arith.constant 0 : index
    %c0_17 = arith.constant 0 : index
    %c0_18 = arith.constant 0 : index
    %c0_19 = arith.constant 0 : index
    %21 = vector.load %arg2[%c0_16, %c0_17, %c0_18, %c0_19] : memref<1x2x16x8xf32, #tpu.memory_space<vmem>>, vector<1x2x16x8xf32>
    %22 = vector.shape_cast %21 : vector<1x2x16x8xf32> to vector<2x16x8xf32>
    %23 = vector.shape_cast %22 : vector<2x16x8xf32> to vector<32x8xf32>
    %cst_20 = arith.constant dense<0.000000e+00> : vector<32x8xf32>
    %24 = tpu.matmul %23, %0, %cst_20 {dimension_numbers = #tpu.dot_dimension_numbers<[1], [0], [0], [1], [0, 0, 1, 1], [], []>} : vector<32x8xf32>, vector<8x8xf32>, vector<32x8xf32> -> vector<32x8xf32>
    %25 = vector.broadcast %1 : vector<1x8xf32> to vector<32x8xf32>
    %26 = arith.mulf %24, %25 : vector<32x8xf32>
    %27 = vector.broadcast %2 : vector<1x8xf32> to vector<32x8xf32>
    %28 = arith.addf %26, %27 : vector<32x8xf32>
    %29 = vector.shape_cast %28 : vector<32x8xf32> to vector<2x16x8xf32>
    %30 = vector.broadcast %17 : f32 to vector<2x16x8xf32>
    %31 = arith.mulf %29, %30 : vector<2x16x8xf32>
    %c0_21 = arith.constant 0 : index
    %c0_22 = arith.constant 0 : index
    %c0_23 = arith.constant 0 : index
    %c0_24 = arith.constant 0 : index
    %32 = vector.load %arg4[%c0_21, %c0_22, %c0_23, %c0_24] : memref<1x2x16x8xf32, #tpu.memory_space<vmem>>, vector<1x2x16x8xf32>
    %33 = vector.shape_cast %32 : vector<1x2x16x8xf32> to vector<2x16x8xf32>
    %34 = vector.shape_cast %33 : vector<2x16x8xf32> to vector<32x8xf32>
    %cst_25 = arith.constant dense<0.000000e+00> : vector<32x8xf32>
    %35 = tpu.matmul %34, %0, %cst_25 {dimension_numbers = #tpu.dot_dimension_numbers<[1], [0], [0], [1], [0, 0, 1, 1], [], []>} : vector<32x8xf32>, vector<8x8xf32>, vector<32x8xf32> -> vector<32x8xf32>
    %36 = vector.broadcast %1 : vector<1x8xf32> to vector<32x8xf32>
    %37 = arith.mulf %35, %36 : vector<32x8xf32>
    %38 = vector.broadcast %2 : vector<1x8xf32> to vector<32x8xf32>
    %39 = arith.addf %37, %38 : vector<32x8xf32>
    %40 = vector.shape_cast %39 : vector<32x8xf32> to vector<2x16x8xf32>
    %41 = vector.broadcast %20 : f32 to vector<2x16x8xf32>
    %42 = arith.mulf %40, %41 : vector<2x16x8xf32>
    %cst_26 = arith.constant 0.000000e+00 : f32
    %43 = vector.broadcast %cst_26 : f32 to vector<12x20x8xf32>
    %c0_27 = arith.constant 0 : index
    %c0_28 = arith.constant 0 : index
    %c0_29 = arith.constant 0 : index
    %44 = vector.load %arg13[%c0_27, %c0_28, %c0_29] : memref<12x20x8xf32, #tpu.memory_space<vmem>>, vector<12x20x8xf32>
    tpu.vector_store %arg13[%c0_27, %c0_28, %c0_29], %43 {strides = array<i32>} : memref<12x20x8xf32, #tpu.memory_space<vmem>>, vector<12x20x8xf32>,
    %c0_30 = arith.constant 0 : index
    %c2 = arith.constant 2 : index
    %c0_31 = arith.constant 0 : index
    %45 = vector.load %arg13[%c0_30, %c2, %c0_31] : memref<12x20x8xf32, #tpu.memory_space<vmem>>, vector<2x16x8xf32>
    tpu.vector_store %arg13[%c0_30, %c2, %c0_31], %31 {strides = array<i32>} : memref<12x20x8xf32, #tpu.memory_space<vmem>>, vector<2x16x8xf32>,
    %c2_32 = arith.constant 2 : index
    %c2_33 = arith.constant 2 : index
    %c0_34 = arith.constant 0 : index
    %46 = vector.load %arg13[%c2_32, %c2_33, %c0_34] : memref<12x20x8xf32, #tpu.memory_space<vmem>>, vector<8x16x8xf32>
    tpu.vector_store %arg13[%c2_32, %c2_33, %c0_34], %14 {strides = array<i32>} : memref<12x20x8xf32, #tpu.memory_space<vmem>>, vector<8x16x8xf32>,
    %c10 = arith.constant 10 : index
    %c2_35 = arith.constant 2 : index
    %c0_36 = arith.constant 0 : index
    %47 = vector.load %arg13[%c10, %c2_35, %c0_36] : memref<12x20x8xf32, #tpu.memory_space<vmem>>, vector<2x16x8xf32>
    tpu.vector_store %arg13[%c10, %c2_35, %c0_36], %42 {strides = array<i32>} : memref<12x20x8xf32, #tpu.memory_space<vmem>>, vector<2x16x8xf32>,
    %c0_37 = arith.constant 0 : index
    %c0_38 = arith.constant 0 : index
    %c0_39 = arith.constant 0 : index
    %48 = vector.load %arg13[%c0_37, %c0_38, %c0_39] : memref<12x20x8xf32, #tpu.memory_space<vmem>>, vector<12x20x8xf32>
    %49 = vector.extract_strided_slice %48 {offsets = [0, 0, 0], sizes = [12, 16, 8], strides = [1, 1, 1]} : vector<12x20x8xf32> to vector<12x16x8xf32>
    %50 = vector.extract_strided_slice %48 {offsets = [0, 1, 0], sizes = [12, 16, 8], strides = [1, 1, 1]} : vector<12x20x8xf32> to vector<12x16x8xf32>
    %51 = vector.extract_strided_slice %48 {offsets = [0, 2, 0], sizes = [12, 16, 8], strides = [1, 1, 1]} : vector<12x20x8xf32> to vector<12x16x8xf32>
    %52 = vector.extract_strided_slice %48 {offsets = [0, 3, 0], sizes = [12, 16, 8], strides = [1, 1, 1]} : vector<12x20x8xf32> to vector<12x16x8xf32>
    %53 = vector.extract_strided_slice %48 {offsets = [0, 4, 0], sizes = [12, 16, 8], strides = [1, 1, 1]} : vector<12x20x8xf32> to vector<12x16x8xf32>
    %cst_40 = arith.constant 0.000000e+00 : f32
    %54 = vector.broadcast %cst_40 : f32 to vector<8x16x8xf32>
    %55 = vector.extract_strided_slice %49 {offsets = [0, 0, 0], sizes = [8, 16, 8], strides = [1, 1, 1]} : vector<12x16x8xf32> to vector<8x16x8xf32>
    %56 = vector.extract_strided_slice %3 {offsets = [0, 0, 0], sizes = [1, 1, 8], strides = [1, 1, 1]} : vector<5x5x8xf32> to vector<1x1x8xf32>
    %57 = vector.shape_cast %56 : vector<1x1x8xf32> to vector<8xf32>
    %58 = vector.shape_cast %57 : vector<8xf32> to vector<1x1x8xf32>
    %59 = vector.broadcast %58 : vector<1x1x8xf32> to vector<8x16x8xf32>
    %60 = arith.mulf %55, %59 : vector<8x16x8xf32>
    %61 = arith.addf %54, %60 : vector<8x16x8xf32>
    %62 = vector.extract_strided_slice %50 {offsets = [0, 0, 0], sizes = [8, 16, 8], strides = [1, 1, 1]} : vector<12x16x8xf32> to vector<8x16x8xf32>
    %63 = vector.extract_strided_slice %3 {offsets = [0, 1, 0], sizes = [1, 1, 8], strides = [1, 1, 1]} : vector<5x5x8xf32> to vector<1x1x8xf32>
    %64 = vector.shape_cast %63 : vector<1x1x8xf32> to vector<8xf32>
    %65 = vector.shape_cast %64 : vector<8xf32> to vector<1x1x8xf32>
    %66 = vector.broadcast %65 : vector<1x1x8xf32> to vector<8x16x8xf32>
    %67 = arith.mulf %62, %66 : vector<8x16x8xf32>
    %68 = arith.addf %61, %67 : vector<8x16x8xf32>
    %69 = vector.extract_strided_slice %51 {offsets = [0, 0, 0], sizes = [8, 16, 8], strides = [1, 1, 1]} : vector<12x16x8xf32> to vector<8x16x8xf32>
    %70 = vector.extract_strided_slice %3 {offsets = [0, 2, 0], sizes = [1, 1, 8], strides = [1, 1, 1]} : vector<5x5x8xf32> to vector<1x1x8xf32>
    %71 = vector.shape_cast %70 : vector<1x1x8xf32> to vector<8xf32>
    %72 = vector.shape_cast %71 : vector<8xf32> to vector<1x1x8xf32>
    %73 = vector.broadcast %72 : vector<1x1x8xf32> to vector<8x16x8xf32>
    %74 = arith.mulf %69, %73 : vector<8x16x8xf32>
    %75 = arith.addf %68, %74 : vector<8x16x8xf32>
    %76 = vector.extract_strided_slice %52 {offsets = [0, 0, 0], sizes = [8, 16, 8], strides = [1, 1, 1]} : vector<12x16x8xf32> to vector<8x16x8xf32>
    %77 = vector.extract_strided_slice %3 {offsets = [0, 3, 0], sizes = [1, 1, 8], strides = [1, 1, 1]} : vector<5x5x8xf32> to vector<1x1x8xf32>
    %78 = vector.shape_cast %77 : vector<1x1x8xf32> to vector<8xf32>
    %79 = vector.shape_cast %78 : vector<8xf32> to vector<1x1x8xf32>
    %80 = vector.broadcast %79 : vector<1x1x8xf32> to vector<8x16x8xf32>
    %81 = arith.mulf %76, %80 : vector<8x16x8xf32>
    %82 = arith.addf %75, %81 : vector<8x16x8xf32>
    %83 = vector.extract_strided_slice %53 {offsets = [0, 0, 0], sizes = [8, 16, 8], strides = [1, 1, 1]} : vector<12x16x8xf32> to vector<8x16x8xf32>
    %84 = vector.extract_strided_slice %3 {offsets = [0, 4, 0], sizes = [1, 1, 8], strides = [1, 1, 1]} : vector<5x5x8xf32> to vector<1x1x8xf32>
    %85 = vector.shape_cast %84 : vector<1x1x8xf32> to vector<8xf32>
    %86 = vector.shape_cast %85 : vector<8xf32> to vector<1x1x8xf32>
    %87 = vector.broadcast %86 : vector<1x1x8xf32> to vector<8x16x8xf32>
    %88 = arith.mulf %83, %87 : vector<8x16x8xf32>
    %89 = arith.addf %82, %88 : vector<8x16x8xf32>
    %90 = vector.extract_strided_slice %49 {offsets = [1, 0, 0], sizes = [8, 16, 8], strides = [1, 1, 1]} : vector<12x16x8xf32> to vector<8x16x8xf32>
    %91 = vector.extract_strided_slice %3 {offsets = [1, 0, 0], sizes = [1, 1, 8], strides = [1, 1, 1]} : vector<5x5x8xf32> to vector<1x1x8xf32>
    %92 = vector.shape_cast %91 : vector<1x1x8xf32> to vector<8xf32>
    %93 = vector.shape_cast %92 : vector<8xf32> to vector<1x1x8xf32>
    %94 = vector.broadcast %93 : vector<1x1x8xf32> to vector<8x16x8xf32>
    %95 = arith.mulf %90, %94 : vector<8x16x8xf32>
    %96 = arith.addf %89, %95 : vector<8x16x8xf32>
    %97 = vector.extract_strided_slice %50 {offsets = [1, 0, 0], sizes = [8, 16, 8], strides = [1, 1, 1]} : vector<12x16x8xf32> to vector<8x16x8xf32>
    %98 = vector.extract_strided_slice %3 {offsets = [1, 1, 0], sizes = [1, 1, 8], strides = [1, 1, 1]} : vector<5x5x8xf32> to vector<1x1x8xf32>
    %99 = vector.shape_cast %98 : vector<1x1x8xf32> to vector<8xf32>
    %100 = vector.shape_cast %99 : vector<8xf32> to vector<1x1x8xf32>
    %101 = vector.broadcast %100 : vector<1x1x8xf32> to vector<8x16x8xf32>
    %102 = arith.mulf %97, %101 : vector<8x16x8xf32>
    %103 = arith.addf %96, %102 : vector<8x16x8xf32>
    %104 = vector.extract_strided_slice %51 {offsets = [1, 0, 0], sizes = [8, 16, 8], strides = [1, 1, 1]} : vector<12x16x8xf32> to vector<8x16x8xf32>
    %105 = vector.extract_strided_slice %3 {offsets = [1, 2, 0], sizes = [1, 1, 8], strides = [1, 1, 1]} : vector<5x5x8xf32> to vector<1x1x8xf32>
    %106 = vector.shape_cast %105 : vector<1x1x8xf32> to vector<8xf32>
    %107 = vector.shape_cast %106 : vector<8xf32> to vector<1x1x8xf32>
    %108 = vector.broadcast %107 : vector<1x1x8xf32> to vector<8x16x8xf32>
    %109 = arith.mulf %104, %108 : vector<8x16x8xf32>
    %110 = arith.addf %103, %109 : vector<8x16x8xf32>
    %111 = vector.extract_strided_slice %52 {offsets = [1, 0, 0], sizes = [8, 16, 8], strides = [1, 1, 1]} : vector<12x16x8xf32> to vector<8x16x8xf32>
    %112 = vector.extract_strided_slice %3 {offsets = [1, 3, 0], sizes = [1, 1, 8], strides = [1, 1, 1]} : vector<5x5x8xf32> to vector<1x1x8xf32>
    %113 = vector.shape_cast %112 : vector<1x1x8xf32> to vector<8xf32>
    %114 = vector.shape_cast %113 : vector<8xf32> to vector<1x1x8xf32>
    %115 = vector.broadcast %114 : vector<1x1x8xf32> to vector<8x16x8xf32>
    %116 = arith.mulf %111, %115 : vector<8x16x8xf32>
    %117 = arith.addf %110, %116 : vector<8x16x8xf32>
    %118 = vector.extract_strided_slice %53 {offsets = [1, 0, 0], sizes = [8, 16, 8], strides = [1, 1, 1]} : vector<12x16x8xf32> to vector<8x16x8xf32>
    %119 = vector.extract_strided_slice %3 {offsets = [1, 4, 0], sizes = [1, 1, 8], strides = [1, 1, 1]} : vector<5x5x8xf32> to vector<1x1x8xf32>
    %120 = vector.shape_cast %119 : vector<1x1x8xf32> to vector<8xf32>
    %121 = vector.shape_cast %120 : vector<8xf32> to vector<1x1x8xf32>
    %122 = vector.broadcast %121 : vector<1x1x8xf32> to vector<8x16x8xf32>
    %123 = arith.mulf %118, %122 : vector<8x16x8xf32>
    %124 = arith.addf %117, %123 : vector<8x16x8xf32>
    %125 = vector.extract_strided_slice %49 {offsets = [2, 0, 0], sizes = [8, 16, 8], strides = [1, 1, 1]} : vector<12x16x8xf32> to vector<8x16x8xf32>
    %126 = vector.extract_strided_slice %3 {offsets = [2, 0, 0], sizes = [1, 1, 8], strides = [1, 1, 1]} : vector<5x5x8xf32> to vector<1x1x8xf32>
    %127 = vector.shape_cast %126 : vector<1x1x8xf32> to vector<8xf32>
    %128 = vector.shape_cast %127 : vector<8xf32> to vector<1x1x8xf32>
    %129 = vector.broadcast %128 : vector<1x1x8xf32> to vector<8x16x8xf32>
    %130 = arith.mulf %125, %129 : vector<8x16x8xf32>
    %131 = arith.addf %124, %130 : vector<8x16x8xf32>
    %132 = vector.extract_strided_slice %50 {offsets = [2, 0, 0], sizes = [8, 16, 8], strides = [1, 1, 1]} : vector<12x16x8xf32> to vector<8x16x8xf32>
    %133 = vector.extract_strided_slice %3 {offsets = [2, 1, 0], sizes = [1, 1, 8], strides = [1, 1, 1]} : vector<5x5x8xf32> to vector<1x1x8xf32>
    %134 = vector.shape_cast %133 : vector<1x1x8xf32> to vector<8xf32>
    %135 = vector.shape_cast %134 : vector<8xf32> to vector<1x1x8xf32>
    %136 = vector.broadcast %135 : vector<1x1x8xf32> to vector<8x16x8xf32>
    %137 = arith.mulf %132, %136 : vector<8x16x8xf32>
    %138 = arith.addf %131, %137 : vector<8x16x8xf32>
    %139 = vector.extract_strided_slice %51 {offsets = [2, 0, 0], sizes = [8, 16, 8], strides = [1, 1, 1]} : vector<12x16x8xf32> to vector<8x16x8xf32>
    %140 = vector.extract_strided_slice %3 {offsets = [2, 2, 0], sizes = [1, 1, 8], strides = [1, 1, 1]} : vector<5x5x8xf32> to vector<1x1x8xf32>
    %141 = vector.shape_cast %140 : vector<1x1x8xf32> to vector<8xf32>
    %142 = vector.shape_cast %141 : vector<8xf32> to vector<1x1x8xf32>
    %143 = vector.broadcast %142 : vector<1x1x8xf32> to vector<8x16x8xf32>
    %144 = arith.mulf %139, %143 : vector<8x16x8xf32>
    %145 = arith.addf %138, %144 : vector<8x16x8xf32>
    %146 = vector.extract_strided_slice %52 {offsets = [2, 0, 0], sizes = [8, 16, 8], strides = [1, 1, 1]} : vector<12x16x8xf32> to vector<8x16x8xf32>
    %147 = vector.extract_strided_slice %3 {offsets = [2, 3, 0], sizes = [1, 1, 8], strides = [1, 1, 1]} : vector<5x5x8xf32> to vector<1x1x8xf32>
    %148 = vector.shape_cast %147 : vector<1x1x8xf32> to vector<8xf32>
    %149 = vector.shape_cast %148 : vector<8xf32> to vector<1x1x8xf32>
    %150 = vector.broadcast %149 : vector<1x1x8xf32> to vector<8x16x8xf32>
    %151 = arith.mulf %146, %150 : vector<8x16x8xf32>
    %152 = arith.addf %145, %151 : vector<8x16x8xf32>
    %153 = vector.extract_strided_slice %53 {offsets = [2, 0, 0], sizes = [8, 16, 8], strides = [1, 1, 1]} : vector<12x16x8xf32> to vector<8x16x8xf32>
    %154 = vector.extract_strided_slice %3 {offsets = [2, 4, 0], sizes = [1, 1, 8], strides = [1, 1, 1]} : vector<5x5x8xf32> to vector<1x1x8xf32>
    %155 = vector.shape_cast %154 : vector<1x1x8xf32> to vector<8xf32>
    %156 = vector.shape_cast %155 : vector<8xf32> to vector<1x1x8xf32>
    %157 = vector.broadcast %156 : vector<1x1x8xf32> to vector<8x16x8xf32>
    %158 = arith.mulf %153, %157 : vector<8x16x8xf32>
    %159 = arith.addf %152, %158 : vector<8x16x8xf32>
    %160 = vector.extract_strided_slice %49 {offsets = [3, 0, 0], sizes = [8, 16, 8], strides = [1, 1, 1]} : vector<12x16x8xf32> to vector<8x16x8xf32>
    %161 = vector.extract_strided_slice %3 {offsets = [3, 0, 0], sizes = [1, 1, 8], strides = [1, 1, 1]} : vector<5x5x8xf32> to vector<1x1x8xf32>
    %162 = vector.shape_cast %161 : vector<1x1x8xf32> to vector<8xf32>
    %163 = vector.shape_cast %162 : vector<8xf32> to vector<1x1x8xf32>
    %164 = vector.broadcast %163 : vector<1x1x8xf32> to vector<8x16x8xf32>
    %165 = arith.mulf %160, %164 : vector<8x16x8xf32>
    %166 = arith.addf %159, %165 : vector<8x16x8xf32>
    %167 = vector.extract_strided_slice %50 {offsets = [3, 0, 0], sizes = [8, 16, 8], strides = [1, 1, 1]} : vector<12x16x8xf32> to vector<8x16x8xf32>
    %168 = vector.extract_strided_slice %3 {offsets = [3, 1, 0], sizes = [1, 1, 8], strides = [1, 1, 1]} : vector<5x5x8xf32> to vector<1x1x8xf32>
    %169 = vector.shape_cast %168 : vector<1x1x8xf32> to vector<8xf32>
    %170 = vector.shape_cast %169 : vector<8xf32> to vector<1x1x8xf32>
    %171 = vector.broadcast %170 : vector<1x1x8xf32> to vector<8x16x8xf32>
    %172 = arith.mulf %167, %171 : vector<8x16x8xf32>
    %173 = arith.addf %166, %172 : vector<8x16x8xf32>
    %174 = vector.extract_strided_slice %51 {offsets = [3, 0, 0], sizes = [8, 16, 8], strides = [1, 1, 1]} : vector<12x16x8xf32> to vector<8x16x8xf32>
    %175 = vector.extract_strided_slice %3 {offsets = [3, 2, 0], sizes = [1, 1, 8], strides = [1, 1, 1]} : vector<5x5x8xf32> to vector<1x1x8xf32>
    %176 = vector.shape_cast %175 : vector<1x1x8xf32> to vector<8xf32>
    %177 = vector.shape_cast %176 : vector<8xf32> to vector<1x1x8xf32>
    %178 = vector.broadcast %177 : vector<1x1x8xf32> to vector<8x16x8xf32>
    %179 = arith.mulf %174, %178 : vector<8x16x8xf32>
    %180 = arith.addf %173, %179 : vector<8x16x8xf32>
    %181 = vector.extract_strided_slice %52 {offsets = [3, 0, 0], sizes = [8, 16, 8], strides = [1, 1, 1]} : vector<12x16x8xf32> to vector<8x16x8xf32>
    %182 = vector.extract_strided_slice %3 {offsets = [3, 3, 0], sizes = [1, 1, 8], strides = [1, 1, 1]} : vector<5x5x8xf32> to vector<1x1x8xf32>
    %183 = vector.shape_cast %182 : vector<1x1x8xf32> to vector<8xf32>
    %184 = vector.shape_cast %183 : vector<8xf32> to vector<1x1x8xf32>
    %185 = vector.broadcast %184 : vector<1x1x8xf32> to vector<8x16x8xf32>
    %186 = arith.mulf %181, %185 : vector<8x16x8xf32>
    %187 = arith.addf %180, %186 : vector<8x16x8xf32>
    %188 = vector.extract_strided_slice %53 {offsets = [3, 0, 0], sizes = [8, 16, 8], strides = [1, 1, 1]} : vector<12x16x8xf32> to vector<8x16x8xf32>
    %189 = vector.extract_strided_slice %3 {offsets = [3, 4, 0], sizes = [1, 1, 8], strides = [1, 1, 1]} : vector<5x5x8xf32> to vector<1x1x8xf32>
    %190 = vector.shape_cast %189 : vector<1x1x8xf32> to vector<8xf32>
    %191 = vector.shape_cast %190 : vector<8xf32> to vector<1x1x8xf32>
    %192 = vector.broadcast %191 : vector<1x1x8xf32> to vector<8x16x8xf32>
    %193 = arith.mulf %188, %192 : vector<8x16x8xf32>
    %194 = arith.addf %187, %193 : vector<8x16x8xf32>
    %195 = vector.extract_strided_slice %49 {offsets = [4, 0, 0], sizes = [8, 16, 8], strides = [1, 1, 1]} : vector<12x16x8xf32> to vector<8x16x8xf32>
    %196 = vector.extract_strided_slice %3 {offsets = [4, 0, 0], sizes = [1, 1, 8], strides = [1, 1, 1]} : vector<5x5x8xf32> to vector<1x1x8xf32>
    %197 = vector.shape_cast %196 : vector<1x1x8xf32> to vector<8xf32>
    %198 = vector.shape_cast %197 : vector<8xf32> to vector<1x1x8xf32>
    %199 = vector.broadcast %198 : vector<1x1x8xf32> to vector<8x16x8xf32>
    %200 = arith.mulf %195, %199 : vector<8x16x8xf32>
    %201 = arith.addf %194, %200 : vector<8x16x8xf32>
    %202 = vector.extract_strided_slice %50 {offsets = [4, 0, 0], sizes = [8, 16, 8], strides = [1, 1, 1]} : vector<12x16x8xf32> to vector<8x16x8xf32>
    %203 = vector.extract_strided_slice %3 {offsets = [4, 1, 0], sizes = [1, 1, 8], strides = [1, 1, 1]} : vector<5x5x8xf32> to vector<1x1x8xf32>
    %204 = vector.shape_cast %203 : vector<1x1x8xf32> to vector<8xf32>
    %205 = vector.shape_cast %204 : vector<8xf32> to vector<1x1x8xf32>
    %206 = vector.broadcast %205 : vector<1x1x8xf32> to vector<8x16x8xf32>
    %207 = arith.mulf %202, %206 : vector<8x16x8xf32>
    %208 = arith.addf %201, %207 : vector<8x16x8xf32>
    %209 = vector.extract_strided_slice %51 {offsets = [4, 0, 0], sizes = [8, 16, 8], strides = [1, 1, 1]} : vector<12x16x8xf32> to vector<8x16x8xf32>
    %210 = vector.extract_strided_slice %3 {offsets = [4, 2, 0], sizes = [1, 1, 8], strides = [1, 1, 1]} : vector<5x5x8xf32> to vector<1x1x8xf32>
    %211 = vector.shape_cast %210 : vector<1x1x8xf32> to vector<8xf32>
    %212 = vector.shape_cast %211 : vector<8xf32> to vector<1x1x8xf32>
    %213 = vector.broadcast %212 : vector<1x1x8xf32> to vector<8x16x8xf32>
    %214 = arith.mulf %209, %213 : vector<8x16x8xf32>
    %215 = arith.addf %208, %214 : vector<8x16x8xf32>
    %216 = vector.extract_strided_slice %52 {offsets = [4, 0, 0], sizes = [8, 16, 8], strides = [1, 1, 1]} : vector<12x16x8xf32> to vector<8x16x8xf32>
    %217 = vector.extract_strided_slice %3 {offsets = [4, 3, 0], sizes = [1, 1, 8], strides = [1, 1, 1]} : vector<5x5x8xf32> to vector<1x1x8xf32>
    %218 = vector.shape_cast %217 : vector<1x1x8xf32> to vector<8xf32>
    %219 = vector.shape_cast %218 : vector<8xf32> to vector<1x1x8xf32>
    %220 = vector.broadcast %219 : vector<1x1x8xf32> to vector<8x16x8xf32>
    %221 = arith.mulf %216, %220 : vector<8x16x8xf32>
    %222 = arith.addf %215, %221 : vector<8x16x8xf32>
    %223 = vector.extract_strided_slice %53 {offsets = [4, 0, 0], sizes = [8, 16, 8], strides = [1, 1, 1]} : vector<12x16x8xf32> to vector<8x16x8xf32>
    %224 = vector.extract_strided_slice %3 {offsets = [4, 4, 0], sizes = [1, 1, 8], strides = [1, 1, 1]} : vector<5x5x8xf32> to vector<1x1x8xf32>
    %225 = vector.shape_cast %224 : vector<1x1x8xf32> to vector<8xf32>
    %226 = vector.shape_cast %225 : vector<8xf32> to vector<1x1x8xf32>
    %227 = vector.broadcast %226 : vector<1x1x8xf32> to vector<8x16x8xf32>
    %228 = arith.mulf %223, %227 : vector<8x16x8xf32>
    %229 = arith.addf %222, %228 : vector<8x16x8xf32>
    %230 = vector.shape_cast %4 : vector<1x8xf32> to vector<1x1x8xf32>
    %231 = vector.broadcast %230 : vector<1x1x8xf32> to vector<8x16x8xf32>
    %232 = arith.mulf %229, %231 : vector<8x16x8xf32>
    %233 = vector.shape_cast %5 : vector<1x8xf32> to vector<1x1x8xf32>
    %234 = vector.broadcast %233 : vector<1x1x8xf32> to vector<8x16x8xf32>
    %235 = arith.addf %232, %234 : vector<8x16x8xf32>
    %c0_41 = arith.constant 0 : index
    %c0_42 = arith.constant 0 : index
    %c0_43 = arith.constant 0 : index
    %c0_44 = arith.constant 0 : index
    %236 = vector.load %arg11[%c0_41, %c0_42, %c0_43, %c0_44] : memref<1x8x16x16xf32, #tpu.memory_space<vmem>>, vector<1x8x16x16xf32>
    %237 = vector.shape_cast %236 : vector<1x8x16x16xf32> to vector<8x16x16xf32>
    %238 = vector.extract_strided_slice %237 {offsets = [0, 0, 0], sizes = [8, 16, 8], strides = [1, 1, 1]} : vector<8x16x16xf32> to vector<8x16x8xf32>
    %239 = arith.addf %14, %238 : vector<8x16x8xf32>
    %240 = vector.extract_strided_slice %237 {offsets = [0, 0, 8], sizes = [8, 16, 8], strides = [1, 1, 1]} : vector<8x16x16xf32> to vector<8x16x8xf32>
    %241 = arith.addf %235, %240 : vector<8x16x8xf32>
    %c0_45 = arith.constant 0 : index
    %c0_46 = arith.constant 0 : index
    %c0_47 = arith.constant 0 : index
    %c0_48 = arith.constant 0 : index
    %242 = vector.load %arg12[%c0_45, %c0_46, %c0_47, %c0_48] : memref<1x8x16x16xf32, #tpu.memory_space<vmem>>, vector<1x8x16x8xf32>
    %243 = vector.shape_cast %242 : vector<1x8x16x8xf32> to vector<8x16x8xf32>
    %244 = vector.shape_cast %239 : vector<8x16x8xf32> to vector<1x8x16x8xf32>
    tpu.vector_store %arg12[%c0_45, %c0_46, %c0_47, %c0_48], %244 {strides = array<i32>} : memref<1x8x16x16xf32, #tpu.memory_space<vmem>>, vector<1x8x16x8xf32>,
    %c0_49 = arith.constant 0 : index
    %c0_50 = arith.constant 0 : index
    %c0_51 = arith.constant 0 : index
    %c8 = arith.constant 8 : index
    %245 = vector.load %arg12[%c0_49, %c0_50, %c0_51, %c8] : memref<1x8x16x16xf32, #tpu.memory_space<vmem>>, vector<1x8x16x8xf32>
    %246 = vector.shape_cast %245 : vector<1x8x16x8xf32> to vector<8x16x8xf32>
    %247 = vector.shape_cast %241 : vector<8x16x8xf32> to vector<1x8x16x8xf32>
    tpu.vector_store %arg12[%c0_49, %c0_50, %c0_51, %c8], %247 {strides = array<i32>} : memref<1x8x16x16xf32, #tpu.memory_space<vmem>>, vector<1x8x16x8xf32>,
    return
  }
  func.func @transform_0(%arg0: i32, %arg1: i32) -> (i32, i32, i32, i32) {
    %c4_i32 = arith.constant 4 : i32
    %0 = arith.muli %arg1, %c4_i32 : i32
    %c1_i32 = arith.constant 1 : i32
    %1 = arith.subi %0, %c1_i32 : i32
    %c0_i32 = arith.constant 0 : i32
    %2 = arith.maxsi %1, %c0_i32 : i32
    %c0_i32_0 = arith.constant 0 : i32
    %c0_i32_1 = arith.constant 0 : i32
    %c0_i32_2 = arith.constant 0 : i32
    return %arg0, %2, %c0_i32_0, %c0_i32_1 : i32, i32, i32, i32
  }
  func.func @transform_1(%arg0: i32, %arg1: i32) -> (i32, i32, i32, i32) {
    %c0_i32 = arith.constant 0 : i32
    %c0_i32_0 = arith.constant 0 : i32
    %c0_i32_1 = arith.constant 0 : i32
    return %arg0, %arg1, %c0_i32, %c0_i32_0 : i32, i32, i32, i32
  }
  func.func @transform_2(%arg0: i32, %arg1: i32) -> (i32, i32, i32, i32) {
    %c4_i32 = arith.constant 4 : i32
    %0 = arith.muli %arg1, %c4_i32 : i32
    %c4_i32_0 = arith.constant 4 : i32
    %1 = arith.addi %0, %c4_i32_0 : i32
    %c7_i32 = arith.constant 7 : i32
    %2 = arith.minsi %1, %c7_i32 : i32
    %c0_i32 = arith.constant 0 : i32
    %c0_i32_1 = arith.constant 0 : i32
    %c0_i32_2 = arith.constant 0 : i32
    return %arg0, %2, %c0_i32, %c0_i32_1 : i32, i32, i32, i32
  }
  func.func @transform_3(%arg0: i32, %arg1: i32) -> (i32, i32) {
    %c0_i32 = arith.constant 0 : i32
    %c0_i32_0 = arith.constant 0 : i32
    %c0_i32_1 = arith.constant 0 : i32
    return %c0_i32, %c0_i32_0 : i32, i32
  }
  func.func @transform_4(%arg0: i32, %arg1: i32) -> (i32, i32) {
    %c0_i32 = arith.constant 0 : i32
    %c0_i32_0 = arith.constant 0 : i32
    %c0_i32_1 = arith.constant 0 : i32
    return %c0_i32, %c0_i32_0 : i32, i32
  }
  func.func @transform_5(%arg0: i32, %arg1: i32) -> (i32, i32) {
    %c0_i32 = arith.constant 0 : i32
    %c0_i32_0 = arith.constant 0 : i32
    %c0_i32_1 = arith.constant 0 : i32
    return %c0_i32, %c0_i32_0 : i32, i32
  }
  func.func @transform_6(%arg0: i32, %arg1: i32) -> (i32, i32, i32) {
    %c0_i32 = arith.constant 0 : i32
    %c0_i32_0 = arith.constant 0 : i32
    %c0_i32_1 = arith.constant 0 : i32
    %c0_i32_2 = arith.constant 0 : i32
    return %c0_i32, %c0_i32_0, %c0_i32_1 : i32, i32, i32
  }
  func.func @transform_7(%arg0: i32, %arg1: i32) -> (i32, i32) {
    %c0_i32 = arith.constant 0 : i32
    %c0_i32_0 = arith.constant 0 : i32
    %c0_i32_1 = arith.constant 0 : i32
    return %c0_i32, %c0_i32_0 : i32, i32
  }
  func.func @transform_8(%arg0: i32, %arg1: i32) -> (i32, i32) {
    %c0_i32 = arith.constant 0 : i32
    %c0_i32_0 = arith.constant 0 : i32
    %c0_i32_1 = arith.constant 0 : i32
    return %c0_i32, %c0_i32_0 : i32, i32
  }
  func.func @transform_9(%arg0: i32, %arg1: i32) -> (i32, i32, i32, i32) {
    %c0_i32 = arith.constant 0 : i32
    %c0_i32_0 = arith.constant 0 : i32
    %c0_i32_1 = arith.constant 0 : i32
    return %arg0, %arg1, %c0_i32, %c0_i32_0 : i32, i32, i32, i32
  }
  func.func @transform_10(%arg0: i32, %arg1: i32) -> (i32, i32, i32, i32) {
    %c0_i32 = arith.constant 0 : i32
    %c0_i32_0 = arith.constant 0 : i32
    %c0_i32_1 = arith.constant 0 : i32
    return %arg0, %arg1, %c0_i32, %c0_i32_0 : i32, i32, i32, i32
  }
}

</mosaic_0001>

<llo_original>
// kernel: ghost_bottleneck_forward.2
$region0: #{ghost_bottleneck_forward.2}
  #allocation0 [shape = 'u32[]', space=smem, size = 0x4, offset = 0x4, fixed_abs, tag = 'smem constant byte address 0x4 - core index']
  #allocation1 [shape = 'u32[144,128]{1,0:T(1,128)}', space=vmem, size = 0x12000, scoped, tag = 'internal scratch']
  #allocation2 [shape = 'f32[12,20,4]{2,1,0:T(8,128)}', space=vmem, size = 0x24000, scoped, tag = 'scratch operand']
  %s0 = inlined_call_operand.vmem [shape: f32[2,16,16,16], index: 0, kind: input, shape index: {}, may-alias: {0,1,2}]
  %s1 = inlined_call_operand.vmem [shape: f32[2,16,16,16], index: 1, kind: input, shape index: {}, may-alias: {0,1,2}]
  %s2 = inlined_call_operand.vmem [shape: f32[2,16,16,16], index: 2, kind: input, shape index: {}, may-alias: {0,1,2}]
  %s3 = inlined_call_operand.vmem [shape: f32[16,4], index: 3, kind: input, shape index: {}]
  %s4 = inlined_call_operand.vmem [shape: f32[1,4], index: 4, kind: input, shape index: {}]
  %s5 = inlined_call_operand.vmem [shape: f32[1,4], index: 5, kind: input, shape index: {}]
  %s6 = inlined_call_operand.vmem [shape: f32[5,5,4], index: 6, kind: input, shape index: {}]
  %s7 = inlined_call_operand.vmem [shape: f32[1,4], index: 7, kind: input, shape index: {}]
  %s8 = inlined_call_operand.vmem [shape: f32[1,4], index: 8, kind: input, shape index: {}]
  %s9 = inlined_call_operand.vmem [shape: f32[2,16,16,8], index: 9, kind: output, shape index: {}]
  %s10 = sld [smem:[#allocation0]]
  $region69: #{ghost_bottleneck_forward.2} parent=0
    _
  %s12 = ssub.s32 1, %s10
  %s13 = scalar_select 0, %s12, %s10
  loop: start=0, step=1, limit=6
  $region2: #{ghost_bottleneck_forward.2} parent=0 // loop_pre_header
    _
  $region3: #{ghost_bottleneck_forward.2} parent=0 // loop_header
    %s15 = sphi 0, %s19
    %p16 = scmp.ge.s32.totalorder %s15, 6
    %s22 = sphi 0, %s34
    %s23 = sphi 0, %s30
    %s24 = sphi 0, %s22
    %s25 = sphi 0, %s23
    %s26 = sphi 0, %s24
    %s27 = sphi 0, %s25
    %s47 = sphi 0, %s49
    %s50 = sphi 0, %s47
    %s51 = sphi 0, %s50
    %s67 = sphi 0, %s51
    %s75 = sphi 0, %s77
    %s78 = sphi 0, %s75
    %s79 = sphi 0, %s78
    %s95 = sphi 0, %s79
    %s111 = sphi 0, %s113
    %s114 = sphi 0, %s111
    %s115 = sphi 0, %s114
    %s131 = sphi 0, %s115
    %s135 = sphi 0, %s135
    %s137 = sphi 0, %s135
    %s138 = sphi 0, %s137
    %s152 = sphi 0, %s138
    %s156 = sphi 0, %s156
    %s158 = sphi 0, %s156
    %s159 = sphi 0, %s158
    %s173 = sphi 0, %s159
    %s177 = sphi 0, %s177
    %s179 = sphi 0, %s177
    %s180 = sphi 0, %s179
    %s194 = sphi 0, %s180
    %s198 = sphi 0, %s198
    %s200 = sphi 0, %s198
    %s201 = sphi 0, %s200
    %s215 = sphi 0, %s201
    %s219 = sphi 0, %s219
    %s221 = sphi 0, %s219
    %s222 = sphi 0, %s221
    %s236 = sphi 0, %s222
    %s240 = sphi 0, %s240
    %s242 = sphi 0, %s240
    %s243 = sphi 0, %s242
    %s257 = sphi 0, %s243
    %s265 = sphi 0, %s267
    %s268 = sphi 0, %s265
    %s269 = sphi 0, %s268
    %s285 = sphi 0, %s269
  $region4: #{ghost_bottleneck_forward.2} parent=0 // loop_header_branch
    %18 = sbr.rel (%p16) target = $region8
  $region5: #{ghost_bottleneck_forward.2} parent=0 // loop_body
    %s20 = ssub.s32 %s15, 1
    %s21 = ssub.s32 %s15, 2
    %s28 = sadd.s32 1, %s23
    %p29 = scmp.ge.s32.totalorder %s28, 2
    %s30 = scalar_select %p29, 0, %s28
    %s31 = sadd.s32 1, %s22
    %s32 = scalar_select %p29, %s31, %s22
    %p33 = scmp.ge.s32.totalorder %s32, 2
    %s34 = scalar_select %p33, 0, %s32
    %s35 = smul.u32 %s23, 4
    %s36 = ssub.s32 %s35, 1
    %p37 = scmp.gt.s32.totalorder %s36, 0
    %s38 = scalar_select %p37, %s36, 0
    %s39 = smul.u32 %s30, 4
    %s40 = ssub.s32 %s39, 1
    %p41 = scmp.gt.s32.totalorder %s40, 0
    %s42 = scalar_select %p41, %s40, 0
    %s43 = ssub.s32 %s22, %s34
    %s44 = ssub.s32 %s38, %s42
    %s45 = sor.u32 %s43, %s44
    %p46 = scmp.eq.s32.totalorder %s45, 0
    %s48 = sadd.s32 %s47, 1
    %s49 = scalar_select %p46, %s47, %s48
    %p52 = pneg %p46
    %p53 = scmp.eq.s32.totalorder %s15, 3
    %p54 = por %p52, %p53
    %p55 = scmp.ne.s32.totalorder %s47, %s50
    %p56 = scmp.eq.s32.totalorder %s15, 0
    %p57 = por %p55, %p56
    %p58 = scmp.ne.s32.totalorder %s47, %s50
    %p59 = scmp.eq.s32.totalorder %s20, 3
    %p60 = por %p58, %p59
    %p61 = scmp.ne.s32.totalorder %s50, %s51
    %p62 = scmp.eq.s32.totalorder %s20, 0
    %p63 = por %p61, %p62
    %p64 = scmp.ne.s32.totalorder %s50, %s51
    %p65 = scmp.eq.s32.totalorder %s21, 3
    %p66 = por %p64, %p65
    %p68 = scmp.ne.s32.totalorder %s51, %s67
    %p69 = scmp.eq.s32.totalorder %s21, 0
    %p70 = por %p68, %p69
    %s71 = ssub.s32 %s22, %s34
    %s72 = ssub.s32 %s23, %s30
    %s73 = sor.u32 %s71, %s72
    %p74 = scmp.eq.s32.totalorder %s73, 0
    %s76 = sadd.s32 %s75, 1
    %s77 = scalar_select %p74, %s75, %s76
    %p80 = pneg %p74
    %p81 = scmp.eq.s32.totalorder %s15, 3
    %p82 = por %p80, %p81
    %p83 = scmp.ne.s32.totalorder %s75, %s78
    %p84 = scmp.eq.s32.totalorder %s15, 0
    %p85 = por %p83, %p84
    %p86 = scmp.ne.s32.totalorder %s75, %s78
    %p87 = scmp.eq.s32.totalorder %s20, 3
    %p88 = por %p86, %p87
    %p89 = scmp.ne.s32.totalorder %s78, %s79
    %p90 = scmp.eq.s32.totalorder %s20, 0
    %p91 = por %p89, %p90
    %p92 = scmp.ne.s32.totalorder %s78, %s79
    %p93 = scmp.eq.s32.totalorder %s21, 3
    %p94 = por %p92, %p93
    %p96 = scmp.ne.s32.totalorder %s79, %s95
    %p97 = scmp.eq.s32.totalorder %s21, 0
    %p98 = por %p96, %p97
    %s99 = smul.u32 %s23, 4
    %s100 = sadd.s32 %s99, 4
    %p101 = scmp.lt.s32.totalorder %s100, 7
    %s102 = scalar_select %p101, %s100, 7
    %s103 = smul.u32 %s30, 4
    %s104 = sadd.s32 %s103, 4
    %p105 = scmp.lt.s32.totalorder %s104, 7
    %s106 = scalar_select %p105, %s104, 7
    %s107 = ssub.s32 %s22, %s34
    %s108 = ssub.s32 %s102, %s106
    %s109 = sor.u32 %s107, %s108
    %p110 = scmp.eq.s32.totalorder %s109, 0
    %s112 = sadd.s32 %s111, 1
    %s113 = scalar_select %p110, %s111, %s112
    %p116 = pneg %p110
    %p117 = scmp.eq.s32.totalorder %s15, 3
    %p118 = por %p116, %p117
    %p119 = scmp.ne.s32.totalorder %s111, %s114
    %p120 = scmp.eq.s32.totalorder %s15, 0
    %p121 = por %p119, %p120
    %p122 = scmp.ne.s32.totalorder %s111, %s114
    %p123 = scmp.eq.s32.totalorder %s20, 3
    %p124 = por %p122, %p123
    %p125 = scmp.ne.s32.totalorder %s114, %s115
    %p126 = scmp.eq.s32.totalorder %s20, 0
    %p127 = por %p125, %p126
    %p128 = scmp.ne.s32.totalorder %s114, %s115
    %p129 = scmp.eq.s32.totalorder %s21, 3
    %p130 = por %p128, %p129
    %p132 = scmp.ne.s32.totalorder %s115, %s131
    %p133 = scmp.eq.s32.totalorder %s21, 0
    %p134 = por %p132, %p133
    %s136 = sadd.s32 %s135, 1
    %p139 = scmp.eq.s32.totalorder %s15, 3
    %p140 = scmp.ne.s32.totalorder %s135, %s137
    %p141 = scmp.eq.s32.totalorder %s15, 0
    %p142 = por %p140, %p141
    %p143 = scmp.ne.s32.totalorder %s135, %s137
    %p144 = scmp.eq.s32.totalorder %s20, 3
    %p145 = por %p143, %p144
    %p146 = scmp.ne.s32.totalorder %s137, %s138
    %p147 = scmp.eq.s32.totalorder %s20, 0
    %p148 = por %p146, %p147
    %p149 = scmp.ne.s32.totalorder %s137, %s138
    %p150 = scmp.eq.s32.totalorder %s21, 3
    %p151 = por %p149, %p150
    %p153 = scmp.ne.s32.totalorder %s138, %s152
    %p154 = scmp.eq.s32.totalorder %s21, 0
    %p155 = por %p153, %p154
    %s157 = sadd.s32 %s156, 1
    %p160 = scmp.eq.s32.totalorder %s15, 3
    %p161 = scmp.ne.s32.totalorder %s156, %s158
    %p162 = scmp.eq.s32.totalorder %s15, 0
    %p163 = por %p161, %p162
    %p164 = scmp.ne.s32.totalorder %s156, %s158
    %p165 = scmp.eq.s32.totalorder %s20, 3
    %p166 = por %p164, %p165
    %p167 = scmp.ne.s32.totalorder %s158, %s159
    %p168 = scmp.eq.s32.totalorder %s20, 0
    %p169 = por %p167, %p168
    %p170 = scmp.ne.s32.totalorder %s158, %s159
    %p171 = scmp.eq.s32.totalorder %s21, 3
    %p172 = por %p170, %p171
    %p174 = scmp.ne.s32.totalorder %s159, %s173
    %p175 = scmp.eq.s32.totalorder %s21, 0
    %p176 = por %p174, %p175
    %s178 = sadd.s32 %s177, 1
    %p181 = scmp.eq.s32.totalorder %s15, 3
    %p182 = scmp.ne.s32.totalorder %s177, %s179
    %p183 = scmp.eq.s32.totalorder %s15, 0
    %p184 = por %p182, %p183
    %p185 = scmp.ne.s32.totalorder %s177, %s179
    %p186 = scmp.eq.s32.totalorder %s20, 3
    %p187 = por %p185, %p186
    %p188 = scmp.ne.s32.totalorder %s179, %s180
    %p189 = scmp.eq.s32.totalorder %s20, 0
    %p190 = por %p188, %p189
    %p191 = scmp.ne.s32.totalorder %s179, %s180
    %p192 = scmp.eq.s32.totalorder %s21, 3
    %p193 = por %p191, %p192
    %p195 = scmp.ne.s32.totalorder %s180, %s194
    %p196 = scmp.eq.s32.totalorder %s21, 0
    %p197 = por %p195, %p196
    %s199 = sadd.s32 %s198, 1
    %p202 = scmp.eq.s32.totalorder %s15, 3
    %p203 = scmp.ne.s32.totalorder %s198, %s200
    %p204 = scmp.eq.s32.totalorder %s15, 0
    %p205 = por %p203, %p204
    %p206 = scmp.ne.s32.totalorder %s198, %s200
    %p207 = scmp.eq.s32.totalorder %s20, 3
    %p208 = por %p206, %p207
    %p209 = scmp.ne.s32.totalorder %s200, %s201
    %p210 = scmp.eq.s32.totalorder %s20, 0
    %p211 = por %p209, %p210
    %p212 = scmp.ne.s32.totalorder %s200, %s201
    %p213 = scmp.eq.s32.totalorder %s21, 3
    %p214 = por %p212, %p213
    %p216 = scmp.ne.s32.totalorder %s201, %s215
    %p217 = scmp.eq.s32.totalorder %s21, 0
    %p218 = por %p216, %p217
    %s220 = sadd.s32 %s219, 1
    %p223 = scmp.eq.s32.totalorder %s15, 3
    %p224 = scmp.ne.s32.totalorder %s219, %s221
    %p225 = scmp.eq.s32.totalorder %s15, 0
    %p226 = por %p224, %p225
    %p227 = scmp.ne.s32.totalorder %s219, %s221
    %p228 = scmp.eq.s32.totalorder %s20, 3
    %p229 = por %p227, %p228
    %p230 = scmp.ne.s32.totalorder %s221, %s222
    %p231 = scmp.eq.s32.totalorder %s20, 0
    %p232 = por %p230, %p231
    %p233 = scmp.ne.s32.totalorder %s221, %s222
    %p234 = scmp.eq.s32.totalorder %s21, 3
    %p235 = por %p233, %p234
    %p237 = scmp.ne.s32.totalorder %s222, %s236
    %p238 = scmp.eq.s32.totalorder %s21, 0
    %p239 = por %p237, %p238
    %s241 = sadd.s32 %s240, 1
    %p244 = scmp.eq.s32.totalorder %s15, 3
    %p245 = scmp.ne.s32.totalorder %s240, %s242
    %p246 = scmp.eq.s32.totalorder %s15, 0
    %p247 = por %p245, %p246
    %p248 = scmp.ne.s32.totalorder %s240, %s242
    %p249 = scmp.eq.s32.totalorder %s20, 3
    %p250 = por %p248, %p249
    %p251 = scmp.ne.s32.totalorder %s242, %s243
    %p252 = scmp.eq.s32.totalorder %s20, 0
    %p253 = por %p251, %p252
    %p254 = scmp.ne.s32.totalorder %s242, %s243
    %p255 = scmp.eq.s32.totalorder %s21, 3
    %p256 = por %p254, %p255
    %p258 = scmp.ne.s32.totalorder %s243, %s257
    %p259 = scmp.eq.s32.totalorder %s21, 0
    %p260 = por %p258, %p259
    %s261 = ssub.s32 %s22, %s34
    %s262 = ssub.s32 %s23, %s30
    %s263 = sor.u32 %s261, %s262
    %p264 = scmp.eq.s32.totalorder %s263, 0
    %s266 = sadd.s32 %s265, 1
    %s267 = scalar_select %p264, %s265, %s266
    %p270 = pneg %p264
    %p271 = scmp.eq.s32.totalorder %s15, 3
    %p272 = por %p270, %p271
    %p273 = scmp.ne.s32.totalorder %s265, %s268
    %p274 = scmp.eq.s32.totalorder %s15, 0
    %p275 = por %p273, %p274
    %p276 = scmp.ne.s32.totalorder %s265, %s268
    %p277 = scmp.eq.s32.totalorder %s20, 3
    %p278 = por %p276, %p277
    %p279 = scmp.ne.s32.totalorder %s268, %s269
    %p280 = scmp.eq.s32.totalorder %s20, 0
    %p281 = por %p279, %p280
    %p282 = scmp.ne.s32.totalorder %s268, %s269
    %p283 = scmp.eq.s32.totalorder %s21, 3
    %p284 = por %p282, %p283
    %p286 = scmp.ne.s32.totalorder %s269, %s285
    %p287 = scmp.eq.s32.totalorder %s21, 0
    %p288 = por %p286, %p287
    %p289 = scmp.le.s32.totalorder 1, %s15
    %p290 = scmp.lt.s32.totalorder %s15, 5
    %p291 = pnand %p289, %p290
    %p292 = pneg %p291
    // Predicated region
    $region9: #{ghost_bottleneck_forward.2} parent=5 // pred_check
      _
    $region10: #{ghost_bottleneck_forward.2} parent=5 // pred_check_branch
      %294 = sbr.rel (%p291) target = $region12
    $region11: #{ghost_bottleneck_forward.2} parent=5 // pred_region
      %s295 = ssub.s32 %s15, 1
      // Predicated region
      $region13: #{ghost_bottleneck_forward.2} parent=11 // pred_check
        %p296 = pneg %p148
      $region14: #{ghost_bottleneck_forward.2} parent=11 // pred_check_branch
        %298 = sbr.rel (%p296) target = $region16
      $region15: #{ghost_bottleneck_forward.2} parent=11 // pred_region
        _
      $region16: #{ghost_bottleneck_forward.2} parent=11 // pred_fallthru
        _
      // Predicated region
      $region17: #{ghost_bottleneck_forward.2} parent=11 // pred_check
        %p299 = pneg %p169
      $region18: #{ghost_bottleneck_forward.2} parent=11 // pred_check_branch
        %301 = sbr.rel (%p299) target = $region20
      $region19: #{ghost_bottleneck_forward.2} parent=11 // pred_region
        _
      $region20: #{ghost_bottleneck_forward.2} parent=11 // pred_fallthru
        _
      // Predicated region
      $region21: #{ghost_bottleneck_forward.2} parent=11 // pred_check
        %p302 = pneg %p190
      $region22: #{ghost_bottleneck_forward.2} parent=11 // pred_check_branch
        %304 = sbr.rel (%p302) target = $region24
      $region23: #{ghost_bottleneck_forward.2} parent=11 // pred_region
        _
      $region24: #{ghost_bottleneck_forward.2} parent=11 // pred_fallthru
        _
      // Predicated region
      $region25: #{ghost_bottleneck_forward.2} parent=11 // pred_check
        %p305 = pneg %p211
      $region26: #{ghost_bottleneck_forward.2} parent=11 // pred_check_branch
        %307 = sbr.rel (%p305) target = $region28
      $region27: #{ghost_bottleneck_forward.2} parent=11 // pred_region
        _
      $region28: #{ghost_bottleneck_forward.2} parent=11 // pred_fallthru
        _
      // Predicated region
      $region29: #{ghost_bottleneck_forward.2} parent=11 // pred_check
        %p308 = pneg %p232
      $region30: #{ghost_bottleneck_forward.2} parent=11 // pred_check_branch
        %310 = sbr.rel (%p308) target = $region32
      $region31: #{ghost_bottleneck_forward.2} parent=11 // pred_region
        _
      $region32: #{ghost_bottleneck_forward.2} parent=11 // pred_fallthru
        _
      // Predicated region
      $region33: #{ghost_bottleneck_forward.2} parent=11 // pred_check
        %p311 = pneg %p253
      $region34: #{ghost_bottleneck_forward.2} parent=11 // pred_check_branch
        %313 = sbr.rel (%p311) target = $region36
      $region35: #{ghost_bottleneck_forward.2} parent=11 // pred_region
        _
      $region36: #{ghost_bottleneck_forward.2} parent=11 // pred_fallthru
        _
    $region12: #{ghost_bottleneck_forward.2} parent=5 // pred_fallthru
      _
    %p314 = scmp.lt.s32.totalorder %s15, 4
    // Predicated region
    $region37: #{ghost_bottleneck_forward.2} parent=5 // pred_check
      %p315 = pneg %p314
    $region38: #{ghost_bottleneck_forward.2} parent=5 // pred_check_branch
      %317 = sbr.rel (%p315) target = $region40
    $region39: #{ghost_bottleneck_forward.2} parent=5 // pred_region
      // Predicated region
      $region41: #{ghost_bottleneck_forward.2} parent=39 // pred_check
        %p318 = pneg %p57
      $region42: #{ghost_bottleneck_forward.2} parent=39 // pred_check_branch
        %320 = sbr.rel (%p318) target = $region44
      $region43: #{ghost_bottleneck_forward.2} parent=39 // pred_region
        %s321 = smul.u32 %s23, 4
        %s322 = ssub.s32 %s321, 1
        %p323 = scmp.gt.s32.totalorder %s322, 0
        %s324 = scalar_select %p323, %s322, 0
        %s325 = smul.u32 2, %s324
        %p326 = scmp.lt.s32.totalorder %s22, 1
        %s327 = scalar_select %p326, %s22, 1
        %p328 = scmp.lt.s32.totalorder %s325, 15
        %s329 = scalar_select %p328, %s325, 15
        %s330 = smul.addr %s329, 2
        %s331 = smul.addr %s327, 32
        %s332 = sadd.s32 %s330, %s331
        %s333 = smul.addr %s332, 8
        %s334 = scalar_lea.vmem %s0, %s333
        %s335 = smul.u32 %s23, 4
        %s336 = ssub.s32 %s335, 1
        %p337 = scmp.gt.s32.totalorder %s336, 0
        %s338 = scalar_select %p337, %s336, 0
        %s339 = smul.u32 2, %s338
      $region44: #{ghost_bottleneck_forward.2} parent=39 // pred_fallthru
        _
      // Predicated region
      $region45: #{ghost_bottleneck_forward.2} parent=39 // pred_check
        %p340 = pneg %p85
      $region46: #{ghost_bottleneck_forward.2} parent=39 // pred_check_branch
        %342 = sbr.rel (%p340) target = $region48
      $region47: #{ghost_bottleneck_forward.2} parent=39 // pred_region
        %s343 = smul.u32 8, %s23
        %p344 = scmp.lt.s32.totalorder %s22, 1
        %s345 = scalar_select %p344, %s22, 1
        %p346 = scmp.lt.s32.totalorder %s343, 15
        %s347 = scalar_select %p346, %s343, 15
        %s348 = smul.addr %s347, 2
        %s349 = smul.addr %s345, 32
        %s350 = sadd.s32 %s348, %s349
        %s351 = smul.addr %s350, 8
        %s352 = scalar_lea.vmem %s1, %s351
        %s353 = smul.u32 8, %s23
      $region48: #{ghost_bottleneck_forward.2} parent=39 // pred_fallthru
        _
      // Predicated region
      $region49: #{ghost_bottleneck_forward.2} parent=39 // pred_check
        %p354 = pneg %p121
      $region50: #{ghost_bottleneck_forward.2} parent=39 // pred_check_branch
        %356 = sbr.rel (%p354) target = $region52
      $region51: #{ghost_bottleneck_forward.2} parent=39 // pred_region
        %s357 = smul.u32 %s23, 4
        %s358 = sadd.s32 %s357, 4
        %p359 = scmp.lt.s32.totalorder %s358, 7
        %s360 = scalar_select %p359, %s358, 7
        %s361 = smul.u32 2, %s360
        %p362 = scmp.lt.s32.totalorder %s22, 1
        %s363 = scalar_select %p362, %s22, 1
        %p364 = scmp.lt.s32.totalorder %s361, 15
        %s365 = scalar_select %p364, %s361, 15
        %s366 = smul.addr %s365, 2
        %s367 = smul.addr %s363, 32
        %s368 = sadd.s32 %s366, %s367
        %s369 = smul.addr %s368, 8
        %s370 = scalar_lea.vmem %s2, %s369
        %s371 = smul.u32 %s23, 4
        %s372 = sadd.s32 %s371, 4
        %p373 = scmp.lt.s32.totalorder %s372, 7
        %s374 = scalar_select %p373, %s372, 7
        %s375 = smul.u32 2, %s374
      $region52: #{ghost_bottleneck_forward.2} parent=39 // pred_fallthru
        _
    $region40: #{ghost_bottleneck_forward.2} parent=5 // pred_fallthru
      _
    %p376 = scmp.le.s32.totalorder 1, %s15
    %p377 = scmp.lt.s32.totalorder %s15, 5
    %p378 = pnand %p376, %p377
    %p379 = pneg %p378
    // Predicated region
    $region53: #{ghost_bottleneck_forward.2} parent=5 // pred_check
      _
    $region54: #{ghost_bottleneck_forward.2} parent=5 // pred_check_branch
      %381 = sbr.rel (%p378) target = $region56
    $region55: #{ghost_bottleneck_forward.2} parent=5 // pred_region
      %s382 = ssub.s32 %s15, 1
      %s383 = smul.u32 %s25, 4
      %s384 = ssub.s32 %s383, 1
      %p385 = scmp.gt.s32.totalorder %s384, 0
      %s386 = scalar_select %p385, %s384, 0
      %s387 = smul.u32 2, %s386
      %p388 = scmp.lt.s32.totalorder %s24, 1
      %s389 = scalar_select %p388, %s24, 1
      %p390 = scmp.lt.s32.totalorder %s387, 15
      %s391 = scalar_select %p390, %s387, 15
      %s392 = smul.addr %s391, 2
      %s393 = smul.addr %s389, 32
      %s394 = sadd.s32 %s392, %s393
      %s395 = smul.addr %s394, 8
      %s396 = scalar_lea.vmem %s0, %s395
      %p397 = pneg %p63
      %p398 = pneg %p60
      %s399 = smul.u32 8, %s25
      %p400 = scmp.lt.s32.totalorder %s24, 1
      %s401 = scalar_select %p400, %s24, 1
      %p402 = scmp.lt.s32.totalorder %s399, 15
      %s403 = scalar_select %p402, %s399, 15
      %s404 = smul.addr %s403, 2
      %s405 = smul.addr %s401, 32
      %s406 = sadd.s32 %s404, %s405
      %s407 = smul.addr %s406, 8
      %s408 = scalar_lea.vmem %s1, %s407
      %p409 = pneg %p91
      %p410 = pneg %p88
      %s411 = smul.u32 %s25, 4
      %s412 = sadd.s32 %s411, 4
      %p413 = scmp.lt.s32.totalorder %s412, 7
      %s414 = scalar_select %p413, %s412, 7
      %s415 = smul.u32 2, %s414
      %p416 = scmp.lt.s32.totalorder %s24, 1
      %s417 = scalar_select %p416, %s24, 1
      %p418 = scmp.lt.s32.totalorder %s415, 15
      %s419 = scalar_select %p418, %s415, 15
      %s420 = smul.addr %s419, 2
      %s421 = smul.addr %s417, 32
      %s422 = sadd.s32 %s420, %s421
      %s423 = smul.addr %s422, 8
      %s424 = scalar_lea.vmem %s2, %s423
      %p425 = pneg %p127
      %p426 = pneg %p124
      %p427 = pneg %p148
      %p428 = pneg %p145
      %p429 = pneg %p169
      %p430 = pneg %p166
      %p431 = pneg %p190
      %p432 = pneg %p187
      %p433 = pneg %p211
      %p434 = pneg %p208
      %p435 = pneg %p232
      %p436 = pneg %p229
      %p437 = pneg %p253
      %p438 = pneg %p250
      %p439 = pneg %p281
      %p440 = pneg %p278
      %s441 = smul.u32 8, %s25
      %p442 = scmp.lt.s32.totalorder %s24, 1
      %s443 = scalar_select %p442, %s24, 1
      %p444 = scmp.lt.s32.totalorder %s441, 15
      %s445 = scalar_select %p444, %s441, 15
      %s446 = smul.addr %s445, 2
      %s447 = smul.addr %s443, 32
      %s448 = sadd.s32 %s446, %s447
      %s449 = smul.addr %s448, 8
      %s450 = scalar_lea.vmem %s9, %s449
      %s451 = smul.u32 %s25, 4
      %s452 = ssub.s32 %s451, 1
      %p453 = scmp.gt.s32.totalorder %s452, 0
      %s454 = scalar_select %p453, %s452, 0
      %s455 = smul.u32 2, %s454
      %p456 = scmp.lt.s32.totalorder %s24, 1
      %s457 = scalar_select %p456, %s24, 1
      %p458 = scmp.lt.s32.totalorder %s455, 15
      %s459 = scalar_select %p458, %s455, 15
      %s460 = smul.addr %s459, 2
      %s461 = smul.addr %s457, 32
      %s462 = sadd.s32 %s460, %s461
      %s463 = smul.addr %s462, 8
      %s464 = scalar_lea.vmem %s0, %s463
      %s465 = smul.u32 %s25, 4
      %s466 = ssub.s32 %s465, 1
      %p467 = scmp.gt.s32.totalorder %s466, 0
      %s468 = scalar_select %p467, %s466, 0
      %s469 = smul.u32 2, %s468
      %s470 = smul.u32 8, %s25
      %p471 = scmp.lt.s32.totalorder %s24, 1
      %s472 = scalar_select %p471, %s24, 1
      %p473 = scmp.lt.s32.totalorder %s470, 15
      %s474 = scalar_select %p473, %s470, 15
      %s475 = smul.addr %s474, 2
      %s476 = smul.addr %s472, 32
      %s477 = sadd.s32 %s475, %s476
      %s478 = smul.addr %s477, 8
      %s479 = scalar_lea.vmem %s1, %s478
      %s480 = smul.u32 8, %s25
      %s481 = smul.u32 %s25, 4
      %s482 = sadd.s32 %s481, 4
      %p483 = scmp.lt.s32.totalorder %s482, 7
      %s484 = scalar_select %p483, %s482, 7
      %s485 = smul.u32 2, %s484
      %p486 = scmp.lt.s32.totalorder %s24, 1
      %s487 = scalar_select %p486, %s24, 1
      %p488 = scmp.lt.s32.totalorder %s485, 15
      %s489 = scalar_select %p488, %s485, 15
      %s490 = smul.addr %s489, 2
      %s491 = smul.addr %s487, 32
      %s492 = sadd.s32 %s490, %s491
      %s493 = smul.addr %s492, 8
      %s494 = scalar_lea.vmem %s2, %s493
      %s495 = smul.u32 %s25, 4
      %s496 = sadd.s32 %s495, 4
      %p497 = scmp.lt.s32.totalorder %s496, 7
      %s498 = scalar_select %p497, %s496, 7
      %s499 = smul.u32 2, %s498
      %s500 = smul.u32 8, %s25
      %p501 = scmp.lt.s32.totalorder %s24, 1
      %s502 = scalar_select %p501, %s24, 1
      %p503 = scmp.lt.s32.totalorder %s500, 15
      %s504 = scalar_select %p503, %s500, 15
      %s505 = smul.addr %s504, 2
      %s506 = smul.addr %s502, 32
      %s507 = sadd.s32 %s505, %s506
      %s508 = smul.addr %s507, 8
      %s509 = scalar_lea.vmem %s9, %s508
      %s510 = smul.u32 8, %s25
      %v511 = vld [vmem:[%s3] sm:$0xff]
      %v512 = vld [vmem:[%s3 + $0x8] sm:$0xff]
      %v513 = vld [vmem:[%s4] sm:$0x1]
      %v514 = vld [vmem:[%s5] sm:$0x1]
      %v515 = vld [vmem:[%s6] sm:$0x1f]
      %v516 = vld [vmem:[%s6 + $0x8] sm:$0x1f]
      %v517 = vld [vmem:[%s6 + $0x10] sm:$0x1f]
      %v518 = vld [vmem:[%s6 + $0x18] sm:$0x1f]
      %v519 = vld [vmem:[%s6 + $0x20] sm:$0x1f]
      %v520 = vld [vmem:[%s7] sm:$0x1]
      %v521 = vld [vmem:[%s8] sm:$0x1]
      %v522 = vld [vmem:[%s479] sm:$0xff]
      %v523 = vld [vmem:[%s479 + $0x8] sm:$0xff]
      %v524 = vld [vmem:[%s479 + $0x10] sm:$0xff]
      %v525 = vld [vmem:[%s479 + $0x18] sm:$0xff]
      %v526 = vld [vmem:[%s479 + $0x20] sm:$0xff]
      %v527 = vld [vmem:[%s479 + $0x28] sm:$0xff]
      %v528 = vld [vmem:[%s479 + $0x30] sm:$0xff]
      %v529 = vld [vmem:[%s479 + $0x38] sm:$0xff]
      %v530 = vld [vmem:[%s479 + $0x40] sm:$0xff]
      %v531 = vld [vmem:[%s479 + $0x48] sm:$0xff]
      %v532 = vld [vmem:[%s479 + $0x50] sm:$0xff]
      %v533 = vld [vmem:[%s479 + $0x58] sm:$0xff]
      %v534 = vld [vmem:[%s479 + $0x60] sm:$0xff]
      %v535 = vld [vmem:[%s479 + $0x68] sm:$0xff]
      %v536 = vld [vmem:[%s479 + $0x70] sm:$0xff]
      %v537 = vld [vmem:[%s479 + $0x78] sm:$0xff]
      %vm538 = vcmask 130048
      %v540 = vsel %vm538, %v522, 0
      %v543 = vsel %vm538, %v523, 0
      %v546 = vsel %vm538, %v524, 0
      %v549 = vsel %vm538, %v525, 0
      %v552 = vsel %vm538, %v526, 0
      %v555 = vsel %vm538, %v527, 0
      %v558 = vsel %vm538, %v528, 0
      %v561 = vsel %vm538, %v529, 0
      %v564 = vsel %vm538, %v530, 0
      %v567 = vsel %vm538, %v531, 0
      %v570 = vsel %vm538, %v532, 0
      %v573 = vsel %vm538, %v533, 0
      %v576 = vsel %vm538, %v534, 0
      %v579 = vsel %vm538, %v535, 0
      %v582 = vsel %vm538, %v536, 0
      %v585 = vsel %vm538, %v537, 0
      %587 = vmatprep.subr.mxu0 0.0
      %588 = vmatpush1.msra.mxu0 %v511
      %589 = vmatprep.subr.mxu0 0.0
      %590 = vmatpush1.msra.mxu0 %v512
      %591 = vmatprep.subr.mxu0 0.0
      %592 = vmatpush1.msra.mxu0 0.0
      %593 = vmatprep.subr.mxu0 0.0
      %594 = vmatpush1.msra.mxu0 0.0
      %595 = vmatprep.subr.mxu0 0.0
      %596 = vmatpush1.msra.mxu0 0.0
      %597 = vmatprep.subr.mxu0 0.0
      %598 = vmatpush1.msra.mxu0 0.0
      %599 = vmatprep.subr.mxu0 0.0
      %600 = vmatpush1.msra.mxu0 0.0
      %601 = vmatprep.subr.mxu0 0.0
      %602 = vmatpush1.msra.mxu0 0.0
      %603 = vmatprep.subr.mxu0 0.0
      %604 = vmatpush1.msra.mxu0 0.0
      %605 = vmatprep.subr.mxu0 0.0
      %606 = vmatpush1.msra.mxu0 0.0
      %607 = vmatprep.subr.mxu0 0.0
      %608 = vmatpush1.msra.mxu0 0.0
      %609 = vmatprep.subr.mxu0 0.0
      %610 = vmatpush1.msra.mxu0 0.0
      %611 = vmatprep.subr.mxu0 0.0
      %612 = vmatpush1.msra.mxu0 0.0
      %613 = vmatprep.subr.mxu0 0.0
      %614 = vmatpush1.msra.mxu0 0.0
      %615 = vmatprep.subr.mxu0 0.0
      %616 = vmatpush1.msra.mxu0 0.0
      %617 = vmatprep.subr.mxu0 0.0
      %618 = vmatpush1.msra.mxu0 0.0
      %619 = vmatprep.subr.mxu0 0.0
      %620 = vmatpush1.msra.mxu0 0.0
      %621 = vmatprep.subr.mxu0 0.0
      %622 = vmatpush1.msra.mxu0 0.0
      %623 = vmatprep.subr.mxu0 0.0
      %624 = vmatpush1.msra.mxu0 0.0
      %625 = vmatprep.subr.mxu0 0.0
      %626 = vmatpush1.msra.mxu0 0.0
      %627 = vmatprep.subr.mxu0 0.0
      %628 = vmatpush1.msra.mxu0 0.0
      %629 = vmatprep.subr.mxu0 0.0
      %630 = vmatpush1.msra.mxu0 0.0
      %631 = vmatprep.subr.mxu0 0.0
      %632 = vmatpush1.msra.mxu0 0.0
      %633 = vmatprep.subr.mxu0 0.0
      %634 = vmatpush1.msra.mxu0 0.0
      %635 = vmatprep.subr.mxu0 0.0
      %636 = vmatpush1.msra.mxu0 0.0
      %637 = vmatprep.subr.mxu0 0.0
      %638 = vmatpush1.msra.mxu0 0.0
      %639 = vmatprep.subr.mxu0 0.0
      %640 = vmatpush1.msra.mxu0 0.0
      %641 = vmatprep.subr.mxu0 0.0
      %642 = vmatpush1.msra.mxu0 0.0
      %643 = vmatprep.subr.mxu0 0.0
      %644 = vmatpush1.msra.mxu0 0.0
      %645 = vmatprep.subr.mxu0 0.0
      %646 = vmatpush1.msra.mxu0 0.0
      %647 = vmatprep.subr.mxu0 0.0
      %648 = vmatpush1.msra.mxu0 0.0
      %649 = vmatprep.subr.mxu0 0.0
      %650 = vmatpush1.msra.mxu0 0.0
      %651 = vmatprep.mubr.f32.mxu0 0.0
      %652 = vmatmul.mubr.f32.gmra.mrb[0].mxu0 %v540
      %v653 = vpop.f32.mrb[0].mxu0
      %v654 = vadd.f32 0.0, %v653
      %v655 = vpop.f32.mrb[0].mxu0
      %656 = vmatprep.mubr.f32.mxu0 0.0
      %657 = vmatmul.mubr.f32.gmra.mrb[0].mxu0 %v543
      %v658 = vpop.f32.mrb[0].mxu0
      %v659 = vadd.f32 0.0, %v658
      %v660 = vpop.f32.mrb[0].mxu0
      %661 = vmatprep.mubr.f32.mxu0 0.0
      %662 = vmatmul.mubr.f32.gmra.mrb[0].mxu0 %v546
      %v663 = vpop.f32.mrb[0].mxu0
      %v664 = vadd.f32 0.0, %v663
      %v665 = vpop.f32.mrb[0].mxu0
      %666 = vmatprep.mubr.f32.mxu0 0.0
      %667 = vmatmul.mubr.f32.gmra.mrb[0].mxu0 %v549
      %v668 = vpop.f32.mrb[0].mxu0
      %v669 = vadd.f32 0.0, %v668
      %v670 = vpop.f32.mrb[0].mxu0
      %671 = vmatprep.mubr.f32.mxu0 0.0
      %672 = vmatmul.mubr.f32.gmra.mrb[0].mxu0 %v552
      %v673 = vpop.f32.mrb[0].mxu0
      %v674 = vadd.f32 0.0, %v673
      %v675 = vpop.f32.mrb[0].mxu0
      %676 = vmatprep.mubr.f32.mxu0 0.0
      %677 = vmatmul.mubr.f32.gmra.mrb[0].mxu0 %v555
      %v678 = vpop.f32.mrb[0].mxu0
      %v679 = vadd.f32 0.0, %v678
      %v680 = vpop.f32.mrb[0].mxu0
      %681 = vmatprep.mubr.f32.mxu0 0.0
      %682 = vmatmul.mubr.f32.gmra.mrb[0].mxu0 %v558
      %v683 = vpop.f32.mrb[0].mxu0
      %v684 = vadd.f32 0.0, %v683
      %v685 = vpop.f32.mrb[0].mxu0
      %686 = vmatprep.mubr.f32.mxu0 0.0
      %687 = vmatmul.mubr.f32.gmra.mrb[0].mxu0 %v561
      %v688 = vpop.f32.mrb[0].mxu0
      %v689 = vadd.f32 0.0, %v688
      %v690 = vpop.f32.mrb[0].mxu0
      %691 = vmatprep.mubr.f32.mxu0 0.0
      %692 = vmatmul.mubr.f32.gmra.mrb[0].mxu0 %v564
      %v693 = vpop.f32.mrb[0].mxu0
      %v694 = vadd.f32 0.0, %v693
      %v695 = vpop.f32.mrb[0].mxu0
      %696 = vmatprep.mubr.f32.mxu0 0.0
      %697 = vmatmul.mubr.f32.gmra.mrb[0].mxu0 %v567
      %v698 = vpop.f32.mrb[0].mxu0
      %v699 = vadd.f32 0.0, %v698
      %v700 = vpop.f32.mrb[0].mxu0
      %701 = vmatprep.mubr.f32.mxu0 0.0
      %702 = vmatmul.mubr.f32.gmra.mrb[0].mxu0 %v570
      %v703 = vpop.f32.mrb[0].mxu0
      %v704 = vadd.f32 0.0, %v703
      %v705 = vpop.f32.mrb[0].mxu0
      %706 = vmatprep.mubr.f32.mxu0 0.0
      %707 = vmatmul.mubr.f32.gmra.mrb[0].mxu0 %v573
      %v708 = vpop.f32.mrb[0].mxu0
      %v709 = vadd.f32 0.0, %v708
      %v710 = vpop.f32.mrb[0].mxu0
      %711 = vmatprep.mubr.f32.mxu0 0.0
      %712 = vmatmul.mubr.f32.gmra.mrb[0].mxu0 %v576
      %v713 = vpop.f32.mrb[0].mxu0
      %v714 = vadd.f32 0.0, %v713
      %v715 = vpop.f32.mrb[0].mxu0
      %716 = vmatprep.mubr.f32.mxu0 0.0
      %717 = vmatmul.mubr.f32.gmra.mrb[0].mxu0 %v579
      %v718 = vpop.f32.mrb[0].mxu0
      %v719 = vadd.f32 0.0, %v718
      %v720 = vpop.f32.mrb[0].mxu0
      %721 = vmatprep.mubr.f32.mxu0 0.0
      %722 = vmatmul.mubr.f32.gmra.mrb[0].mxu0 %v582
      %v723 = vpop.f32.mrb[0].mxu0
      %v724 = vadd.f32 0.0, %v723
      %v725 = vpop.f32.mrb[0].mxu0
      %726 = vmatprep.mubr.f32.mxu0 0.0
      %727 = vmatmul.mubr.f32.gmra.mrb[0].mxu0 %v585
      %v728 = vpop.f32.mrb[0].mxu0
      %v729 = vadd.f32 0.0, %v728
      %v730 = vpop.f32.mrb[0].mxu0
      %731 = vdwg.mxu0
      %v733 = vlaneseq
      %v734 = vshrl.u32 %v733, 7
      %v735 = vsub.s32 0, %v734
      %v736 = vrot.slane %v513, %v735
      %v738 = vmul.f32 %v654, %v736
      %v739 = vmul.f32 %v659, %v736
      %v740 = vmul.f32 %v664, %v736
      %v741 = vmul.f32 %v669, %v736
      %v742 = vmul.f32 %v674, %v736
      %v743 = vmul.f32 %v679, %v736
      %v744 = vmul.f32 %v684, %v736
      %v745 = vmul.f32 %v689, %v736
      %v746 = vmul.f32 %v694, %v736
      %v747 = vmul.f32 %v699, %v736
      %v748 = vmul.f32 %v704, %v736
      %v749 = vmul.f32 %v709, %v736
      %v750 = vmul.f32 %v714, %v736
      %v751 = vmul.f32 %v719, %v736
      %v752 = vmul.f32 %v724, %v736
      %v753 = vmul.f32 %v729, %v736
      %v755 = vlaneseq
      %v756 = vshrl.u32 %v755, 7
      %v757 = vsub.s32 0, %v756
      %v758 = vrot.slane %v514, %v757
      %v760 = vadd.f32 %v738, %v758
      %v761 = vadd.f32 %v739, %v758
      %v762 = vadd.f32 %v740, %v758
      %v763 = vadd.f32 %v741, %v758
      %v764 = vadd.f32 %v742, %v758
      %v765 = vadd.f32 %v743, %v758
      %v766 = vadd.f32 %v744, %v758
      %v767 = vadd.f32 %v745, %v758
      %v768 = vadd.f32 %v746, %v758
      %v769 = vadd.f32 %v747, %v758
      %v770 = vadd.f32 %v748, %v758
      %v771 = vadd.f32 %v749, %v758
      %v772 = vadd.f32 %v750, %v758
      %v773 = vadd.f32 %v751, %v758
      %v774 = vadd.f32 %v752, %v758
      %v775 = vadd.f32 %v753, %v758
      %v776 = vxor.u32 %v760, 2147483648
      %v777 = vxor.u32 %v761, 2147483648
      %v778 = vxor.u32 %v762, 2147483648
      %v779 = vxor.u32 %v763, 2147483648
      %v780 = vxor.u32 %v764, 2147483648
      %v781 = vxor.u32 %v765, 2147483648
      %v782 = vxor.u32 %v766, 2147483648
      %v783 = vxor.u32 %v767, 2147483648
      %v784 = vxor.u32 %v768, 2147483648
      %v785 = vxor.u32 %v769, 2147483648
      %v786 = vxor.u32 %v770, 2147483648
      %v787 = vxor.u32 %v771, 2147483648
      %v788 = vxor.u32 %v772, 2147483648
      %v789 = vxor.u32 %v773, 2147483648
      %v790 = vxor.u32 %v774, 2147483648
      %v791 = vxor.u32 %v775, 2147483648
      %v792 = vmul.f32 %v776, 1.442695
      %v793 = vpow.pop %v792
      %v794 = vmul.f32 %v777, 1.442695
      %v795 = vpow.pop %v794
      %v796 = vmul.f32 %v778, 1.442695
      %v797 = vpow.pop %v796
      %v798 = vmul.f32 %v779, 1.442695
      %v799 = vpow.pop %v798
      %v800 = vmul.f32 %v780, 1.442695
      %v801 = vpow.pop %v800
      %v802 = vmul.f32 %v781, 1.442695
      %v803 = vpow.pop %v802
      %v804 = vmul.f32 %v782, 1.442695
      %v805 = vpow.pop %v804
      %v806 = vmul.f32 %v783, 1.442695
      %v807 = vpow.pop %v806
      %v808 = vmul.f32 %v784, 1.442695
      %v809 = vpow.pop %v808
      %v810 = vmul.f32 %v785, 1.442695
      %v811 = vpow.pop %v810
      %v812 = vmul.f32 %v786, 1.442695
      %v813 = vpow.pop %v812
      %v814 = vmul.f32 %v787, 1.442695
      %v815 = vpow.pop %v814
      %v816 = vmul.f32 %v788, 1.442695
      %v817 = vpow.pop %v816
      %v818 = vmul.f32 %v789, 1.442695
      %v819 = vpow.pop %v818
      %v820 = vmul.f32 %v790, 1.442695
      %v821 = vpow.pop %v820
      %v822 = vmul.f32 %v791, 1.442695
      %v823 = vpow.pop %v822
      %v824 = vadd.f32 %v793, 1.0
      %v825 = vadd.f32 %v795, 1.0
      %v826 = vadd.f32 %v797, 1.0
      %v827 = vadd.f32 %v799, 1.0
      %v828 = vadd.f32 %v801, 1.0
      %v829 = vadd.f32 %v803, 1.0
      %v830 = vadd.f32 %v805, 1.0
      %v831 = vadd.f32 %v807, 1.0
      %v832 = vadd.f32 %v809, 1.0
      %v833 = vadd.f32 %v811, 1.0
      %v834 = vadd.f32 %v813, 1.0
      %v835 = vadd.f32 %v815, 1.0
      %v836 = vadd.f32 %v817, 1.0
      %v837 = vadd.f32 %v819, 1.0
      %v838 = vadd.f32 %v821, 1.0
      %v839 = vadd.f32 %v823, 1.0
      %v840 = vrcp.pop %v824
      %v841 = vmul.f32 1.0, %v840
      %v842 = vrcp.pop %v825
      %v843 = vmul.f32 1.0, %v842
      %v844 = vrcp.pop %v826
      %v845 = vmul.f32 1.0, %v844
      %v846 = vrcp.pop %v827
      %v847 = vmul.f32 1.0, %v846
      %v848 = vrcp.pop %v828
      %v849 = vmul.f32 1.0, %v848
      %v850 = vrcp.pop %v829
      %v851 = vmul.f32 1.0, %v850
      %v852 = vrcp.pop %v830
      %v853 = vmul.f32 1.0, %v852
      %v854 = vrcp.pop %v831
      %v855 = vmul.f32 1.0, %v854
      %v856 = vrcp.pop %v832
      %v857 = vmul.f32 1.0, %v856
      %v858 = vrcp.pop %v833
      %v859 = vmul.f32 1.0, %v858
      %v860 = vrcp.pop %v834
      %v861 = vmul.f32 1.0, %v860
      %v862 = vrcp.pop %v835
      %v863 = vmul.f32 1.0, %v862
      %v864 = vrcp.pop %v836
      %v865 = vmul.f32 1.0, %v864
      %v866 = vrcp.pop %v837
      %v867 = vmul.f32 1.0, %v866
      %v868 = vrcp.pop %v838
      %v869 = vmul.f32 1.0, %v868
      %v870 = vrcp.pop %v839
      %v871 = vmul.f32 1.0, %v870
      %v872 = vmul.f32 %v760, %v841
      %v873 = vmul.f32 %v761, %v843
      %v874 = vmul.f32 %v762, %v845
      %v875 = vmul.f32 %v763, %v847
      %v876 = vmul.f32 %v764, %v849
      %v877 = vmul.f32 %v765, %v851
      %v878 = vmul.f32 %v766, %v853
      %v879 = vmul.f32 %v767, %v855
      %v880 = vmul.f32 %v768, %v857
      %v881 = vmul.f32 %v769, %v859
      %v882 = vmul.f32 %v770, %v861
      %v883 = vmul.f32 %v771, %v863
      %v884 = vmul.f32 %v772, %v865
      %v885 = vmul.f32 %v773, %v867
      %v886 = vmul.f32 %v774, %v869
      %v887 = vmul.f32 %v775, %v871
      %p888 = scmp.gt.s32.totalorder %s25, 0
      %s889 = scalar_select %p888, 1, 0
      %s890 = scvt.s32.f32 %s889
      %p891 = scmp.lt.s32.totalorder %s25, 1
      %s892 = scalar_select %p891, 1, 0
      %s893 = scvt.s32.f32 %s892
      %v894 = vld [vmem:[%s464] sm:$0xff]
      %v895 = vld [vmem:[%s464 + $0x8] sm:$0xff]
      %v896 = vld [vmem:[%s464 + $0x10] sm:$0xff]
      %v897 = vld [vmem:[%s464 + $0x18] sm:$0xff]
      %v899 = vsel %vm538, %v894, 0
      %v902 = vsel %vm538, %v895, 0
      %v905 = vsel %vm538, %v896, 0
      %v908 = vsel %vm538, %v897, 0
      %910 = vmatprep.subr.mxu0 0.0
      %911 = vmatpush1.msra.mxu0 %v511
      %912 = vmatprep.subr.mxu0 0.0
      %913 = vmatpush1.msra.mxu0 %v512
      %914 = vmatprep.subr.mxu0 0.0
      %915 = vmatpush1.msra.mxu0 0.0
      %916 = vmatprep.subr.mxu0 0.0
      %917 = vmatpush1.msra.mxu0 0.0
      %918 = vmatprep.subr.mxu0 0.0
      %919 = vmatpush1.msra.mxu0 0.0
      %920 = vmatprep.subr.mxu0 0.0
      %921 = vmatpush1.msra.mxu0 0.0
      %922 = vmatprep.subr.mxu0 0.0
      %923 = vmatpush1.msra.mxu0 0.0
      %924 = vmatprep.subr.mxu0 0.0
      %925 = vmatpush1.msra.mxu0 0.0
      %926 = vmatprep.subr.mxu0 0.0
      %927 = vmatpush1.msra.mxu0 0.0
      %928 = vmatprep.subr.mxu0 0.0
      %929 = vmatpush1.msra.mxu0 0.0
      %930 = vmatprep.subr.mxu0 0.0
      %931 = vmatpush1.msra.mxu0 0.0
      %932 = vmatprep.subr.mxu0 0.0
      %933 = vmatpush1.msra.mxu0 0.0
      %934 = vmatprep.subr.mxu0 0.0
      %935 = vmatpush1.msra.mxu0 0.0
      %936 = vmatprep.subr.mxu0 0.0
      %937 = vmatpush1.msra.mxu0 0.0
      %938 = vmatprep.subr.mxu0 0.0
      %939 = vmatpush1.msra.mxu0 0.0
      %940 = vmatprep.subr.mxu0 0.0
      %941 = vmatpush1.msra.mxu0 0.0
      %942 = vmatprep.subr.mxu0 0.0
      %943 = vmatpush1.msra.mxu0 0.0
      %944 = vmatprep.subr.mxu0 0.0
      %945 = vmatpush1.msra.mxu0 0.0
      %946 = vmatprep.subr.mxu0 0.0
      %947 = vmatpush1.msra.mxu0 0.0
      %948 = vmatprep.subr.mxu0 0.0
      %949 = vmatpush1.msra.mxu0 0.0
      %950 = vmatprep.subr.mxu0 0.0
      %951 = vmatpush1.msra.mxu0 0.0
      %952 = vmatprep.subr.mxu0 0.0
      %953 = vmatpush1.msra.mxu0 0.0
      %954 = vmatprep.subr.mxu0 0.0
      %955 = vmatpush1.msra.mxu0 0.0
      %956 = vmatprep.subr.mxu0 0.0
      %957 = vmatpush1.msra.mxu0 0.0
      %958 = vmatprep.subr.mxu0 0.0
      %959 = vmatpush1.msra.mxu0 0.0
      %960 = vmatprep.subr.mxu0 0.0
      %961 = vmatpush1.msra.mxu0 0.0
      %962 = vmatprep.subr.mxu0 0.0
      %963 = vmatpush1.msra.mxu0 0.0
      %964 = vmatprep.subr.mxu0 0.0
      %965 = vmatpush1.msra.mxu0 0.0
      %966 = vmatprep.subr.mxu0 0.0
      %967 = vmatpush1.msra.mxu0 0.0
      %968 = vmatprep.subr.mxu0 0.0
      %969 = vmatpush1.msra.mxu0 0.0
      %970 = vmatprep.subr.mxu0 0.0
      %971 = vmatpush1.msra.mxu0 0.0
      %972 = vmatprep.subr.mxu0 0.0
      %973 = vmatpush1.msra.mxu0 0.0
      %974 = vmatprep.mubr.f32.mxu0 0.0
      %975 = vmatmul.mubr.f32.gmra.mrb[0].mxu0 %v899
      %v976 = vpop.f32.mrb[0].mxu0
      %v977 = vadd.f32 0.0, %v976
      %v978 = vpop.f32.mrb[0].mxu0
      %979 = vmatprep.mubr.f32.mxu0 0.0
      %980 = vmatmul.mubr.f32.gmra.mrb[0].mxu0 %v902
      %v981 = vpop.f32.mrb[0].mxu0
      %v982 = vadd.f32 0.0, %v981
      %v983 = vpop.f32.mrb[0].mxu0
      %984 = vmatprep.mubr.f32.mxu0 0.0
      %985 = vmatmul.mubr.f32.gmra.mrb[0].mxu0 %v905
      %v986 = vpop.f32.mrb[0].mxu0
      %v987 = vadd.f32 0.0, %v986
      %v988 = vpop.f32.mrb[0].mxu0
      %989 = vmatprep.mubr.f32.mxu0 0.0
      %990 = vmatmul.mubr.f32.gmra.mrb[0].mxu0 %v908
      %v991 = vpop.f32.mrb[0].mxu0
      %v992 = vadd.f32 0.0, %v991
      %v993 = vpop.f32.mrb[0].mxu0
      %994 = vdwg.mxu0
      %v995 = vmul.f32 %v977, %v736
      %v996 = vmul.f32 %v982, %v736
      %v997 = vmul.f32 %v987, %v736
      %v998 = vmul.f32 %v992, %v736
      %v999 = vadd.f32 %v995, %v758
      %v1000 = vadd.f32 %v996, %v758
      %v1001 = vadd.f32 %v997, %v758
      %v1002 = vadd.f32 %v998, %v758
      %v1003 = vxor.u32 %v999, 2147483648
      %v1004 = vxor.u32 %v1000, 2147483648
      %v1005 = vxor.u32 %v1001, 2147483648
      %v1006 = vxor.u32 %v1002, 2147483648
      %v1007 = vmul.f32 %v1003, 1.442695
      %v1008 = vpow.pop %v1007
      %v1009 = vmul.f32 %v1004, 1.442695
      %v1010 = vpow.pop %v1009
      %v1011 = vmul.f32 %v1005, 1.442695
      %v1012 = vpow.pop %v1011
      %v1013 = vmul.f32 %v1006, 1.442695
      %v1014 = vpow.pop %v1013
      %v1015 = vadd.f32 %v1008, 1.0
      %v1016 = vadd.f32 %v1010, 1.0
      %v1017 = vadd.f32 %v1012, 1.0
      %v1018 = vadd.f32 %v1014, 1.0
      %v1019 = vrcp.pop %v1015
      %v1020 = vmul.f32 1.0, %v1019
      %v1021 = vrcp.pop %v1016
      %v1022 = vmul.f32 1.0, %v1021
      %v1023 = vrcp.pop %v1017
      %v1024 = vmul.f32 1.0, %v1023
      %v1025 = vrcp.pop %v1018
      %v1026 = vmul.f32 1.0, %v1025
      %v1027 = vmul.f32 %v999, %v1020
      %v1028 = vmul.f32 %v1000, %v1022
      %v1029 = vmul.f32 %v1001, %v1024
      %v1030 = vmul.f32 %v1002, %v1026
      %v1031 = vstv %s890
      %v1032 = vmul.f32 %v1027, %v1031
      %v1033 = vmul.f32 %v1028, %v1031
      %v1034 = vmul.f32 %v1029, %v1031
      %v1035 = vmul.f32 %v1030, %v1031
      %v1036 = vld [vmem:[%s494] sm:$0xff]
      %v1037 = vld [vmem:[%s494 + $0x8] sm:$0xff]
      %v1038 = vld [vmem:[%s494 + $0x10] sm:$0xff]
      %v1039 = vld [vmem:[%s494 + $0x18] sm:$0xff]
      %v1041 = vsel %vm538, %v1036, 0
      %v1044 = vsel %vm538, %v1037, 0
      %v1047 = vsel %vm538, %v1038, 0
      %v1050 = vsel %vm538, %v1039, 0
      %1052 = vmatprep.subr.mxu0 0.0
      %1053 = vmatpush1.msra.mxu0 %v511
      %1054 = vmatprep.subr.mxu0 0.0
      %1055 = vmatpush1.msra.mxu0 %v512
      %1056 = vmatprep.subr.mxu0 0.0
      %1057 = vmatpush1.msra.mxu0 0.0
      %1058 = vmatprep.subr.mxu0 0.0
      %1059 = vmatpush1.msra.mxu0 0.0
      %1060 = vmatprep.subr.mxu0 0.0
      %1061 = vmatpush1.msra.mxu0 0.0
      %1062 = vmatprep.subr.mxu0 0.0
      %1063 = vmatpush1.msra.mxu0 0.0
      %1064 = vmatprep.subr.mxu0 0.0
      %1065 = vmatpush1.msra.mxu0 0.0
      %1066 = vmatprep.subr.mxu0 0.0
      %1067 = vmatpush1.msra.mxu0 0.0
      %1068 = vmatprep.subr.mxu0 0.0
      %1069 = vmatpush1.msra.mxu0 0.0
      %1070 = vmatprep.subr.mxu0 0.0
      %1071 = vmatpush1.msra.mxu0 0.0
      %1072 = vmatprep.subr.mxu0 0.0
      %1073 = vmatpush1.msra.mxu0 0.0
      %1074 = vmatprep.subr.mxu0 0.0
      %1075 = vmatpush1.msra.mxu0 0.0
      %1076 = vmatprep.subr.mxu0 0.0
      %1077 = vmatpush1.msra.mxu0 0.0
      %1078 = vmatprep.subr.mxu0 0.0
      %1079 = vmatpush1.msra.mxu0 0.0
      %1080 = vmatprep.subr.mxu0 0.0
      %1081 = vmatpush1.msra.mxu0 0.0
      %1082 = vmatprep.subr.mxu0 0.0
      %1083 = vmatpush1.msra.mxu0 0.0
      %1084 = vmatprep.subr.mxu0 0.0
      %1085 = vmatpush1.msra.mxu0 0.0
      %1086 = vmatprep.subr.mxu0 0.0
      %1087 = vmatpush1.msra.mxu0 0.0
      %1088 = vmatprep.subr.mxu0 0.0
      %1089 = vmatpush1.msra.mxu0 0.0
      %1090 = vmatprep.subr.mxu0 0.0
      %1091 = vmatpush1.msra.mxu0 0.0
      %1092 = vmatprep.subr.mxu0 0.0
      %1093 = vmatpush1.msra.mxu0 0.0
      %1094 = vmatprep.subr.mxu0 0.0
      %1095 = vmatpush1.msra.mxu0 0.0
      %1096 = vmatprep.subr.mxu0 0.0
      %1097 = vmatpush1.msra.mxu0 0.0
      %1098 = vmatprep.subr.mxu0 0.0
      %1099 = vmatpush1.msra.mxu0 0.0
      %1100 = vmatprep.subr.mxu0 0.0
      %1101 = vmatpush1.msra.mxu0 0.0
      %1102 = vmatprep.subr.mxu0 0.0
      %1103 = vmatpush1.msra.mxu0 0.0
      %1104 = vmatprep.subr.mxu0 0.0
      %1105 = vmatpush1.msra.mxu0 0.0
      %1106 = vmatprep.subr.mxu0 0.0
      %1107 = vmatpush1.msra.mxu0 0.0
      %1108 = vmatprep.subr.mxu0 0.0
      %1109 = vmatpush1.msra.mxu0 0.0
      %1110 = vmatprep.subr.mxu0 0.0
      %1111 = vmatpush1.msra.mxu0 0.0
      %1112 = vmatprep.subr.mxu0 0.0
      %1113 = vmatpush1.msra.mxu0 0.0
      %1114 = vmatprep.subr.mxu0 0.0
      %1115 = vmatpush1.msra.mxu0 0.0
      %1116 = vmatprep.mubr.f32.mxu0 0.0
      %1117 = vmatmul.mubr.f32.gmra.mrb[0].mxu0 %v1041
      %v1118 = vpop.f32.mrb[0].mxu0
      %v1119 = vadd.f32 0.0, %v1118
      %v1120 = vpop.f32.mrb[0].mxu0
      %1121 = vmatprep.mubr.f32.mxu0 0.0
      %1122 = vmatmul.mubr.f32.gmra.mrb[0].mxu0 %v1044
      %v1123 = vpop.f32.mrb[0].mxu0
      %v1124 = vadd.f32 0.0, %v1123
      %v1125 = vpop.f32.mrb[0].mxu0
      %1126 = vmatprep.mubr.f32.mxu0 0.0
      %1127 = vmatmul.mubr.f32.gmra.mrb[0].mxu0 %v1047
      %v1128 = vpop.f32.mrb[0].mxu0
      %v1129 = vadd.f32 0.0, %v1128
      %v1130 = vpop.f32.mrb[0].mxu0
      %1131 = vmatprep.mubr.f32.mxu0 0.0
      %1132 = vmatmul.mubr.f32.gmra.mrb[0].mxu0 %v1050
      %v1133 = vpop.f32.mrb[0].mxu0
      %v1134 = vadd.f32 0.0, %v1133
      %v1135 = vpop.f32.mrb[0].mxu0
      %1136 = vdwg.mxu0
      %v1137 = vmul.f32 %v1119, %v736
      %v1138 = vmul.f32 %v1124, %v736
      %v1139 = vmul.f32 %v1129, %v736
      %v1140 = vmul.f32 %v1134, %v736
      %v1141 = vadd.f32 %v1137, %v758
      %v1142 = vadd.f32 %v1138, %v758
      %v1143 = vadd.f32 %v1139, %v758
      %v1144 = vadd.f32 %v1140, %v758
      %v1145 = vxor.u32 %v1141, 2147483648
      %v1146 = vxor.u32 %v1142, 2147483648
      %v1147 = vxor.u32 %v1143, 2147483648
      %v1148 = vxor.u32 %v1144, 2147483648
      %v1149 = vmul.f32 %v1145, 1.442695
      %v1150 = vpow.pop %v1149
      %v1151 = vmul.f32 %v1146, 1.442695
      %v1152 = vpow.pop %v1151
      %v1153 = vmul.f32 %v1147, 1.442695
      %v1154 = vpow.pop %v1153
      %v1155 = vmul.f32 %v1148, 1.442695
      %v1156 = vpow.pop %v1155
      %v1157 = vadd.f32 %v1150, 1.0
      %v1158 = vadd.f32 %v1152, 1.0
      %v1159 = vadd.f32 %v1154, 1.0
      %v1160 = vadd.f32 %v1156, 1.0
      %v1161 = vrcp.pop %v1157
      %v1162 = vmul.f32 1.0, %v1161
      %v1163 = vrcp.pop %v1158
      %v1164 = vmul.f32 1.0, %v1163
      %v1165 = vrcp.pop %v1159
      %v1166 = vmul.f32 1.0, %v1165
      %v1167 = vrcp.pop %v1160
      %v1168 = vmul.f32 1.0, %v1167
      %v1169 = vmul.f32 %v1141, %v1162
      %v1170 = vmul.f32 %v1142, %v1164
      %v1171 = vmul.f32 %v1143, %v1166
      %v1172 = vmul.f32 %v1144, %v1168
      %v1173 = vstv %s893
      %v1174 = vmul.f32 %v1169, %v1173
      %v1175 = vmul.f32 %v1170, %v1173
      %v1176 = vmul.f32 %v1171, %v1173
      %v1177 = vmul.f32 %v1172, %v1173
      %vm1178 = vcmask 31744
      %1179 = vst.msk [vmem:[#allocation2] sm:$0xff] %vm1178, 0.0
      %1180 = vst.msk [vmem:[#allocation2 + $0x8] sm:$0xff] %vm1178, 0.0
      %vm1181 = vcmask 27648
      %1182 = vst.msk [vmem:[#allocation2 + $0x10] sm:$0xf] %vm1181, 0.0
      %1183 = vst.msk [vmem:[#allocation2 + $0x18] sm:$0xff] %vm1178, 0.0
      %1184 = vst.msk [vmem:[#allocation2 + $0x20] sm:$0xff] %vm1178, 0.0
      %1185 = vst.msk [vmem:[#allocation2 + $0x28] sm:$0xf] %vm1181, 0.0
      %1186 = vst.msk [vmem:[#allocation2 + $0x30] sm:$0xff] %vm1178, 0.0
      %1187 = vst.msk [vmem:[#allocation2 + $0x38] sm:$0xff] %vm1178, 0.0
      %1188 = vst.msk [vmem:[#allocation2 + $0x40] sm:$0xf] %vm1181, 0.0
      %1189 = vst.msk [vmem:[#allocation2 + $0x48] sm:$0xff] %vm1178, 0.0
      %1190 = vst.msk [vmem:[#allocation2 + $0x50] sm:$0xff] %vm1178, 0.0
      %1191 = vst.msk [vmem:[#allocation2 + $0x58] sm:$0xf] %vm1181, 0.0
      %1192 = vst.msk [vmem:[#allocation2 + $0x60] sm:$0xff] %vm1178, 0.0
      %1193 = vst.msk [vmem:[#allocation2 + $0x68] sm:$0xff] %vm1178, 0.0
      %1194 = vst.msk [vmem:[#allocation2 + $0x70] sm:$0xf] %vm1181, 0.0
      %1195 = vst.msk [vmem:[#allocation2 + $0x78] sm:$0xff] %vm1178, 0.0
      %1196 = vst.msk [vmem:[#allocation2 + $0x80] sm:$0xff] %vm1178, 0.0
      %1197 = vst.msk [vmem:[#allocation2 + $0x88] sm:$0xf] %vm1181, 0.0
      %1198 = vst.msk [vmem:[#allocation2 + $0x90] sm:$0xff] %vm1178, 0.0
      %1199 = vst.msk [vmem:[#allocation2 + $0x98] sm:$0xff] %vm1178, 0.0
      %1200 = vst.msk [vmem:[#allocation2 + $0xa0] sm:$0xf] %vm1181, 0.0
      %1201 = vst.msk [vmem:[#allocation2 + $0xa8] sm:$0xff] %vm1178, 0.0
      %1202 = vst.msk [vmem:[#allocation2 + $0xb0] sm:$0xff] %vm1178, 0.0
      %1203 = vst.msk [vmem:[#allocation2 + $0xb8] sm:$0xf] %vm1181, 0.0
      %1204 = vst.msk [vmem:[#allocation2 + $0xc0] sm:$0xff] %vm1178, 0.0
      %1205 = vst.msk [vmem:[#allocation2 + $0xc8] sm:$0xff] %vm1178, 0.0
      %1206 = vst.msk [vmem:[#allocation2 + $0xd0] sm:$0xf] %vm1181, 0.0
      %1207 = vst.msk [vmem:[#allocation2 + $0xd8] sm:$0xff] %vm1178, 0.0
      %1208 = vst.msk [vmem:[#allocation2 + $0xe0] sm:$0xff] %vm1178, 0.0
      %1209 = vst.msk [vmem:[#allocation2 + $0xe8] sm:$0xf] %vm1181, 0.0
      %1210 = vst.msk [vmem:[#allocation2 + $0xf0] sm:$0xff] %vm1178, 0.0
      %1211 = vst.msk [vmem:[#allocation2 + $0xf8] sm:$0xff] %vm1178, 0.0
      %1212 = vst.msk [vmem:[#allocation2 + $0x100] sm:$0xf] %vm1181, 0.0
      %1213 = vst.msk [vmem:[#allocation2 + $0x108] sm:$0xff] %vm1178, 0.0
      %1214 = vst.msk [vmem:[#allocation2 + $0x110] sm:$0xff] %vm1178, 0.0
      %1215 = vst.msk [vmem:[#allocation2 + $0x118] sm:$0xf] %vm1181, 0.0
      %1216 = vst.msk [vmem:[#allocation2 + $0x2] sm:$0xff] %vm1178, %v1032
      %1217 = vst.msk [vmem:[#allocation2 + $0xa] sm:$0xff] %vm1178, %v1033
      %1218 = vst.msk [vmem:[#allocation2 + $0x1a] sm:$0xff] %vm1178, %v1034
      %1219 = vst.msk [vmem:[#allocation2 + $0x22] sm:$0xff] %vm1178, %v1035
      %s1220 = scalar_lea.vmem [#allocation2], 48
      %1221 = vst.msk [vmem:[%s1220 + $0x2] sm:$0xff] %vm1178, %v872
      %1222 = vst.msk [vmem:[%s1220 + $0xa] sm:$0xff] %vm1178, %v873
      %1223 = vst.msk [vmem:[%s1220 + $0x1a] sm:$0xff] %vm1178, %v874
      %1224 = vst.msk [vmem:[%s1220 + $0x22] sm:$0xff] %vm1178, %v875
      %1225 = vst.msk [vmem:[%s1220 + $0x32] sm:$0xff] %vm1178, %v876
      %1226 = vst.msk [vmem:[%s1220 + $0x3a] sm:$0xff] %vm1178, %v877
      %1227 = vst.msk [vmem:[%s1220 + $0x4a] sm:$0xff] %vm1178, %v878
      %1228 = vst.msk [vmem:[%s1220 + $0x52] sm:$0xff] %vm1178, %v879
      %1229 = vst.msk [vmem:[%s1220 + $0x62] sm:$0xff] %vm1178, %v880
      %1230 = vst.msk [vmem:[%s1220 + $0x6a] sm:$0xff] %vm1178, %v881
      %1231 = vst.msk [vmem:[%s1220 + $0x7a] sm:$0xff] %vm1178, %v882
      %1232 = vst.msk [vmem:[%s1220 + $0x82] sm:$0xff] %vm1178, %v883
      %1233 = vst.msk [vmem:[%s1220 + $0x92] sm:$0xff] %vm1178, %v884
      %1234 = vst.msk [vmem:[%s1220 + $0x9a] sm:$0xff] %vm1178, %v885
      %1235 = vst.msk [vmem:[%s1220 + $0xaa] sm:$0xff] %vm1178, %v886
      %1236 = vst.msk [vmem:[%s1220 + $0xb2] sm:$0xff] %vm1178, %v887
      %s1237 = scalar_lea.vmem [#allocation2], 240
      %1238 = vst.msk [vmem:[%s1237 + $0x2] sm:$0xff] %vm1178, %v1174
      %1239 = vst.msk [vmem:[%s1237 + $0xa] sm:$0xff] %vm1178, %v1175
      %1240 = vst.msk [vmem:[%s1237 + $0x1a] sm:$0xff] %vm1178, %v1176
      %1241 = vst.msk [vmem:[%s1237 + $0x22] sm:$0xff] %vm1178, %v1177
      %v1242 = vld [vmem:[#allocation2] sm:$0xff]
      %v1243 = vld [vmem:[#allocation2 + $0x8] sm:$0xff]
      %v1244 = vld [vmem:[#allocation2 + $0x10] sm:$0xf]
      %v1245 = vld [vmem:[#allocation2 + $0x18] sm:$0xff]
      %v1246 = vld [vmem:[#allocation2 + $0x20] sm:$0xff]
      %v1247 = vld [vmem:[#allocation2 + $0x28] sm:$0xf]
      %v1248 = vld [vmem:[#allocation2 + $0x30] sm:$0xff]
      %v1249 = vld [vmem:[#allocation2 + $0x38] sm:$0xff]
      %v1250 = vld [vmem:[#allocation2 + $0x40] sm:$0xf]
      %v1251 = vld [vmem:[#allocation2 + $0x48] sm:$0xff]
      %v1252 = vld [vmem:[#allocation2 + $0x50] sm:$0xff]
      %v1253 = vld [vmem:[#allocation2 + $0x58] sm:$0xf]
      %v1254 = vld [vmem:[#allocation2 + $0x60] sm:$0xff]
      %v1255 = vld [vmem:[#allocation2 + $0x68] sm:$0xff]
      %v1256 = vld [vmem:[#allocation2 + $0x70] sm:$0xf]
      %v1257 = vld [vmem:[#allocation2 + $0x78] sm:$0xff]
      %v1258 = vld [vmem:[#allocation2 + $0x80] sm:$0xff]
      %v1259 = vld [vmem:[#allocation2 + $0x88] sm:$0xf]
      %v1260 = vld [vmem:[#allocation2 + $0x90] sm:$0xff]
      %v1261 = vld [vmem:[#allocation2 + $0x98] sm:$0xff]
      %v1262 = vld [vmem:[#allocation2 + $0xa0] sm:$0xf]
      %v1263 = vld [vmem:[#allocation2 + $0xa8] sm:$0xff]
      %v1264 = vld [vmem:[#allocation2 + $0xb0] sm:$0xff]
      %v1265 = vld [vmem:[#allocation2 + $0xb8] sm:$0xf]
      %v1266 = vld [vmem:[#allocation2 + $0xc0] sm:$0xff]
      %v1267 = vld [vmem:[#allocation2 + $0xc8] sm:$0xff]
      %v1268 = vld [vmem:[#allocation2 + $0xd0] sm:$0xf]
      %v1269 = vld [vmem:[#allocation2 + $0xd8] sm:$0xff]
      %v1270 = vld [vmem:[#allocation2 + $0xe0] sm:$0xff]
      %v1271 = vld [vmem:[#allocation2 + $0xe8] sm:$0xf]
      %v1272 = vld [vmem:[#allocation2 + $0xf0] sm:$0xff]
      %v1273 = vld [vmem:[#allocation2 + $0xf8] sm:$0xff]
      %v1274 = vld [vmem:[#allocation2 + $0x100] sm:$0xf]
      %v1275 = vld [vmem:[#allocation2 + $0x108] sm:$0xff]
      %v1276 = vld [vmem:[#allocation2 + $0x110] sm:$0xff]
      %v1277 = vld [vmem:[#allocation2 + $0x118] sm:$0xf]
      %v1278 = vlaneseq
      %v1279 = vshrl.u32 %v1278, 7
      %v1280 = vsub.s32 0, %v1279
      %v1281 = vrot.slane %v515, %v1280
      %v1282 = vmul.f32 %v1242, %v1281
      %v1283 = vmul.f32 %v1243, %v1281
      %v1284 = vmul.f32 %v1245, %v1281
      %v1285 = vmul.f32 %v1246, %v1281
      %v1286 = vmul.f32 %v1248, %v1281
      %v1287 = vmul.f32 %v1249, %v1281
      %v1288 = vmul.f32 %v1251, %v1281
      %v1289 = vmul.f32 %v1252, %v1281
      %v1290 = vmul.f32 %v1254, %v1281
      %v1291 = vmul.f32 %v1255, %v1281
      %v1292 = vmul.f32 %v1257, %v1281
      %v1293 = vmul.f32 %v1258, %v1281
      %v1294 = vmul.f32 %v1260, %v1281
      %v1295 = vmul.f32 %v1261, %v1281
      %v1296 = vmul.f32 %v1263, %v1281
      %v1297 = vmul.f32 %v1264, %v1281
      %v1298 = vadd.f32 %v1282, 0.0
      %v1299 = vadd.f32 %v1283, 0.0
      %v1300 = vadd.f32 %v1284, 0.0
      %v1301 = vadd.f32 %v1285, 0.0
      %v1302 = vadd.f32 %v1286, 0.0
      %v1303 = vadd.f32 %v1287, 0.0
      %v1304 = vadd.f32 %v1288, 0.0
      %v1305 = vadd.f32 %v1289, 0.0
      %v1306 = vadd.f32 %v1290, 0.0
      %v1307 = vadd.f32 %v1291, 0.0
      %v1308 = vadd.f32 %v1292, 0.0
      %v1309 = vadd.f32 %v1293, 0.0
      %v1310 = vadd.f32 %v1294, 0.0
      %v1311 = vadd.f32 %v1295, 0.0
      %v1312 = vadd.f32 %v1296, 0.0
      %v1313 = vadd.f32 %v1297, 0.0
      %v1314 = vlaneseq
      %v1315 = vshrl.u32 %v1314, 7
      %v1316 = vsub.s32 1, %v1315
      %v1317 = vrot.slane %v515, %v1316
      %v1318 = vmul.f32 %v1242, %v1317
      %v1319 = vmul.f32 %v1243, %v1317
      %v1320 = vmul.f32 %v1244, %v1317
      %v1321 = vmul.f32 %v1245, %v1317
      %v1322 = vmul.f32 %v1246, %v1317
      %v1323 = vmul.f32 %v1247, %v1317
      %v1324 = vmul.f32 %v1248, %v1317
      %v1325 = vmul.f32 %v1249, %v1317
      %v1326 = vmul.f32 %v1250, %v1317
      %v1327 = vmul.f32 %v1251, %v1317
      %v1328 = vmul.f32 %v1252, %v1317
      %v1329 = vmul.f32 %v1253, %v1317
      %v1330 = vmul.f32 %v1254, %v1317
      %v1331 = vmul.f32 %v1255, %v1317
      %v1332 = vmul.f32 %v1256, %v1317
      %v1333 = vmul.f32 %v1257, %v1317
      %v1334 = vmul.f32 %v1258, %v1317
      %v1335 = vmul.f32 %v1259, %v1317
      %v1336 = vmul.f32 %v1260, %v1317
      %v1337 = vmul.f32 %v1261, %v1317
      %v1338 = vmul.f32 %v1262, %v1317
      %v1339 = vmul.f32 %v1263, %v1317
      %v1340 = vmul.f32 %v1264, %v1317
      %v1341 = vmul.f32 %v1265, %v1317
      %vm1366 = vcmask 1046528
      %v1367 = vrot.slane %v1318, 1
      %v1368 = vrot.slane %v1319, 1
      %v1369 = vsel %vm1366, %v1367, %v1368
      %v1370 = vrot.slane %v1320, 1
      %v1371 = vsel %vm1366, %v1368, %v1370
      %v1372 = vrot.slane %v1321, 1
      %v1373 = vrot.slane %v1322, 1
      %v1374 = vsel %vm1366, %v1372, %v1373
      %v1375 = vrot.slane %v1323, 1
      %v1376 = vsel %vm1366, %v1373, %v1375
      %v1377 = vrot.slane %v1324, 1
      %v1378 = vrot.slane %v1325, 1
      %v1379 = vsel %vm1366, %v1377, %v1378
      %v1380 = vrot.slane %v1326, 1
      %v1381 = vsel %vm1366, %v1378, %v1380
      %v1382 = vrot.slane %v1327, 1
      %v1383 = vrot.slane %v1328, 1
      %v1384 = vsel %vm1366, %v1382, %v1383
      %v1385 = vrot.slane %v1329, 1
      %v1386 = vsel %vm1366, %v1383, %v1385
      %v1387 = vrot.slane %v1330, 1
      %v1388 = vrot.slane %v1331, 1
      %v1389 = vsel %vm1366, %v1387, %v1388
      %v1390 = vrot.slane %v1332, 1
      %v1391 = vsel %vm1366, %v1388, %v1390
      %v1392 = vrot.slane %v1333, 1
      %v1393 = vrot.slane %v1334, 1
      %v1394 = vsel %vm1366, %v1392, %v1393
      %v1395 = vrot.slane %v1335, 1
      %v1396 = vsel %vm1366, %v1393, %v1395
      %v1397 = vrot.slane %v1336, 1
      %v1398 = vrot.slane %v1337, 1
      %v1399 = vsel %vm1366, %v1397, %v1398
      %v1400 = vrot.slane %v1338, 1
      %v1401 = vsel %vm1366, %v1398, %v1400
      %v1402 = vrot.slane %v1339, 1
      %v1403 = vrot.slane %v1340, 1
      %v1404 = vsel %vm1366, %v1402, %v1403
      %v1405 = vrot.slane %v1341, 1
      %v1406 = vsel %vm1366, %v1403, %v1405
      %v1423 = vadd.f32 %v1298, %v1369
      %v1424 = vadd.f32 %v1299, %v1371
      %v1425 = vadd.f32 %v1300, %v1374
      %v1426 = vadd.f32 %v1301, %v1376
      %v1427 = vadd.f32 %v1302, %v1379
      %v1428 = vadd.f32 %v1303, %v1381
      %v1429 = vadd.f32 %v1304, %v1384
      %v1430 = vadd.f32 %v1305, %v1386
      %v1431 = vadd.f32 %v1306, %v1389
      %v1432 = vadd.f32 %v1307, %v1391
      %v1433 = vadd.f32 %v1308, %v1394
      %v1434 = vadd.f32 %v1309, %v1396
      %v1435 = vadd.f32 %v1310, %v1399
      %v1436 = vadd.f32 %v1311, %v1401
      %v1437 = vadd.f32 %v1312, %v1404
      %v1438 = vadd.f32 %v1313, %v1406
      %v1439 = vlaneseq
      %v1440 = vshrl.u32 %v1439, 7
      %v1441 = vsub.s32 2, %v1440
      %v1442 = vrot.slane %v515, %v1441
      %v1443 = vmul.f32 %v1242, %v1442
      %v1444 = vmul.f32 %v1243, %v1442
      %v1445 = vmul.f32 %v1244, %v1442
      %v1446 = vmul.f32 %v1245, %v1442
      %v1447 = vmul.f32 %v1246, %v1442
      %v1448 = vmul.f32 %v1247, %v1442
      %v1449 = vmul.f32 %v1248, %v1442
      %v1450 = vmul.f32 %v1249, %v1442
      %v1451 = vmul.f32 %v1250, %v1442
      %v1452 = vmul.f32 %v1251, %v1442
      %v1453 = vmul.f32 %v1252, %v1442
      %v1454 = vmul.f32 %v1253, %v1442
      %v1455 = vmul.f32 %v1254, %v1442
      %v1456 = vmul.f32 %v1255, %v1442
      %v1457 = vmul.f32 %v1256, %v1442
      %v1458 = vmul.f32 %v1257, %v1442
      %v1459 = vmul.f32 %v1258, %v1442
      %v1460 = vmul.f32 %v1259, %v1442
      %v1461 = vmul.f32 %v1260, %v1442
      %v1462 = vmul.f32 %v1261, %v1442
      %v1463 = vmul.f32 %v1262, %v1442
      %v1464 = vmul.f32 %v1263, %v1442
      %v1465 = vmul.f32 %v1264, %v1442
      %v1466 = vmul.f32 %v1265, %v1442
      %vm1491 = vcmask 1045504
      %v1492 = vrot.slane %v1443, 2
      %v1493 = vrot.slane %v1444, 2
      %v1494 = vsel %vm1491, %v1492, %v1493
      %v1495 = vrot.slane %v1445, 2
      %v1496 = vsel %vm1491, %v1493, %v1495
      %v1497 = vrot.slane %v1446, 2
      %v1498 = vrot.slane %v1447, 2
      %v1499 = vsel %vm1491, %v1497, %v1498
      %v1500 = vrot.slane %v1448, 2
      %v1501 = vsel %vm1491, %v1498, %v1500
      %v1502 = vrot.slane %v1449, 2
      %v1503 = vrot.slane %v1450, 2
      %v1504 = vsel %vm1491, %v1502, %v1503
      %v1505 = vrot.slane %v1451, 2
      %v1506 = vsel %vm1491, %v1503, %v1505
      %v1507 = vrot.slane %v1452, 2
      %v1508 = vrot.slane %v1453, 2
      %v1509 = vsel %vm1491, %v1507, %v1508
      %v1510 = vrot.slane %v1454, 2
      %v1511 = vsel %vm1491, %v1508, %v1510
      %v1512 = vrot.slane %v1455, 2
      %v1513 = vrot.slane %v1456, 2
      %v1514 = vsel %vm1491, %v1512, %v1513
      %v1515 = vrot.slane %v1457, 2
      %v1516 = vsel %vm1491, %v1513, %v1515
      %v1517 = vrot.slane %v1458, 2
      %v1518 = vrot.slane %v1459, 2
      %v1519 = vsel %vm1491, %v1517, %v1518
      %v1520 = vrot.slane %v1460, 2
      %v1521 = vsel %vm1491, %v1518, %v1520
      %v1522 = vrot.slane %v1461, 2
      %v1523 = vrot.slane %v1462, 2
      %v1524 = vsel %vm1491, %v1522, %v1523
      %v1525 = vrot.slane %v1463, 2
      %v1526 = vsel %vm1491, %v1523, %v1525
      %v1527 = vrot.slane %v1464, 2
      %v1528 = vrot.slane %v1465, 2
      %v1529 = vsel %vm1491, %v1527, %v1528
      %v1530 = vrot.slane %v1466, 2
      %v1531 = vsel %vm1491, %v1528, %v1530
      %v1548 = vadd.f32 %v1423, %v1494
      %v1549 = vadd.f32 %v1424, %v1496
      %v1550 = vadd.f32 %v1425, %v1499
      %v1551 = vadd.f32 %v1426, %v1501
      %v1552 = vadd.f32 %v1427, %v1504
      %v1553 = vadd.f32 %v1428, %v1506
      %v1554 = vadd.f32 %v1429, %v1509
      %v1555 = vadd.f32 %v1430, %v1511
      %v1556 = vadd.f32 %v1431, %v1514
      %v1557 = vadd.f32 %v1432, %v1516
      %v1558 = vadd.f32 %v1433, %v1519
      %v1559 = vadd.f32 %v1434, %v1521
      %v1560 = vadd.f32 %v1435, %v1524
      %v1561 = vadd.f32 %v1436, %v1526
      %v1562 = vadd.f32 %v1437, %v1529
      %v1563 = vadd.f32 %v1438, %v1531
      %v1564 = vlaneseq
      %v1565 = vshrl.u32 %v1564, 7
      %v1566 = vsub.s32 3, %v1565
      %v1567 = vrot.slane %v515, %v1566
      %v1568 = vmul.f32 %v1242, %v1567
      %v1569 = vmul.f32 %v1243, %v1567
      %v1570 = vmul.f32 %v1244, %v1567
      %v1571 = vmul.f32 %v1245, %v1567
      %v1572 = vmul.f32 %v1246, %v1567
      %v1573 = vmul.f32 %v1247, %v1567
      %v1574 = vmul.f32 %v1248, %v1567
      %v1575 = vmul.f32 %v1249, %v1567
      %v1576 = vmul.f32 %v1250, %v1567
      %v1577 = vmul.f32 %v1251, %v1567
      %v1578 = vmul.f32 %v1252, %v1567
      %v1579 = vmul.f32 %v1253, %v1567
      %v1580 = vmul.f32 %v1254, %v1567
      %v1581 = vmul.f32 %v1255, %v1567
      %v1582 = vmul.f32 %v1256, %v1567
      %v1583 = vmul.f32 %v1257, %v1567
      %v1584 = vmul.f32 %v1258, %v1567
      %v1585 = vmul.f32 %v1259, %v1567
      %v1586 = vmul.f32 %v1260, %v1567
      %v1587 = vmul.f32 %v1261, %v1567
      %v1588 = vmul.f32 %v1262, %v1567
      %v1589 = vmul.f32 %v1263, %v1567
      %v1590 = vmul.f32 %v1264, %v1567
      %v1591 = vmul.f32 %v1265, %v1567
      %vm1616 = vcmask 1044480
      %v1617 = vrot.slane %v1568, 3
      %v1618 = vrot.slane %v1569, 3
      %v1619 = vsel %vm1616, %v1617, %v1618
      %v1620 = vrot.slane %v1570, 3
      %v1621 = vsel %vm1616, %v1618, %v1620
      %v1622 = vrot.slane %v1571, 3
      %v1623 = vrot.slane %v1572, 3
      %v1624 = vsel %vm1616, %v1622, %v1623
      %v1625 = vrot.slane %v1573, 3
      %v1626 = vsel %vm1616, %v1623, %v1625
      %v1627 = vrot.slane %v1574, 3
      %v1628 = vrot.slane %v1575, 3
      %v1629 = vsel %vm1616, %v1627, %v1628
      %v1630 = vrot.slane %v1576, 3
      %v1631 = vsel %vm1616, %v1628, %v1630
      %v1632 = vrot.slane %v1577, 3
      %v1633 = vrot.slane %v1578, 3
      %v1634 = vsel %vm1616, %v1632, %v1633
      %v1635 = vrot.slane %v1579, 3
      %v1636 = vsel %vm1616, %v1633, %v1635
      %v1637 = vrot.slane %v1580, 3
      %v1638 = vrot.slane %v1581, 3
      %v1639 = vsel %vm1616, %v1637, %v1638
      %v1640 = vrot.slane %v1582, 3
      %v1641 = vsel %vm1616, %v1638, %v1640
      %v1642 = vrot.slane %v1583, 3
      %v1643 = vrot.slane %v1584, 3
      %v1644 = vsel %vm1616, %v1642, %v1643
      %v1645 = vrot.slane %v1585, 3
      %v1646 = vsel %vm1616, %v1643, %v1645
      %v1647 = vrot.slane %v1586, 3
      %v1648 = vrot.slane %v1587, 3
      %v1649 = vsel %vm1616, %v1647, %v1648
      %v1650 = vrot.slane %v1588, 3
      %v1651 = vsel %vm1616, %v1648, %v1650
      %v1652 = vrot.slane %v1589, 3
      %v1653 = vrot.slane %v1590, 3
      %v1654 = vsel %vm1616, %v1652, %v1653
      %v1655 = vrot.slane %v1591, 3
      %v1656 = vsel %vm1616, %v1653, %v1655
      %v1673 = vadd.f32 %v1548, %v1619
      %v1674 = vadd.f32 %v1549, %v1621
      %v1675 = vadd.f32 %v1550, %v1624
      %v1676 = vadd.f32 %v1551, %v1626
      %v1677 = vadd.f32 %v1552, %v1629
      %v1678 = vadd.f32 %v1553, %v1631
      %v1679 = vadd.f32 %v1554, %v1634
      %v1680 = vadd.f32 %v1555, %v1636
      %v1681 = vadd.f32 %v1556, %v1639
      %v1682 = vadd.f32 %v1557, %v1641
      %v1683 = vadd.f32 %v1558, %v1644
      %v1684 = vadd.f32 %v1559, %v1646
      %v1685 = vadd.f32 %v1560, %v1649
      %v1686 = vadd.f32 %v1561, %v1651
      %v1687 = vadd.f32 %v1562, %v1654
      %v1688 = vadd.f32 %v1563, %v1656
      %v1689 = vlaneseq
      %v1690 = vshrl.u32 %v1689, 7
      %v1691 = vsub.s32 4, %v1690
      %v1692 = vrot.slane %v515, %v1691
      %v1693 = vmul.f32 %v1242, %v1692
      %v1694 = vmul.f32 %v1243, %v1692
      %v1695 = vmul.f32 %v1244, %v1692
      %v1696 = vmul.f32 %v1245, %v1692
      %v1697 = vmul.f32 %v1246, %v1692
      %v1698 = vmul.f32 %v1247, %v1692
      %v1699 = vmul.f32 %v1248, %v1692
      %v1700 = vmul.f32 %v1249, %v1692
      %v1701 = vmul.f32 %v1250, %v1692
      %v1702 = vmul.f32 %v1251, %v1692
      %v1703 = vmul.f32 %v1252, %v1692
      %v1704 = vmul.f32 %v1253, %v1692
      %v1705 = vmul.f32 %v1254, %v1692
      %v1706 = vmul.f32 %v1255, %v1692
      %v1707 = vmul.f32 %v1256, %v1692
      %v1708 = vmul.f32 %v1257, %v1692
      %v1709 = vmul.f32 %v1258, %v1692
      %v1710 = vmul.f32 %v1259, %v1692
      %v1711 = vmul.f32 %v1260, %v1692
      %v1712 = vmul.f32 %v1261, %v1692
      %v1713 = vmul.f32 %v1262, %v1692
      %v1714 = vmul.f32 %v1263, %v1692
      %v1715 = vmul.f32 %v1264, %v1692
      %v1716 = vmul.f32 %v1265, %v1692
      %vm1741 = vcmask 1043456
      %v1742 = vrot.slane %v1693, 4
      %v1743 = vrot.slane %v1694, 4
      %v1744 = vsel %vm1741, %v1742, %v1743
      %v1745 = vrot.slane %v1695, 4
      %v1746 = vsel %vm1741, %v1743, %v1745
      %v1747 = vrot.slane %v1696, 4
      %v1748 = vrot.slane %v1697, 4
      %v1749 = vsel %vm1741, %v1747, %v1748
      %v1750 = vrot.slane %v1698, 4
      %v1751 = vsel %vm1741, %v1748, %v1750
      %v1752 = vrot.slane %v1699, 4
      %v1753 = vrot.slane %v1700, 4
      %v1754 = vsel %vm1741, %v1752, %v1753
      %v1755 = vrot.slane %v1701, 4
      %v1756 = vsel %vm1741, %v1753, %v1755
      %v1757 = vrot.slane %v1702, 4
      %v1758 = vrot.slane %v1703, 4
      %v1759 = vsel %vm1741, %v1757, %v1758
      %v1760 = vrot.slane %v1704, 4
      %v1761 = vsel %vm1741, %v1758, %v1760
      %v1762 = vrot.slane %v1705, 4
      %v1763 = vrot.slane %v1706, 4
      %v1764 = vsel %vm1741, %v1762, %v1763
      %v1765 = vrot.slane %v1707, 4
      %v1766 = vsel %vm1741, %v1763, %v1765
      %v1767 = vrot.slane %v1708, 4
      %v1768 = vrot.slane %v1709, 4
      %v1769 = vsel %vm1741, %v1767, %v1768
      %v1770 = vrot.slane %v1710, 4
      %v1771 = vsel %vm1741, %v1768, %v1770
      %v1772 = vrot.slane %v1711, 4
      %v1773 = vrot.slane %v1712, 4
      %v1774 = vsel %vm1741, %v1772, %v1773
      %v1775 = vrot.slane %v1713, 4
      %v1776 = vsel %vm1741, %v1773, %v1775
      %v1777 = vrot.slane %v1714, 4
      %v1778 = vrot.slane %v1715, 4
      %v1779 = vsel %vm1741, %v1777, %v1778
      %v1780 = vrot.slane %v1716, 4
      %v1781 = vsel %vm1741, %v1778, %v1780
      %v1798 = vadd.f32 %v1673, %v1744
      %v1799 = vadd.f32 %v1674, %v1746
      %v1800 = vadd.f32 %v1675, %v1749
      %v1801 = vadd.f32 %v1676, %v1751
      %v1802 = vadd.f32 %v1677, %v1754
      %v1803 = vadd.f32 %v1678, %v1756
      %v1804 = vadd.f32 %v1679, %v1759
      %v1805 = vadd.f32 %v1680, %v1761
      %v1806 = vadd.f32 %v1681, %v1764
      %v1807 = vadd.f32 %v1682, %v1766
      %v1808 = vadd.f32 %v1683, %v1769
      %v1809 = vadd.f32 %v1684, %v1771
      %v1810 = vadd.f32 %v1685, %v1774
      %v1811 = vadd.f32 %v1686, %v1776
      %v1812 = vadd.f32 %v1687, %v1779
      %v1813 = vadd.f32 %v1688, %v1781
      %v1814 = vlaneseq
      %v1815 = vshrl.u32 %v1814, 7
      %v1816 = vsub.s32 0, %v1815
      %v1817 = vrot.slane %v516, %v1816
      %v1818 = vmul.f32 %v1245, %v1817
      %v1819 = vmul.f32 %v1246, %v1817
      %v1820 = vmul.f32 %v1248, %v1817
      %v1821 = vmul.f32 %v1249, %v1817
      %v1822 = vmul.f32 %v1251, %v1817
      %v1823 = vmul.f32 %v1252, %v1817
      %v1824 = vmul.f32 %v1254, %v1817
      %v1825 = vmul.f32 %v1255, %v1817
      %v1826 = vmul.f32 %v1257, %v1817
      %v1827 = vmul.f32 %v1258, %v1817
      %v1828 = vmul.f32 %v1260, %v1817
      %v1829 = vmul.f32 %v1261, %v1817
      %v1830 = vmul.f32 %v1263, %v1817
      %v1831 = vmul.f32 %v1264, %v1817
      %v1832 = vmul.f32 %v1266, %v1817
      %v1833 = vmul.f32 %v1267, %v1817
      %v1834 = vadd.f32 %v1798, %v1818
      %v1835 = vadd.f32 %v1799, %v1819
      %v1836 = vadd.f32 %v1800, %v1820
      %v1837 = vadd.f32 %v1801, %v1821
      %v1838 = vadd.f32 %v1802, %v1822
      %v1839 = vadd.f32 %v1803, %v1823
      %v1840 = vadd.f32 %v1804, %v1824
      %v1841 = vadd.f32 %v1805, %v1825
      %v1842 = vadd.f32 %v1806, %v1826
      %v1843 = vadd.f32 %v1807, %v1827
      %v1844 = vadd.f32 %v1808, %v1828
      %v1845 = vadd.f32 %v1809, %v1829
      %v1846 = vadd.f32 %v1810, %v1830
      %v1847 = vadd.f32 %v1811, %v1831
      %v1848 = vadd.f32 %v1812, %v1832
      %v1849 = vadd.f32 %v1813, %v1833
      %v1850 = vlaneseq
      %v1851 = vshrl.u32 %v1850, 7
      %v1852 = vsub.s32 1, %v1851
      %v1853 = vrot.slane %v516, %v1852
      %v1854 = vmul.f32 %v1245, %v1853
      %v1855 = vmul.f32 %v1246, %v1853
      %v1856 = vmul.f32 %v1247, %v1853
      %v1857 = vmul.f32 %v1248, %v1853
      %v1858 = vmul.f32 %v1249, %v1853
      %v1859 = vmul.f32 %v1250, %v1853
      %v1860 = vmul.f32 %v1251, %v1853
      %v1861 = vmul.f32 %v1252, %v1853
      %v1862 = vmul.f32 %v1253, %v1853
      %v1863 = vmul.f32 %v1254, %v1853
      %v1864 = vmul.f32 %v1255, %v1853
      %v1865 = vmul.f32 %v1256, %v1853
      %v1866 = vmul.f32 %v1257, %v1853
      %v1867 = vmul.f32 %v1258, %v1853
      %v1868 = vmul.f32 %v1259, %v1853
      %v1869 = vmul.f32 %v1260, %v1853
      %v1870 = vmul.f32 %v1261, %v1853
      %v1871 = vmul.f32 %v1262, %v1853
      %v1872 = vmul.f32 %v1263, %v1853
      %v1873 = vmul.f32 %v1264, %v1853
      %v1874 = vmul.f32 %v1265, %v1853
      %v1875 = vmul.f32 %v1266, %v1853
      %v1876 = vmul.f32 %v1267, %v1853
      %v1877 = vmul.f32 %v1268, %v1853
      %v1902 = vrot.slane %v1854, 1
      %v1903 = vrot.slane %v1855, 1
      %v1904 = vsel %vm1366, %v1902, %v1903
      %v1905 = vrot.slane %v1856, 1
      %v1906 = vsel %vm1366, %v1903, %v1905
      %v1907 = vrot.slane %v1857, 1
      %v1908 = vrot.slane %v1858, 1
      %v1909 = vsel %vm1366, %v1907, %v1908
      %v1910 = vrot.slane %v1859, 1
      %v1911 = vsel %vm1366, %v1908, %v1910
      %v1912 = vrot.slane %v1860, 1
      %v1913 = vrot.slane %v1861, 1
      %v1914 = vsel %vm1366, %v1912, %v1913
      %v1915 = vrot.slane %v1862, 1
      %v1916 = vsel %vm1366, %v1913, %v1915
      %v1917 = vrot.slane %v1863, 1
      %v1918 = vrot.slane %v1864, 1
      %v1919 = vsel %vm1366, %v1917, %v1918
      %v1920 = vrot.slane %v1865, 1
      %v1921 = vsel %vm1366, %v1918, %v1920
      %v1922 = vrot.slane %v1866, 1
      %v1923 = vrot.slane %v1867, 1
      %v1924 = vsel %vm1366, %v1922, %v1923
      %v1925 = vrot.slane %v1868, 1
      %v1926 = vsel %vm1366, %v1923, %v1925
      %v1927 = vrot.slane %v1869, 1
      %v1928 = vrot.slane %v1870, 1
      %v1929 = vsel %vm1366, %v1927, %v1928
      %v1930 = vrot.slane %v1871, 1
      %v1931 = vsel %vm1366, %v1928, %v1930
      %v1932 = vrot.slane %v1872, 1
      %v1933 = vrot.slane %v1873, 1
      %v1934 = vsel %vm1366, %v1932, %v1933
      %v1935 = vrot.slane %v1874, 1
      %v1936 = vsel %vm1366, %v1933, %v1935
      %v1937 = vrot.slane %v1875, 1
      %v1938 = vrot.slane %v1876, 1
      %v1939 = vsel %vm1366, %v1937, %v1938
      %v1940 = vrot.slane %v1877, 1
      %v1941 = vsel %vm1366, %v1938, %v1940
      %v1958 = vadd.f32 %v1834, %v1904
      %v1959 = vadd.f32 %v1835, %v1906
      %v1960 = vadd.f32 %v1836, %v1909
      %v1961 = vadd.f32 %v1837, %v1911
      %v1962 = vadd.f32 %v1838, %v1914
      %v1963 = vadd.f32 %v1839, %v1916
      %v1964 = vadd.f32 %v1840, %v1919
      %v1965 = vadd.f32 %v1841, %v1921
      %v1966 = vadd.f32 %v1842, %v1924
      %v1967 = vadd.f32 %v1843, %v1926
      %v1968 = vadd.f32 %v1844, %v1929
      %v1969 = vadd.f32 %v1845, %v1931
      %v1970 = vadd.f32 %v1846, %v1934
      %v1971 = vadd.f32 %v1847, %v1936
      %v1972 = vadd.f32 %v1848, %v1939
      %v1973 = vadd.f32 %v1849, %v1941
      %v1974 = vlaneseq
      %v1975 = vshrl.u32 %v1974, 7
      %v1976 = vsub.s32 2, %v1975
      %v1977 = vrot.slane %v516, %v1976
      %v1978 = vmul.f32 %v1245, %v1977
      %v1979 = vmul.f32 %v1246, %v1977
      %v1980 = vmul.f32 %v1247, %v1977
      %v1981 = vmul.f32 %v1248, %v1977
      %v1982 = vmul.f32 %v1249, %v1977
      %v1983 = vmul.f32 %v1250, %v1977
      %v1984 = vmul.f32 %v1251, %v1977
      %v1985 = vmul.f32 %v1252, %v1977
      %v1986 = vmul.f32 %v1253, %v1977
      %v1987 = vmul.f32 %v1254, %v1977
      %v1988 = vmul.f32 %v1255, %v1977
      %v1989 = vmul.f32 %v1256, %v1977
      %v1990 = vmul.f32 %v1257, %v1977
      %v1991 = vmul.f32 %v1258, %v1977
      %v1992 = vmul.f32 %v1259, %v1977
      %v1993 = vmul.f32 %v1260, %v1977
      %v1994 = vmul.f32 %v1261, %v1977
      %v1995 = vmul.f32 %v1262, %v1977
      %v1996 = vmul.f32 %v1263, %v1977
      %v1997 = vmul.f32 %v1264, %v1977
      %v1998 = vmul.f32 %v1265, %v1977
      %v1999 = vmul.f32 %v1266, %v1977
      %v2000 = vmul.f32 %v1267, %v1977
      %v2001 = vmul.f32 %v1268, %v1977
      %v2026 = vrot.slane %v1978, 2
      %v2027 = vrot.slane %v1979, 2
      %v2028 = vsel %vm1491, %v2026, %v2027
      %v2029 = vrot.slane %v1980, 2
      %v2030 = vsel %vm1491, %v2027, %v2029
      %v2031 = vrot.slane %v1981, 2
      %v2032 = vrot.slane %v1982, 2
      %v2033 = vsel %vm1491, %v2031, %v2032
      %v2034 = vrot.slane %v1983, 2
      %v2035 = vsel %vm1491, %v2032, %v2034
      %v2036 = vrot.slane %v1984, 2
      %v2037 = vrot.slane %v1985, 2
      %v2038 = vsel %vm1491, %v2036, %v2037
      %v2039 = vrot.slane %v1986, 2
      %v2040 = vsel %vm1491, %v2037, %v2039
      %v2041 = vrot.slane %v1987, 2
      %v2042 = vrot.slane %v1988, 2
      %v2043 = vsel %vm1491, %v2041, %v2042
      %v2044 = vrot.slane %v1989, 2
      %v2045 = vsel %vm1491, %v2042, %v2044
      %v2046 = vrot.slane %v1990, 2
      %v2047 = vrot.slane %v1991, 2
      %v2048 = vsel %vm1491, %v2046, %v2047
      %v2049 = vrot.slane %v1992, 2
      %v2050 = vsel %vm1491, %v2047, %v2049
      %v2051 = vrot.slane %v1993, 2
      %v2052 = vrot.slane %v1994, 2
      %v2053 = vsel %vm1491, %v2051, %v2052
      %v2054 = vrot.slane %v1995, 2
      %v2055 = vsel %vm1491, %v2052, %v2054
      %v2056 = vrot.slane %v1996, 2
      %v2057 = vrot.slane %v1997, 2
      %v2058 = vsel %vm1491, %v2056, %v2057
      %v2059 = vrot.slane %v1998, 2
      %v2060 = vsel %vm1491, %v2057, %v2059
      %v2061 = vrot.slane %v1999, 2
      %v2062 = vrot.slane %v2000, 2
      %v2063 = vsel %vm1491, %v2061, %v2062
      %v2064 = vrot.slane %v2001, 2
      %v2065 = vsel %vm1491, %v2062, %v2064
      %v2082 = vadd.f32 %v1958, %v2028
      %v2083 = vadd.f32 %v1959, %v2030
      %v2084 = vadd.f32 %v1960, %v2033
      %v2085 = vadd.f32 %v1961, %v2035
      %v2086 = vadd.f32 %v1962, %v2038
      %v2087 = vadd.f32 %v1963, %v2040
      %v2088 = vadd.f32 %v1964, %v2043
      %v2089 = vadd.f32 %v1965, %v2045
      %v2090 = vadd.f32 %v1966, %v2048
      %v2091 = vadd.f32 %v1967, %v2050
      %v2092 = vadd.f32 %v1968, %v2053
      %v2093 = vadd.f32 %v1969, %v2055
      %v2094 = vadd.f32 %v1970, %v2058
      %v2095 = vadd.f32 %v1971, %v2060
      %v2096 = vadd.f32 %v1972, %v2063
      %v2097 = vadd.f32 %v1973, %v2065
      %v2098 = vlaneseq
      %v2099 = vshrl.u32 %v2098, 7
      %v2100 = vsub.s32 3, %v2099
      %v2101 = vrot.slane %v516, %v2100
      %v2102 = vmul.f32 %v1245, %v2101
      %v2103 = vmul.f32 %v1246, %v2101
      %v2104 = vmul.f32 %v1247, %v2101
      %v2105 = vmul.f32 %v1248, %v2101
      %v2106 = vmul.f32 %v1249, %v2101
      %v2107 = vmul.f32 %v1250, %v2101
      %v2108 = vmul.f32 %v1251, %v2101
      %v2109 = vmul.f32 %v1252, %v2101
      %v2110 = vmul.f32 %v1253, %v2101
      %v2111 = vmul.f32 %v1254, %v2101
      %v2112 = vmul.f32 %v1255, %v2101
      %v2113 = vmul.f32 %v1256, %v2101
      %v2114 = vmul.f32 %v1257, %v2101
      %v2115 = vmul.f32 %v1258, %v2101
      %v2116 = vmul.f32 %v1259, %v2101
      %v2117 = vmul.f32 %v1260, %v2101
      %v2118 = vmul.f32 %v1261, %v2101
      %v2119 = vmul.f32 %v1262, %v2101
      %v2120 = vmul.f32 %v1263, %v2101
      %v2121 = vmul.f32 %v1264, %v2101
      %v2122 = vmul.f32 %v1265, %v2101
      %v2123 = vmul.f32 %v1266, %v2101
      %v2124 = vmul.f32 %v1267, %v2101
      %v2125 = vmul.f32 %v1268, %v2101
      %v2150 = vrot.slane %v2102, 3
      %v2151 = vrot.slane %v2103, 3
      %v2152 = vsel %vm1616, %v2150, %v2151
      %v2153 = vrot.slane %v2104, 3
      %v2154 = vsel %vm1616, %v2151, %v2153
      %v2155 = vrot.slane %v2105, 3
      %v2156 = vrot.slane %v2106, 3
      %v2157 = vsel %vm1616, %v2155, %v2156
      %v2158 = vrot.slane %v2107, 3
      %v2159 = vsel %vm1616, %v2156, %v2158
      %v2160 = vrot.slane %v2108, 3
      %v2161 = vrot.slane %v2109, 3
      %v2162 = vsel %vm1616, %v2160, %v2161
      %v2163 = vrot.slane %v2110, 3
      %v2164 = vsel %vm1616, %v2161, %v2163
      %v2165 = vrot.slane %v2111, 3
      %v2166 = vrot.slane %v2112, 3
      %v2167 = vsel %vm1616, %v2165, %v2166
      %v2168 = vrot.slane %v2113, 3
      %v2169 = vsel %vm1616, %v2166, %v2168
      %v2170 = vrot.slane %v2114, 3
      %v2171 = vrot.slane %v2115, 3
      %v2172 = vsel %vm1616, %v2170, %v2171
      %v2173 = vrot.slane %v2116, 3
      %v2174 = vsel %vm1616, %v2171, %v2173
      %v2175 = vrot.slane %v2117, 3
      %v2176 = vrot.slane %v2118, 3
      %v2177 = vsel %vm1616, %v2175, %v2176
      %v2178 = vrot.slane %v2119, 3
      %v2179 = vsel %vm1616, %v2176, %v2178
      %v2180 = vrot.slane %v2120, 3
      %v2181 = vrot.slane %v2121, 3
      %v2182 = vsel %vm1616, %v2180, %v2181
      %v2183 = vrot.slane %v2122, 3
      %v2184 = vsel %vm1616, %v2181, %v2183
      %v2185 = vrot.slane %v2123, 3
      %v2186 = vrot.slane %v2124, 3
      %v2187 = vsel %vm1616, %v2185, %v2186
      %v2188 = vrot.slane %v2125, 3
      %v2189 = vsel %vm1616, %v2186, %v2188
      %v2206 = vadd.f32 %v2082, %v2152
      %v2207 = vadd.f32 %v2083, %v2154
      %v2208 = vadd.f32 %v2084, %v2157
      %v2209 = vadd.f32 %v2085, %v2159
      %v2210 = vadd.f32 %v2086, %v2162
      %v2211 = vadd.f32 %v2087, %v2164
      %v2212 = vadd.f32 %v2088, %v2167
      %v2213 = vadd.f32 %v2089, %v2169
      %v2214 = vadd.f32 %v2090, %v2172
      %v2215 = vadd.f32 %v2091, %v2174
      %v2216 = vadd.f32 %v2092, %v2177
      %v2217 = vadd.f32 %v2093, %v2179
      %v2218 = vadd.f32 %v2094, %v2182
      %v2219 = vadd.f32 %v2095, %v2184
      %v2220 = vadd.f32 %v2096, %v2187
      %v2221 = vadd.f32 %v2097, %v2189
      %v2222 = vlaneseq
      %v2223 = vshrl.u32 %v2222, 7
      %v2224 = vsub.s32 4, %v2223
      %v2225 = vrot.slane %v516, %v2224
      %v2226 = vmul.f32 %v1245, %v2225
      %v2227 = vmul.f32 %v1246, %v2225
      %v2228 = vmul.f32 %v1247, %v2225
      %v2229 = vmul.f32 %v1248, %v2225
      %v2230 = vmul.f32 %v1249, %v2225
      %v2231 = vmul.f32 %v1250, %v2225
      %v2232 = vmul.f32 %v1251, %v2225
      %v2233 = vmul.f32 %v1252, %v2225
      %v2234 = vmul.f32 %v1253, %v2225
      %v2235 = vmul.f32 %v1254, %v2225
      %v2236 = vmul.f32 %v1255, %v2225
      %v2237 = vmul.f32 %v1256, %v2225
      %v2238 = vmul.f32 %v1257, %v2225
      %v2239 = vmul.f32 %v1258, %v2225
      %v2240 = vmul.f32 %v1259, %v2225
      %v2241 = vmul.f32 %v1260, %v2225
      %v2242 = vmul.f32 %v1261, %v2225
      %v2243 = vmul.f32 %v1262, %v2225
      %v2244 = vmul.f32 %v1263, %v2225
      %v2245 = vmul.f32 %v1264, %v2225
      %v2246 = vmul.f32 %v1265, %v2225
      %v2247 = vmul.f32 %v1266, %v2225
      %v2248 = vmul.f32 %v1267, %v2225
      %v2249 = vmul.f32 %v1268, %v2225
      %v2274 = vrot.slane %v2226, 4
      %v2275 = vrot.slane %v2227, 4
      %v2276 = vsel %vm1741, %v2274, %v2275
      %v2277 = vrot.slane %v2228, 4
      %v2278 = vsel %vm1741, %v2275, %v2277
      %v2279 = vrot.slane %v2229, 4
      %v2280 = vrot.slane %v2230, 4
      %v2281 = vsel %vm1741, %v2279, %v2280
      %v2282 = vrot.slane %v2231, 4
      %v2283 = vsel %vm1741, %v2280, %v2282
      %v2284 = vrot.slane %v2232, 4
      %v2285 = vrot.slane %v2233, 4
      %v2286 = vsel %vm1741, %v2284, %v2285
      %v2287 = vrot.slane %v2234, 4
      %v2288 = vsel %vm1741, %v2285, %v2287
      %v2289 = vrot.slane %v2235, 4
      %v2290 = vrot.slane %v2236, 4
      %v2291 = vsel %vm1741, %v2289, %v2290
      %v2292 = vrot.slane %v2237, 4
      %v2293 = vsel %vm1741, %v2290, %v2292
      %v2294 = vrot.slane %v2238, 4
      %v2295 = vrot.slane %v2239, 4
      %v2296 = vsel %vm1741, %v2294, %v2295
      %v2297 = vrot.slane %v2240, 4
      %v2298 = vsel %vm1741, %v2295, %v2297
      %v2299 = vrot.slane %v2241, 4
      %v2300 = vrot.slane %v2242, 4
      %v2301 = vsel %vm1741, %v2299, %v2300
      %v2302 = vrot.slane %v2243, 4
      %v2303 = vsel %vm1741, %v2300, %v2302
      %v2304 = vrot.slane %v2244, 4
      %v2305 = vrot.slane %v2245, 4
      %v2306 = vsel %vm1741, %v2304, %v2305
      %v2307 = vrot.slane %v2246, 4
      %v2308 = vsel %vm1741, %v2305, %v2307
      %v2309 = vrot.slane %v2247, 4
      %v2310 = vrot.slane %v2248, 4
      %v2311 = vsel %vm1741, %v2309, %v2310
      %v2312 = vrot.slane %v2249, 4
      %v2313 = vsel %vm1741, %v2310, %v2312
      %v2330 = vadd.f32 %v2206, %v2276
      %v2331 = vadd.f32 %v2207, %v2278
      %v2332 = vadd.f32 %v2208, %v2281
      %v2333 = vadd.f32 %v2209, %v2283
      %v2334 = vadd.f32 %v2210, %v2286
      %v2335 = vadd.f32 %v2211, %v2288
      %v2336 = vadd.f32 %v2212, %v2291
      %v2337 = vadd.f32 %v2213, %v2293
      %v2338 = vadd.f32 %v2214, %v2296
      %v2339 = vadd.f32 %v2215, %v2298
      %v2340 = vadd.f32 %v2216, %v2301
      %v2341 = vadd.f32 %v2217, %v2303
      %v2342 = vadd.f32 %v2218, %v2306
      %v2343 = vadd.f32 %v2219, %v2308
      %v2344 = vadd.f32 %v2220, %v2311
      %v2345 = vadd.f32 %v2221, %v2313
      %v2346 = vlaneseq
      %v2347 = vshrl.u32 %v2346, 7
      %v2348 = vsub.s32 0, %v2347
      %v2349 = vrot.slane %v517, %v2348
      %v2350 = vmul.f32 %v1248, %v2349
      %v2351 = vmul.f32 %v1249, %v2349
      %v2352 = vmul.f32 %v1251, %v2349
      %v2353 = vmul.f32 %v1252, %v2349
      %v2354 = vmul.f32 %v1254, %v2349
      %v2355 = vmul.f32 %v1255, %v2349
      %v2356 = vmul.f32 %v1257, %v2349
      %v2357 = vmul.f32 %v1258, %v2349
      %v2358 = vmul.f32 %v1260, %v2349
      %v2359 = vmul.f32 %v1261, %v2349
      %v2360 = vmul.f32 %v1263, %v2349
      %v2361 = vmul.f32 %v1264, %v2349
      %v2362 = vmul.f32 %v1266, %v2349
      %v2363 = vmul.f32 %v1267, %v2349
      %v2364 = vmul.f32 %v1269, %v2349
      %v2365 = vmul.f32 %v1270, %v2349
      %v2366 = vadd.f32 %v2330, %v2350
      %v2367 = vadd.f32 %v2331, %v2351
      %v2368 = vadd.f32 %v2332, %v2352
      %v2369 = vadd.f32 %v2333, %v2353
      %v2370 = vadd.f32 %v2334, %v2354
      %v2371 = vadd.f32 %v2335, %v2355
      %v2372 = vadd.f32 %v2336, %v2356
      %v2373 = vadd.f32 %v2337, %v2357
      %v2374 = vadd.f32 %v2338, %v2358
      %v2375 = vadd.f32 %v2339, %v2359
      %v2376 = vadd.f32 %v2340, %v2360
      %v2377 = vadd.f32 %v2341, %v2361
      %v2378 = vadd.f32 %v2342, %v2362
      %v2379 = vadd.f32 %v2343, %v2363
      %v2380 = vadd.f32 %v2344, %v2364
      %v2381 = vadd.f32 %v2345, %v2365
      %v2382 = vlaneseq
      %v2383 = vshrl.u32 %v2382, 7
      %v2384 = vsub.s32 1, %v2383
      %v2385 = vrot.slane %v517, %v2384
      %v2386 = vmul.f32 %v1248, %v2385
      %v2387 = vmul.f32 %v1249, %v2385
      %v2388 = vmul.f32 %v1250, %v2385
      %v2389 = vmul.f32 %v1251, %v2385
      %v2390 = vmul.f32 %v1252, %v2385
      %v2391 = vmul.f32 %v1253, %v2385
      %v2392 = vmul.f32 %v1254, %v2385
      %v2393 = vmul.f32 %v1255, %v2385
      %v2394 = vmul.f32 %v1256, %v2385
      %v2395 = vmul.f32 %v1257, %v2385
      %v2396 = vmul.f32 %v1258, %v2385
      %v2397 = vmul.f32 %v1259, %v2385
      %v2398 = vmul.f32 %v1260, %v2385
      %v2399 = vmul.f32 %v1261, %v2385
      %v2400 = vmul.f32 %v1262, %v2385
      %v2401 = vmul.f32 %v1263, %v2385
      %v2402 = vmul.f32 %v1264, %v2385
      %v2403 = vmul.f32 %v1265, %v2385
      %v2404 = vmul.f32 %v1266, %v2385
      %v2405 = vmul.f32 %v1267, %v2385
      %v2406 = vmul.f32 %v1268, %v2385
      %v2407 = vmul.f32 %v1269, %v2385
      %v2408 = vmul.f32 %v1270, %v2385
      %v2409 = vmul.f32 %v1271, %v2385
      %v2434 = vrot.slane %v2386, 1
      %v2435 = vrot.slane %v2387, 1
      %v2436 = vsel %vm1366, %v2434, %v2435
      %v2437 = vrot.slane %v2388, 1
      %v2438 = vsel %vm1366, %v2435, %v2437
      %v2439 = vrot.slane %v2389, 1
      %v2440 = vrot.slane %v2390, 1
      %v2441 = vsel %vm1366, %v2439, %v2440
      %v2442 = vrot.slane %v2391, 1
      %v2443 = vsel %vm1366, %v2440, %v2442
      %v2444 = vrot.slane %v2392, 1
      %v2445 = vrot.slane %v2393, 1
      %v2446 = vsel %vm1366, %v2444, %v2445
      %v2447 = vrot.slane %v2394, 1
      %v2448 = vsel %vm1366, %v2445, %v2447
      %v2449 = vrot.slane %v2395, 1
      %v2450 = vrot.slane %v2396, 1
      %v2451 = vsel %vm1366, %v2449, %v2450
      %v2452 = vrot.slane %v2397, 1
      %v2453 = vsel %vm1366, %v2450, %v2452
      %v2454 = vrot.slane %v2398, 1
      %v2455 = vrot.slane %v2399, 1
      %v2456 = vsel %vm1366, %v2454, %v2455
      %v2457 = vrot.slane %v2400, 1
      %v2458 = vsel %vm1366, %v2455, %v2457
      %v2459 = vrot.slane %v2401, 1
      %v2460 = vrot.slane %v2402, 1
      %v2461 = vsel %vm1366, %v2459, %v2460
      %v2462 = vrot.slane %v2403, 1
      %v2463 = vsel %vm1366, %v2460, %v2462
      %v2464 = vrot.slane %v2404, 1
      %v2465 = vrot.slane %v2405, 1
      %v2466 = vsel %vm1366, %v2464, %v2465
      %v2467 = vrot.slane %v2406, 1
      %v2468 = vsel %vm1366, %v2465, %v2467
      %v2469 = vrot.slane %v2407, 1
      %v2470 = vrot.slane %v2408, 1
      %v2471 = vsel %vm1366, %v2469, %v2470
      %v2472 = vrot.slane %v2409, 1
      %v2473 = vsel %vm1366, %v2470, %v2472
      %v2490 = vadd.f32 %v2366, %v2436
      %v2491 = vadd.f32 %v2367, %v2438
      %v2492 = vadd.f32 %v2368, %v2441
      %v2493 = vadd.f32 %v2369, %v2443
      %v2494 = vadd.f32 %v2370, %v2446
      %v2495 = vadd.f32 %v2371, %v2448
      %v2496 = vadd.f32 %v2372, %v2451
      %v2497 = vadd.f32 %v2373, %v2453
      %v2498 = vadd.f32 %v2374, %v2456
      %v2499 = vadd.f32 %v2375, %v2458
      %v2500 = vadd.f32 %v2376, %v2461
      %v2501 = vadd.f32 %v2377, %v2463
      %v2502 = vadd.f32 %v2378, %v2466
      %v2503 = vadd.f32 %v2379, %v2468
      %v2504 = vadd.f32 %v2380, %v2471
      %v2505 = vadd.f32 %v2381, %v2473
      %v2506 = vlaneseq
      %v2507 = vshrl.u32 %v2506, 7
      %v2508 = vsub.s32 2, %v2507
      %v2509 = vrot.slane %v517, %v2508
      %v2510 = vmul.f32 %v1248, %v2509
      %v2511 = vmul.f32 %v1249, %v2509
      %v2512 = vmul.f32 %v1250, %v2509
      %v2513 = vmul.f32 %v1251, %v2509
      %v2514 = vmul.f32 %v1252, %v2509
      %v2515 = vmul.f32 %v1253, %v2509
      %v2516 = vmul.f32 %v1254, %v2509
      %v2517 = vmul.f32 %v1255, %v2509
      %v2518 = vmul.f32 %v1256, %v2509
      %v2519 = vmul.f32 %v1257, %v2509
      %v2520 = vmul.f32 %v1258, %v2509
      %v2521 = vmul.f32 %v1259, %v2509
      %v2522 = vmul.f32 %v1260, %v2509
      %v2523 = vmul.f32 %v1261, %v2509
      %v2524 = vmul.f32 %v1262, %v2509
      %v2525 = vmul.f32 %v1263, %v2509
      %v2526 = vmul.f32 %v1264, %v2509
      %v2527 = vmul.f32 %v1265, %v2509
      %v2528 = vmul.f32 %v1266, %v2509
      %v2529 = vmul.f32 %v1267, %v2509
      %v2530 = vmul.f32 %v1268, %v2509
      %v2531 = vmul.f32 %v1269, %v2509
      %v2532 = vmul.f32 %v1270, %v2509
      %v2533 = vmul.f32 %v1271, %v2509
      %v2558 = vrot.slane %v2510, 2
      %v2559 = vrot.slane %v2511, 2
      %v2560 = vsel %vm1491, %v2558, %v2559
      %v2561 = vrot.slane %v2512, 2
      %v2562 = vsel %vm1491, %v2559, %v2561
      %v2563 = vrot.slane %v2513, 2
      %v2564 = vrot.slane %v2514, 2
      %v2565 = vsel %vm1491, %v2563, %v2564
      %v2566 = vrot.slane %v2515, 2
      %v2567 = vsel %vm1491, %v2564, %v2566
      %v2568 = vrot.slane %v2516, 2
      %v2569 = vrot.slane %v2517, 2
      %v2570 = vsel %vm1491, %v2568, %v2569
      %v2571 = vrot.slane %v2518, 2
      %v2572 = vsel %vm1491, %v2569, %v2571
      %v2573 = vrot.slane %v2519, 2
      %v2574 = vrot.slane %v2520, 2
      %v2575 = vsel %vm1491, %v2573, %v2574
      %v2576 = vrot.slane %v2521, 2
      %v2577 = vsel %vm1491, %v2574, %v2576
      %v2578 = vrot.slane %v2522, 2
      %v2579 = vrot.slane %v2523, 2
      %v2580 = vsel %vm1491, %v2578, %v2579
      %v2581 = vrot.slane %v2524, 2
      %v2582 = vsel %vm1491, %v2579, %v2581
      %v2583 = vrot.slane %v2525, 2
      %v2584 = vrot.slane %v2526, 2
      %v2585 = vsel %vm1491, %v2583, %v2584
      %v2586 = vrot.slane %v2527, 2
      %v2587 = vsel %vm1491, %v2584, %v2586
      %v2588 = vrot.slane %v2528, 2
      %v2589 = vrot.slane %v2529, 2
      %v2590 = vsel %vm1491, %v2588, %v2589
      %v2591 = vrot.slane %v2530, 2
      %v2592 = vsel %vm1491, %v2589, %v2591
      %v2593 = vrot.slane %v2531, 2
      %v2594 = vrot.slane %v2532, 2
      %v2595 = vsel %vm1491, %v2593, %v2594
      %v2596 = vrot.slane %v2533, 2
      %v2597 = vsel %vm1491, %v2594, %v2596
      %v2614 = vadd.f32 %v2490, %v2560
      %v2615 = vadd.f32 %v2491, %v2562
      %v2616 = vadd.f32 %v2492, %v2565
      %v2617 = vadd.f32 %v2493, %v2567
      %v2618 = vadd.f32 %v2494, %v2570
      %v2619 = vadd.f32 %v2495, %v2572
      %v2620 = vadd.f32 %v2496, %v2575
      %v2621 = vadd.f32 %v2497, %v2577
      %v2622 = vadd.f32 %v2498, %v2580
      %v2623 = vadd.f32 %v2499, %v2582
      %v2624 = vadd.f32 %v2500, %v2585
      %v2625 = vadd.f32 %v2501, %v2587
      %v2626 = vadd.f32 %v2502, %v2590
      %v2627 = vadd.f32 %v2503, %v2592
      %v2628 = vadd.f32 %v2504, %v2595
      %v2629 = vadd.f32 %v2505, %v2597
      %v2630 = vlaneseq
      %v2631 = vshrl.u32 %v2630, 7
      %v2632 = vsub.s32 3, %v2631
      %v2633 = vrot.slane %v517, %v2632
      %v2634 = vmul.f32 %v1248, %v2633
      %v2635 = vmul.f32 %v1249, %v2633
      %v2636 = vmul.f32 %v1250, %v2633
      %v2637 = vmul.f32 %v1251, %v2633
      %v2638 = vmul.f32 %v1252, %v2633
      %v2639 = vmul.f32 %v1253, %v2633
      %v2640 = vmul.f32 %v1254, %v2633
      %v2641 = vmul.f32 %v1255, %v2633
      %v2642 = vmul.f32 %v1256, %v2633
      %v2643 = vmul.f32 %v1257, %v2633
      %v2644 = vmul.f32 %v1258, %v2633
      %v2645 = vmul.f32 %v1259, %v2633
      %v2646 = vmul.f32 %v1260, %v2633
      %v2647 = vmul.f32 %v1261, %v2633
      %v2648 = vmul.f32 %v1262, %v2633
      %v2649 = vmul.f32 %v1263, %v2633
      %v2650 = vmul.f32 %v1264, %v2633
      %v2651 = vmul.f32 %v1265, %v2633
      %v2652 = vmul.f32 %v1266, %v2633
      %v2653 = vmul.f32 %v1267, %v2633
      %v2654 = vmul.f32 %v1268, %v2633
      %v2655 = vmul.f32 %v1269, %v2633
      %v2656 = vmul.f32 %v1270, %v2633
      %v2657 = vmul.f32 %v1271, %v2633
      %v2682 = vrot.slane %v2634, 3
      %v2683 = vrot.slane %v2635, 3
      %v2684 = vsel %vm1616, %v2682, %v2683
      %v2685 = vrot.slane %v2636, 3
      %v2686 = vsel %vm1616, %v2683, %v2685
      %v2687 = vrot.slane %v2637, 3
      %v2688 = vrot.slane %v2638, 3
      %v2689 = vsel %vm1616, %v2687, %v2688
      %v2690 = vrot.slane %v2639, 3
      %v2691 = vsel %vm1616, %v2688, %v2690
      %v2692 = vrot.slane %v2640, 3
      %v2693 = vrot.slane %v2641, 3
      %v2694 = vsel %vm1616, %v2692, %v2693
      %v2695 = vrot.slane %v2642, 3
      %v2696 = vsel %vm1616, %v2693, %v2695
      %v2697 = vrot.slane %v2643, 3
      %v2698 = vrot.slane %v2644, 3
      %v2699 = vsel %vm1616, %v2697, %v2698
      %v2700 = vrot.slane %v2645, 3
      %v2701 = vsel %vm1616, %v2698, %v2700
      %v2702 = vrot.slane %v2646, 3
      %v2703 = vrot.slane %v2647, 3
      %v2704 = vsel %vm1616, %v2702, %v2703
      %v2705 = vrot.slane %v2648, 3
      %v2706 = vsel %vm1616, %v2703, %v2705
      %v2707 = vrot.slane %v2649, 3
      %v2708 = vrot.slane %v2650, 3
      %v2709 = vsel %vm1616, %v2707, %v2708
      %v2710 = vrot.slane %v2651, 3
      %v2711 = vsel %vm1616, %v2708, %v2710
      %v2712 = vrot.slane %v2652, 3
      %v2713 = vrot.slane %v2653, 3
      %v2714 = vsel %vm1616, %v2712, %v2713
      %v2715 = vrot.slane %v2654, 3
      %v2716 = vsel %vm1616, %v2713, %v2715
      %v2717 = vrot.slane %v2655, 3
      %v2718 = vrot.slane %v2656, 3
      %v2719 = vsel %vm1616, %v2717, %v2718
      %v2720 = vrot.slane %v2657, 3
      %v2721 = vsel %vm1616, %v2718, %v2720
      %v2738 = vadd.f32 %v2614, %v2684
      %v2739 = vadd.f32 %v2615, %v2686
      %v2740 = vadd.f32 %v2616, %v2689
      %v2741 = vadd.f32 %v2617, %v2691
      %v2742 = vadd.f32 %v2618, %v2694
      %v2743 = vadd.f32 %v2619, %v2696
      %v2744 = vadd.f32 %v2620, %v2699
      %v2745 = vadd.f32 %v2621, %v2701
      %v2746 = vadd.f32 %v2622, %v2704
      %v2747 = vadd.f32 %v2623, %v2706
      %v2748 = vadd.f32 %v2624, %v2709
      %v2749 = vadd.f32 %v2625, %v2711
      %v2750 = vadd.f32 %v2626, %v2714
      %v2751 = vadd.f32 %v2627, %v2716
      %v2752 = vadd.f32 %v2628, %v2719
      %v2753 = vadd.f32 %v2629, %v2721
      %v2754 = vlaneseq
      %v2755 = vshrl.u32 %v2754, 7
      %v2756 = vsub.s32 4, %v2755
      %v2757 = vrot.slane %v517, %v2756
      %v2758 = vmul.f32 %v1248, %v2757
      %v2759 = vmul.f32 %v1249, %v2757
      %v2760 = vmul.f32 %v1250, %v2757
      %v2761 = vmul.f32 %v1251, %v2757
      %v2762 = vmul.f32 %v1252, %v2757
      %v2763 = vmul.f32 %v1253, %v2757
      %v2764 = vmul.f32 %v1254, %v2757
      %v2765 = vmul.f32 %v1255, %v2757
      %v2766 = vmul.f32 %v1256, %v2757
      %v2767 = vmul.f32 %v1257, %v2757
      %v2768 = vmul.f32 %v1258, %v2757
      %v2769 = vmul.f32 %v1259, %v2757
      %v2770 = vmul.f32 %v1260, %v2757
      %v2771 = vmul.f32 %v1261, %v2757
      %v2772 = vmul.f32 %v1262, %v2757
      %v2773 = vmul.f32 %v1263, %v2757
      %v2774 = vmul.f32 %v1264, %v2757
      %v2775 = vmul.f32 %v1265, %v2757
      %v2776 = vmul.f32 %v1266, %v2757
      %v2777 = vmul.f32 %v1267, %v2757
      %v2778 = vmul.f32 %v1268, %v2757
      %v2779 = vmul.f32 %v1269, %v2757
      %v2780 = vmul.f32 %v1270, %v2757
      %v2781 = vmul.f32 %v1271, %v2757
      %v2806 = vrot.slane %v2758, 4
      %v2807 = vrot.slane %v2759, 4
      %v2808 = vsel %vm1741, %v2806, %v2807
      %v2809 = vrot.slane %v2760, 4
      %v2810 = vsel %vm1741, %v2807, %v2809
      %v2811 = vrot.slane %v2761, 4
      %v2812 = vrot.slane %v2762, 4
      %v2813 = vsel %vm1741, %v2811, %v2812
      %v2814 = vrot.slane %v2763, 4
      %v2815 = vsel %vm1741, %v2812, %v2814
      %v2816 = vrot.slane %v2764, 4
      %v2817 = vrot.slane %v2765, 4
      %v2818 = vsel %vm1741, %v2816, %v2817
      %v2819 = vrot.slane %v2766, 4
      %v2820 = vsel %vm1741, %v2817, %v2819
      %v2821 = vrot.slane %v2767, 4
      %v2822 = vrot.slane %v2768, 4
      %v2823 = vsel %vm1741, %v2821, %v2822
      %v2824 = vrot.slane %v2769, 4
      %v2825 = vsel %vm1741, %v2822, %v2824
      %v2826 = vrot.slane %v2770, 4
      %v2827 = vrot.slane %v2771, 4
      %v2828 = vsel %vm1741, %v2826, %v2827
      %v2829 = vrot.slane %v2772, 4
      %v2830 = vsel %vm1741, %v2827, %v2829
      %v2831 = vrot.slane %v2773, 4
      %v2832 = vrot.slane %v2774, 4
      %v2833 = vsel %vm1741, %v2831, %v2832
      %v2834 = vrot.slane %v2775, 4
      %v2835 = vsel %vm1741, %v2832, %v2834
      %v2836 = vrot.slane %v2776, 4
      %v2837 = vrot.slane %v2777, 4
      %v2838 = vsel %vm1741, %v2836, %v2837
      %v2839 = vrot.slane %v2778, 4
      %v2840 = vsel %vm1741, %v2837, %v2839
      %v2841 = vrot.slane %v2779, 4
      %v2842 = vrot.slane %v2780, 4
      %v2843 = vsel %vm1741, %v2841, %v2842
      %v2844 = vrot.slane %v2781, 4
      %v2845 = vsel %vm1741, %v2842, %v2844
      %v2862 = vadd.f32 %v2738, %v2808
      %v2863 = vadd.f32 %v2739, %v2810
      %v2864 = vadd.f32 %v2740, %v2813
      %v2865 = vadd.f32 %v2741, %v2815
      %v2866 = vadd.f32 %v2742, %v2818
      %v2867 = vadd.f32 %v2743, %v2820
      %v2868 = vadd.f32 %v2744, %v2823
      %v2869 = vadd.f32 %v2745, %v2825
      %v2870 = vadd.f32 %v2746, %v2828
      %v2871 = vadd.f32 %v2747, %v2830
      %v2872 = vadd.f32 %v2748, %v2833
      %v2873 = vadd.f32 %v2749, %v2835
      %v2874 = vadd.f32 %v2750, %v2838
      %v2875 = vadd.f32 %v2751, %v2840
      %v2876 = vadd.f32 %v2752, %v2843
      %v2877 = vadd.f32 %v2753, %v2845
      %v2878 = vlaneseq
      %v2879 = vshrl.u32 %v2878, 7
      %v2880 = vsub.s32 0, %v2879
      %v2881 = vrot.slane %v518, %v2880
      %v2882 = vmul.f32 %v1251, %v2881
      %v2883 = vmul.f32 %v1252, %v2881
      %v2884 = vmul.f32 %v1254, %v2881
      %v2885 = vmul.f32 %v1255, %v2881
      %v2886 = vmul.f32 %v1257, %v2881
      %v2887 = vmul.f32 %v1258, %v2881
      %v2888 = vmul.f32 %v1260, %v2881
      %v2889 = vmul.f32 %v1261, %v2881
      %v2890 = vmul.f32 %v1263, %v2881
      %v2891 = vmul.f32 %v1264, %v2881
      %v2892 = vmul.f32 %v1266, %v2881
      %v2893 = vmul.f32 %v1267, %v2881
      %v2894 = vmul.f32 %v1269, %v2881
      %v2895 = vmul.f32 %v1270, %v2881
      %v2896 = vmul.f32 %v1272, %v2881
      %v2897 = vmul.f32 %v1273, %v2881
      %v2898 = vadd.f32 %v2862, %v2882
      %v2899 = vadd.f32 %v2863, %v2883
      %v2900 = vadd.f32 %v2864, %v2884
      %v2901 = vadd.f32 %v2865, %v2885
      %v2902 = vadd.f32 %v2866, %v2886
      %v2903 = vadd.f32 %v2867, %v2887
      %v2904 = vadd.f32 %v2868, %v2888
      %v2905 = vadd.f32 %v2869, %v2889
      %v2906 = vadd.f32 %v2870, %v2890
      %v2907 = vadd.f32 %v2871, %v2891
      %v2908 = vadd.f32 %v2872, %v2892
      %v2909 = vadd.f32 %v2873, %v2893
      %v2910 = vadd.f32 %v2874, %v2894
      %v2911 = vadd.f32 %v2875, %v2895
      %v2912 = vadd.f32 %v2876, %v2896
      %v2913 = vadd.f32 %v2877, %v2897
      %v2914 = vlaneseq
      %v2915 = vshrl.u32 %v2914, 7
      %v2916 = vsub.s32 1, %v2915
      %v2917 = vrot.slane %v518, %v2916
      %v2918 = vmul.f32 %v1251, %v2917
      %v2919 = vmul.f32 %v1252, %v2917
      %v2920 = vmul.f32 %v1253, %v2917
      %v2921 = vmul.f32 %v1254, %v2917
      %v2922 = vmul.f32 %v1255, %v2917
      %v2923 = vmul.f32 %v1256, %v2917
      %v2924 = vmul.f32 %v1257, %v2917
      %v2925 = vmul.f32 %v1258, %v2917
      %v2926 = vmul.f32 %v1259, %v2917
      %v2927 = vmul.f32 %v1260, %v2917
      %v2928 = vmul.f32 %v1261, %v2917
      %v2929 = vmul.f32 %v1262, %v2917
      %v2930 = vmul.f32 %v1263, %v2917
      %v2931 = vmul.f32 %v1264, %v2917
      %v2932 = vmul.f32 %v1265, %v2917
      %v2933 = vmul.f32 %v1266, %v2917
      %v2934 = vmul.f32 %v1267, %v2917
      %v2935 = vmul.f32 %v1268, %v2917
      %v2936 = vmul.f32 %v1269, %v2917
      %v2937 = vmul.f32 %v1270, %v2917
      %v2938 = vmul.f32 %v1271, %v2917
      %v2939 = vmul.f32 %v1272, %v2917
      %v2940 = vmul.f32 %v1273, %v2917
      %v2941 = vmul.f32 %v1274, %v2917
      %v2966 = vrot.slane %v2918, 1
      %v2967 = vrot.slane %v2919, 1
      %v2968 = vsel %vm1366, %v2966, %v2967
      %v2969 = vrot.slane %v2920, 1
      %v2970 = vsel %vm1366, %v2967, %v2969
      %v2971 = vrot.slane %v2921, 1
      %v2972 = vrot.slane %v2922, 1
      %v2973 = vsel %vm1366, %v2971, %v2972
      %v2974 = vrot.slane %v2923, 1
      %v2975 = vsel %vm1366, %v2972, %v2974
      %v2976 = vrot.slane %v2924, 1
      %v2977 = vrot.slane %v2925, 1
      %v2978 = vsel %vm1366, %v2976, %v2977
      %v2979 = vrot.slane %v2926, 1
      %v2980 = vsel %vm1366, %v2977, %v2979
      %v2981 = vrot.slane %v2927, 1
      %v2982 = vrot.slane %v2928, 1
      %v2983 = vsel %vm1366, %v2981, %v2982
      %v2984 = vrot.slane %v2929, 1
      %v2985 = vsel %vm1366, %v2982, %v2984
      %v2986 = vrot.slane %v2930, 1
      %v2987 = vrot.slane %v2931, 1
      %v2988 = vsel %vm1366, %v2986, %v2987
      %v2989 = vrot.slane %v2932, 1
      %v2990 = vsel %vm1366, %v2987, %v2989
      %v2991 = vrot.slane %v2933, 1
      %v2992 = vrot.slane %v2934, 1
      %v2993 = vsel %vm1366, %v2991, %v2992
      %v2994 = vrot.slane %v2935, 1
      %v2995 = vsel %vm1366, %v2992, %v2994
      %v2996 = vrot.slane %v2936, 1
      %v2997 = vrot.slane %v2937, 1
      %v2998 = vsel %vm1366, %v2996, %v2997
      %v2999 = vrot.slane %v2938, 1
      %v3000 = vsel %vm1366, %v2997, %v2999
      %v3001 = vrot.slane %v2939, 1
      %v3002 = vrot.slane %v2940, 1
      %v3003 = vsel %vm1366, %v3001, %v3002
      %v3004 = vrot.slane %v2941, 1
      %v3005 = vsel %vm1366, %v3002, %v3004
      %v3022 = vadd.f32 %v2898, %v2968
      %v3023 = vadd.f32 %v2899, %v2970
      %v3024 = vadd.f32 %v2900, %v2973
      %v3025 = vadd.f32 %v2901, %v2975
      %v3026 = vadd.f32 %v2902, %v2978
      %v3027 = vadd.f32 %v2903, %v2980
      %v3028 = vadd.f32 %v2904, %v2983
      %v3029 = vadd.f32 %v2905, %v2985
      %v3030 = vadd.f32 %v2906, %v2988
      %v3031 = vadd.f32 %v2907, %v2990
      %v3032 = vadd.f32 %v2908, %v2993
      %v3033 = vadd.f32 %v2909, %v2995
      %v3034 = vadd.f32 %v2910, %v2998
      %v3035 = vadd.f32 %v2911, %v3000
      %v3036 = vadd.f32 %v2912, %v3003
      %v3037 = vadd.f32 %v2913, %v3005
      %v3038 = vlaneseq
      %v3039 = vshrl.u32 %v3038, 7
      %v3040 = vsub.s32 2, %v3039
      %v3041 = vrot.slane %v518, %v3040
      %v3042 = vmul.f32 %v1251, %v3041
      %v3043 = vmul.f32 %v1252, %v3041
      %v3044 = vmul.f32 %v1253, %v3041
      %v3045 = vmul.f32 %v1254, %v3041
      %v3046 = vmul.f32 %v1255, %v3041
      %v3047 = vmul.f32 %v1256, %v3041
      %v3048 = vmul.f32 %v1257, %v3041
      %v3049 = vmul.f32 %v1258, %v3041
      %v3050 = vmul.f32 %v1259, %v3041
      %v3051 = vmul.f32 %v1260, %v3041
      %v3052 = vmul.f32 %v1261, %v3041
      %v3053 = vmul.f32 %v1262, %v3041
      %v3054 = vmul.f32 %v1263, %v3041
      %v3055 = vmul.f32 %v1264, %v3041
      %v3056 = vmul.f32 %v1265, %v3041
      %v3057 = vmul.f32 %v1266, %v3041
      %v3058 = vmul.f32 %v1267, %v3041
      %v3059 = vmul.f32 %v1268, %v3041
      %v3060 = vmul.f32 %v1269, %v3041
      %v3061 = vmul.f32 %v1270, %v3041
      %v3062 = vmul.f32 %v1271, %v3041
      %v3063 = vmul.f32 %v1272, %v3041
      %v3064 = vmul.f32 %v1273, %v3041
      %v3065 = vmul.f32 %v1274, %v3041
      %v3090 = vrot.slane %v3042, 2
      %v3091 = vrot.slane %v3043, 2
      %v3092 = vsel %vm1491, %v3090, %v3091
      %v3093 = vrot.slane %v3044, 2
      %v3094 = vsel %vm1491, %v3091, %v3093
      %v3095 = vrot.slane %v3045, 2
      %v3096 = vrot.slane %v3046, 2
      %v3097 = vsel %vm1491, %v3095, %v3096
      %v3098 = vrot.slane %v3047, 2
      %v3099 = vsel %vm1491, %v3096, %v3098
      %v3100 = vrot.slane %v3048, 2
      %v3101 = vrot.slane %v3049, 2
      %v3102 = vsel %vm1491, %v3100, %v3101
      %v3103 = vrot.slane %v3050, 2
      %v3104 = vsel %vm1491, %v3101, %v3103
      %v3105 = vrot.slane %v3051, 2
      %v3106 = vrot.slane %v3052, 2
      %v3107 = vsel %vm1491, %v3105, %v3106
      %v3108 = vrot.slane %v3053, 2
      %v3109 = vsel %vm1491, %v3106, %v3108
      %v3110 = vrot.slane %v3054, 2
      %v3111 = vrot.slane %v3055, 2
      %v3112 = vsel %vm1491, %v3110, %v3111
      %v3113 = vrot.slane %v3056, 2
      %v3114 = vsel %vm1491, %v3111, %v3113
      %v3115 = vrot.slane %v3057, 2
      %v3116 = vrot.slane %v3058, 2
      %v3117 = vsel %vm1491, %v3115, %v3116
      %v3118 = vrot.slane %v3059, 2
      %v3119 = vsel %vm1491, %v3116, %v3118
      %v3120 = vrot.slane %v3060, 2
      %v3121 = vrot.slane %v3061, 2
      %v3122 = vsel %vm1491, %v3120, %v3121
      %v3123 = vrot.slane %v3062, 2
      %v3124 = vsel %vm1491, %v3121, %v3123
      %v3125 = vrot.slane %v3063, 2
      %v3126 = vrot.slane %v3064, 2
      %v3127 = vsel %vm1491, %v3125, %v3126
      %v3128 = vrot.slane %v3065, 2
      %v3129 = vsel %vm1491, %v3126, %v3128
      %v3146 = vadd.f32 %v3022, %v3092
      %v3147 = vadd.f32 %v3023, %v3094
      %v3148 = vadd.f32 %v3024, %v3097
      %v3149 = vadd.f32 %v3025, %v3099
      %v3150 = vadd.f32 %v3026, %v3102
      %v3151 = vadd.f32 %v3027, %v3104
      %v3152 = vadd.f32 %v3028, %v3107
      %v3153 = vadd.f32 %v3029, %v3109
      %v3154 = vadd.f32 %v3030, %v3112
      %v3155 = vadd.f32 %v3031, %v3114
      %v3156 = vadd.f32 %v3032, %v3117
      %v3157 = vadd.f32 %v3033, %v3119
      %v3158 = vadd.f32 %v3034, %v3122
      %v3159 = vadd.f32 %v3035, %v3124
      %v3160 = vadd.f32 %v3036, %v3127
      %v3161 = vadd.f32 %v3037, %v3129
      %v3162 = vlaneseq
      %v3163 = vshrl.u32 %v3162, 7
      %v3164 = vsub.s32 3, %v3163
      %v3165 = vrot.slane %v518, %v3164
      %v3166 = vmul.f32 %v1251, %v3165
      %v3167 = vmul.f32 %v1252, %v3165
      %v3168 = vmul.f32 %v1253, %v3165
      %v3169 = vmul.f32 %v1254, %v3165
      %v3170 = vmul.f32 %v1255, %v3165
      %v3171 = vmul.f32 %v1256, %v3165
      %v3172 = vmul.f32 %v1257, %v3165
      %v3173 = vmul.f32 %v1258, %v3165
      %v3174 = vmul.f32 %v1259, %v3165
      %v3175 = vmul.f32 %v1260, %v3165
      %v3176 = vmul.f32 %v1261, %v3165
      %v3177 = vmul.f32 %v1262, %v3165
      %v3178 = vmul.f32 %v1263, %v3165
      %v3179 = vmul.f32 %v1264, %v3165
      %v3180 = vmul.f32 %v1265, %v3165
      %v3181 = vmul.f32 %v1266, %v3165
      %v3182 = vmul.f32 %v1267, %v3165
      %v3183 = vmul.f32 %v1268, %v3165
      %v3184 = vmul.f32 %v1269, %v3165
      %v3185 = vmul.f32 %v1270, %v3165
      %v3186 = vmul.f32 %v1271, %v3165
      %v3187 = vmul.f32 %v1272, %v3165
      %v3188 = vmul.f32 %v1273, %v3165
      %v3189 = vmul.f32 %v1274, %v3165
      %v3214 = vrot.slane %v3166, 3
      %v3215 = vrot.slane %v3167, 3
      %v3216 = vsel %vm1616, %v3214, %v3215
      %v3217 = vrot.slane %v3168, 3
      %v3218 = vsel %vm1616, %v3215, %v3217
      %v3219 = vrot.slane %v3169, 3
      %v3220 = vrot.slane %v3170, 3
      %v3221 = vsel %vm1616, %v3219, %v3220
      %v3222 = vrot.slane %v3171, 3
      %v3223 = vsel %vm1616, %v3220, %v3222
      %v3224 = vrot.slane %v3172, 3
      %v3225 = vrot.slane %v3173, 3
      %v3226 = vsel %vm1616, %v3224, %v3225
      %v3227 = vrot.slane %v3174, 3
      %v3228 = vsel %vm1616, %v3225, %v3227
      %v3229 = vrot.slane %v3175, 3
      %v3230 = vrot.slane %v3176, 3
      %v3231 = vsel %vm1616, %v3229, %v3230
      %v3232 = vrot.slane %v3177, 3
      %v3233 = vsel %vm1616, %v3230, %v3232
      %v3234 = vrot.slane %v3178, 3
      %v3235 = vrot.slane %v3179, 3
      %v3236 = vsel %vm1616, %v3234, %v3235
      %v3237 = vrot.slane %v3180, 3
      %v3238 = vsel %vm1616, %v3235, %v3237
      %v3239 = vrot.slane %v3181, 3
      %v3240 = vrot.slane %v3182, 3
      %v3241 = vsel %vm1616, %v3239, %v3240
      %v3242 = vrot.slane %v3183, 3
      %v3243 = vsel %vm1616, %v3240, %v3242
      %v3244 = vrot.slane %v3184, 3
      %v3245 = vrot.slane %v3185, 3
      %v3246 = vsel %vm1616, %v3244, %v3245
      %v3247 = vrot.slane %v3186, 3
      %v3248 = vsel %vm1616, %v3245, %v3247
      %v3249 = vrot.slane %v3187, 3
      %v3250 = vrot.slane %v3188, 3
      %v3251 = vsel %vm1616, %v3249, %v3250
      %v3252 = vrot.slane %v3189, 3
      %v3253 = vsel %vm1616, %v3250, %v3252
      %v3270 = vadd.f32 %v3146, %v3216
      %v3271 = vadd.f32 %v3147, %v3218
      %v3272 = vadd.f32 %v3148, %v3221
      %v3273 = vadd.f32 %v3149, %v3223
      %v3274 = vadd.f32 %v3150, %v3226
      %v3275 = vadd.f32 %v3151, %v3228
      %v3276 = vadd.f32 %v3152, %v3231
      %v3277 = vadd.f32 %v3153, %v3233
      %v3278 = vadd.f32 %v3154, %v3236
      %v3279 = vadd.f32 %v3155, %v3238
      %v3280 = vadd.f32 %v3156, %v3241
      %v3281 = vadd.f32 %v3157, %v3243
      %v3282 = vadd.f32 %v3158, %v3246
      %v3283 = vadd.f32 %v3159, %v3248
      %v3284 = vadd.f32 %v3160, %v3251
      %v3285 = vadd.f32 %v3161, %v3253
      %v3286 = vlaneseq
      %v3287 = vshrl.u32 %v3286, 7
      %v3288 = vsub.s32 4, %v3287
      %v3289 = vrot.slane %v518, %v3288
      %v3290 = vmul.f32 %v1251, %v3289
      %v3291 = vmul.f32 %v1252, %v3289
      %v3292 = vmul.f32 %v1253, %v3289
      %v3293 = vmul.f32 %v1254, %v3289
      %v3294 = vmul.f32 %v1255, %v3289
      %v3295 = vmul.f32 %v1256, %v3289
      %v3296 = vmul.f32 %v1257, %v3289
      %v3297 = vmul.f32 %v1258, %v3289
      %v3298 = vmul.f32 %v1259, %v3289
      %v3299 = vmul.f32 %v1260, %v3289
      %v3300 = vmul.f32 %v1261, %v3289
      %v3301 = vmul.f32 %v1262, %v3289
      %v3302 = vmul.f32 %v1263, %v3289
      %v3303 = vmul.f32 %v1264, %v3289
      %v3304 = vmul.f32 %v1265, %v3289
      %v3305 = vmul.f32 %v1266, %v3289
      %v3306 = vmul.f32 %v1267, %v3289
      %v3307 = vmul.f32 %v1268, %v3289
      %v3308 = vmul.f32 %v1269, %v3289
      %v3309 = vmul.f32 %v1270, %v3289
      %v3310 = vmul.f32 %v1271, %v3289
      %v3311 = vmul.f32 %v1272, %v3289
      %v3312 = vmul.f32 %v1273, %v3289
      %v3313 = vmul.f32 %v1274, %v3289
      %v3338 = vrot.slane %v3290, 4
      %v3339 = vrot.slane %v3291, 4
      %v3340 = vsel %vm1741, %v3338, %v3339
      %v3341 = vrot.slane %v3292, 4
      %v3342 = vsel %vm1741, %v3339, %v3341
      %v3343 = vrot.slane %v3293, 4
      %v3344 = vrot.slane %v3294, 4
      %v3345 = vsel %vm1741, %v3343, %v3344
      %v3346 = vrot.slane %v3295, 4
      %v3347 = vsel %vm1741, %v3344, %v3346
      %v3348 = vrot.slane %v3296, 4
      %v3349 = vrot.slane %v3297, 4
      %v3350 = vsel %vm1741, %v3348, %v3349
      %v3351 = vrot.slane %v3298, 4
      %v3352 = vsel %vm1741, %v3349, %v3351
      %v3353 = vrot.slane %v3299, 4
      %v3354 = vrot.slane %v3300, 4
      %v3355 = vsel %vm1741, %v3353, %v3354
      %v3356 = vrot.slane %v3301, 4
      %v3357 = vsel %vm1741, %v3354, %v3356
      %v3358 = vrot.slane %v3302, 4
      %v3359 = vrot.slane %v3303, 4
      %v3360 = vsel %vm1741, %v3358, %v3359
      %v3361 = vrot.slane %v3304, 4
      %v3362 = vsel %vm1741, %v3359, %v3361
      %v3363 = vrot.slane %v3305, 4
      %v3364 = vrot.slane %v3306, 4
      %v3365 = vsel %vm1741, %v3363, %v3364
      %v3366 = vrot.slane %v3307, 4
      %v3367 = vsel %vm1741, %v3364, %v3366
      %v3368 = vrot.slane %v3308, 4
      %v3369 = vrot.slane %v3309, 4
      %v3370 = vsel %vm1741, %v3368, %v3369
      %v3371 = vrot.slane %v3310, 4
      %v3372 = vsel %vm1741, %v3369, %v3371
      %v3373 = vrot.slane %v3311, 4
      %v3374 = vrot.slane %v3312, 4
      %v3375 = vsel %vm1741, %v3373, %v3374
      %v3376 = vrot.slane %v3313, 4
      %v3377 = vsel %vm1741, %v3374, %v3376
      %v3394 = vadd.f32 %v3270, %v3340
      %v3395 = vadd.f32 %v3271, %v3342
      %v3396 = vadd.f32 %v3272, %v3345
      %v3397 = vadd.f32 %v3273, %v3347
      %v3398 = vadd.f32 %v3274, %v3350
      %v3399 = vadd.f32 %v3275, %v3352
      %v3400 = vadd.f32 %v3276, %v3355
      %v3401 = vadd.f32 %v3277, %v3357
      %v3402 = vadd.f32 %v3278, %v3360
      %v3403 = vadd.f32 %v3279, %v3362
      %v3404 = vadd.f32 %v3280, %v3365
      %v3405 = vadd.f32 %v3281, %v3367
      %v3406 = vadd.f32 %v3282, %v3370
      %v3407 = vadd.f32 %v3283, %v3372
      %v3408 = vadd.f32 %v3284, %v3375
      %v3409 = vadd.f32 %v3285, %v3377
      %v3410 = vlaneseq
      %v3411 = vshrl.u32 %v3410, 7
      %v3412 = vsub.s32 0, %v3411
      %v3413 = vrot.slane %v519, %v3412
      %v3414 = vmul.f32 %v1254, %v3413
      %v3415 = vmul.f32 %v1255, %v3413
      %v3416 = vmul.f32 %v1257, %v3413
      %v3417 = vmul.f32 %v1258, %v3413
      %v3418 = vmul.f32 %v1260, %v3413
      %v3419 = vmul.f32 %v1261, %v3413
      %v3420 = vmul.f32 %v1263, %v3413
      %v3421 = vmul.f32 %v1264, %v3413
      %v3422 = vmul.f32 %v1266, %v3413
      %v3423 = vmul.f32 %v1267, %v3413
      %v3424 = vmul.f32 %v1269, %v3413
      %v3425 = vmul.f32 %v1270, %v3413
      %v3426 = vmul.f32 %v1272, %v3413
      %v3427 = vmul.f32 %v1273, %v3413
      %v3428 = vmul.f32 %v1275, %v3413
      %v3429 = vmul.f32 %v1276, %v3413
      %v3430 = vadd.f32 %v3394, %v3414
      %v3431 = vadd.f32 %v3395, %v3415
      %v3432 = vadd.f32 %v3396, %v3416
      %v3433 = vadd.f32 %v3397, %v3417
      %v3434 = vadd.f32 %v3398, %v3418
      %v3435 = vadd.f32 %v3399, %v3419
      %v3436 = vadd.f32 %v3400, %v3420
      %v3437 = vadd.f32 %v3401, %v3421
      %v3438 = vadd.f32 %v3402, %v3422
      %v3439 = vadd.f32 %v3403, %v3423
      %v3440 = vadd.f32 %v3404, %v3424
      %v3441 = vadd.f32 %v3405, %v3425
      %v3442 = vadd.f32 %v3406, %v3426
      %v3443 = vadd.f32 %v3407, %v3427
      %v3444 = vadd.f32 %v3408, %v3428
      %v3445 = vadd.f32 %v3409, %v3429
      %v3446 = vlaneseq
      %v3447 = vshrl.u32 %v3446, 7
      %v3448 = vsub.s32 1, %v3447
      %v3449 = vrot.slane %v519, %v3448
      %v3450 = vmul.f32 %v1254, %v3449
      %v3451 = vmul.f32 %v1255, %v3449
      %v3452 = vmul.f32 %v1256, %v3449
      %v3453 = vmul.f32 %v1257, %v3449
      %v3454 = vmul.f32 %v1258, %v3449
      %v3455 = vmul.f32 %v1259, %v3449
      %v3456 = vmul.f32 %v1260, %v3449
      %v3457 = vmul.f32 %v1261, %v3449
      %v3458 = vmul.f32 %v1262, %v3449
      %v3459 = vmul.f32 %v1263, %v3449
      %v3460 = vmul.f32 %v1264, %v3449
      %v3461 = vmul.f32 %v1265, %v3449
      %v3462 = vmul.f32 %v1266, %v3449
      %v3463 = vmul.f32 %v1267, %v3449
      %v3464 = vmul.f32 %v1268, %v3449
      %v3465 = vmul.f32 %v1269, %v3449
      %v3466 = vmul.f32 %v1270, %v3449
      %v3467 = vmul.f32 %v1271, %v3449
      %v3468 = vmul.f32 %v1272, %v3449
      %v3469 = vmul.f32 %v1273, %v3449
      %v3470 = vmul.f32 %v1274, %v3449
      %v3471 = vmul.f32 %v1275, %v3449
      %v3472 = vmul.f32 %v1276, %v3449
      %v3473 = vmul.f32 %v1277, %v3449
      %v3498 = vrot.slane %v3450, 1
      %v3499 = vrot.slane %v3451, 1
      %v3500 = vsel %vm1366, %v3498, %v3499
      %v3501 = vrot.slane %v3452, 1
      %v3502 = vsel %vm1366, %v3499, %v3501
      %v3503 = vrot.slane %v3453, 1
      %v3504 = vrot.slane %v3454, 1
      %v3505 = vsel %vm1366, %v3503, %v3504
      %v3506 = vrot.slane %v3455, 1
      %v3507 = vsel %vm1366, %v3504, %v3506
      %v3508 = vrot.slane %v3456, 1
      %v3509 = vrot.slane %v3457, 1
      %v3510 = vsel %vm1366, %v3508, %v3509
      %v3511 = vrot.slane %v3458, 1
      %v3512 = vsel %vm1366, %v3509, %v3511
      %v3513 = vrot.slane %v3459, 1
      %v3514 = vrot.slane %v3460, 1
      %v3515 = vsel %vm1366, %v3513, %v3514
      %v3516 = vrot.slane %v3461, 1
      %v3517 = vsel %vm1366, %v3514, %v3516
      %v3518 = vrot.slane %v3462, 1
      %v3519 = vrot.slane %v3463, 1
      %v3520 = vsel %vm1366, %v3518, %v3519
      %v3521 = vrot.slane %v3464, 1
      %v3522 = vsel %vm1366, %v3519, %v3521
      %v3523 = vrot.slane %v3465, 1
      %v3524 = vrot.slane %v3466, 1
      %v3525 = vsel %vm1366, %v3523, %v3524
      %v3526 = vrot.slane %v3467, 1
      %v3527 = vsel %vm1366, %v3524, %v3526
      %v3528 = vrot.slane %v3468, 1
      %v3529 = vrot.slane %v3469, 1
      %v3530 = vsel %vm1366, %v3528, %v3529
      %v3531 = vrot.slane %v3470, 1
      %v3532 = vsel %vm1366, %v3529, %v3531
      %v3533 = vrot.slane %v3471, 1
      %v3534 = vrot.slane %v3472, 1
      %v3535 = vsel %vm1366, %v3533, %v3534
      %v3536 = vrot.slane %v3473, 1
      %v3537 = vsel %vm1366, %v3534, %v3536
      %v3554 = vadd.f32 %v3430, %v3500
      %v3555 = vadd.f32 %v3431, %v3502
      %v3556 = vadd.f32 %v3432, %v3505
      %v3557 = vadd.f32 %v3433, %v3507
      %v3558 = vadd.f32 %v3434, %v3510
      %v3559 = vadd.f32 %v3435, %v3512
      %v3560 = vadd.f32 %v3436, %v3515
      %v3561 = vadd.f32 %v3437, %v3517
      %v3562 = vadd.f32 %v3438, %v3520
      %v3563 = vadd.f32 %v3439, %v3522
      %v3564 = vadd.f32 %v3440, %v3525
      %v3565 = vadd.f32 %v3441, %v3527
      %v3566 = vadd.f32 %v3442, %v3530
      %v3567 = vadd.f32 %v3443, %v3532
      %v3568 = vadd.f32 %v3444, %v3535
      %v3569 = vadd.f32 %v3445, %v3537
      %v3570 = vlaneseq
      %v3571 = vshrl.u32 %v3570, 7
      %v3572 = vsub.s32 2, %v3571
      %v3573 = vrot.slane %v519, %v3572
      %v3574 = vmul.f32 %v1254, %v3573
      %v3575 = vmul.f32 %v1255, %v3573
      %v3576 = vmul.f32 %v1256, %v3573
      %v3577 = vmul.f32 %v1257, %v3573
      %v3578 = vmul.f32 %v1258, %v3573
      %v3579 = vmul.f32 %v1259, %v3573
      %v3580 = vmul.f32 %v1260, %v3573
      %v3581 = vmul.f32 %v1261, %v3573
      %v3582 = vmul.f32 %v1262, %v3573
      %v3583 = vmul.f32 %v1263, %v3573
      %v3584 = vmul.f32 %v1264, %v3573
      %v3585 = vmul.f32 %v1265, %v3573
      %v3586 = vmul.f32 %v1266, %v3573
      %v3587 = vmul.f32 %v1267, %v3573
      %v3588 = vmul.f32 %v1268, %v3573
      %v3589 = vmul.f32 %v1269, %v3573
      %v3590 = vmul.f32 %v1270, %v3573
      %v3591 = vmul.f32 %v1271, %v3573
      %v3592 = vmul.f32 %v1272, %v3573
      %v3593 = vmul.f32 %v1273, %v3573
      %v3594 = vmul.f32 %v1274, %v3573
      %v3595 = vmul.f32 %v1275, %v3573
      %v3596 = vmul.f32 %v1276, %v3573
      %v3597 = vmul.f32 %v1277, %v3573
      %v3622 = vrot.slane %v3574, 2
      %v3623 = vrot.slane %v3575, 2
      %v3624 = vsel %vm1491, %v3622, %v3623
      %v3625 = vrot.slane %v3576, 2
      %v3626 = vsel %vm1491, %v3623, %v3625
      %v3627 = vrot.slane %v3577, 2
      %v3628 = vrot.slane %v3578, 2
      %v3629 = vsel %vm1491, %v3627, %v3628
      %v3630 = vrot.slane %v3579, 2
      %v3631 = vsel %vm1491, %v3628, %v3630
      %v3632 = vrot.slane %v3580, 2
      %v3633 = vrot.slane %v3581, 2
      %v3634 = vsel %vm1491, %v3632, %v3633
      %v3635 = vrot.slane %v3582, 2
      %v3636 = vsel %vm1491, %v3633, %v3635
      %v3637 = vrot.slane %v3583, 2
      %v3638 = vrot.slane %v3584, 2
      %v3639 = vsel %vm1491, %v3637, %v3638
      %v3640 = vrot.slane %v3585, 2
      %v3641 = vsel %vm1491, %v3638, %v3640
      %v3642 = vrot.slane %v3586, 2
      %v3643 = vrot.slane %v3587, 2
      %v3644 = vsel %vm1491, %v3642, %v3643
      %v3645 = vrot.slane %v3588, 2
      %v3646 = vsel %vm1491, %v3643, %v3645
      %v3647 = vrot.slane %v3589, 2
      %v3648 = vrot.slane %v3590, 2
      %v3649 = vsel %vm1491, %v3647, %v3648
      %v3650 = vrot.slane %v3591, 2
      %v3651 = vsel %vm1491, %v3648, %v3650
      %v3652 = vrot.slane %v3592, 2
      %v3653 = vrot.slane %v3593, 2
      %v3654 = vsel %vm1491, %v3652, %v3653
      %v3655 = vrot.slane %v3594, 2
      %v3656 = vsel %vm1491, %v3653, %v3655
      %v3657 = vrot.slane %v3595, 2
      %v3658 = vrot.slane %v3596, 2
      %v3659 = vsel %vm1491, %v3657, %v3658
      %v3660 = vrot.slane %v3597, 2
      %v3661 = vsel %vm1491, %v3658, %v3660
      %v3678 = vadd.f32 %v3554, %v3624
      %v3679 = vadd.f32 %v3555, %v3626
      %v3680 = vadd.f32 %v3556, %v3629
      %v3681 = vadd.f32 %v3557, %v3631
      %v3682 = vadd.f32 %v3558, %v3634
      %v3683 = vadd.f32 %v3559, %v3636
      %v3684 = vadd.f32 %v3560, %v3639
      %v3685 = vadd.f32 %v3561, %v3641
      %v3686 = vadd.f32 %v3562, %v3644
      %v3687 = vadd.f32 %v3563, %v3646
      %v3688 = vadd.f32 %v3564, %v3649
      %v3689 = vadd.f32 %v3565, %v3651
      %v3690 = vadd.f32 %v3566, %v3654
      %v3691 = vadd.f32 %v3567, %v3656
      %v3692 = vadd.f32 %v3568, %v3659
      %v3693 = vadd.f32 %v3569, %v3661
      %v3694 = vlaneseq
      %v3695 = vshrl.u32 %v3694, 7
      %v3696 = vsub.s32 3, %v3695
      %v3697 = vrot.slane %v519, %v3696
      %v3698 = vmul.f32 %v1254, %v3697
      %v3699 = vmul.f32 %v1255, %v3697
      %v3700 = vmul.f32 %v1256, %v3697
      %v3701 = vmul.f32 %v1257, %v3697
      %v3702 = vmul.f32 %v1258, %v3697
      %v3703 = vmul.f32 %v1259, %v3697
      %v3704 = vmul.f32 %v1260, %v3697
      %v3705 = vmul.f32 %v1261, %v3697
      %v3706 = vmul.f32 %v1262, %v3697
      %v3707 = vmul.f32 %v1263, %v3697
      %v3708 = vmul.f32 %v1264, %v3697
      %v3709 = vmul.f32 %v1265, %v3697
      %v3710 = vmul.f32 %v1266, %v3697
      %v3711 = vmul.f32 %v1267, %v3697
      %v3712 = vmul.f32 %v1268, %v3697
      %v3713 = vmul.f32 %v1269, %v3697
      %v3714 = vmul.f32 %v1270, %v3697
      %v3715 = vmul.f32 %v1271, %v3697
      %v3716 = vmul.f32 %v1272, %v3697
      %v3717 = vmul.f32 %v1273, %v3697
      %v3718 = vmul.f32 %v1274, %v3697
      %v3719 = vmul.f32 %v1275, %v3697
      %v3720 = vmul.f32 %v1276, %v3697
      %v3721 = vmul.f32 %v1277, %v3697
      %v3746 = vrot.slane %v3698, 3
      %v3747 = vrot.slane %v3699, 3
      %v3748 = vsel %vm1616, %v3746, %v3747
      %v3749 = vrot.slane %v3700, 3
      %v3750 = vsel %vm1616, %v3747, %v3749
      %v3751 = vrot.slane %v3701, 3
      %v3752 = vrot.slane %v3702, 3
      %v3753 = vsel %vm1616, %v3751, %v3752
      %v3754 = vrot.slane %v3703, 3
      %v3755 = vsel %vm1616, %v3752, %v3754
      %v3756 = vrot.slane %v3704, 3
      %v3757 = vrot.slane %v3705, 3
      %v3758 = vsel %vm1616, %v3756, %v3757
      %v3759 = vrot.slane %v3706, 3
      %v3760 = vsel %vm1616, %v3757, %v3759
      %v3761 = vrot.slane %v3707, 3
      %v3762 = vrot.slane %v3708, 3
      %v3763 = vsel %vm1616, %v3761, %v3762
      %v3764 = vrot.slane %v3709, 3
      %v3765 = vsel %vm1616, %v3762, %v3764
      %v3766 = vrot.slane %v3710, 3
      %v3767 = vrot.slane %v3711, 3
      %v3768 = vsel %vm1616, %v3766, %v3767
      %v3769 = vrot.slane %v3712, 3
      %v3770 = vsel %vm1616, %v3767, %v3769
      %v3771 = vrot.slane %v3713, 3
      %v3772 = vrot.slane %v3714, 3
      %v3773 = vsel %vm1616, %v3771, %v3772
      %v3774 = vrot.slane %v3715, 3
      %v3775 = vsel %vm1616, %v3772, %v3774
      %v3776 = vrot.slane %v3716, 3
      %v3777 = vrot.slane %v3717, 3
      %v3778 = vsel %vm1616, %v3776, %v3777
      %v3779 = vrot.slane %v3718, 3
      %v3780 = vsel %vm1616, %v3777, %v3779
      %v3781 = vrot.slane %v3719, 3
      %v3782 = vrot.slane %v3720, 3
      %v3783 = vsel %vm1616, %v3781, %v3782
      %v3784 = vrot.slane %v3721, 3
      %v3785 = vsel %vm1616, %v3782, %v3784
      %v3802 = vadd.f32 %v3678, %v3748
      %v3803 = vadd.f32 %v3679, %v3750
      %v3804 = vadd.f32 %v3680, %v3753
      %v3805 = vadd.f32 %v3681, %v3755
      %v3806 = vadd.f32 %v3682, %v3758
      %v3807 = vadd.f32 %v3683, %v3760
      %v3808 = vadd.f32 %v3684, %v3763
      %v3809 = vadd.f32 %v3685, %v3765
      %v3810 = vadd.f32 %v3686, %v3768
      %v3811 = vadd.f32 %v3687, %v3770
      %v3812 = vadd.f32 %v3688, %v3773
      %v3813 = vadd.f32 %v3689, %v3775
      %v3814 = vadd.f32 %v3690, %v3778
      %v3815 = vadd.f32 %v3691, %v3780
      %v3816 = vadd.f32 %v3692, %v3783
      %v3817 = vadd.f32 %v3693, %v3785
      %v3818 = vlaneseq
      %v3819 = vshrl.u32 %v3818, 7
      %v3820 = vsub.s32 4, %v3819
      %v3821 = vrot.slane %v519, %v3820
      %v3822 = vmul.f32 %v1254, %v3821
      %v3823 = vmul.f32 %v1255, %v3821
      %v3824 = vmul.f32 %v1256, %v3821
      %v3825 = vmul.f32 %v1257, %v3821
      %v3826 = vmul.f32 %v1258, %v3821
      %v3827 = vmul.f32 %v1259, %v3821
      %v3828 = vmul.f32 %v1260, %v3821
      %v3829 = vmul.f32 %v1261, %v3821
      %v3830 = vmul.f32 %v1262, %v3821
      %v3831 = vmul.f32 %v1263, %v3821
      %v3832 = vmul.f32 %v1264, %v3821
      %v3833 = vmul.f32 %v1265, %v3821
      %v3834 = vmul.f32 %v1266, %v3821
      %v3835 = vmul.f32 %v1267, %v3821
      %v3836 = vmul.f32 %v1268, %v3821
      %v3837 = vmul.f32 %v1269, %v3821
      %v3838 = vmul.f32 %v1270, %v3821
      %v3839 = vmul.f32 %v1271, %v3821
      %v3840 = vmul.f32 %v1272, %v3821
      %v3841 = vmul.f32 %v1273, %v3821
      %v3842 = vmul.f32 %v1274, %v3821
      %v3843 = vmul.f32 %v1275, %v3821
      %v3844 = vmul.f32 %v1276, %v3821
      %v3845 = vmul.f32 %v1277, %v3821
      %v3870 = vrot.slane %v3822, 4
      %v3871 = vrot.slane %v3823, 4
      %v3872 = vsel %vm1741, %v3870, %v3871
      %v3873 = vrot.slane %v3824, 4
      %v3874 = vsel %vm1741, %v3871, %v3873
      %v3875 = vrot.slane %v3825, 4
      %v3876 = vrot.slane %v3826, 4
      %v3877 = vsel %vm1741, %v3875, %v3876
      %v3878 = vrot.slane %v3827, 4
      %v3879 = vsel %vm1741, %v3876, %v3878
      %v3880 = vrot.slane %v3828, 4
      %v3881 = vrot.slane %v3829, 4
      %v3882 = vsel %vm1741, %v3880, %v3881
      %v3883 = vrot.slane %v3830, 4
      %v3884 = vsel %vm1741, %v3881, %v3883
      %v3885 = vrot.slane %v3831, 4
      %v3886 = vrot.slane %v3832, 4
      %v3887 = vsel %vm1741, %v3885, %v3886
      %v3888 = vrot.slane %v3833, 4
      %v3889 = vsel %vm1741, %v3886, %v3888
      %v3890 = vrot.slane %v3834, 4
      %v3891 = vrot.slane %v3835, 4
      %v3892 = vsel %vm1741, %v3890, %v3891
      %v3893 = vrot.slane %v3836, 4
      %v3894 = vsel %vm1741, %v3891, %v3893
      %v3895 = vrot.slane %v3837, 4
      %v3896 = vrot.slane %v3838, 4
      %v3897 = vsel %vm1741, %v3895, %v3896
      %v3898 = vrot.slane %v3839, 4
      %v3899 = vsel %vm1741, %v3896, %v3898
      %v3900 = vrot.slane %v3840, 4
      %v3901 = vrot.slane %v3841, 4
      %v3902 = vsel %vm1741, %v3900, %v3901
      %v3903 = vrot.slane %v3842, 4
      %v3904 = vsel %vm1741, %v3901, %v3903
      %v3905 = vrot.slane %v3843, 4
      %v3906 = vrot.slane %v3844, 4
      %v3907 = vsel %vm1741, %v3905, %v3906
      %v3908 = vrot.slane %v3845, 4
      %v3909 = vsel %vm1741, %v3906, %v3908
      %v3926 = vadd.f32 %v3802, %v3872
      %v3927 = vadd.f32 %v3803, %v3874
      %v3928 = vadd.f32 %v3804, %v3877
      %v3929 = vadd.f32 %v3805, %v3879
      %v3930 = vadd.f32 %v3806, %v3882
      %v3931 = vadd.f32 %v3807, %v3884
      %v3932 = vadd.f32 %v3808, %v3887
      %v3933 = vadd.f32 %v3809, %v3889
      %v3934 = vadd.f32 %v3810, %v3892
      %v3935 = vadd.f32 %v3811, %v3894
      %v3936 = vadd.f32 %v3812, %v3897
      %v3937 = vadd.f32 %v3813, %v3899
      %v3938 = vadd.f32 %v3814, %v3902
      %v3939 = vadd.f32 %v3815, %v3904
      %v3940 = vadd.f32 %v3816, %v3907
      %v3941 = vadd.f32 %v3817, %v3909
      %v3943 = vlaneseq
      %v3944 = vshrl.u32 %v3943, 7
      %v3945 = vsub.s32 0, %v3944
      %v3946 = vrot.slane %v520, %v3945
      %v3948 = vmul.f32 %v3926, %v3946
      %v3949 = vmul.f32 %v3927, %v3946
      %v3950 = vmul.f32 %v3928, %v3946
      %v3951 = vmul.f32 %v3929, %v3946
      %v3952 = vmul.f32 %v3930, %v3946
      %v3953 = vmul.f32 %v3931, %v3946
      %v3954 = vmul.f32 %v3932, %v3946
      %v3955 = vmul.f32 %v3933, %v3946
      %v3956 = vmul.f32 %v3934, %v3946
      %v3957 = vmul.f32 %v3935, %v3946
      %v3958 = vmul.f32 %v3936, %v3946
      %v3959 = vmul.f32 %v3937, %v3946
      %v3960 = vmul.f32 %v3938, %v3946
      %v3961 = vmul.f32 %v3939, %v3946
      %v3962 = vmul.f32 %v3940, %v3946
      %v3963 = vmul.f32 %v3941, %v3946
      %v3965 = vlaneseq
      %v3966 = vshrl.u32 %v3965, 7
      %v3967 = vsub.s32 0, %v3966
      %v3968 = vrot.slane %v521, %v3967
      %v3970 = vadd.f32 %v3948, %v3968
      %v3971 = vadd.f32 %v3949, %v3968
      %v3972 = vadd.f32 %v3950, %v3968
      %v3973 = vadd.f32 %v3951, %v3968
      %v3974 = vadd.f32 %v3952, %v3968
      %v3975 = vadd.f32 %v3953, %v3968
      %v3976 = vadd.f32 %v3954, %v3968
      %v3977 = vadd.f32 %v3955, %v3968
      %v3978 = vadd.f32 %v3956, %v3968
      %v3979 = vadd.f32 %v3957, %v3968
      %v3980 = vadd.f32 %v3958, %v3968
      %v3981 = vadd.f32 %v3959, %v3968
      %v3982 = vadd.f32 %v3960, %v3968
      %v3983 = vadd.f32 %v3961, %v3968
      %v3984 = vadd.f32 %v3962, %v3968
      %v3985 = vadd.f32 %v3963, %v3968
      %v3986 = vxor.u32 %v3970, 2147483648
      %v3987 = vxor.u32 %v3971, 2147483648
      %v3988 = vxor.u32 %v3972, 2147483648
      %v3989 = vxor.u32 %v3973, 2147483648
      %v3990 = vxor.u32 %v3974, 2147483648
      %v3991 = vxor.u32 %v3975, 2147483648
      %v3992 = vxor.u32 %v3976, 2147483648
      %v3993 = vxor.u32 %v3977, 2147483648
      %v3994 = vxor.u32 %v3978, 2147483648
      %v3995 = vxor.u32 %v3979, 2147483648
      %v3996 = vxor.u32 %v3980, 2147483648
      %v3997 = vxor.u32 %v3981, 2147483648
      %v3998 = vxor.u32 %v3982, 2147483648
      %v3999 = vxor.u32 %v3983, 2147483648
      %v4000 = vxor.u32 %v3984, 2147483648
      %v4001 = vxor.u32 %v3985, 2147483648
      %v4002 = vmul.f32 %v3986, 1.442695
      %v4003 = vpow.pop %v4002
      %v4004 = vmul.f32 %v3987, 1.442695
      %v4005 = vpow.pop %v4004
      %v4006 = vmul.f32 %v3988, 1.442695
      %v4007 = vpow.pop %v4006
      %v4008 = vmul.f32 %v3989, 1.442695
      %v4009 = vpow.pop %v4008
      %v4010 = vmul.f32 %v3990, 1.442695
      %v4011 = vpow.pop %v4010
      %v4012 = vmul.f32 %v3991, 1.442695
      %v4013 = vpow.pop %v4012
      %v4014 = vmul.f32 %v3992, 1.442695
      %v4015 = vpow.pop %v4014
      %v4016 = vmul.f32 %v3993, 1.442695
      %v4017 = vpow.pop %v4016
      %v4018 = vmul.f32 %v3994, 1.442695
      %v4019 = vpow.pop %v4018
      %v4020 = vmul.f32 %v3995, 1.442695
      %v4021 = vpow.pop %v4020
      %v4022 = vmul.f32 %v3996, 1.442695
      %v4023 = vpow.pop %v4022
      %v4024 = vmul.f32 %v3997, 1.442695
      %v4025 = vpow.pop %v4024
      %v4026 = vmul.f32 %v3998, 1.442695
      %v4027 = vpow.pop %v4026
      %v4028 = vmul.f32 %v3999, 1.442695
      %v4029 = vpow.pop %v4028
      %v4030 = vmul.f32 %v4000, 1.442695
      %v4031 = vpow.pop %v4030
      %v4032 = vmul.f32 %v4001, 1.442695
      %v4033 = vpow.pop %v4032
      %v4034 = vadd.f32 %v4003, 1.0
      %v4035 = vadd.f32 %v4005, 1.0
      %v4036 = vadd.f32 %v4007, 1.0
      %v4037 = vadd.f32 %v4009, 1.0
      %v4038 = vadd.f32 %v4011, 1.0
      %v4039 = vadd.f32 %v4013, 1.0
      %v4040 = vadd.f32 %v4015, 1.0
      %v4041 = vadd.f32 %v4017, 1.0
      %v4042 = vadd.f32 %v4019, 1.0
      %v4043 = vadd.f32 %v4021, 1.0
      %v4044 = vadd.f32 %v4023, 1.0
      %v4045 = vadd.f32 %v4025, 1.0
      %v4046 = vadd.f32 %v4027, 1.0
      %v4047 = vadd.f32 %v4029, 1.0
      %v4048 = vadd.f32 %v4031, 1.0
      %v4049 = vadd.f32 %v4033, 1.0
      %v4050 = vrcp.pop %v4034
      %v4051 = vmul.f32 1.0, %v4050
      %v4052 = vrcp.pop %v4035
      %v4053 = vmul.f32 1.0, %v4052
      %v4054 = vrcp.pop %v4036
      %v4055 = vmul.f32 1.0, %v4054
      %v4056 = vrcp.pop %v4037
      %v4057 = vmul.f32 1.0, %v4056
      %v4058 = vrcp.pop %v4038
      %v4059 = vmul.f32 1.0, %v4058
      %v4060 = vrcp.pop %v4039
      %v4061 = vmul.f32 1.0, %v4060
      %v4062 = vrcp.pop %v4040
      %v4063 = vmul.f32 1.0, %v4062
      %v4064 = vrcp.pop %v4041
      %v4065 = vmul.f32 1.0, %v4064
      %v4066 = vrcp.pop %v4042
      %v4067 = vmul.f32 1.0, %v4066
      %v4068 = vrcp.pop %v4043
      %v4069 = vmul.f32 1.0, %v4068
      %v4070 = vrcp.pop %v4044
      %v4071 = vmul.f32 1.0, %v4070
      %v4072 = vrcp.pop %v4045
      %v4073 = vmul.f32 1.0, %v4072
      %v4074 = vrcp.pop %v4046
      %v4075 = vmul.f32 1.0, %v4074
      %v4076 = vrcp.pop %v4047
      %v4077 = vmul.f32 1.0, %v4076
      %v4078 = vrcp.pop %v4048
      %v4079 = vmul.f32 1.0, %v4078
      %v4080 = vrcp.pop %v4049
      %v4081 = vmul.f32 1.0, %v4080
      %v4082 = vmul.f32 %v3970, %v4051
      %v4083 = vmul.f32 %v3971, %v4053
      %v4084 = vmul.f32 %v3972, %v4055
      %v4085 = vmul.f32 %v3973, %v4057
      %v4086 = vmul.f32 %v3974, %v4059
      %v4087 = vmul.f32 %v3975, %v4061
      %v4088 = vmul.f32 %v3976, %v4063
      %v4089 = vmul.f32 %v3977, %v4065
      %v4090 = vmul.f32 %v3978, %v4067
      %v4091 = vmul.f32 %v3979, %v4069
      %v4092 = vmul.f32 %v3980, %v4071
      %v4093 = vmul.f32 %v3981, %v4073
      %v4094 = vmul.f32 %v3982, %v4075
      %v4095 = vmul.f32 %v3983, %v4077
      %v4096 = vmul.f32 %v3984, %v4079
      %v4097 = vmul.f32 %v3985, %v4081
      %4098 = vst.msk [vmem:[%s509] sm:$0xff] %vm1178, %v872
      %4099 = vst.msk [vmem:[%s509 + $0x8] sm:$0xff] %vm1178, %v873
      %4100 = vst.msk [vmem:[%s509 + $0x10] sm:$0xff] %vm1178, %v874
      %4101 = vst.msk [vmem:[%s509 + $0x18] sm:$0xff] %vm1178, %v875
      %4102 = vst.msk [vmem:[%s509 + $0x20] sm:$0xff] %vm1178, %v876
      %4103 = vst.msk [vmem:[%s509 + $0x28] sm:$0xff] %vm1178, %v877
      %4104 = vst.msk [vmem:[%s509 + $0x30] sm:$0xff] %vm1178, %v878
      %4105 = vst.msk [vmem:[%s509 + $0x38] sm:$0xff] %vm1178, %v879
      %4106 = vst.msk [vmem:[%s509 + $0x40] sm:$0xff] %vm1178, %v880
      %4107 = vst.msk [vmem:[%s509 + $0x48] sm:$0xff] %vm1178, %v881
      %4108 = vst.msk [vmem:[%s509 + $0x50] sm:$0xff] %vm1178, %v882
      %4109 = vst.msk [vmem:[%s509 + $0x58] sm:$0xff] %vm1178, %v883
      %4110 = vst.msk [vmem:[%s509 + $0x60] sm:$0xff] %vm1178, %v884
      %4111 = vst.msk [vmem:[%s509 + $0x68] sm:$0xff] %vm1178, %v885
      %4112 = vst.msk [vmem:[%s509 + $0x70] sm:$0xff] %vm1178, %v886
      %4113 = vst.msk [vmem:[%s509 + $0x78] sm:$0xff] %vm1178, %v887
      %4130 = vrot.lane.b32.xlu0 %v4082, 4
      %v4131 = vpop.permute.xlu0 %4130
      %4132 = vrot.lane.b32.xlu0 %v4083, 4
      %v4133 = vpop.permute.xlu0 %4132
      %4134 = vrot.lane.b32.xlu0 %v4084, 4
      %v4135 = vpop.permute.xlu0 %4134
      %4136 = vrot.lane.b32.xlu0 %v4085, 4
      %v4137 = vpop.permute.xlu0 %4136
      %4138 = vrot.lane.b32.xlu0 %v4086, 4
      %v4139 = vpop.permute.xlu0 %4138
      %4140 = vrot.lane.b32.xlu0 %v4087, 4
      %v4141 = vpop.permute.xlu0 %4140
      %4142 = vrot.lane.b32.xlu0 %v4088, 4
      %v4143 = vpop.permute.xlu0 %4142
      %4144 = vrot.lane.b32.xlu0 %v4089, 4
      %v4145 = vpop.permute.xlu0 %4144
      %4146 = vrot.lane.b32.xlu0 %v4090, 4
      %v4147 = vpop.permute.xlu0 %4146
      %4148 = vrot.lane.b32.xlu0 %v4091, 4
      %v4149 = vpop.permute.xlu0 %4148
      %4150 = vrot.lane.b32.xlu0 %v4092, 4
      %v4151 = vpop.permute.xlu0 %4150
      %4152 = vrot.lane.b32.xlu0 %v4093, 4
      %v4153 = vpop.permute.xlu0 %4152
      %4154 = vrot.lane.b32.xlu0 %v4094, 4
      %v4155 = vpop.permute.xlu0 %4154
      %4156 = vrot.lane.b32.xlu0 %v4095, 4
      %v4157 = vpop.permute.xlu0 %4156
      %4158 = vrot.lane.b32.xlu0 %v4096, 4
      %v4159 = vpop.permute.xlu0 %4158
      %4160 = vrot.lane.b32.xlu0 %v4097, 4
      %v4161 = vpop.permute.xlu0 %4160
      %vm4178 = vcmask 64544
      %4179 = vst.msk [vmem:[%s509] sm:$0xff] %vm4178, %v4131
      %4180 = vst.msk [vmem:[%s509 + $0x8] sm:$0xff] %vm4178, %v4133
      %4181 = vst.msk [vmem:[%s509 + $0x10] sm:$0xff] %vm4178, %v4135
      %4182 = vst.msk [vmem:[%s509 + $0x18] sm:$0xff] %vm4178, %v4137
      %4183 = vst.msk [vmem:[%s509 + $0x20] sm:$0xff] %vm4178, %v4139
      %4184 = vst.msk [vmem:[%s509 + $0x28] sm:$0xff] %vm4178, %v4141
      %4185 = vst.msk [vmem:[%s509 + $0x30] sm:$0xff] %vm4178, %v4143
      %4186 = vst.msk [vmem:[%s509 + $0x38] sm:$0xff] %vm4178, %v4145
      %4187 = vst.msk [vmem:[%s509 + $0x40] sm:$0xff] %vm4178, %v4147
      %4188 = vst.msk [vmem:[%s509 + $0x48] sm:$0xff] %vm4178, %v4149
      %4189 = vst.msk [vmem:[%s509 + $0x50] sm:$0xff] %vm4178, %v4151
      %4190 = vst.msk [vmem:[%s509 + $0x58] sm:$0xff] %vm4178, %v4153
      %4191 = vst.msk [vmem:[%s509 + $0x60] sm:$0xff] %vm4178, %v4155
      %4192 = vst.msk [vmem:[%s509 + $0x68] sm:$0xff] %vm4178, %v4157
      %4193 = vst.msk [vmem:[%s509 + $0x70] sm:$0xff] %vm4178, %v4159
      %4194 = vst.msk [vmem:[%s509 + $0x78] sm:$0xff] %vm4178, %v4161
      %s4195 = smul.u32 8, %s25
      %p4196 = scmp.lt.s32.totalorder %s24, 1
      %s4197 = scalar_select %p4196, %s24, 1
      %p4198 = scmp.lt.s32.totalorder %s4195, 15
      %s4199 = scalar_select %p4198, %s4195, 15
      %s4200 = smul.addr %s4199, 2
      %s4201 = smul.addr %s4197, 32
      %s4202 = sadd.s32 %s4200, %s4201
      %s4203 = smul.addr %s4202, 8
      %s4204 = scalar_lea.vmem %s9, %s4203
      // Predicated region
      $region57: #{ghost_bottleneck_forward.2} parent=55 // pred_check
        %p4205 = pneg %p278
      $region58: #{ghost_bottleneck_forward.2} parent=55 // pred_check_branch
        %4207 = sbr.rel (%p4205) target = $region60
      $region59: #{ghost_bottleneck_forward.2} parent=55 // pred_region
        %s4208 = smul.u32 8, %s25
      $region60: #{ghost_bottleneck_forward.2} parent=55 // pred_fallthru
        _
    $region56: #{ghost_bottleneck_forward.2} parent=5 // pred_fallthru
      _
    %p4209 = scmp.le.s32.totalorder 2, %s15
    // Predicated region
    $region61: #{ghost_bottleneck_forward.2} parent=5 // pred_check
      %p4210 = pneg %p4209
    $region62: #{ghost_bottleneck_forward.2} parent=5 // pred_check_branch
      %4212 = sbr.rel (%p4210) target = $region64
    $region63: #{ghost_bottleneck_forward.2} parent=5 // pred_region
      %s4213 = ssub.s32 %s15, 2
      // Predicated region
      $region65: #{ghost_bottleneck_forward.2} parent=63 // pred_check
        %p4214 = pneg %p284
      $region66: #{ghost_bottleneck_forward.2} parent=63 // pred_check_branch
        %4216 = sbr.rel (%p4214) target = $region68
      $region67: #{ghost_bottleneck_forward.2} parent=63 // pred_region
        %s4217 = smul.u32 8, %s27
        %p4218 = scmp.lt.s32.totalorder %s26, 1
        %s4219 = scalar_select %p4218, %s26, 1
        %p4220 = scmp.lt.s32.totalorder %s4217, 15
        %s4221 = scalar_select %p4220, %s4217, 15
        %s4222 = smul.addr %s4221, 2
        %s4223 = smul.addr %s4219, 32
        %s4224 = sadd.s32 %s4222, %s4223
        %s4225 = smul.addr %s4224, 8
        %s4226 = scalar_lea.vmem %s9, %s4225
      $region68: #{ghost_bottleneck_forward.2} parent=63 // pred_fallthru
        _
    $region64: #{ghost_bottleneck_forward.2} parent=5 // pred_fallthru
      _
  $region6: #{ghost_bottleneck_forward.2} parent=0 // loop_footer
    %s19 = sadd.s32 1, %s15
  $region7: #{ghost_bottleneck_forward.2} parent=0 // loop_footer_branch
    %14 = sbr.rel target = $region3
  $region8: #{ghost_bottleneck_forward.2} parent=0 // loop_exit
    _

// kernel: ghost_bottleneck_forward.3
$region0: #{ghost_bottleneck_forward.3}
  #allocation0 [shape = 'u32[]', space=smem, size = 0x4, offset = 0x4, fixed_abs, tag = 'smem constant byte address 0x4 - core index']
  #allocation1 [shape = 'u32[144,128]{1,0:T(1,128)}', space=vmem, size = 0x12000, scoped, tag = 'internal scratch']
  #allocation2 [shape = 'f32[12,20,8]{2,1,0:T(8,128)}', space=vmem, size = 0x24000, scoped, tag = 'scratch operand']
  %s0 = inlined_call_operand.vmem [shape: f32[2,16,16,8], index: 0, kind: input, shape index: {}, may-alias: {0,1,2}]
  %s1 = inlined_call_operand.vmem [shape: f32[2,16,16,8], index: 1, kind: input, shape index: {}, may-alias: {0,1,2}]
  %s2 = inlined_call_operand.vmem [shape: f32[2,16,16,8], index: 2, kind: input, shape index: {}, may-alias: {0,1,2}]
  %s3 = inlined_call_operand.vmem [shape: f32[8,8], index: 3, kind: input, shape index: {}]
  %s4 = inlined_call_operand.vmem [shape: f32[1,8], index: 4, kind: input, shape index: {}]
  %s5 = inlined_call_operand.vmem [shape: f32[1,8], index: 5, kind: input, shape index: {}]
  %s6 = inlined_call_operand.vmem [shape: f32[5,5,8], index: 6, kind: input, shape index: {}]
  %s7 = inlined_call_operand.vmem [shape: f32[1,8], index: 7, kind: input, shape index: {}]
  %s8 = inlined_call_operand.vmem [shape: f32[1,8], index: 8, kind: input, shape index: {}]
  %s9 = inlined_call_operand.vmem [shape: f32[2,16,16,16], index: 9, kind: input, shape index: {}]
  %s10 = inlined_call_operand.vmem [shape: f32[2,16,16,16], index: 10, kind: output, shape index: {}]
  %s11 = sld [smem:[#allocation0]]
  $region73: #{ghost_bottleneck_forward.3} parent=0
    _
  %s13 = ssub.s32 1, %s11
  %s14 = scalar_select 0, %s13, %s11
  loop: start=0, step=1, limit=6
  $region2: #{ghost_bottleneck_forward.3} parent=0 // loop_pre_header
    _
  $region3: #{ghost_bottleneck_forward.3} parent=0 // loop_header
    %s16 = sphi 0, %s20
    %p17 = scmp.ge.s32.totalorder %s16, 6
    %s23 = sphi 0, %s35
    %s24 = sphi 0, %s31
    %s25 = sphi 0, %s23
    %s26 = sphi 0, %s24
    %s27 = sphi 0, %s25
    %s28 = sphi 0, %s26
    %s48 = sphi 0, %s50
    %s51 = sphi 0, %s48
    %s52 = sphi 0, %s51
    %s68 = sphi 0, %s52
    %s76 = sphi 0, %s78
    %s79 = sphi 0, %s76
    %s80 = sphi 0, %s79
    %s96 = sphi 0, %s80
    %s112 = sphi 0, %s114
    %s115 = sphi 0, %s112
    %s116 = sphi 0, %s115
    %s132 = sphi 0, %s116
    %s136 = sphi 0, %s136
    %s138 = sphi 0, %s136
    %s139 = sphi 0, %s138
    %s153 = sphi 0, %s139
    %s157 = sphi 0, %s157
    %s159 = sphi 0, %s157
    %s160 = sphi 0, %s159
    %s174 = sphi 0, %s160
    %s178 = sphi 0, %s178
    %s180 = sphi 0, %s178
    %s181 = sphi 0, %s180
    %s195 = sphi 0, %s181
    %s199 = sphi 0, %s199
    %s201 = sphi 0, %s199
    %s202 = sphi 0, %s201
    %s216 = sphi 0, %s202
    %s220 = sphi 0, %s220
    %s222 = sphi 0, %s220
    %s223 = sphi 0, %s222
    %s237 = sphi 0, %s223
    %s241 = sphi 0, %s241
    %s243 = sphi 0, %s241
    %s244 = sphi 0, %s243
    %s258 = sphi 0, %s244
    %s266 = sphi 0, %s268
    %s269 = sphi 0, %s266
    %s270 = sphi 0, %s269
    %s286 = sphi 0, %s270
    %s294 = sphi 0, %s296
    %s297 = sphi 0, %s294
    %s298 = sphi 0, %s297
    %s314 = sphi 0, %s298
  $region4: #{ghost_bottleneck_forward.3} parent=0 // loop_header_branch
    %19 = sbr.rel (%p17) target = $region8
  $region5: #{ghost_bottleneck_forward.3} parent=0 // loop_body
    %s21 = ssub.s32 %s16, 1
    %s22 = ssub.s32 %s16, 2
    %s29 = sadd.s32 1, %s24
    %p30 = scmp.ge.s32.totalorder %s29, 2
    %s31 = scalar_select %p30, 0, %s29
    %s32 = sadd.s32 1, %s23
    %s33 = scalar_select %p30, %s32, %s23
    %p34 = scmp.ge.s32.totalorder %s33, 2
    %s35 = scalar_select %p34, 0, %s33
    %s36 = smul.u32 %s24, 4
    %s37 = ssub.s32 %s36, 1
    %p38 = scmp.gt.s32.totalorder %s37, 0
    %s39 = scalar_select %p38, %s37, 0
    %s40 = smul.u32 %s31, 4
    %s41 = ssub.s32 %s40, 1
    %p42 = scmp.gt.s32.totalorder %s41, 0
    %s43 = scalar_select %p42, %s41, 0
    %s44 = ssub.s32 %s23, %s35
    %s45 = ssub.s32 %s39, %s43
    %s46 = sor.u32 %s44, %s45
    %p47 = scmp.eq.s32.totalorder %s46, 0
    %s49 = sadd.s32 %s48, 1
    %s50 = scalar_select %p47, %s48, %s49
    %p53 = pneg %p47
    %p54 = scmp.eq.s32.totalorder %s16, 3
    %p55 = por %p53, %p54
    %p56 = scmp.ne.s32.totalorder %s48, %s51
    %p57 = scmp.eq.s32.totalorder %s16, 0
    %p58 = por %p56, %p57
    %p59 = scmp.ne.s32.totalorder %s48, %s51
    %p60 = scmp.eq.s32.totalorder %s21, 3
    %p61 = por %p59, %p60
    %p62 = scmp.ne.s32.totalorder %s51, %s52
    %p63 = scmp.eq.s32.totalorder %s21, 0
    %p64 = por %p62, %p63
    %p65 = scmp.ne.s32.totalorder %s51, %s52
    %p66 = scmp.eq.s32.totalorder %s22, 3
    %p67 = por %p65, %p66
    %p69 = scmp.ne.s32.totalorder %s52, %s68
    %p70 = scmp.eq.s32.totalorder %s22, 0
    %p71 = por %p69, %p70
    %s72 = ssub.s32 %s23, %s35
    %s73 = ssub.s32 %s24, %s31
    %s74 = sor.u32 %s72, %s73
    %p75 = scmp.eq.s32.totalorder %s74, 0
    %s77 = sadd.s32 %s76, 1
    %s78 = scalar_select %p75, %s76, %s77
    %p81 = pneg %p75
    %p82 = scmp.eq.s32.totalorder %s16, 3
    %p83 = por %p81, %p82
    %p84 = scmp.ne.s32.totalorder %s76, %s79
    %p85 = scmp.eq.s32.totalorder %s16, 0
    %p86 = por %p84, %p85
    %p87 = scmp.ne.s32.totalorder %s76, %s79
    %p88 = scmp.eq.s32.totalorder %s21, 3
    %p89 = por %p87, %p88
    %p90 = scmp.ne.s32.totalorder %s79, %s80
    %p91 = scmp.eq.s32.totalorder %s21, 0
    %p92 = por %p90, %p91
    %p93 = scmp.ne.s32.totalorder %s79, %s80
    %p94 = scmp.eq.s32.totalorder %s22, 3
    %p95 = por %p93, %p94
    %p97 = scmp.ne.s32.totalorder %s80, %s96
    %p98 = scmp.eq.s32.totalorder %s22, 0
    %p99 = por %p97, %p98
    %s100 = smul.u32 %s24, 4
    %s101 = sadd.s32 %s100, 4
    %p102 = scmp.lt.s32.totalorder %s101, 7
    %s103 = scalar_select %p102, %s101, 7
    %s104 = smul.u32 %s31, 4
    %s105 = sadd.s32 %s104, 4
    %p106 = scmp.lt.s32.totalorder %s105, 7
    %s107 = scalar_select %p106, %s105, 7
    %s108 = ssub.s32 %s23, %s35
    %s109 = ssub.s32 %s103, %s107
    %s110 = sor.u32 %s108, %s109
    %p111 = scmp.eq.s32.totalorder %s110, 0
    %s113 = sadd.s32 %s112, 1
    %s114 = scalar_select %p111, %s112, %s113
    %p117 = pneg %p111
    %p118 = scmp.eq.s32.totalorder %s16, 3
    %p119 = por %p117, %p118
    %p120 = scmp.ne.s32.totalorder %s112, %s115
    %p121 = scmp.eq.s32.totalorder %s16, 0
    %p122 = por %p120, %p121
    %p123 = scmp.ne.s32.totalorder %s112, %s115
    %p124 = scmp.eq.s32.totalorder %s21, 3
    %p125 = por %p123, %p124
    %p126 = scmp.ne.s32.totalorder %s115, %s116
    %p127 = scmp.eq.s32.totalorder %s21, 0
    %p128 = por %p126, %p127
    %p129 = scmp.ne.s32.totalorder %s115, %s116
    %p130 = scmp.eq.s32.totalorder %s22, 3
    %p131 = por %p129, %p130
    %p133 = scmp.ne.s32.totalorder %s116, %s132
    %p134 = scmp.eq.s32.totalorder %s22, 0
    %p135 = por %p133, %p134
    %s137 = sadd.s32 %s136, 1
    %p140 = scmp.eq.s32.totalorder %s16, 3
    %p141 = scmp.ne.s32.totalorder %s136, %s138
    %p142 = scmp.eq.s32.totalorder %s16, 0
    %p143 = por %p141, %p142
    %p144 = scmp.ne.s32.totalorder %s136, %s138
    %p145 = scmp.eq.s32.totalorder %s21, 3
    %p146 = por %p144, %p145
    %p147 = scmp.ne.s32.totalorder %s138, %s139
    %p148 = scmp.eq.s32.totalorder %s21, 0
    %p149 = por %p147, %p148
    %p150 = scmp.ne.s32.totalorder %s138, %s139
    %p151 = scmp.eq.s32.totalorder %s22, 3
    %p152 = por %p150, %p151
    %p154 = scmp.ne.s32.totalorder %s139, %s153
    %p155 = scmp.eq.s32.totalorder %s22, 0
    %p156 = por %p154, %p155
    %s158 = sadd.s32 %s157, 1
    %p161 = scmp.eq.s32.totalorder %s16, 3
    %p162 = scmp.ne.s32.totalorder %s157, %s159
    %p163 = scmp.eq.s32.totalorder %s16, 0
    %p164 = por %p162, %p163
    %p165 = scmp.ne.s32.totalorder %s157, %s159
    %p166 = scmp.eq.s32.totalorder %s21, 3
    %p167 = por %p165, %p166
    %p168 = scmp.ne.s32.totalorder %s159, %s160
    %p169 = scmp.eq.s32.totalorder %s21, 0
    %p170 = por %p168, %p169
    %p171 = scmp.ne.s32.totalorder %s159, %s160
    %p172 = scmp.eq.s32.totalorder %s22, 3
    %p173 = por %p171, %p172
    %p175 = scmp.ne.s32.totalorder %s160, %s174
    %p176 = scmp.eq.s32.totalorder %s22, 0
    %p177 = por %p175, %p176
    %s179 = sadd.s32 %s178, 1
    %p182 = scmp.eq.s32.totalorder %s16, 3
    %p183 = scmp.ne.s32.totalorder %s178, %s180
    %p184 = scmp.eq.s32.totalorder %s16, 0
    %p185 = por %p183, %p184
    %p186 = scmp.ne.s32.totalorder %s178, %s180
    %p187 = scmp.eq.s32.totalorder %s21, 3
    %p188 = por %p186, %p187
    %p189 = scmp.ne.s32.totalorder %s180, %s181
    %p190 = scmp.eq.s32.totalorder %s21, 0
    %p191 = por %p189, %p190
    %p192 = scmp.ne.s32.totalorder %s180, %s181
    %p193 = scmp.eq.s32.totalorder %s22, 3
    %p194 = por %p192, %p193
    %p196 = scmp.ne.s32.totalorder %s181, %s195
    %p197 = scmp.eq.s32.totalorder %s22, 0
    %p198 = por %p196, %p197
    %s200 = sadd.s32 %s199, 1
    %p203 = scmp.eq.s32.totalorder %s16, 3
    %p204 = scmp.ne.s32.totalorder %s199, %s201
    %p205 = scmp.eq.s32.totalorder %s16, 0
    %p206 = por %p204, %p205
    %p207 = scmp.ne.s32.totalorder %s199, %s201
    %p208 = scmp.eq.s32.totalorder %s21, 3
    %p209 = por %p207, %p208
    %p210 = scmp.ne.s32.totalorder %s201, %s202
    %p211 = scmp.eq.s32.totalorder %s21, 0
    %p212 = por %p210, %p211
    %p213 = scmp.ne.s32.totalorder %s201, %s202
    %p214 = scmp.eq.s32.totalorder %s22, 3
    %p215 = por %p213, %p214
    %p217 = scmp.ne.s32.totalorder %s202, %s216
    %p218 = scmp.eq.s32.totalorder %s22, 0
    %p219 = por %p217, %p218
    %s221 = sadd.s32 %s220, 1
    %p224 = scmp.eq.s32.totalorder %s16, 3
    %p225 = scmp.ne.s32.totalorder %s220, %s222
    %p226 = scmp.eq.s32.totalorder %s16, 0
    %p227 = por %p225, %p226
    %p228 = scmp.ne.s32.totalorder %s220, %s222
    %p229 = scmp.eq.s32.totalorder %s21, 3
    %p230 = por %p228, %p229
    %p231 = scmp.ne.s32.totalorder %s222, %s223
    %p232 = scmp.eq.s32.totalorder %s21, 0
    %p233 = por %p231, %p232
    %p234 = scmp.ne.s32.totalorder %s222, %s223
    %p235 = scmp.eq.s32.totalorder %s22, 3
    %p236 = por %p234, %p235
    %p238 = scmp.ne.s32.totalorder %s223, %s237
    %p239 = scmp.eq.s32.totalorder %s22, 0
    %p240 = por %p238, %p239
    %s242 = sadd.s32 %s241, 1
    %p245 = scmp.eq.s32.totalorder %s16, 3
    %p246 = scmp.ne.s32.totalorder %s241, %s243
    %p247 = scmp.eq.s32.totalorder %s16, 0
    %p248 = por %p246, %p247
    %p249 = scmp.ne.s32.totalorder %s241, %s243
    %p250 = scmp.eq.s32.totalorder %s21, 3
    %p251 = por %p249, %p250
    %p252 = scmp.ne.s32.totalorder %s243, %s244
    %p253 = scmp.eq.s32.totalorder %s21, 0
    %p254 = por %p252, %p253
    %p255 = scmp.ne.s32.totalorder %s243, %s244
    %p256 = scmp.eq.s32.totalorder %s22, 3
    %p257 = por %p255, %p256
    %p259 = scmp.ne.s32.totalorder %s244, %s258
    %p260 = scmp.eq.s32.totalorder %s22, 0
    %p261 = por %p259, %p260
    %s262 = ssub.s32 %s23, %s35
    %s263 = ssub.s32 %s24, %s31
    %s264 = sor.u32 %s262, %s263
    %p265 = scmp.eq.s32.totalorder %s264, 0
    %s267 = sadd.s32 %s266, 1
    %s268 = scalar_select %p265, %s266, %s267
    %p271 = pneg %p265
    %p272 = scmp.eq.s32.totalorder %s16, 3
    %p273 = por %p271, %p272
    %p274 = scmp.ne.s32.totalorder %s266, %s269
    %p275 = scmp.eq.s32.totalorder %s16, 0
    %p276 = por %p274, %p275
    %p277 = scmp.ne.s32.totalorder %s266, %s269
    %p278 = scmp.eq.s32.totalorder %s21, 3
    %p279 = por %p277, %p278
    %p280 = scmp.ne.s32.totalorder %s269, %s270
    %p281 = scmp.eq.s32.totalorder %s21, 0
    %p282 = por %p280, %p281
    %p283 = scmp.ne.s32.totalorder %s269, %s270
    %p284 = scmp.eq.s32.totalorder %s22, 3
    %p285 = por %p283, %p284
    %p287 = scmp.ne.s32.totalorder %s270, %s286
    %p288 = scmp.eq.s32.totalorder %s22, 0
    %p289 = por %p287, %p288
    %s290 = ssub.s32 %s23, %s35
    %s291 = ssub.s32 %s24, %s31
    %s292 = sor.u32 %s290, %s291
    %p293 = scmp.eq.s32.totalorder %s292, 0
    %s295 = sadd.s32 %s294, 1
    %s296 = scalar_select %p293, %s294, %s295
    %p299 = pneg %p293
    %p300 = scmp.eq.s32.totalorder %s16, 3
    %p301 = por %p299, %p300
    %p302 = scmp.ne.s32.totalorder %s294, %s297
    %p303 = scmp.eq.s32.totalorder %s16, 0
    %p304 = por %p302, %p303
    %p305 = scmp.ne.s32.totalorder %s294, %s297
    %p306 = scmp.eq.s32.totalorder %s21, 3
    %p307 = por %p305, %p306
    %p308 = scmp.ne.s32.totalorder %s297, %s298
    %p309 = scmp.eq.s32.totalorder %s21, 0
    %p310 = por %p308, %p309
    %p311 = scmp.ne.s32.totalorder %s297, %s298
    %p312 = scmp.eq.s32.totalorder %s22, 3
    %p313 = por %p311, %p312
    %p315 = scmp.ne.s32.totalorder %s298, %s314
    %p316 = scmp.eq.s32.totalorder %s22, 0
    %p317 = por %p315, %p316
    %p318 = scmp.le.s32.totalorder 1, %s16
    %p319 = scmp.lt.s32.totalorder %s16, 5
    %p320 = pnand %p318, %p319
    %p321 = pneg %p320
    // Predicated region
    $region9: #{ghost_bottleneck_forward.3} parent=5 // pred_check
      _
    $region10: #{ghost_bottleneck_forward.3} parent=5 // pred_check_branch
      %323 = sbr.rel (%p320) target = $region12
    $region11: #{ghost_bottleneck_forward.3} parent=5 // pred_region
      %s324 = ssub.s32 %s16, 1
      // Predicated region
      $region13: #{ghost_bottleneck_forward.3} parent=11 // pred_check
        %p325 = pneg %p149
      $region14: #{ghost_bottleneck_forward.3} parent=11 // pred_check_branch
        %327 = sbr.rel (%p325) target = $region16
      $region15: #{ghost_bottleneck_forward.3} parent=11 // pred_region
        _
      $region16: #{ghost_bottleneck_forward.3} parent=11 // pred_fallthru
        _
      // Predicated region
      $region17: #{ghost_bottleneck_forward.3} parent=11 // pred_check
        %p328 = pneg %p170
      $region18: #{ghost_bottleneck_forward.3} parent=11 // pred_check_branch
        %330 = sbr.rel (%p328) target = $region20
      $region19: #{ghost_bottleneck_forward.3} parent=11 // pred_region
        _
      $region20: #{ghost_bottleneck_forward.3} parent=11 // pred_fallthru
        _
      // Predicated region
      $region21: #{ghost_bottleneck_forward.3} parent=11 // pred_check
        %p331 = pneg %p191
      $region22: #{ghost_bottleneck_forward.3} parent=11 // pred_check_branch
        %333 = sbr.rel (%p331) target = $region24
      $region23: #{ghost_bottleneck_forward.3} parent=11 // pred_region
        _
      $region24: #{ghost_bottleneck_forward.3} parent=11 // pred_fallthru
        _
      // Predicated region
      $region25: #{ghost_bottleneck_forward.3} parent=11 // pred_check
        %p334 = pneg %p212
      $region26: #{ghost_bottleneck_forward.3} parent=11 // pred_check_branch
        %336 = sbr.rel (%p334) target = $region28
      $region27: #{ghost_bottleneck_forward.3} parent=11 // pred_region
        _
      $region28: #{ghost_bottleneck_forward.3} parent=11 // pred_fallthru
        _
      // Predicated region
      $region29: #{ghost_bottleneck_forward.3} parent=11 // pred_check
        %p337 = pneg %p233
      $region30: #{ghost_bottleneck_forward.3} parent=11 // pred_check_branch
        %339 = sbr.rel (%p337) target = $region32
      $region31: #{ghost_bottleneck_forward.3} parent=11 // pred_region
        _
      $region32: #{ghost_bottleneck_forward.3} parent=11 // pred_fallthru
        _
      // Predicated region
      $region33: #{ghost_bottleneck_forward.3} parent=11 // pred_check
        %p340 = pneg %p254
      $region34: #{ghost_bottleneck_forward.3} parent=11 // pred_check_branch
        %342 = sbr.rel (%p340) target = $region36
      $region35: #{ghost_bottleneck_forward.3} parent=11 // pred_region
        _
      $region36: #{ghost_bottleneck_forward.3} parent=11 // pred_fallthru
        _
    $region12: #{ghost_bottleneck_forward.3} parent=5 // pred_fallthru
      _
    %p343 = scmp.lt.s32.totalorder %s16, 4
    // Predicated region
    $region37: #{ghost_bottleneck_forward.3} parent=5 // pred_check
      %p344 = pneg %p343
    $region38: #{ghost_bottleneck_forward.3} parent=5 // pred_check_branch
      %346 = sbr.rel (%p344) target = $region40
    $region39: #{ghost_bottleneck_forward.3} parent=5 // pred_region
      // Predicated region
      $region41: #{ghost_bottleneck_forward.3} parent=39 // pred_check
        %p347 = pneg %p58
      $region42: #{ghost_bottleneck_forward.3} parent=39 // pred_check_branch
        %349 = sbr.rel (%p347) target = $region44
      $region43: #{ghost_bottleneck_forward.3} parent=39 // pred_region
        %s350 = smul.u32 %s24, 4
        %s351 = ssub.s32 %s350, 1
        %p352 = scmp.gt.s32.totalorder %s351, 0
        %s353 = scalar_select %p352, %s351, 0
        %s354 = smul.u32 2, %s353
        %p355 = scmp.lt.s32.totalorder %s23, 1
        %s356 = scalar_select %p355, %s23, 1
        %p357 = scmp.lt.s32.totalorder %s354, 15
        %s358 = scalar_select %p357, %s354, 15
        %s359 = smul.addr %s358, 2
        %s360 = smul.addr %s356, 32
        %s361 = sadd.s32 %s359, %s360
        %s362 = smul.addr %s361, 8
        %s363 = scalar_lea.vmem %s0, %s362
        %s364 = smul.u32 %s24, 4
        %s365 = ssub.s32 %s364, 1
        %p366 = scmp.gt.s32.totalorder %s365, 0
        %s367 = scalar_select %p366, %s365, 0
        %s368 = smul.u32 2, %s367
      $region44: #{ghost_bottleneck_forward.3} parent=39 // pred_fallthru
        _
      // Predicated region
      $region45: #{ghost_bottleneck_forward.3} parent=39 // pred_check
        %p369 = pneg %p86
      $region46: #{ghost_bottleneck_forward.3} parent=39 // pred_check_branch
        %371 = sbr.rel (%p369) target = $region48
      $region47: #{ghost_bottleneck_forward.3} parent=39 // pred_region
        %s372 = smul.u32 8, %s24
        %p373 = scmp.lt.s32.totalorder %s23, 1
        %s374 = scalar_select %p373, %s23, 1
        %p375 = scmp.lt.s32.totalorder %s372, 15
        %s376 = scalar_select %p375, %s372, 15
        %s377 = smul.addr %s376, 2
        %s378 = smul.addr %s374, 32
        %s379 = sadd.s32 %s377, %s378
        %s380 = smul.addr %s379, 8
        %s381 = scalar_lea.vmem %s1, %s380
        %s382 = smul.u32 8, %s24
      $region48: #{ghost_bottleneck_forward.3} parent=39 // pred_fallthru
        _
      // Predicated region
      $region49: #{ghost_bottleneck_forward.3} parent=39 // pred_check
        %p383 = pneg %p122
      $region50: #{ghost_bottleneck_forward.3} parent=39 // pred_check_branch
        %385 = sbr.rel (%p383) target = $region52
      $region51: #{ghost_bottleneck_forward.3} parent=39 // pred_region
        %s386 = smul.u32 %s24, 4
        %s387 = sadd.s32 %s386, 4
        %p388 = scmp.lt.s32.totalorder %s387, 7
        %s389 = scalar_select %p388, %s387, 7
        %s390 = smul.u32 2, %s389
        %p391 = scmp.lt.s32.totalorder %s23, 1
        %s392 = scalar_select %p391, %s23, 1
        %p393 = scmp.lt.s32.totalorder %s390, 15
        %s394 = scalar_select %p393, %s390, 15
        %s395 = smul.addr %s394, 2
        %s396 = smul.addr %s392, 32
        %s397 = sadd.s32 %s395, %s396
        %s398 = smul.addr %s397, 8
        %s399 = scalar_lea.vmem %s2, %s398
        %s400 = smul.u32 %s24, 4
        %s401 = sadd.s32 %s400, 4
        %p402 = scmp.lt.s32.totalorder %s401, 7
        %s403 = scalar_select %p402, %s401, 7
        %s404 = smul.u32 2, %s403
      $region52: #{ghost_bottleneck_forward.3} parent=39 // pred_fallthru
        _
      // Predicated region
      $region53: #{ghost_bottleneck_forward.3} parent=39 // pred_check
        %p405 = pneg %p276
      $region54: #{ghost_bottleneck_forward.3} parent=39 // pred_check_branch
        %407 = sbr.rel (%p405) target = $region56
      $region55: #{ghost_bottleneck_forward.3} parent=39 // pred_region
        %s408 = smul.u32 8, %s24
        %p409 = scmp.lt.s32.totalorder %s23, 1
        %s410 = scalar_select %p409, %s23, 1
        %p411 = scmp.lt.s32.totalorder %s408, 15
        %s412 = scalar_select %p411, %s408, 15
        %s413 = smul.addr %s412, 2
        %s414 = smul.addr %s410, 32
        %s415 = sadd.s32 %s413, %s414
        %s416 = smul.addr %s415, 8
        %s417 = scalar_lea.vmem %s9, %s416
        %s418 = smul.u32 8, %s24
      $region56: #{ghost_bottleneck_forward.3} parent=39 // pred_fallthru
        _
    $region40: #{ghost_bottleneck_forward.3} parent=5 // pred_fallthru
      _
    %p419 = scmp.le.s32.totalorder 1, %s16
    %p420 = scmp.lt.s32.totalorder %s16, 5
    %p421 = pnand %p419, %p420
    %p422 = pneg %p421
    // Predicated region
    $region57: #{ghost_bottleneck_forward.3} parent=5 // pred_check
      _
    $region58: #{ghost_bottleneck_forward.3} parent=5 // pred_check_branch
      %424 = sbr.rel (%p421) target = $region60
    $region59: #{ghost_bottleneck_forward.3} parent=5 // pred_region
      %s425 = ssub.s32 %s16, 1
      %s426 = smul.u32 %s26, 4
      %s427 = ssub.s32 %s426, 1
      %p428 = scmp.gt.s32.totalorder %s427, 0
      %s429 = scalar_select %p428, %s427, 0
      %s430 = smul.u32 2, %s429
      %p431 = scmp.lt.s32.totalorder %s25, 1
      %s432 = scalar_select %p431, %s25, 1
      %p433 = scmp.lt.s32.totalorder %s430, 15
      %s434 = scalar_select %p433, %s430, 15
      %s435 = smul.addr %s434, 2
      %s436 = smul.addr %s432, 32
      %s437 = sadd.s32 %s435, %s436
      %s438 = smul.addr %s437, 8
      %s439 = scalar_lea.vmem %s0, %s438
      %p440 = pneg %p64
      %p441 = pneg %p61
      %s442 = smul.u32 8, %s26
      %p443 = scmp.lt.s32.totalorder %s25, 1
      %s444 = scalar_select %p443, %s25, 1
      %p445 = scmp.lt.s32.totalorder %s442, 15
      %s446 = scalar_select %p445, %s442, 15
      %s447 = smul.addr %s446, 2
      %s448 = smul.addr %s444, 32
      %s449 = sadd.s32 %s447, %s448
      %s450 = smul.addr %s449, 8
      %s451 = scalar_lea.vmem %s1, %s450
      %p452 = pneg %p92
      %p453 = pneg %p89
      %s454 = smul.u32 %s26, 4
      %s455 = sadd.s32 %s454, 4
      %p456 = scmp.lt.s32.totalorder %s455, 7
      %s457 = scalar_select %p456, %s455, 7
      %s458 = smul.u32 2, %s457
      %p459 = scmp.lt.s32.totalorder %s25, 1
      %s460 = scalar_select %p459, %s25, 1
      %p461 = scmp.lt.s32.totalorder %s458, 15
      %s462 = scalar_select %p461, %s458, 15
      %s463 = smul.addr %s462, 2
      %s464 = smul.addr %s460, 32
      %s465 = sadd.s32 %s463, %s464
      %s466 = smul.addr %s465, 8
      %s467 = scalar_lea.vmem %s2, %s466
      %p468 = pneg %p128
      %p469 = pneg %p125
      %p470 = pneg %p149
      %p471 = pneg %p146
      %p472 = pneg %p170
      %p473 = pneg %p167
      %p474 = pneg %p191
      %p475 = pneg %p188
      %p476 = pneg %p212
      %p477 = pneg %p209
      %p478 = pneg %p233
      %p479 = pneg %p230
      %p480 = pneg %p254
      %p481 = pneg %p251
      %s482 = smul.u32 8, %s26
      %p483 = scmp.lt.s32.totalorder %s25, 1
      %s484 = scalar_select %p483, %s25, 1
      %p485 = scmp.lt.s32.totalorder %s482, 15
      %s486 = scalar_select %p485, %s482, 15
      %s487 = smul.addr %s486, 2
      %s488 = smul.addr %s484, 32
      %s489 = sadd.s32 %s487, %s488
      %s490 = smul.addr %s489, 8
      %s491 = scalar_lea.vmem %s9, %s490
      %p492 = pneg %p282
      %p493 = pneg %p279
      %p494 = pneg %p310
      %p495 = pneg %p307
      %s496 = smul.u32 8, %s26
      %p497 = scmp.lt.s32.totalorder %s25, 1
      %s498 = scalar_select %p497, %s25, 1
      %p499 = scmp.lt.s32.totalorder %s496, 15
      %s500 = scalar_select %p499, %s496, 15
      %s501 = smul.addr %s500, 2
      %s502 = smul.addr %s498, 32
      %s503 = sadd.s32 %s501, %s502
      %s504 = smul.addr %s503, 8
      %s505 = scalar_lea.vmem %s10, %s504
      %s506 = smul.u32 %s26, 4
      %s507 = ssub.s32 %s506, 1
      %p508 = scmp.gt.s32.totalorder %s507, 0
      %s509 = scalar_select %p508, %s507, 0
      %s510 = smul.u32 2, %s509
      %p511 = scmp.lt.s32.totalorder %s25, 1
      %s512 = scalar_select %p511, %s25, 1
      %p513 = scmp.lt.s32.totalorder %s510, 15
      %s514 = scalar_select %p513, %s510, 15
      %s515 = smul.addr %s514, 2
      %s516 = smul.addr %s512, 32
      %s517 = sadd.s32 %s515, %s516
      %s518 = smul.addr %s517, 8
      %s519 = scalar_lea.vmem %s0, %s518
      %s520 = smul.u32 %s26, 4
      %s521 = ssub.s32 %s520, 1
      %p522 = scmp.gt.s32.totalorder %s521, 0
      %s523 = scalar_select %p522, %s521, 0
      %s524 = smul.u32 2, %s523
      %s525 = smul.u32 8, %s26
      %p526 = scmp.lt.s32.totalorder %s25, 1
      %s527 = scalar_select %p526, %s25, 1
      %p528 = scmp.lt.s32.totalorder %s525, 15
      %s529 = scalar_select %p528, %s525, 15
      %s530 = smul.addr %s529, 2
      %s531 = smul.addr %s527, 32
      %s532 = sadd.s32 %s530, %s531
      %s533 = smul.addr %s532, 8
      %s534 = scalar_lea.vmem %s1, %s533
      %s535 = smul.u32 8, %s26
      %s536 = smul.u32 %s26, 4
      %s537 = sadd.s32 %s536, 4
      %p538 = scmp.lt.s32.totalorder %s537, 7
      %s539 = scalar_select %p538, %s537, 7
      %s540 = smul.u32 2, %s539
      %p541 = scmp.lt.s32.totalorder %s25, 1
      %s542 = scalar_select %p541, %s25, 1
      %p543 = scmp.lt.s32.totalorder %s540, 15
      %s544 = scalar_select %p543, %s540, 15
      %s545 = smul.addr %s544, 2
      %s546 = smul.addr %s542, 32
      %s547 = sadd.s32 %s545, %s546
      %s548 = smul.addr %s547, 8
      %s549 = scalar_lea.vmem %s2, %s548
      %s550 = smul.u32 %s26, 4
      %s551 = sadd.s32 %s550, 4
      %p552 = scmp.lt.s32.totalorder %s551, 7
      %s553 = scalar_select %p552, %s551, 7
      %s554 = smul.u32 2, %s553
      %s555 = smul.u32 8, %s26
      %p556 = scmp.lt.s32.totalorder %s25, 1
      %s557 = scalar_select %p556, %s25, 1
      %p558 = scmp.lt.s32.totalorder %s555, 15
      %s559 = scalar_select %p558, %s555, 15
      %s560 = smul.addr %s559, 2
      %s561 = smul.addr %s557, 32
      %s562 = sadd.s32 %s560, %s561
      %s563 = smul.addr %s562, 8
      %s564 = scalar_lea.vmem %s9, %s563
      %s565 = smul.u32 8, %s26
      %s566 = smul.u32 8, %s26
      %p567 = scmp.lt.s32.totalorder %s25, 1
      %s568 = scalar_select %p567, %s25, 1
      %p569 = scmp.lt.s32.totalorder %s566, 15
      %s570 = scalar_select %p569, %s566, 15
      %s571 = smul.addr %s570, 2
      %s572 = smul.addr %s568, 32
      %s573 = sadd.s32 %s571, %s572
      %s574 = smul.addr %s573, 8
      %s575 = scalar_lea.vmem %s10, %s574
      %s576 = smul.u32 8, %s26
      %v577 = vld [vmem:[%s3] sm:$0xff]
      %v578 = vld [vmem:[%s4] sm:$0x1]
      %v579 = vld [vmem:[%s5] sm:$0x1]
      %v580 = vld [vmem:[%s6] sm:$0x1f]
      %v581 = vld [vmem:[%s6 + $0x8] sm:$0x1f]
      %v582 = vld [vmem:[%s6 + $0x10] sm:$0x1f]
      %v583 = vld [vmem:[%s6 + $0x18] sm:$0x1f]
      %v584 = vld [vmem:[%s6 + $0x20] sm:$0x1f]
      %v585 = vld [vmem:[%s7] sm:$0x1]
      %v586 = vld [vmem:[%s8] sm:$0x1]
      %v587 = vld [vmem:[%s534] sm:$0xff]
      %v588 = vld [vmem:[%s534 + $0x8] sm:$0xff]
      %v589 = vld [vmem:[%s534 + $0x10] sm:$0xff]
      %v590 = vld [vmem:[%s534 + $0x18] sm:$0xff]
      %v591 = vld [vmem:[%s534 + $0x20] sm:$0xff]
      %v592 = vld [vmem:[%s534 + $0x28] sm:$0xff]
      %v593 = vld [vmem:[%s534 + $0x30] sm:$0xff]
      %v594 = vld [vmem:[%s534 + $0x38] sm:$0xff]
      %v595 = vld [vmem:[%s534 + $0x40] sm:$0xff]
      %v596 = vld [vmem:[%s534 + $0x48] sm:$0xff]
      %v597 = vld [vmem:[%s534 + $0x50] sm:$0xff]
      %v598 = vld [vmem:[%s534 + $0x58] sm:$0xff]
      %v599 = vld [vmem:[%s534 + $0x60] sm:$0xff]
      %v600 = vld [vmem:[%s534 + $0x68] sm:$0xff]
      %v601 = vld [vmem:[%s534 + $0x70] sm:$0xff]
      %v602 = vld [vmem:[%s534 + $0x78] sm:$0xff]
      %vm603 = vcmask 64512
      %v605 = vsel %vm603, %v587, 0
      %v608 = vsel %vm603, %v588, 0
      %v611 = vsel %vm603, %v589, 0
      %v614 = vsel %vm603, %v590, 0
      %v617 = vsel %vm603, %v591, 0
      %v620 = vsel %vm603, %v592, 0
      %v623 = vsel %vm603, %v593, 0
      %v626 = vsel %vm603, %v594, 0
      %v629 = vsel %vm603, %v595, 0
      %v632 = vsel %vm603, %v596, 0
      %v635 = vsel %vm603, %v597, 0
      %v638 = vsel %vm603, %v598, 0
      %v641 = vsel %vm603, %v599, 0
      %v644 = vsel %vm603, %v600, 0
      %v647 = vsel %vm603, %v601, 0
      %v650 = vsel %vm603, %v602, 0
      %652 = vmatprep.subr.mxu0 0.0
      %653 = vmatpush1.msra.mxu0 %v577
      %654 = vmatprep.subr.mxu0 0.0
      %655 = vmatpush1.msra.mxu0 0.0
      %656 = vmatprep.subr.mxu0 0.0
      %657 = vmatpush1.msra.mxu0 0.0
      %658 = vmatprep.subr.mxu0 0.0
      %659 = vmatpush1.msra.mxu0 0.0
      %660 = vmatprep.subr.mxu0 0.0
      %661 = vmatpush1.msra.mxu0 0.0
      %662 = vmatprep.subr.mxu0 0.0
      %663 = vmatpush1.msra.mxu0 0.0
      %664 = vmatprep.subr.mxu0 0.0
      %665 = vmatpush1.msra.mxu0 0.0
      %666 = vmatprep.subr.mxu0 0.0
      %667 = vmatpush1.msra.mxu0 0.0
      %668 = vmatprep.subr.mxu0 0.0
      %669 = vmatpush1.msra.mxu0 0.0
      %670 = vmatprep.subr.mxu0 0.0
      %671 = vmatpush1.msra.mxu0 0.0
      %672 = vmatprep.subr.mxu0 0.0
      %673 = vmatpush1.msra.mxu0 0.0
      %674 = vmatprep.subr.mxu0 0.0
      %675 = vmatpush1.msra.mxu0 0.0
      %676 = vmatprep.subr.mxu0 0.0
      %677 = vmatpush1.msra.mxu0 0.0
      %678 = vmatprep.subr.mxu0 0.0
      %679 = vmatpush1.msra.mxu0 0.0
      %680 = vmatprep.subr.mxu0 0.0
      %681 = vmatpush1.msra.mxu0 0.0
      %682 = vmatprep.subr.mxu0 0.0
      %683 = vmatpush1.msra.mxu0 0.0
      %684 = vmatprep.subr.mxu0 0.0
      %685 = vmatpush1.msra.mxu0 0.0
      %686 = vmatprep.subr.mxu0 0.0
      %687 = vmatpush1.msra.mxu0 0.0
      %688 = vmatprep.subr.mxu0 0.0
      %689 = vmatpush1.msra.mxu0 0.0
      %690 = vmatprep.subr.mxu0 0.0
      %691 = vmatpush1.msra.mxu0 0.0
      %692 = vmatprep.subr.mxu0 0.0
      %693 = vmatpush1.msra.mxu0 0.0
      %694 = vmatprep.subr.mxu0 0.0
      %695 = vmatpush1.msra.mxu0 0.0
      %696 = vmatprep.subr.mxu0 0.0
      %697 = vmatpush1.msra.mxu0 0.0
      %698 = vmatprep.subr.mxu0 0.0
      %699 = vmatpush1.msra.mxu0 0.0
      %700 = vmatprep.subr.mxu0 0.0
      %701 = vmatpush1.msra.mxu0 0.0
      %702 = vmatprep.subr.mxu0 0.0
      %703 = vmatpush1.msra.mxu0 0.0
      %704 = vmatprep.subr.mxu0 0.0
      %705 = vmatpush1.msra.mxu0 0.0
      %706 = vmatprep.subr.mxu0 0.0
      %707 = vmatpush1.msra.mxu0 0.0
      %708 = vmatprep.subr.mxu0 0.0
      %709 = vmatpush1.msra.mxu0 0.0
      %710 = vmatprep.subr.mxu0 0.0
      %711 = vmatpush1.msra.mxu0 0.0
      %712 = vmatprep.subr.mxu0 0.0
      %713 = vmatpush1.msra.mxu0 0.0
      %714 = vmatprep.subr.mxu0 0.0
      %715 = vmatpush1.msra.mxu0 0.0
      %716 = vmatprep.mubr.f32.mxu0 0.0
      %717 = vmatmul.mubr.f32.gmra.mrb[0].mxu0 %v605
      %v718 = vpop.f32.mrb[0].mxu0
      %v719 = vadd.f32 0.0, %v718
      %v720 = vpop.f32.mrb[0].mxu0
      %721 = vmatprep.mubr.f32.mxu0 0.0
      %722 = vmatmul.mubr.f32.gmra.mrb[0].mxu0 %v608
      %v723 = vpop.f32.mrb[0].mxu0
      %v724 = vadd.f32 0.0, %v723
      %v725 = vpop.f32.mrb[0].mxu0
      %726 = vmatprep.mubr.f32.mxu0 0.0
      %727 = vmatmul.mubr.f32.gmra.mrb[0].mxu0 %v611
      %v728 = vpop.f32.mrb[0].mxu0
      %v729 = vadd.f32 0.0, %v728
      %v730 = vpop.f32.mrb[0].mxu0
      %731 = vmatprep.mubr.f32.mxu0 0.0
      %732 = vmatmul.mubr.f32.gmra.mrb[0].mxu0 %v614
      %v733 = vpop.f32.mrb[0].mxu0
      %v734 = vadd.f32 0.0, %v733
      %v735 = vpop.f32.mrb[0].mxu0
      %736 = vmatprep.mubr.f32.mxu0 0.0
      %737 = vmatmul.mubr.f32.gmra.mrb[0].mxu0 %v617
      %v738 = vpop.f32.mrb[0].mxu0
      %v739 = vadd.f32 0.0, %v738
      %v740 = vpop.f32.mrb[0].mxu0
      %741 = vmatprep.mubr.f32.mxu0 0.0
      %742 = vmatmul.mubr.f32.gmra.mrb[0].mxu0 %v620
      %v743 = vpop.f32.mrb[0].mxu0
      %v744 = vadd.f32 0.0, %v743
      %v745 = vpop.f32.mrb[0].mxu0
      %746 = vmatprep.mubr.f32.mxu0 0.0
      %747 = vmatmul.mubr.f32.gmra.mrb[0].mxu0 %v623
      %v748 = vpop.f32.mrb[0].mxu0
      %v749 = vadd.f32 0.0, %v748
      %v750 = vpop.f32.mrb[0].mxu0
      %751 = vmatprep.mubr.f32.mxu0 0.0
      %752 = vmatmul.mubr.f32.gmra.mrb[0].mxu0 %v626
      %v753 = vpop.f32.mrb[0].mxu0
      %v754 = vadd.f32 0.0, %v753
      %v755 = vpop.f32.mrb[0].mxu0
      %756 = vmatprep.mubr.f32.mxu0 0.0
      %757 = vmatmul.mubr.f32.gmra.mrb[0].mxu0 %v629
      %v758 = vpop.f32.mrb[0].mxu0
      %v759 = vadd.f32 0.0, %v758
      %v760 = vpop.f32.mrb[0].mxu0
      %761 = vmatprep.mubr.f32.mxu0 0.0
      %762 = vmatmul.mubr.f32.gmra.mrb[0].mxu0 %v632
      %v763 = vpop.f32.mrb[0].mxu0
      %v764 = vadd.f32 0.0, %v763
      %v765 = vpop.f32.mrb[0].mxu0
      %766 = vmatprep.mubr.f32.mxu0 0.0
      %767 = vmatmul.mubr.f32.gmra.mrb[0].mxu0 %v635
      %v768 = vpop.f32.mrb[0].mxu0
      %v769 = vadd.f32 0.0, %v768
      %v770 = vpop.f32.mrb[0].mxu0
      %771 = vmatprep.mubr.f32.mxu0 0.0
      %772 = vmatmul.mubr.f32.gmra.mrb[0].mxu0 %v638
      %v773 = vpop.f32.mrb[0].mxu0
      %v774 = vadd.f32 0.0, %v773
      %v775 = vpop.f32.mrb[0].mxu0
      %776 = vmatprep.mubr.f32.mxu0 0.0
      %777 = vmatmul.mubr.f32.gmra.mrb[0].mxu0 %v641
      %v778 = vpop.f32.mrb[0].mxu0
      %v779 = vadd.f32 0.0, %v778
      %v780 = vpop.f32.mrb[0].mxu0
      %781 = vmatprep.mubr.f32.mxu0 0.0
      %782 = vmatmul.mubr.f32.gmra.mrb[0].mxu0 %v644
      %v783 = vpop.f32.mrb[0].mxu0
      %v784 = vadd.f32 0.0, %v783
      %v785 = vpop.f32.mrb[0].mxu0
      %786 = vmatprep.mubr.f32.mxu0 0.0
      %787 = vmatmul.mubr.f32.gmra.mrb[0].mxu0 %v647
      %v788 = vpop.f32.mrb[0].mxu0
      %v789 = vadd.f32 0.0, %v788
      %v790 = vpop.f32.mrb[0].mxu0
      %791 = vmatprep.mubr.f32.mxu0 0.0
      %792 = vmatmul.mubr.f32.gmra.mrb[0].mxu0 %v650
      %v793 = vpop.f32.mrb[0].mxu0
      %v794 = vadd.f32 0.0, %v793
      %v795 = vpop.f32.mrb[0].mxu0
      %796 = vdwg.mxu0
      %v798 = vlaneseq
      %v799 = vshrl.u32 %v798, 7
      %v800 = vsub.s32 0, %v799
      %v801 = vrot.slane %v578, %v800
      %v803 = vmul.f32 %v719, %v801
      %v804 = vmul.f32 %v724, %v801
      %v805 = vmul.f32 %v729, %v801
      %v806 = vmul.f32 %v734, %v801
      %v807 = vmul.f32 %v739, %v801
      %v808 = vmul.f32 %v744, %v801
      %v809 = vmul.f32 %v749, %v801
      %v810 = vmul.f32 %v754, %v801
      %v811 = vmul.f32 %v759, %v801
      %v812 = vmul.f32 %v764, %v801
      %v813 = vmul.f32 %v769, %v801
      %v814 = vmul.f32 %v774, %v801
      %v815 = vmul.f32 %v779, %v801
      %v816 = vmul.f32 %v784, %v801
      %v817 = vmul.f32 %v789, %v801
      %v818 = vmul.f32 %v794, %v801
      %v820 = vlaneseq
      %v821 = vshrl.u32 %v820, 7
      %v822 = vsub.s32 0, %v821
      %v823 = vrot.slane %v579, %v822
      %v825 = vadd.f32 %v803, %v823
      %v826 = vadd.f32 %v804, %v823
      %v827 = vadd.f32 %v805, %v823
      %v828 = vadd.f32 %v806, %v823
      %v829 = vadd.f32 %v807, %v823
      %v830 = vadd.f32 %v808, %v823
      %v831 = vadd.f32 %v809, %v823
      %v832 = vadd.f32 %v810, %v823
      %v833 = vadd.f32 %v811, %v823
      %v834 = vadd.f32 %v812, %v823
      %v835 = vadd.f32 %v813, %v823
      %v836 = vadd.f32 %v814, %v823
      %v837 = vadd.f32 %v815, %v823
      %v838 = vadd.f32 %v816, %v823
      %v839 = vadd.f32 %v817, %v823
      %v840 = vadd.f32 %v818, %v823
      %p841 = scmp.gt.s32.totalorder %s26, 0
      %s842 = scalar_select %p841, 1, 0
      %s843 = scvt.s32.f32 %s842
      %p844 = scmp.lt.s32.totalorder %s26, 1
      %s845 = scalar_select %p844, 1, 0
      %s846 = scvt.s32.f32 %s845
      %v847 = vld [vmem:[%s519] sm:$0xff]
      %v848 = vld [vmem:[%s519 + $0x8] sm:$0xff]
      %v849 = vld [vmem:[%s519 + $0x10] sm:$0xff]
      %v850 = vld [vmem:[%s519 + $0x18] sm:$0xff]
      %v852 = vsel %vm603, %v847, 0
      %v855 = vsel %vm603, %v848, 0
      %v858 = vsel %vm603, %v849, 0
      %v861 = vsel %vm603, %v850, 0
      %863 = vmatprep.subr.mxu0 0.0
      %864 = vmatpush1.msra.mxu0 %v577
      %865 = vmatprep.subr.mxu0 0.0
      %866 = vmatpush1.msra.mxu0 0.0
      %867 = vmatprep.subr.mxu0 0.0
      %868 = vmatpush1.msra.mxu0 0.0
      %869 = vmatprep.subr.mxu0 0.0
      %870 = vmatpush1.msra.mxu0 0.0
      %871 = vmatprep.subr.mxu0 0.0
      %872 = vmatpush1.msra.mxu0 0.0
      %873 = vmatprep.subr.mxu0 0.0
      %874 = vmatpush1.msra.mxu0 0.0
      %875 = vmatprep.subr.mxu0 0.0
      %876 = vmatpush1.msra.mxu0 0.0
      %877 = vmatprep.subr.mxu0 0.0
      %878 = vmatpush1.msra.mxu0 0.0
      %879 = vmatprep.subr.mxu0 0.0
      %880 = vmatpush1.msra.mxu0 0.0
      %881 = vmatprep.subr.mxu0 0.0
      %882 = vmatpush1.msra.mxu0 0.0
      %883 = vmatprep.subr.mxu0 0.0
      %884 = vmatpush1.msra.mxu0 0.0
      %885 = vmatprep.subr.mxu0 0.0
      %886 = vmatpush1.msra.mxu0 0.0
      %887 = vmatprep.subr.mxu0 0.0
      %888 = vmatpush1.msra.mxu0 0.0
      %889 = vmatprep.subr.mxu0 0.0
      %890 = vmatpush1.msra.mxu0 0.0
      %891 = vmatprep.subr.mxu0 0.0
      %892 = vmatpush1.msra.mxu0 0.0
      %893 = vmatprep.subr.mxu0 0.0
      %894 = vmatpush1.msra.mxu0 0.0
      %895 = vmatprep.subr.mxu0 0.0
      %896 = vmatpush1.msra.mxu0 0.0
      %897 = vmatprep.subr.mxu0 0.0
      %898 = vmatpush1.msra.mxu0 0.0
      %899 = vmatprep.subr.mxu0 0.0
      %900 = vmatpush1.msra.mxu0 0.0
      %901 = vmatprep.subr.mxu0 0.0
      %902 = vmatpush1.msra.mxu0 0.0
      %903 = vmatprep.subr.mxu0 0.0
      %904 = vmatpush1.msra.mxu0 0.0
      %905 = vmatprep.subr.mxu0 0.0
      %906 = vmatpush1.msra.mxu0 0.0
      %907 = vmatprep.subr.mxu0 0.0
      %908 = vmatpush1.msra.mxu0 0.0
      %909 = vmatprep.subr.mxu0 0.0
      %910 = vmatpush1.msra.mxu0 0.0
      %911 = vmatprep.subr.mxu0 0.0
      %912 = vmatpush1.msra.mxu0 0.0
      %913 = vmatprep.subr.mxu0 0.0
      %914 = vmatpush1.msra.mxu0 0.0
      %915 = vmatprep.subr.mxu0 0.0
      %916 = vmatpush1.msra.mxu0 0.0
      %917 = vmatprep.subr.mxu0 0.0
      %918 = vmatpush1.msra.mxu0 0.0
      %919 = vmatprep.subr.mxu0 0.0
      %920 = vmatpush1.msra.mxu0 0.0
      %921 = vmatprep.subr.mxu0 0.0
      %922 = vmatpush1.msra.mxu0 0.0
      %923 = vmatprep.subr.mxu0 0.0
      %924 = vmatpush1.msra.mxu0 0.0
      %925 = vmatprep.subr.mxu0 0.0
      %926 = vmatpush1.msra.mxu0 0.0
      %927 = vmatprep.mubr.f32.mxu0 0.0
      %928 = vmatmul.mubr.f32.gmra.mrb[0].mxu0 %v852
      %v929 = vpop.f32.mrb[0].mxu0
      %v930 = vadd.f32 0.0, %v929
      %v931 = vpop.f32.mrb[0].mxu0
      %932 = vmatprep.mubr.f32.mxu0 0.0
      %933 = vmatmul.mubr.f32.gmra.mrb[0].mxu0 %v855
      %v934 = vpop.f32.mrb[0].mxu0
      %v935 = vadd.f32 0.0, %v934
      %v936 = vpop.f32.mrb[0].mxu0
      %937 = vmatprep.mubr.f32.mxu0 0.0
      %938 = vmatmul.mubr.f32.gmra.mrb[0].mxu0 %v858
      %v939 = vpop.f32.mrb[0].mxu0
      %v940 = vadd.f32 0.0, %v939
      %v941 = vpop.f32.mrb[0].mxu0
      %942 = vmatprep.mubr.f32.mxu0 0.0
      %943 = vmatmul.mubr.f32.gmra.mrb[0].mxu0 %v861
      %v944 = vpop.f32.mrb[0].mxu0
      %v945 = vadd.f32 0.0, %v944
      %v946 = vpop.f32.mrb[0].mxu0
      %947 = vdwg.mxu0
      %v948 = vmul.f32 %v930, %v801
      %v949 = vmul.f32 %v935, %v801
      %v950 = vmul.f32 %v940, %v801
      %v951 = vmul.f32 %v945, %v801
      %v952 = vadd.f32 %v948, %v823
      %v953 = vadd.f32 %v949, %v823
      %v954 = vadd.f32 %v950, %v823
      %v955 = vadd.f32 %v951, %v823
      %v956 = vstv %s843
      %v957 = vmul.f32 %v952, %v956
      %v958 = vmul.f32 %v953, %v956
      %v959 = vmul.f32 %v954, %v956
      %v960 = vmul.f32 %v955, %v956
      %v961 = vld [vmem:[%s549] sm:$0xff]
      %v962 = vld [vmem:[%s549 + $0x8] sm:$0xff]
      %v963 = vld [vmem:[%s549 + $0x10] sm:$0xff]
      %v964 = vld [vmem:[%s549 + $0x18] sm:$0xff]
      %v966 = vsel %vm603, %v961, 0
      %v969 = vsel %vm603, %v962, 0
      %v972 = vsel %vm603, %v963, 0
      %v975 = vsel %vm603, %v964, 0
      %977 = vmatprep.subr.mxu0 0.0
      %978 = vmatpush1.msra.mxu0 %v577
      %979 = vmatprep.subr.mxu0 0.0
      %980 = vmatpush1.msra.mxu0 0.0
      %981 = vmatprep.subr.mxu0 0.0
      %982 = vmatpush1.msra.mxu0 0.0
      %983 = vmatprep.subr.mxu0 0.0
      %984 = vmatpush1.msra.mxu0 0.0
      %985 = vmatprep.subr.mxu0 0.0
      %986 = vmatpush1.msra.mxu0 0.0
      %987 = vmatprep.subr.mxu0 0.0
      %988 = vmatpush1.msra.mxu0 0.0
      %989 = vmatprep.subr.mxu0 0.0
      %990 = vmatpush1.msra.mxu0 0.0
      %991 = vmatprep.subr.mxu0 0.0
      %992 = vmatpush1.msra.mxu0 0.0
      %993 = vmatprep.subr.mxu0 0.0
      %994 = vmatpush1.msra.mxu0 0.0
      %995 = vmatprep.subr.mxu0 0.0
      %996 = vmatpush1.msra.mxu0 0.0
      %997 = vmatprep.subr.mxu0 0.0
      %998 = vmatpush1.msra.mxu0 0.0
      %999 = vmatprep.subr.mxu0 0.0
      %1000 = vmatpush1.msra.mxu0 0.0
      %1001 = vmatprep.subr.mxu0 0.0
      %1002 = vmatpush1.msra.mxu0 0.0
      %1003 = vmatprep.subr.mxu0 0.0
      %1004 = vmatpush1.msra.mxu0 0.0
      %1005 = vmatprep.subr.mxu0 0.0
      %1006 = vmatpush1.msra.mxu0 0.0
      %1007 = vmatprep.subr.mxu0 0.0
      %1008 = vmatpush1.msra.mxu0 0.0
      %1009 = vmatprep.subr.mxu0 0.0
      %1010 = vmatpush1.msra.mxu0 0.0
      %1011 = vmatprep.subr.mxu0 0.0
      %1012 = vmatpush1.msra.mxu0 0.0
      %1013 = vmatprep.subr.mxu0 0.0
      %1014 = vmatpush1.msra.mxu0 0.0
      %1015 = vmatprep.subr.mxu0 0.0
      %1016 = vmatpush1.msra.mxu0 0.0
      %1017 = vmatprep.subr.mxu0 0.0
      %1018 = vmatpush1.msra.mxu0 0.0
      %1019 = vmatprep.subr.mxu0 0.0
      %1020 = vmatpush1.msra.mxu0 0.0
      %1021 = vmatprep.subr.mxu0 0.0
      %1022 = vmatpush1.msra.mxu0 0.0
      %1023 = vmatprep.subr.mxu0 0.0
      %1024 = vmatpush1.msra.mxu0 0.0
      %1025 = vmatprep.subr.mxu0 0.0
      %1026 = vmatpush1.msra.mxu0 0.0
      %1027 = vmatprep.subr.mxu0 0.0
      %1028 = vmatpush1.msra.mxu0 0.0
      %1029 = vmatprep.subr.mxu0 0.0
      %1030 = vmatpush1.msra.mxu0 0.0
      %1031 = vmatprep.subr.mxu0 0.0
      %1032 = vmatpush1.msra.mxu0 0.0
      %1033 = vmatprep.subr.mxu0 0.0
      %1034 = vmatpush1.msra.mxu0 0.0
      %1035 = vmatprep.subr.mxu0 0.0
      %1036 = vmatpush1.msra.mxu0 0.0
      %1037 = vmatprep.subr.mxu0 0.0
      %1038 = vmatpush1.msra.mxu0 0.0
      %1039 = vmatprep.subr.mxu0 0.0
      %1040 = vmatpush1.msra.mxu0 0.0
      %1041 = vmatprep.mubr.f32.mxu0 0.0
      %1042 = vmatmul.mubr.f32.gmra.mrb[0].mxu0 %v966
      %v1043 = vpop.f32.mrb[0].mxu0
      %v1044 = vadd.f32 0.0, %v1043
      %v1045 = vpop.f32.mrb[0].mxu0
      %1046 = vmatprep.mubr.f32.mxu0 0.0
      %1047 = vmatmul.mubr.f32.gmra.mrb[0].mxu0 %v969
      %v1048 = vpop.f32.mrb[0].mxu0
      %v1049 = vadd.f32 0.0, %v1048
      %v1050 = vpop.f32.mrb[0].mxu0
      %1051 = vmatprep.mubr.f32.mxu0 0.0
      %1052 = vmatmul.mubr.f32.gmra.mrb[0].mxu0 %v972
      %v1053 = vpop.f32.mrb[0].mxu0
      %v1054 = vadd.f32 0.0, %v1053
      %v1055 = vpop.f32.mrb[0].mxu0
      %1056 = vmatprep.mubr.f32.mxu0 0.0
      %1057 = vmatmul.mubr.f32.gmra.mrb[0].mxu0 %v975
      %v1058 = vpop.f32.mrb[0].mxu0
      %v1059 = vadd.f32 0.0, %v1058
      %v1060 = vpop.f32.mrb[0].mxu0
      %1061 = vdwg.mxu0
      %v1062 = vmul.f32 %v1044, %v801
      %v1063 = vmul.f32 %v1049, %v801
      %v1064 = vmul.f32 %v1054, %v801
      %v1065 = vmul.f32 %v1059, %v801
      %v1066 = vadd.f32 %v1062, %v823
      %v1067 = vadd.f32 %v1063, %v823
      %v1068 = vadd.f32 %v1064, %v823
      %v1069 = vadd.f32 %v1065, %v823
      %v1070 = vstv %s846
      %v1071 = vmul.f32 %v1066, %v1070
      %v1072 = vmul.f32 %v1067, %v1070
      %v1073 = vmul.f32 %v1068, %v1070
      %v1074 = vmul.f32 %v1069, %v1070
      %1075 = vst.msk [vmem:[#allocation2] sm:$0xff] %vm603, 0.0
      %1076 = vst.msk [vmem:[#allocation2 + $0x8] sm:$0xff] %vm603, 0.0
      %vm1077 = vcmask 60416
      %1078 = vst.msk [vmem:[#allocation2 + $0x10] sm:$0xf] %vm1077, 0.0
      %1079 = vst.msk [vmem:[#allocation2 + $0x18] sm:$0xff] %vm603, 0.0
      %1080 = vst.msk [vmem:[#allocation2 + $0x20] sm:$0xff] %vm603, 0.0
      %1081 = vst.msk [vmem:[#allocation2 + $0x28] sm:$0xf] %vm1077, 0.0
      %1082 = vst.msk [vmem:[#allocation2 + $0x30] sm:$0xff] %vm603, 0.0
      %1083 = vst.msk [vmem:[#allocation2 + $0x38] sm:$0xff] %vm603, 0.0
      %1084 = vst.msk [vmem:[#allocation2 + $0x40] sm:$0xf] %vm1077, 0.0
      %1085 = vst.msk [vmem:[#allocation2 + $0x48] sm:$0xff] %vm603, 0.0
      %1086 = vst.msk [vmem:[#allocation2 + $0x50] sm:$0xff] %vm603, 0.0
      %1087 = vst.msk [vmem:[#allocation2 + $0x58] sm:$0xf] %vm1077, 0.0
      %1088 = vst.msk [vmem:[#allocation2 + $0x60] sm:$0xff] %vm603, 0.0
      %1089 = vst.msk [vmem:[#allocation2 + $0x68] sm:$0xff] %vm603, 0.0
      %1090 = vst.msk [vmem:[#allocation2 + $0x70] sm:$0xf] %vm1077, 0.0
      %1091 = vst.msk [vmem:[#allocation2 + $0x78] sm:$0xff] %vm603, 0.0
      %1092 = vst.msk [vmem:[#allocation2 + $0x80] sm:$0xff] %vm603, 0.0
      %1093 = vst.msk [vmem:[#allocation2 + $0x88] sm:$0xf] %vm1077, 0.0
      %1094 = vst.msk [vmem:[#allocation2 + $0x90] sm:$0xff] %vm603, 0.0
      %1095 = vst.msk [vmem:[#allocation2 + $0x98] sm:$0xff] %vm603, 0.0
      %1096 = vst.msk [vmem:[#allocation2 + $0xa0] sm:$0xf] %vm1077, 0.0
      %1097 = vst.msk [vmem:[#allocation2 + $0xa8] sm:$0xff] %vm603, 0.0
      %1098 = vst.msk [vmem:[#allocation2 + $0xb0] sm:$0xff] %vm603, 0.0
      %1099 = vst.msk [vmem:[#allocation2 + $0xb8] sm:$0xf] %vm1077, 0.0
      %1100 = vst.msk [vmem:[#allocation2 + $0xc0] sm:$0xff] %vm603, 0.0
      %1101 = vst.msk [vmem:[#allocation2 + $0xc8] sm:$0xff] %vm603, 0.0
      %1102 = vst.msk [vmem:[#allocation2 + $0xd0] sm:$0xf] %vm1077, 0.0
      %1103 = vst.msk [vmem:[#allocation2 + $0xd8] sm:$0xff] %vm603, 0.0
      %1104 = vst.msk [vmem:[#allocation2 + $0xe0] sm:$0xff] %vm603, 0.0
      %1105 = vst.msk [vmem:[#allocation2 + $0xe8] sm:$0xf] %vm1077, 0.0
      %1106 = vst.msk [vmem:[#allocation2 + $0xf0] sm:$0xff] %vm603, 0.0
      %1107 = vst.msk [vmem:[#allocation2 + $0xf8] sm:$0xff] %vm603, 0.0
      %1108 = vst.msk [vmem:[#allocation2 + $0x100] sm:$0xf] %vm1077, 0.0
      %1109 = vst.msk [vmem:[#allocation2 + $0x108] sm:$0xff] %vm603, 0.0
      %1110 = vst.msk [vmem:[#allocation2 + $0x110] sm:$0xff] %vm603, 0.0
      %1111 = vst.msk [vmem:[#allocation2 + $0x118] sm:$0xf] %vm1077, 0.0
      %1112 = vst.msk [vmem:[#allocation2 + $0x2] sm:$0xff] %vm603, %v957
      %1113 = vst.msk [vmem:[#allocation2 + $0xa] sm:$0xff] %vm603, %v958
      %1114 = vst.msk [vmem:[#allocation2 + $0x1a] sm:$0xff] %vm603, %v959
      %1115 = vst.msk [vmem:[#allocation2 + $0x22] sm:$0xff] %vm603, %v960
      %s1116 = scalar_lea.vmem [#allocation2], 48
      %1117 = vst.msk [vmem:[%s1116 + $0x2] sm:$0xff] %vm603, %v825
      %1118 = vst.msk [vmem:[%s1116 + $0xa] sm:$0xff] %vm603, %v826
      %1119 = vst.msk [vmem:[%s1116 + $0x1a] sm:$0xff] %vm603, %v827
      %1120 = vst.msk [vmem:[%s1116 + $0x22] sm:$0xff] %vm603, %v828
      %1121 = vst.msk [vmem:[%s1116 + $0x32] sm:$0xff] %vm603, %v829
      %1122 = vst.msk [vmem:[%s1116 + $0x3a] sm:$0xff] %vm603, %v830
      %1123 = vst.msk [vmem:[%s1116 + $0x4a] sm:$0xff] %vm603, %v831
      %1124 = vst.msk [vmem:[%s1116 + $0x52] sm:$0xff] %vm603, %v832
      %1125 = vst.msk [vmem:[%s1116 + $0x62] sm:$0xff] %vm603, %v833
      %1126 = vst.msk [vmem:[%s1116 + $0x6a] sm:$0xff] %vm603, %v834
      %1127 = vst.msk [vmem:[%s1116 + $0x7a] sm:$0xff] %vm603, %v835
      %1128 = vst.msk [vmem:[%s1116 + $0x82] sm:$0xff] %vm603, %v836
      %1129 = vst.msk [vmem:[%s1116 + $0x92] sm:$0xff] %vm603, %v837
      %1130 = vst.msk [vmem:[%s1116 + $0x9a] sm:$0xff] %vm603, %v838
      %1131 = vst.msk [vmem:[%s1116 + $0xaa] sm:$0xff] %vm603, %v839
      %1132 = vst.msk [vmem:[%s1116 + $0xb2] sm:$0xff] %vm603, %v840
      %s1133 = scalar_lea.vmem [#allocation2], 240
      %1134 = vst.msk [vmem:[%s1133 + $0x2] sm:$0xff] %vm603, %v1071
      %1135 = vst.msk [vmem:[%s1133 + $0xa] sm:$0xff] %vm603, %v1072
      %1136 = vst.msk [vmem:[%s1133 + $0x1a] sm:$0xff] %vm603, %v1073
      %1137 = vst.msk [vmem:[%s1133 + $0x22] sm:$0xff] %vm603, %v1074
      %v1138 = vld [vmem:[#allocation2] sm:$0xff]
      %v1139 = vld [vmem:[#allocation2 + $0x8] sm:$0xff]
      %v1140 = vld [vmem:[#allocation2 + $0x10] sm:$0xf]
      %v1141 = vld [vmem:[#allocation2 + $0x18] sm:$0xff]
      %v1142 = vld [vmem:[#allocation2 + $0x20] sm:$0xff]
      %v1143 = vld [vmem:[#allocation2 + $0x28] sm:$0xf]
      %v1144 = vld [vmem:[#allocation2 + $0x30] sm:$0xff]
      %v1145 = vld [vmem:[#allocation2 + $0x38] sm:$0xff]
      %v1146 = vld [vmem:[#allocation2 + $0x40] sm:$0xf]
      %v1147 = vld [vmem:[#allocation2 + $0x48] sm:$0xff]
      %v1148 = vld [vmem:[#allocation2 + $0x50] sm:$0xff]
      %v1149 = vld [vmem:[#allocation2 + $0x58] sm:$0xf]
      %v1150 = vld [vmem:[#allocation2 + $0x60] sm:$0xff]
      %v1151 = vld [vmem:[#allocation2 + $0x68] sm:$0xff]
      %v1152 = vld [vmem:[#allocation2 + $0x70] sm:$0xf]
      %v1153 = vld [vmem:[#allocation2 + $0x78] sm:$0xff]
      %v1154 = vld [vmem:[#allocation2 + $0x80] sm:$0xff]
      %v1155 = vld [vmem:[#allocation2 + $0x88] sm:$0xf]
      %v1156 = vld [vmem:[#allocation2 + $0x90] sm:$0xff]
      %v1157 = vld [vmem:[#allocation2 + $0x98] sm:$0xff]
      %v1158 = vld [vmem:[#allocation2 + $0xa0] sm:$0xf]
      %v1159 = vld [vmem:[#allocation2 + $0xa8] sm:$0xff]
      %v1160 = vld [vmem:[#allocation2 + $0xb0] sm:$0xff]
      %v1161 = vld [vmem:[#allocation2 + $0xb8] sm:$0xf]
      %v1162 = vld [vmem:[#allocation2 + $0xc0] sm:$0xff]
      %v1163 = vld [vmem:[#allocation2 + $0xc8] sm:$0xff]
      %v1164 = vld [vmem:[#allocation2 + $0xd0] sm:$0xf]
      %v1165 = vld [vmem:[#allocation2 + $0xd8] sm:$0xff]
      %v1166 = vld [vmem:[#allocation2 + $0xe0] sm:$0xff]
      %v1167 = vld [vmem:[#allocation2 + $0xe8] sm:$0xf]
      %v1168 = vld [vmem:[#allocation2 + $0xf0] sm:$0xff]
      %v1169 = vld [vmem:[#allocation2 + $0xf8] sm:$0xff]
      %v1170 = vld [vmem:[#allocation2 + $0x100] sm:$0xf]
      %v1171 = vld [vmem:[#allocation2 + $0x108] sm:$0xff]
      %v1172 = vld [vmem:[#allocation2 + $0x110] sm:$0xff]
      %v1173 = vld [vmem:[#allocation2 + $0x118] sm:$0xf]
      %v1174 = vlaneseq
      %v1175 = vshrl.u32 %v1174, 7
      %v1176 = vsub.s32 0, %v1175
      %v1177 = vrot.slane %v580, %v1176
      %v1178 = vmul.f32 %v1138, %v1177
      %v1179 = vmul.f32 %v1139, %v1177
      %v1180 = vmul.f32 %v1141, %v1177
      %v1181 = vmul.f32 %v1142, %v1177
      %v1182 = vmul.f32 %v1144, %v1177
      %v1183 = vmul.f32 %v1145, %v1177
      %v1184 = vmul.f32 %v1147, %v1177
      %v1185 = vmul.f32 %v1148, %v1177
      %v1186 = vmul.f32 %v1150, %v1177
      %v1187 = vmul.f32 %v1151, %v1177
      %v1188 = vmul.f32 %v1153, %v1177
      %v1189 = vmul.f32 %v1154, %v1177
      %v1190 = vmul.f32 %v1156, %v1177
      %v1191 = vmul.f32 %v1157, %v1177
      %v1192 = vmul.f32 %v1159, %v1177
      %v1193 = vmul.f32 %v1160, %v1177
      %v1194 = vadd.f32 %v1178, 0.0
      %v1195 = vadd.f32 %v1179, 0.0
      %v1196 = vadd.f32 %v1180, 0.0
      %v1197 = vadd.f32 %v1181, 0.0
      %v1198 = vadd.f32 %v1182, 0.0
      %v1199 = vadd.f32 %v1183, 0.0
      %v1200 = vadd.f32 %v1184, 0.0
      %v1201 = vadd.f32 %v1185, 0.0
      %v1202 = vadd.f32 %v1186, 0.0
      %v1203 = vadd.f32 %v1187, 0.0
      %v1204 = vadd.f32 %v1188, 0.0
      %v1205 = vadd.f32 %v1189, 0.0
      %v1206 = vadd.f32 %v1190, 0.0
      %v1207 = vadd.f32 %v1191, 0.0
      %v1208 = vadd.f32 %v1192, 0.0
      %v1209 = vadd.f32 %v1193, 0.0
      %v1210 = vlaneseq
      %v1211 = vshrl.u32 %v1210, 7
      %v1212 = vsub.s32 1, %v1211
      %v1213 = vrot.slane %v580, %v1212
      %v1214 = vmul.f32 %v1138, %v1213
      %v1215 = vmul.f32 %v1139, %v1213
      %v1216 = vmul.f32 %v1140, %v1213
      %v1217 = vmul.f32 %v1141, %v1213
      %v1218 = vmul.f32 %v1142, %v1213
      %v1219 = vmul.f32 %v1143, %v1213
      %v1220 = vmul.f32 %v1144, %v1213
      %v1221 = vmul.f32 %v1145, %v1213
      %v1222 = vmul.f32 %v1146, %v1213
      %v1223 = vmul.f32 %v1147, %v1213
      %v1224 = vmul.f32 %v1148, %v1213
      %v1225 = vmul.f32 %v1149, %v1213
      %v1226 = vmul.f32 %v1150, %v1213
      %v1227 = vmul.f32 %v1151, %v1213
      %v1228 = vmul.f32 %v1152, %v1213
      %v1229 = vmul.f32 %v1153, %v1213
      %v1230 = vmul.f32 %v1154, %v1213
      %v1231 = vmul.f32 %v1155, %v1213
      %v1232 = vmul.f32 %v1156, %v1213
      %v1233 = vmul.f32 %v1157, %v1213
      %v1234 = vmul.f32 %v1158, %v1213
      %v1235 = vmul.f32 %v1159, %v1213
      %v1236 = vmul.f32 %v1160, %v1213
      %v1237 = vmul.f32 %v1161, %v1213
      %vm1262 = vcmask 1046528
      %v1263 = vrot.slane %v1214, 1
      %v1264 = vrot.slane %v1215, 1
      %v1265 = vsel %vm1262, %v1263, %v1264
      %v1266 = vrot.slane %v1216, 1
      %v1267 = vsel %vm1262, %v1264, %v1266
      %v1268 = vrot.slane %v1217, 1
      %v1269 = vrot.slane %v1218, 1
      %v1270 = vsel %vm1262, %v1268, %v1269
      %v1271 = vrot.slane %v1219, 1
      %v1272 = vsel %vm1262, %v1269, %v1271
      %v1273 = vrot.slane %v1220, 1
      %v1274 = vrot.slane %v1221, 1
      %v1275 = vsel %vm1262, %v1273, %v1274
      %v1276 = vrot.slane %v1222, 1
      %v1277 = vsel %vm1262, %v1274, %v1276
      %v1278 = vrot.slane %v1223, 1
      %v1279 = vrot.slane %v1224, 1
      %v1280 = vsel %vm1262, %v1278, %v1279
      %v1281 = vrot.slane %v1225, 1
      %v1282 = vsel %vm1262, %v1279, %v1281
      %v1283 = vrot.slane %v1226, 1
      %v1284 = vrot.slane %v1227, 1
      %v1285 = vsel %vm1262, %v1283, %v1284
      %v1286 = vrot.slane %v1228, 1
      %v1287 = vsel %vm1262, %v1284, %v1286
      %v1288 = vrot.slane %v1229, 1
      %v1289 = vrot.slane %v1230, 1
      %v1290 = vsel %vm1262, %v1288, %v1289
      %v1291 = vrot.slane %v1231, 1
      %v1292 = vsel %vm1262, %v1289, %v1291
      %v1293 = vrot.slane %v1232, 1
      %v1294 = vrot.slane %v1233, 1
      %v1295 = vsel %vm1262, %v1293, %v1294
      %v1296 = vrot.slane %v1234, 1
      %v1297 = vsel %vm1262, %v1294, %v1296
      %v1298 = vrot.slane %v1235, 1
      %v1299 = vrot.slane %v1236, 1
      %v1300 = vsel %vm1262, %v1298, %v1299
      %v1301 = vrot.slane %v1237, 1
      %v1302 = vsel %vm1262, %v1299, %v1301
      %v1319 = vadd.f32 %v1194, %v1265
      %v1320 = vadd.f32 %v1195, %v1267
      %v1321 = vadd.f32 %v1196, %v1270
      %v1322 = vadd.f32 %v1197, %v1272
      %v1323 = vadd.f32 %v1198, %v1275
      %v1324 = vadd.f32 %v1199, %v1277
      %v1325 = vadd.f32 %v1200, %v1280
      %v1326 = vadd.f32 %v1201, %v1282
      %v1327 = vadd.f32 %v1202, %v1285
      %v1328 = vadd.f32 %v1203, %v1287
      %v1329 = vadd.f32 %v1204, %v1290
      %v1330 = vadd.f32 %v1205, %v1292
      %v1331 = vadd.f32 %v1206, %v1295
      %v1332 = vadd.f32 %v1207, %v1297
      %v1333 = vadd.f32 %v1208, %v1300
      %v1334 = vadd.f32 %v1209, %v1302
      %v1335 = vlaneseq
      %v1336 = vshrl.u32 %v1335, 7
      %v1337 = vsub.s32 2, %v1336
      %v1338 = vrot.slane %v580, %v1337
      %v1339 = vmul.f32 %v1138, %v1338
      %v1340 = vmul.f32 %v1139, %v1338
      %v1341 = vmul.f32 %v1140, %v1338
      %v1342 = vmul.f32 %v1141, %v1338
      %v1343 = vmul.f32 %v1142, %v1338
      %v1344 = vmul.f32 %v1143, %v1338
      %v1345 = vmul.f32 %v1144, %v1338
      %v1346 = vmul.f32 %v1145, %v1338
      %v1347 = vmul.f32 %v1146, %v1338
      %v1348 = vmul.f32 %v1147, %v1338
      %v1349 = vmul.f32 %v1148, %v1338
      %v1350 = vmul.f32 %v1149, %v1338
      %v1351 = vmul.f32 %v1150, %v1338
      %v1352 = vmul.f32 %v1151, %v1338
      %v1353 = vmul.f32 %v1152, %v1338
      %v1354 = vmul.f32 %v1153, %v1338
      %v1355 = vmul.f32 %v1154, %v1338
      %v1356 = vmul.f32 %v1155, %v1338
      %v1357 = vmul.f32 %v1156, %v1338
      %v1358 = vmul.f32 %v1157, %v1338
      %v1359 = vmul.f32 %v1158, %v1338
      %v1360 = vmul.f32 %v1159, %v1338
      %v1361 = vmul.f32 %v1160, %v1338
      %v1362 = vmul.f32 %v1161, %v1338
      %vm1387 = vcmask 1045504
      %v1388 = vrot.slane %v1339, 2
      %v1389 = vrot.slane %v1340, 2
      %v1390 = vsel %vm1387, %v1388, %v1389
      %v1391 = vrot.slane %v1341, 2
      %v1392 = vsel %vm1387, %v1389, %v1391
      %v1393 = vrot.slane %v1342, 2
      %v1394 = vrot.slane %v1343, 2
      %v1395 = vsel %vm1387, %v1393, %v1394
      %v1396 = vrot.slane %v1344, 2
      %v1397 = vsel %vm1387, %v1394, %v1396
      %v1398 = vrot.slane %v1345, 2
      %v1399 = vrot.slane %v1346, 2
      %v1400 = vsel %vm1387, %v1398, %v1399
      %v1401 = vrot.slane %v1347, 2
      %v1402 = vsel %vm1387, %v1399, %v1401
      %v1403 = vrot.slane %v1348, 2
      %v1404 = vrot.slane %v1349, 2
      %v1405 = vsel %vm1387, %v1403, %v1404
      %v1406 = vrot.slane %v1350, 2
      %v1407 = vsel %vm1387, %v1404, %v1406
      %v1408 = vrot.slane %v1351, 2
      %v1409 = vrot.slane %v1352, 2
      %v1410 = vsel %vm1387, %v1408, %v1409
      %v1411 = vrot.slane %v1353, 2
      %v1412 = vsel %vm1387, %v1409, %v1411
      %v1413 = vrot.slane %v1354, 2
      %v1414 = vrot.slane %v1355, 2
      %v1415 = vsel %vm1387, %v1413, %v1414
      %v1416 = vrot.slane %v1356, 2
      %v1417 = vsel %vm1387, %v1414, %v1416
      %v1418 = vrot.slane %v1357, 2
      %v1419 = vrot.slane %v1358, 2
      %v1420 = vsel %vm1387, %v1418, %v1419
      %v1421 = vrot.slane %v1359, 2
      %v1422 = vsel %vm1387, %v1419, %v1421
      %v1423 = vrot.slane %v1360, 2
      %v1424 = vrot.slane %v1361, 2
      %v1425 = vsel %vm1387, %v1423, %v1424
      %v1426 = vrot.slane %v1362, 2
      %v1427 = vsel %vm1387, %v1424, %v1426
      %v1444 = vadd.f32 %v1319, %v1390
      %v1445 = vadd.f32 %v1320, %v1392
      %v1446 = vadd.f32 %v1321, %v1395
      %v1447 = vadd.f32 %v1322, %v1397
      %v1448 = vadd.f32 %v1323, %v1400
      %v1449 = vadd.f32 %v1324, %v1402
      %v1450 = vadd.f32 %v1325, %v1405
      %v1451 = vadd.f32 %v1326, %v1407
      %v1452 = vadd.f32 %v1327, %v1410
      %v1453 = vadd.f32 %v1328, %v1412
      %v1454 = vadd.f32 %v1329, %v1415
      %v1455 = vadd.f32 %v1330, %v1417
      %v1456 = vadd.f32 %v1331, %v1420
      %v1457 = vadd.f32 %v1332, %v1422
      %v1458 = vadd.f32 %v1333, %v1425
      %v1459 = vadd.f32 %v1334, %v1427
      %v1460 = vlaneseq
      %v1461 = vshrl.u32 %v1460, 7
      %v1462 = vsub.s32 3, %v1461
      %v1463 = vrot.slane %v580, %v1462
      %v1464 = vmul.f32 %v1138, %v1463
      %v1465 = vmul.f32 %v1139, %v1463
      %v1466 = vmul.f32 %v1140, %v1463
      %v1467 = vmul.f32 %v1141, %v1463
      %v1468 = vmul.f32 %v1142, %v1463
      %v1469 = vmul.f32 %v1143, %v1463
      %v1470 = vmul.f32 %v1144, %v1463
      %v1471 = vmul.f32 %v1145, %v1463
      %v1472 = vmul.f32 %v1146, %v1463
      %v1473 = vmul.f32 %v1147, %v1463
      %v1474 = vmul.f32 %v1148, %v1463
      %v1475 = vmul.f32 %v1149, %v1463
      %v1476 = vmul.f32 %v1150, %v1463
      %v1477 = vmul.f32 %v1151, %v1463
      %v1478 = vmul.f32 %v1152, %v1463
      %v1479 = vmul.f32 %v1153, %v1463
      %v1480 = vmul.f32 %v1154, %v1463
      %v1481 = vmul.f32 %v1155, %v1463
      %v1482 = vmul.f32 %v1156, %v1463
      %v1483 = vmul.f32 %v1157, %v1463
      %v1484 = vmul.f32 %v1158, %v1463
      %v1485 = vmul.f32 %v1159, %v1463
      %v1486 = vmul.f32 %v1160, %v1463
      %v1487 = vmul.f32 %v1161, %v1463
      %vm1512 = vcmask 1044480
      %v1513 = vrot.slane %v1464, 3
      %v1514 = vrot.slane %v1465, 3
      %v1515 = vsel %vm1512, %v1513, %v1514
      %v1516 = vrot.slane %v1466, 3
      %v1517 = vsel %vm1512, %v1514, %v1516
      %v1518 = vrot.slane %v1467, 3
      %v1519 = vrot.slane %v1468, 3
      %v1520 = vsel %vm1512, %v1518, %v1519
      %v1521 = vrot.slane %v1469, 3
      %v1522 = vsel %vm1512, %v1519, %v1521
      %v1523 = vrot.slane %v1470, 3
      %v1524 = vrot.slane %v1471, 3
      %v1525 = vsel %vm1512, %v1523, %v1524
      %v1526 = vrot.slane %v1472, 3
      %v1527 = vsel %vm1512, %v1524, %v1526
      %v1528 = vrot.slane %v1473, 3
      %v1529 = vrot.slane %v1474, 3
      %v1530 = vsel %vm1512, %v1528, %v1529
      %v1531 = vrot.slane %v1475, 3
      %v1532 = vsel %vm1512, %v1529, %v1531
      %v1533 = vrot.slane %v1476, 3
      %v1534 = vrot.slane %v1477, 3
      %v1535 = vsel %vm1512, %v1533, %v1534
      %v1536 = vrot.slane %v1478, 3
      %v1537 = vsel %vm1512, %v1534, %v1536
      %v1538 = vrot.slane %v1479, 3
      %v1539 = vrot.slane %v1480, 3
      %v1540 = vsel %vm1512, %v1538, %v1539
      %v1541 = vrot.slane %v1481, 3
      %v1542 = vsel %vm1512, %v1539, %v1541
      %v1543 = vrot.slane %v1482, 3
      %v1544 = vrot.slane %v1483, 3
      %v1545 = vsel %vm1512, %v1543, %v1544
      %v1546 = vrot.slane %v1484, 3
      %v1547 = vsel %vm1512, %v1544, %v1546
      %v1548 = vrot.slane %v1485, 3
      %v1549 = vrot.slane %v1486, 3
      %v1550 = vsel %vm1512, %v1548, %v1549
      %v1551 = vrot.slane %v1487, 3
      %v1552 = vsel %vm1512, %v1549, %v1551
      %v1569 = vadd.f32 %v1444, %v1515
      %v1570 = vadd.f32 %v1445, %v1517
      %v1571 = vadd.f32 %v1446, %v1520
      %v1572 = vadd.f32 %v1447, %v1522
      %v1573 = vadd.f32 %v1448, %v1525
      %v1574 = vadd.f32 %v1449, %v1527
      %v1575 = vadd.f32 %v1450, %v1530
      %v1576 = vadd.f32 %v1451, %v1532
      %v1577 = vadd.f32 %v1452, %v1535
      %v1578 = vadd.f32 %v1453, %v1537
      %v1579 = vadd.f32 %v1454, %v1540
      %v1580 = vadd.f32 %v1455, %v1542
      %v1581 = vadd.f32 %v1456, %v1545
      %v1582 = vadd.f32 %v1457, %v1547
      %v1583 = vadd.f32 %v1458, %v1550
      %v1584 = vadd.f32 %v1459, %v1552
      %v1585 = vlaneseq
      %v1586 = vshrl.u32 %v1585, 7
      %v1587 = vsub.s32 4, %v1586
      %v1588 = vrot.slane %v580, %v1587
      %v1589 = vmul.f32 %v1138, %v1588
      %v1590 = vmul.f32 %v1139, %v1588
      %v1591 = vmul.f32 %v1140, %v1588
      %v1592 = vmul.f32 %v1141, %v1588
      %v1593 = vmul.f32 %v1142, %v1588
      %v1594 = vmul.f32 %v1143, %v1588
      %v1595 = vmul.f32 %v1144, %v1588
      %v1596 = vmul.f32 %v1145, %v1588
      %v1597 = vmul.f32 %v1146, %v1588
      %v1598 = vmul.f32 %v1147, %v1588
      %v1599 = vmul.f32 %v1148, %v1588
      %v1600 = vmul.f32 %v1149, %v1588
      %v1601 = vmul.f32 %v1150, %v1588
      %v1602 = vmul.f32 %v1151, %v1588
      %v1603 = vmul.f32 %v1152, %v1588
      %v1604 = vmul.f32 %v1153, %v1588
      %v1605 = vmul.f32 %v1154, %v1588
      %v1606 = vmul.f32 %v1155, %v1588
      %v1607 = vmul.f32 %v1156, %v1588
      %v1608 = vmul.f32 %v1157, %v1588
      %v1609 = vmul.f32 %v1158, %v1588
      %v1610 = vmul.f32 %v1159, %v1588
      %v1611 = vmul.f32 %v1160, %v1588
      %v1612 = vmul.f32 %v1161, %v1588
      %vm1637 = vcmask 1043456
      %v1638 = vrot.slane %v1589, 4
      %v1639 = vrot.slane %v1590, 4
      %v1640 = vsel %vm1637, %v1638, %v1639
      %v1641 = vrot.slane %v1591, 4
      %v1642 = vsel %vm1637, %v1639, %v1641
      %v1643 = vrot.slane %v1592, 4
      %v1644 = vrot.slane %v1593, 4
      %v1645 = vsel %vm1637, %v1643, %v1644
      %v1646 = vrot.slane %v1594, 4
      %v1647 = vsel %vm1637, %v1644, %v1646
      %v1648 = vrot.slane %v1595, 4
      %v1649 = vrot.slane %v1596, 4
      %v1650 = vsel %vm1637, %v1648, %v1649
      %v1651 = vrot.slane %v1597, 4
      %v1652 = vsel %vm1637, %v1649, %v1651
      %v1653 = vrot.slane %v1598, 4
      %v1654 = vrot.slane %v1599, 4
      %v1655 = vsel %vm1637, %v1653, %v1654
      %v1656 = vrot.slane %v1600, 4
      %v1657 = vsel %vm1637, %v1654, %v1656
      %v1658 = vrot.slane %v1601, 4
      %v1659 = vrot.slane %v1602, 4
      %v1660 = vsel %vm1637, %v1658, %v1659
      %v1661 = vrot.slane %v1603, 4
      %v1662 = vsel %vm1637, %v1659, %v1661
      %v1663 = vrot.slane %v1604, 4
      %v1664 = vrot.slane %v1605, 4
      %v1665 = vsel %vm1637, %v1663, %v1664
      %v1666 = vrot.slane %v1606, 4
      %v1667 = vsel %vm1637, %v1664, %v1666
      %v1668 = vrot.slane %v1607, 4
      %v1669 = vrot.slane %v1608, 4
      %v1670 = vsel %vm1637, %v1668, %v1669
      %v1671 = vrot.slane %v1609, 4
      %v1672 = vsel %vm1637, %v1669, %v1671
      %v1673 = vrot.slane %v1610, 4
      %v1674 = vrot.slane %v1611, 4
      %v1675 = vsel %vm1637, %v1673, %v1674
      %v1676 = vrot.slane %v1612, 4
      %v1677 = vsel %vm1637, %v1674, %v1676
      %v1694 = vadd.f32 %v1569, %v1640
      %v1695 = vadd.f32 %v1570, %v1642
      %v1696 = vadd.f32 %v1571, %v1645
      %v1697 = vadd.f32 %v1572, %v1647
      %v1698 = vadd.f32 %v1573, %v1650
      %v1699 = vadd.f32 %v1574, %v1652
      %v1700 = vadd.f32 %v1575, %v1655
      %v1701 = vadd.f32 %v1576, %v1657
      %v1702 = vadd.f32 %v1577, %v1660
      %v1703 = vadd.f32 %v1578, %v1662
      %v1704 = vadd.f32 %v1579, %v1665
      %v1705 = vadd.f32 %v1580, %v1667
      %v1706 = vadd.f32 %v1581, %v1670
      %v1707 = vadd.f32 %v1582, %v1672
      %v1708 = vadd.f32 %v1583, %v1675
      %v1709 = vadd.f32 %v1584, %v1677
      %v1710 = vlaneseq
      %v1711 = vshrl.u32 %v1710, 7
      %v1712 = vsub.s32 0, %v1711
      %v1713 = vrot.slane %v581, %v1712
      %v1714 = vmul.f32 %v1141, %v1713
      %v1715 = vmul.f32 %v1142, %v1713
      %v1716 = vmul.f32 %v1144, %v1713
      %v1717 = vmul.f32 %v1145, %v1713
      %v1718 = vmul.f32 %v1147, %v1713
      %v1719 = vmul.f32 %v1148, %v1713
      %v1720 = vmul.f32 %v1150, %v1713
      %v1721 = vmul.f32 %v1151, %v1713
      %v1722 = vmul.f32 %v1153, %v1713
      %v1723 = vmul.f32 %v1154, %v1713
      %v1724 = vmul.f32 %v1156, %v1713
      %v1725 = vmul.f32 %v1157, %v1713
      %v1726 = vmul.f32 %v1159, %v1713
      %v1727 = vmul.f32 %v1160, %v1713
      %v1728 = vmul.f32 %v1162, %v1713
      %v1729 = vmul.f32 %v1163, %v1713
      %v1730 = vadd.f32 %v1694, %v1714
      %v1731 = vadd.f32 %v1695, %v1715
      %v1732 = vadd.f32 %v1696, %v1716
      %v1733 = vadd.f32 %v1697, %v1717
      %v1734 = vadd.f32 %v1698, %v1718
      %v1735 = vadd.f32 %v1699, %v1719
      %v1736 = vadd.f32 %v1700, %v1720
      %v1737 = vadd.f32 %v1701, %v1721
      %v1738 = vadd.f32 %v1702, %v1722
      %v1739 = vadd.f32 %v1703, %v1723
      %v1740 = vadd.f32 %v1704, %v1724
      %v1741 = vadd.f32 %v1705, %v1725
      %v1742 = vadd.f32 %v1706, %v1726
      %v1743 = vadd.f32 %v1707, %v1727
      %v1744 = vadd.f32 %v1708, %v1728
      %v1745 = vadd.f32 %v1709, %v1729
      %v1746 = vlaneseq
      %v1747 = vshrl.u32 %v1746, 7
      %v1748 = vsub.s32 1, %v1747
      %v1749 = vrot.slane %v581, %v1748
      %v1750 = vmul.f32 %v1141, %v1749
      %v1751 = vmul.f32 %v1142, %v1749
      %v1752 = vmul.f32 %v1143, %v1749
      %v1753 = vmul.f32 %v1144, %v1749
      %v1754 = vmul.f32 %v1145, %v1749
      %v1755 = vmul.f32 %v1146, %v1749
      %v1756 = vmul.f32 %v1147, %v1749
      %v1757 = vmul.f32 %v1148, %v1749
      %v1758 = vmul.f32 %v1149, %v1749
      %v1759 = vmul.f32 %v1150, %v1749
      %v1760 = vmul.f32 %v1151, %v1749
      %v1761 = vmul.f32 %v1152, %v1749
      %v1762 = vmul.f32 %v1153, %v1749
      %v1763 = vmul.f32 %v1154, %v1749
      %v1764 = vmul.f32 %v1155, %v1749
      %v1765 = vmul.f32 %v1156, %v1749
      %v1766 = vmul.f32 %v1157, %v1749
      %v1767 = vmul.f32 %v1158, %v1749
      %v1768 = vmul.f32 %v1159, %v1749
      %v1769 = vmul.f32 %v1160, %v1749
      %v1770 = vmul.f32 %v1161, %v1749
      %v1771 = vmul.f32 %v1162, %v1749
      %v1772 = vmul.f32 %v1163, %v1749
      %v1773 = vmul.f32 %v1164, %v1749
      %v1798 = vrot.slane %v1750, 1
      %v1799 = vrot.slane %v1751, 1
      %v1800 = vsel %vm1262, %v1798, %v1799
      %v1801 = vrot.slane %v1752, 1
      %v1802 = vsel %vm1262, %v1799, %v1801
      %v1803 = vrot.slane %v1753, 1
      %v1804 = vrot.slane %v1754, 1
      %v1805 = vsel %vm1262, %v1803, %v1804
      %v1806 = vrot.slane %v1755, 1
      %v1807 = vsel %vm1262, %v1804, %v1806
      %v1808 = vrot.slane %v1756, 1
      %v1809 = vrot.slane %v1757, 1
      %v1810 = vsel %vm1262, %v1808, %v1809
      %v1811 = vrot.slane %v1758, 1
      %v1812 = vsel %vm1262, %v1809, %v1811
      %v1813 = vrot.slane %v1759, 1
      %v1814 = vrot.slane %v1760, 1
      %v1815 = vsel %vm1262, %v1813, %v1814
      %v1816 = vrot.slane %v1761, 1
      %v1817 = vsel %vm1262, %v1814, %v1816
      %v1818 = vrot.slane %v1762, 1
      %v1819 = vrot.slane %v1763, 1
      %v1820 = vsel %vm1262, %v1818, %v1819
      %v1821 = vrot.slane %v1764, 1
      %v1822 = vsel %vm1262, %v1819, %v1821
      %v1823 = vrot.slane %v1765, 1
      %v1824 = vrot.slane %v1766, 1
      %v1825 = vsel %vm1262, %v1823, %v1824
      %v1826 = vrot.slane %v1767, 1
      %v1827 = vsel %vm1262, %v1824, %v1826
      %v1828 = vrot.slane %v1768, 1
      %v1829 = vrot.slane %v1769, 1
      %v1830 = vsel %vm1262, %v1828, %v1829
      %v1831 = vrot.slane %v1770, 1
      %v1832 = vsel %vm1262, %v1829, %v1831
      %v1833 = vrot.slane %v1771, 1
      %v1834 = vrot.slane %v1772, 1
      %v1835 = vsel %vm1262, %v1833, %v1834
      %v1836 = vrot.slane %v1773, 1
      %v1837 = vsel %vm1262, %v1834, %v1836
      %v1854 = vadd.f32 %v1730, %v1800
      %v1855 = vadd.f32 %v1731, %v1802
      %v1856 = vadd.f32 %v1732, %v1805
      %v1857 = vadd.f32 %v1733, %v1807
      %v1858 = vadd.f32 %v1734, %v1810
      %v1859 = vadd.f32 %v1735, %v1812
      %v1860 = vadd.f32 %v1736, %v1815
      %v1861 = vadd.f32 %v1737, %v1817
      %v1862 = vadd.f32 %v1738, %v1820
      %v1863 = vadd.f32 %v1739, %v1822
      %v1864 = vadd.f32 %v1740, %v1825
      %v1865 = vadd.f32 %v1741, %v1827
      %v1866 = vadd.f32 %v1742, %v1830
      %v1867 = vadd.f32 %v1743, %v1832
      %v1868 = vadd.f32 %v1744, %v1835
      %v1869 = vadd.f32 %v1745, %v1837
      %v1870 = vlaneseq
      %v1871 = vshrl.u32 %v1870, 7
      %v1872 = vsub.s32 2, %v1871
      %v1873 = vrot.slane %v581, %v1872
      %v1874 = vmul.f32 %v1141, %v1873
      %v1875 = vmul.f32 %v1142, %v1873
      %v1876 = vmul.f32 %v1143, %v1873
      %v1877 = vmul.f32 %v1144, %v1873
      %v1878 = vmul.f32 %v1145, %v1873
      %v1879 = vmul.f32 %v1146, %v1873
      %v1880 = vmul.f32 %v1147, %v1873
      %v1881 = vmul.f32 %v1148, %v1873
      %v1882 = vmul.f32 %v1149, %v1873
      %v1883 = vmul.f32 %v1150, %v1873
      %v1884 = vmul.f32 %v1151, %v1873
      %v1885 = vmul.f32 %v1152, %v1873
      %v1886 = vmul.f32 %v1153, %v1873
      %v1887 = vmul.f32 %v1154, %v1873
      %v1888 = vmul.f32 %v1155, %v1873
      %v1889 = vmul.f32 %v1156, %v1873
      %v1890 = vmul.f32 %v1157, %v1873
      %v1891 = vmul.f32 %v1158, %v1873
      %v1892 = vmul.f32 %v1159, %v1873
      %v1893 = vmul.f32 %v1160, %v1873
      %v1894 = vmul.f32 %v1161, %v1873
      %v1895 = vmul.f32 %v1162, %v1873
      %v1896 = vmul.f32 %v1163, %v1873
      %v1897 = vmul.f32 %v1164, %v1873
      %v1922 = vrot.slane %v1874, 2
      %v1923 = vrot.slane %v1875, 2
      %v1924 = vsel %vm1387, %v1922, %v1923
      %v1925 = vrot.slane %v1876, 2
      %v1926 = vsel %vm1387, %v1923, %v1925
      %v1927 = vrot.slane %v1877, 2
      %v1928 = vrot.slane %v1878, 2
      %v1929 = vsel %vm1387, %v1927, %v1928
      %v1930 = vrot.slane %v1879, 2
      %v1931 = vsel %vm1387, %v1928, %v1930
      %v1932 = vrot.slane %v1880, 2
      %v1933 = vrot.slane %v1881, 2
      %v1934 = vsel %vm1387, %v1932, %v1933
      %v1935 = vrot.slane %v1882, 2
      %v1936 = vsel %vm1387, %v1933, %v1935
      %v1937 = vrot.slane %v1883, 2
      %v1938 = vrot.slane %v1884, 2
      %v1939 = vsel %vm1387, %v1937, %v1938
      %v1940 = vrot.slane %v1885, 2
      %v1941 = vsel %vm1387, %v1938, %v1940
      %v1942 = vrot.slane %v1886, 2
      %v1943 = vrot.slane %v1887, 2
      %v1944 = vsel %vm1387, %v1942, %v1943
      %v1945 = vrot.slane %v1888, 2
      %v1946 = vsel %vm1387, %v1943, %v1945
      %v1947 = vrot.slane %v1889, 2
      %v1948 = vrot.slane %v1890, 2
      %v1949 = vsel %vm1387, %v1947, %v1948
      %v1950 = vrot.slane %v1891, 2
      %v1951 = vsel %vm1387, %v1948, %v1950
      %v1952 = vrot.slane %v1892, 2
      %v1953 = vrot.slane %v1893, 2
      %v1954 = vsel %vm1387, %v1952, %v1953
      %v1955 = vrot.slane %v1894, 2
      %v1956 = vsel %vm1387, %v1953, %v1955
      %v1957 = vrot.slane %v1895, 2
      %v1958 = vrot.slane %v1896, 2
      %v1959 = vsel %vm1387, %v1957, %v1958
      %v1960 = vrot.slane %v1897, 2
      %v1961 = vsel %vm1387, %v1958, %v1960
      %v1978 = vadd.f32 %v1854, %v1924
      %v1979 = vadd.f32 %v1855, %v1926
      %v1980 = vadd.f32 %v1856, %v1929
      %v1981 = vadd.f32 %v1857, %v1931
      %v1982 = vadd.f32 %v1858, %v1934
      %v1983 = vadd.f32 %v1859, %v1936
      %v1984 = vadd.f32 %v1860, %v1939
      %v1985 = vadd.f32 %v1861, %v1941
      %v1986 = vadd.f32 %v1862, %v1944
      %v1987 = vadd.f32 %v1863, %v1946
      %v1988 = vadd.f32 %v1864, %v1949
      %v1989 = vadd.f32 %v1865, %v1951
      %v1990 = vadd.f32 %v1866, %v1954
      %v1991 = vadd.f32 %v1867, %v1956
      %v1992 = vadd.f32 %v1868, %v1959
      %v1993 = vadd.f32 %v1869, %v1961
      %v1994 = vlaneseq
      %v1995 = vshrl.u32 %v1994, 7
      %v1996 = vsub.s32 3, %v1995
      %v1997 = vrot.slane %v581, %v1996
      %v1998 = vmul.f32 %v1141, %v1997
      %v1999 = vmul.f32 %v1142, %v1997
      %v2000 = vmul.f32 %v1143, %v1997
      %v2001 = vmul.f32 %v1144, %v1997
      %v2002 = vmul.f32 %v1145, %v1997
      %v2003 = vmul.f32 %v1146, %v1997
      %v2004 = vmul.f32 %v1147, %v1997
      %v2005 = vmul.f32 %v1148, %v1997
      %v2006 = vmul.f32 %v1149, %v1997
      %v2007 = vmul.f32 %v1150, %v1997
      %v2008 = vmul.f32 %v1151, %v1997
      %v2009 = vmul.f32 %v1152, %v1997
      %v2010 = vmul.f32 %v1153, %v1997
      %v2011 = vmul.f32 %v1154, %v1997
      %v2012 = vmul.f32 %v1155, %v1997
      %v2013 = vmul.f32 %v1156, %v1997
      %v2014 = vmul.f32 %v1157, %v1997
      %v2015 = vmul.f32 %v1158, %v1997
      %v2016 = vmul.f32 %v1159, %v1997
      %v2017 = vmul.f32 %v1160, %v1997
      %v2018 = vmul.f32 %v1161, %v1997
      %v2019 = vmul.f32 %v1162, %v1997
      %v2020 = vmul.f32 %v1163, %v1997
      %v2021 = vmul.f32 %v1164, %v1997
      %v2046 = vrot.slane %v1998, 3
      %v2047 = vrot.slane %v1999, 3
      %v2048 = vsel %vm1512, %v2046, %v2047
      %v2049 = vrot.slane %v2000, 3
      %v2050 = vsel %vm1512, %v2047, %v2049
      %v2051 = vrot.slane %v2001, 3
      %v2052 = vrot.slane %v2002, 3
      %v2053 = vsel %vm1512, %v2051, %v2052
      %v2054 = vrot.slane %v2003, 3
      %v2055 = vsel %vm1512, %v2052, %v2054
      %v2056 = vrot.slane %v2004, 3
      %v2057 = vrot.slane %v2005, 3
      %v2058 = vsel %vm1512, %v2056, %v2057
      %v2059 = vrot.slane %v2006, 3
      %v2060 = vsel %vm1512, %v2057, %v2059
      %v2061 = vrot.slane %v2007, 3
      %v2062 = vrot.slane %v2008, 3
      %v2063 = vsel %vm1512, %v2061, %v2062
      %v2064 = vrot.slane %v2009, 3
      %v2065 = vsel %vm1512, %v2062, %v2064
      %v2066 = vrot.slane %v2010, 3
      %v2067 = vrot.slane %v2011, 3
      %v2068 = vsel %vm1512, %v2066, %v2067
      %v2069 = vrot.slane %v2012, 3
      %v2070 = vsel %vm1512, %v2067, %v2069
      %v2071 = vrot.slane %v2013, 3
      %v2072 = vrot.slane %v2014, 3
      %v2073 = vsel %vm1512, %v2071, %v2072
      %v2074 = vrot.slane %v2015, 3
      %v2075 = vsel %vm1512, %v2072, %v2074
      %v2076 = vrot.slane %v2016, 3
      %v2077 = vrot.slane %v2017, 3
      %v2078 = vsel %vm1512, %v2076, %v2077
      %v2079 = vrot.slane %v2018, 3
      %v2080 = vsel %vm1512, %v2077, %v2079
      %v2081 = vrot.slane %v2019, 3
      %v2082 = vrot.slane %v2020, 3
      %v2083 = vsel %vm1512, %v2081, %v2082
      %v2084 = vrot.slane %v2021, 3
      %v2085 = vsel %vm1512, %v2082, %v2084
      %v2102 = vadd.f32 %v1978, %v2048
      %v2103 = vadd.f32 %v1979, %v2050
      %v2104 = vadd.f32 %v1980, %v2053
      %v2105 = vadd.f32 %v1981, %v2055
      %v2106 = vadd.f32 %v1982, %v2058
      %v2107 = vadd.f32 %v1983, %v2060
      %v2108 = vadd.f32 %v1984, %v2063
      %v2109 = vadd.f32 %v1985, %v2065
      %v2110 = vadd.f32 %v1986, %v2068
      %v2111 = vadd.f32 %v1987, %v2070
      %v2112 = vadd.f32 %v1988, %v2073
      %v2113 = vadd.f32 %v1989, %v2075
      %v2114 = vadd.f32 %v1990, %v2078
      %v2115 = vadd.f32 %v1991, %v2080
      %v2116 = vadd.f32 %v1992, %v2083
      %v2117 = vadd.f32 %v1993, %v2085
      %v2118 = vlaneseq
      %v2119 = vshrl.u32 %v2118, 7
      %v2120 = vsub.s32 4, %v2119
      %v2121 = vrot.slane %v581, %v2120
      %v2122 = vmul.f32 %v1141, %v2121
      %v2123 = vmul.f32 %v1142, %v2121
      %v2124 = vmul.f32 %v1143, %v2121
      %v2125 = vmul.f32 %v1144, %v2121
      %v2126 = vmul.f32 %v1145, %v2121
      %v2127 = vmul.f32 %v1146, %v2121
      %v2128 = vmul.f32 %v1147, %v2121
      %v2129 = vmul.f32 %v1148, %v2121
      %v2130 = vmul.f32 %v1149, %v2121
      %v2131 = vmul.f32 %v1150, %v2121
      %v2132 = vmul.f32 %v1151, %v2121
      %v2133 = vmul.f32 %v1152, %v2121
      %v2134 = vmul.f32 %v1153, %v2121
      %v2135 = vmul.f32 %v1154, %v2121
      %v2136 = vmul.f32 %v1155, %v2121
      %v2137 = vmul.f32 %v1156, %v2121
      %v2138 = vmul.f32 %v1157, %v2121
      %v2139 = vmul.f32 %v1158, %v2121
      %v2140 = vmul.f32 %v1159, %v2121
      %v2141 = vmul.f32 %v1160, %v2121
      %v2142 = vmul.f32 %v1161, %v2121
      %v2143 = vmul.f32 %v1162, %v2121
      %v2144 = vmul.f32 %v1163, %v2121
      %v2145 = vmul.f32 %v1164, %v2121
      %v2170 = vrot.slane %v2122, 4
      %v2171 = vrot.slane %v2123, 4
      %v2172 = vsel %vm1637, %v2170, %v2171
      %v2173 = vrot.slane %v2124, 4
      %v2174 = vsel %vm1637, %v2171, %v2173
      %v2175 = vrot.slane %v2125, 4
      %v2176 = vrot.slane %v2126, 4
      %v2177 = vsel %vm1637, %v2175, %v2176
      %v2178 = vrot.slane %v2127, 4
      %v2179 = vsel %vm1637, %v2176, %v2178
      %v2180 = vrot.slane %v2128, 4
      %v2181 = vrot.slane %v2129, 4
      %v2182 = vsel %vm1637, %v2180, %v2181
      %v2183 = vrot.slane %v2130, 4
      %v2184 = vsel %vm1637, %v2181, %v2183
      %v2185 = vrot.slane %v2131, 4
      %v2186 = vrot.slane %v2132, 4
      %v2187 = vsel %vm1637, %v2185, %v2186
      %v2188 = vrot.slane %v2133, 4
      %v2189 = vsel %vm1637, %v2186, %v2188
      %v2190 = vrot.slane %v2134, 4
      %v2191 = vrot.slane %v2135, 4
      %v2192 = vsel %vm1637, %v2190, %v2191
      %v2193 = vrot.slane %v2136, 4
      %v2194 = vsel %vm1637, %v2191, %v2193
      %v2195 = vrot.slane %v2137, 4
      %v2196 = vrot.slane %v2138, 4
      %v2197 = vsel %vm1637, %v2195, %v2196
      %v2198 = vrot.slane %v2139, 4
      %v2199 = vsel %vm1637, %v2196, %v2198
      %v2200 = vrot.slane %v2140, 4
      %v2201 = vrot.slane %v2141, 4
      %v2202 = vsel %vm1637, %v2200, %v2201
      %v2203 = vrot.slane %v2142, 4
      %v2204 = vsel %vm1637, %v2201, %v2203
      %v2205 = vrot.slane %v2143, 4
      %v2206 = vrot.slane %v2144, 4
      %v2207 = vsel %vm1637, %v2205, %v2206
      %v2208 = vrot.slane %v2145, 4
      %v2209 = vsel %vm1637, %v2206, %v2208
      %v2226 = vadd.f32 %v2102, %v2172
      %v2227 = vadd.f32 %v2103, %v2174
      %v2228 = vadd.f32 %v2104, %v2177
      %v2229 = vadd.f32 %v2105, %v2179
      %v2230 = vadd.f32 %v2106, %v2182
      %v2231 = vadd.f32 %v2107, %v2184
      %v2232 = vadd.f32 %v2108, %v2187
      %v2233 = vadd.f32 %v2109, %v2189
      %v2234 = vadd.f32 %v2110, %v2192
      %v2235 = vadd.f32 %v2111, %v2194
      %v2236 = vadd.f32 %v2112, %v2197
      %v2237 = vadd.f32 %v2113, %v2199
      %v2238 = vadd.f32 %v2114, %v2202
      %v2239 = vadd.f32 %v2115, %v2204
      %v2240 = vadd.f32 %v2116, %v2207
      %v2241 = vadd.f32 %v2117, %v2209
      %v2242 = vlaneseq
      %v2243 = vshrl.u32 %v2242, 7
      %v2244 = vsub.s32 0, %v2243
      %v2245 = vrot.slane %v582, %v2244
      %v2246 = vmul.f32 %v1144, %v2245
      %v2247 = vmul.f32 %v1145, %v2245
      %v2248 = vmul.f32 %v1147, %v2245
      %v2249 = vmul.f32 %v1148, %v2245
      %v2250 = vmul.f32 %v1150, %v2245
      %v2251 = vmul.f32 %v1151, %v2245
      %v2252 = vmul.f32 %v1153, %v2245
      %v2253 = vmul.f32 %v1154, %v2245
      %v2254 = vmul.f32 %v1156, %v2245
      %v2255 = vmul.f32 %v1157, %v2245
      %v2256 = vmul.f32 %v1159, %v2245
      %v2257 = vmul.f32 %v1160, %v2245
      %v2258 = vmul.f32 %v1162, %v2245
      %v2259 = vmul.f32 %v1163, %v2245
      %v2260 = vmul.f32 %v1165, %v2245
      %v2261 = vmul.f32 %v1166, %v2245
      %v2262 = vadd.f32 %v2226, %v2246
      %v2263 = vadd.f32 %v2227, %v2247
      %v2264 = vadd.f32 %v2228, %v2248
      %v2265 = vadd.f32 %v2229, %v2249
      %v2266 = vadd.f32 %v2230, %v2250
      %v2267 = vadd.f32 %v2231, %v2251
      %v2268 = vadd.f32 %v2232, %v2252
      %v2269 = vadd.f32 %v2233, %v2253
      %v2270 = vadd.f32 %v2234, %v2254
      %v2271 = vadd.f32 %v2235, %v2255
      %v2272 = vadd.f32 %v2236, %v2256
      %v2273 = vadd.f32 %v2237, %v2257
      %v2274 = vadd.f32 %v2238, %v2258
      %v2275 = vadd.f32 %v2239, %v2259
      %v2276 = vadd.f32 %v2240, %v2260
      %v2277 = vadd.f32 %v2241, %v2261
      %v2278 = vlaneseq
      %v2279 = vshrl.u32 %v2278, 7
      %v2280 = vsub.s32 1, %v2279
      %v2281 = vrot.slane %v582, %v2280
      %v2282 = vmul.f32 %v1144, %v2281
      %v2283 = vmul.f32 %v1145, %v2281
      %v2284 = vmul.f32 %v1146, %v2281
      %v2285 = vmul.f32 %v1147, %v2281
      %v2286 = vmul.f32 %v1148, %v2281
      %v2287 = vmul.f32 %v1149, %v2281
      %v2288 = vmul.f32 %v1150, %v2281
      %v2289 = vmul.f32 %v1151, %v2281
      %v2290 = vmul.f32 %v1152, %v2281
      %v2291 = vmul.f32 %v1153, %v2281
      %v2292 = vmul.f32 %v1154, %v2281
      %v2293 = vmul.f32 %v1155, %v2281
      %v2294 = vmul.f32 %v1156, %v2281
      %v2295 = vmul.f32 %v1157, %v2281
      %v2296 = vmul.f32 %v1158, %v2281
      %v2297 = vmul.f32 %v1159, %v2281
      %v2298 = vmul.f32 %v1160, %v2281
      %v2299 = vmul.f32 %v1161, %v2281
      %v2300 = vmul.f32 %v1162, %v2281
      %v2301 = vmul.f32 %v1163, %v2281
      %v2302 = vmul.f32 %v1164, %v2281
      %v2303 = vmul.f32 %v1165, %v2281
      %v2304 = vmul.f32 %v1166, %v2281
      %v2305 = vmul.f32 %v1167, %v2281
      %v2330 = vrot.slane %v2282, 1
      %v2331 = vrot.slane %v2283, 1
      %v2332 = vsel %vm1262, %v2330, %v2331
      %v2333 = vrot.slane %v2284, 1
      %v2334 = vsel %vm1262, %v2331, %v2333
      %v2335 = vrot.slane %v2285, 1
      %v2336 = vrot.slane %v2286, 1
      %v2337 = vsel %vm1262, %v2335, %v2336
      %v2338 = vrot.slane %v2287, 1
      %v2339 = vsel %vm1262, %v2336, %v2338
      %v2340 = vrot.slane %v2288, 1
      %v2341 = vrot.slane %v2289, 1
      %v2342 = vsel %vm1262, %v2340, %v2341
      %v2343 = vrot.slane %v2290, 1
      %v2344 = vsel %vm1262, %v2341, %v2343
      %v2345 = vrot.slane %v2291, 1
      %v2346 = vrot.slane %v2292, 1
      %v2347 = vsel %vm1262, %v2345, %v2346
      %v2348 = vrot.slane %v2293, 1
      %v2349 = vsel %vm1262, %v2346, %v2348
      %v2350 = vrot.slane %v2294, 1
      %v2351 = vrot.slane %v2295, 1
      %v2352 = vsel %vm1262, %v2350, %v2351
      %v2353 = vrot.slane %v2296, 1
      %v2354 = vsel %vm1262, %v2351, %v2353
      %v2355 = vrot.slane %v2297, 1
      %v2356 = vrot.slane %v2298, 1
      %v2357 = vsel %vm1262, %v2355, %v2356
      %v2358 = vrot.slane %v2299, 1
      %v2359 = vsel %vm1262, %v2356, %v2358
      %v2360 = vrot.slane %v2300, 1
      %v2361 = vrot.slane %v2301, 1
      %v2362 = vsel %vm1262, %v2360, %v2361
      %v2363 = vrot.slane %v2302, 1
      %v2364 = vsel %vm1262, %v2361, %v2363
      %v2365 = vrot.slane %v2303, 1
      %v2366 = vrot.slane %v2304, 1
      %v2367 = vsel %vm1262, %v2365, %v2366
      %v2368 = vrot.slane %v2305, 1
      %v2369 = vsel %vm1262, %v2366, %v2368
      %v2386 = vadd.f32 %v2262, %v2332
      %v2387 = vadd.f32 %v2263, %v2334
      %v2388 = vadd.f32 %v2264, %v2337
      %v2389 = vadd.f32 %v2265, %v2339
      %v2390 = vadd.f32 %v2266, %v2342
      %v2391 = vadd.f32 %v2267, %v2344
      %v2392 = vadd.f32 %v2268, %v2347
      %v2393 = vadd.f32 %v2269, %v2349
      %v2394 = vadd.f32 %v2270, %v2352
      %v2395 = vadd.f32 %v2271, %v2354
      %v2396 = vadd.f32 %v2272, %v2357
      %v2397 = vadd.f32 %v2273, %v2359
      %v2398 = vadd.f32 %v2274, %v2362
      %v2399 = vadd.f32 %v2275, %v2364
      %v2400 = vadd.f32 %v2276, %v2367
      %v2401 = vadd.f32 %v2277, %v2369
      %v2402 = vlaneseq
      %v2403 = vshrl.u32 %v2402, 7
      %v2404 = vsub.s32 2, %v2403
      %v2405 = vrot.slane %v582, %v2404
      %v2406 = vmul.f32 %v1144, %v2405
      %v2407 = vmul.f32 %v1145, %v2405
      %v2408 = vmul.f32 %v1146, %v2405
      %v2409 = vmul.f32 %v1147, %v2405
      %v2410 = vmul.f32 %v1148, %v2405
      %v2411 = vmul.f32 %v1149, %v2405
      %v2412 = vmul.f32 %v1150, %v2405
      %v2413 = vmul.f32 %v1151, %v2405
      %v2414 = vmul.f32 %v1152, %v2405
      %v2415 = vmul.f32 %v1153, %v2405
      %v2416 = vmul.f32 %v1154, %v2405
      %v2417 = vmul.f32 %v1155, %v2405
      %v2418 = vmul.f32 %v1156, %v2405
      %v2419 = vmul.f32 %v1157, %v2405
      %v2420 = vmul.f32 %v1158, %v2405
      %v2421 = vmul.f32 %v1159, %v2405
      %v2422 = vmul.f32 %v1160, %v2405
      %v2423 = vmul.f32 %v1161, %v2405
      %v2424 = vmul.f32 %v1162, %v2405
      %v2425 = vmul.f32 %v1163, %v2405
      %v2426 = vmul.f32 %v1164, %v2405
      %v2427 = vmul.f32 %v1165, %v2405
      %v2428 = vmul.f32 %v1166, %v2405
      %v2429 = vmul.f32 %v1167, %v2405
      %v2454 = vrot.slane %v2406, 2
      %v2455 = vrot.slane %v2407, 2
      %v2456 = vsel %vm1387, %v2454, %v2455
      %v2457 = vrot.slane %v2408, 2
      %v2458 = vsel %vm1387, %v2455, %v2457
      %v2459 = vrot.slane %v2409, 2
      %v2460 = vrot.slane %v2410, 2
      %v2461 = vsel %vm1387, %v2459, %v2460
      %v2462 = vrot.slane %v2411, 2
      %v2463 = vsel %vm1387, %v2460, %v2462
      %v2464 = vrot.slane %v2412, 2
      %v2465 = vrot.slane %v2413, 2
      %v2466 = vsel %vm1387, %v2464, %v2465
      %v2467 = vrot.slane %v2414, 2
      %v2468 = vsel %vm1387, %v2465, %v2467
      %v2469 = vrot.slane %v2415, 2
      %v2470 = vrot.slane %v2416, 2
      %v2471 = vsel %vm1387, %v2469, %v2470
      %v2472 = vrot.slane %v2417, 2
      %v2473 = vsel %vm1387, %v2470, %v2472
      %v2474 = vrot.slane %v2418, 2
      %v2475 = vrot.slane %v2419, 2
      %v2476 = vsel %vm1387, %v2474, %v2475
      %v2477 = vrot.slane %v2420, 2
      %v2478 = vsel %vm1387, %v2475, %v2477
      %v2479 = vrot.slane %v2421, 2
      %v2480 = vrot.slane %v2422, 2
      %v2481 = vsel %vm1387, %v2479, %v2480
      %v2482 = vrot.slane %v2423, 2
      %v2483 = vsel %vm1387, %v2480, %v2482
      %v2484 = vrot.slane %v2424, 2
      %v2485 = vrot.slane %v2425, 2
      %v2486 = vsel %vm1387, %v2484, %v2485
      %v2487 = vrot.slane %v2426, 2
      %v2488 = vsel %vm1387, %v2485, %v2487
      %v2489 = vrot.slane %v2427, 2
      %v2490 = vrot.slane %v2428, 2
      %v2491 = vsel %vm1387, %v2489, %v2490
      %v2492 = vrot.slane %v2429, 2
      %v2493 = vsel %vm1387, %v2490, %v2492
      %v2510 = vadd.f32 %v2386, %v2456
      %v2511 = vadd.f32 %v2387, %v2458
      %v2512 = vadd.f32 %v2388, %v2461
      %v2513 = vadd.f32 %v2389, %v2463
      %v2514 = vadd.f32 %v2390, %v2466
      %v2515 = vadd.f32 %v2391, %v2468
      %v2516 = vadd.f32 %v2392, %v2471
      %v2517 = vadd.f32 %v2393, %v2473
      %v2518 = vadd.f32 %v2394, %v2476
      %v2519 = vadd.f32 %v2395, %v2478
      %v2520 = vadd.f32 %v2396, %v2481
      %v2521 = vadd.f32 %v2397, %v2483
      %v2522 = vadd.f32 %v2398, %v2486
      %v2523 = vadd.f32 %v2399, %v2488
      %v2524 = vadd.f32 %v2400, %v2491
      %v2525 = vadd.f32 %v2401, %v2493
      %v2526 = vlaneseq
      %v2527 = vshrl.u32 %v2526, 7
      %v2528 = vsub.s32 3, %v2527
      %v2529 = vrot.slane %v582, %v2528
      %v2530 = vmul.f32 %v1144, %v2529
      %v2531 = vmul.f32 %v1145, %v2529
      %v2532 = vmul.f32 %v1146, %v2529
      %v2533 = vmul.f32 %v1147, %v2529
      %v2534 = vmul.f32 %v1148, %v2529
      %v2535 = vmul.f32 %v1149, %v2529
      %v2536 = vmul.f32 %v1150, %v2529
      %v2537 = vmul.f32 %v1151, %v2529
      %v2538 = vmul.f32 %v1152, %v2529
      %v2539 = vmul.f32 %v1153, %v2529
      %v2540 = vmul.f32 %v1154, %v2529
      %v2541 = vmul.f32 %v1155, %v2529
      %v2542 = vmul.f32 %v1156, %v2529
      %v2543 = vmul.f32 %v1157, %v2529
      %v2544 = vmul.f32 %v1158, %v2529
      %v2545 = vmul.f32 %v1159, %v2529
      %v2546 = vmul.f32 %v1160, %v2529
      %v2547 = vmul.f32 %v1161, %v2529
      %v2548 = vmul.f32 %v1162, %v2529
      %v2549 = vmul.f32 %v1163, %v2529
      %v2550 = vmul.f32 %v1164, %v2529
      %v2551 = vmul.f32 %v1165, %v2529
      %v2552 = vmul.f32 %v1166, %v2529
      %v2553 = vmul.f32 %v1167, %v2529
      %v2578 = vrot.slane %v2530, 3
      %v2579 = vrot.slane %v2531, 3
      %v2580 = vsel %vm1512, %v2578, %v2579
      %v2581 = vrot.slane %v2532, 3
      %v2582 = vsel %vm1512, %v2579, %v2581
      %v2583 = vrot.slane %v2533, 3
      %v2584 = vrot.slane %v2534, 3
      %v2585 = vsel %vm1512, %v2583, %v2584
      %v2586 = vrot.slane %v2535, 3
      %v2587 = vsel %vm1512, %v2584, %v2586
      %v2588 = vrot.slane %v2536, 3
      %v2589 = vrot.slane %v2537, 3
      %v2590 = vsel %vm1512, %v2588, %v2589
      %v2591 = vrot.slane %v2538, 3
      %v2592 = vsel %vm1512, %v2589, %v2591
      %v2593 = vrot.slane %v2539, 3
      %v2594 = vrot.slane %v2540, 3
      %v2595 = vsel %vm1512, %v2593, %v2594
      %v2596 = vrot.slane %v2541, 3
      %v2597 = vsel %vm1512, %v2594, %v2596
      %v2598 = vrot.slane %v2542, 3
      %v2599 = vrot.slane %v2543, 3
      %v2600 = vsel %vm1512, %v2598, %v2599
      %v2601 = vrot.slane %v2544, 3
      %v2602 = vsel %vm1512, %v2599, %v2601
      %v2603 = vrot.slane %v2545, 3
      %v2604 = vrot.slane %v2546, 3
      %v2605 = vsel %vm1512, %v2603, %v2604
      %v2606 = vrot.slane %v2547, 3
      %v2607 = vsel %vm1512, %v2604, %v2606
      %v2608 = vrot.slane %v2548, 3
      %v2609 = vrot.slane %v2549, 3
      %v2610 = vsel %vm1512, %v2608, %v2609
      %v2611 = vrot.slane %v2550, 3
      %v2612 = vsel %vm1512, %v2609, %v2611
      %v2613 = vrot.slane %v2551, 3
      %v2614 = vrot.slane %v2552, 3
      %v2615 = vsel %vm1512, %v2613, %v2614
      %v2616 = vrot.slane %v2553, 3
      %v2617 = vsel %vm1512, %v2614, %v2616
      %v2634 = vadd.f32 %v2510, %v2580
      %v2635 = vadd.f32 %v2511, %v2582
      %v2636 = vadd.f32 %v2512, %v2585
      %v2637 = vadd.f32 %v2513, %v2587
      %v2638 = vadd.f32 %v2514, %v2590
      %v2639 = vadd.f32 %v2515, %v2592
      %v2640 = vadd.f32 %v2516, %v2595
      %v2641 = vadd.f32 %v2517, %v2597
      %v2642 = vadd.f32 %v2518, %v2600
      %v2643 = vadd.f32 %v2519, %v2602
      %v2644 = vadd.f32 %v2520, %v2605
      %v2645 = vadd.f32 %v2521, %v2607
      %v2646 = vadd.f32 %v2522, %v2610
      %v2647 = vadd.f32 %v2523, %v2612
      %v2648 = vadd.f32 %v2524, %v2615
      %v2649 = vadd.f32 %v2525, %v2617
      %v2650 = vlaneseq
      %v2651 = vshrl.u32 %v2650, 7
      %v2652 = vsub.s32 4, %v2651
      %v2653 = vrot.slane %v582, %v2652
      %v2654 = vmul.f32 %v1144, %v2653
      %v2655 = vmul.f32 %v1145, %v2653
      %v2656 = vmul.f32 %v1146, %v2653
      %v2657 = vmul.f32 %v1147, %v2653
      %v2658 = vmul.f32 %v1148, %v2653
      %v2659 = vmul.f32 %v1149, %v2653
      %v2660 = vmul.f32 %v1150, %v2653
      %v2661 = vmul.f32 %v1151, %v2653
      %v2662 = vmul.f32 %v1152, %v2653
      %v2663 = vmul.f32 %v1153, %v2653
      %v2664 = vmul.f32 %v1154, %v2653
      %v2665 = vmul.f32 %v1155, %v2653
      %v2666 = vmul.f32 %v1156, %v2653
      %v2667 = vmul.f32 %v1157, %v2653
      %v2668 = vmul.f32 %v1158, %v2653
      %v2669 = vmul.f32 %v1159, %v2653
      %v2670 = vmul.f32 %v1160, %v2653
      %v2671 = vmul.f32 %v1161, %v2653
      %v2672 = vmul.f32 %v1162, %v2653
      %v2673 = vmul.f32 %v1163, %v2653
      %v2674 = vmul.f32 %v1164, %v2653
      %v2675 = vmul.f32 %v1165, %v2653
      %v2676 = vmul.f32 %v1166, %v2653
      %v2677 = vmul.f32 %v1167, %v2653
      %v2702 = vrot.slane %v2654, 4
      %v2703 = vrot.slane %v2655, 4
      %v2704 = vsel %vm1637, %v2702, %v2703
      %v2705 = vrot.slane %v2656, 4
      %v2706 = vsel %vm1637, %v2703, %v2705
      %v2707 = vrot.slane %v2657, 4
      %v2708 = vrot.slane %v2658, 4
      %v2709 = vsel %vm1637, %v2707, %v2708
      %v2710 = vrot.slane %v2659, 4
      %v2711 = vsel %vm1637, %v2708, %v2710
      %v2712 = vrot.slane %v2660, 4
      %v2713 = vrot.slane %v2661, 4
      %v2714 = vsel %vm1637, %v2712, %v2713
      %v2715 = vrot.slane %v2662, 4
      %v2716 = vsel %vm1637, %v2713, %v2715
      %v2717 = vrot.slane %v2663, 4
      %v2718 = vrot.slane %v2664, 4
      %v2719 = vsel %vm1637, %v2717, %v2718
      %v2720 = vrot.slane %v2665, 4
      %v2721 = vsel %vm1637, %v2718, %v2720
      %v2722 = vrot.slane %v2666, 4
      %v2723 = vrot.slane %v2667, 4
      %v2724 = vsel %vm1637, %v2722, %v2723
      %v2725 = vrot.slane %v2668, 4
      %v2726 = vsel %vm1637, %v2723, %v2725
      %v2727 = vrot.slane %v2669, 4
      %v2728 = vrot.slane %v2670, 4
      %v2729 = vsel %vm1637, %v2727, %v2728
      %v2730 = vrot.slane %v2671, 4
      %v2731 = vsel %vm1637, %v2728, %v2730
      %v2732 = vrot.slane %v2672, 4
      %v2733 = vrot.slane %v2673, 4
      %v2734 = vsel %vm1637, %v2732, %v2733
      %v2735 = vrot.slane %v2674, 4
      %v2736 = vsel %vm1637, %v2733, %v2735
      %v2737 = vrot.slane %v2675, 4
      %v2738 = vrot.slane %v2676, 4
      %v2739 = vsel %vm1637, %v2737, %v2738
      %v2740 = vrot.slane %v2677, 4
      %v2741 = vsel %vm1637, %v2738, %v2740
      %v2758 = vadd.f32 %v2634, %v2704
      %v2759 = vadd.f32 %v2635, %v2706
      %v2760 = vadd.f32 %v2636, %v2709
      %v2761 = vadd.f32 %v2637, %v2711
      %v2762 = vadd.f32 %v2638, %v2714
      %v2763 = vadd.f32 %v2639, %v2716
      %v2764 = vadd.f32 %v2640, %v2719
      %v2765 = vadd.f32 %v2641, %v2721
      %v2766 = vadd.f32 %v2642, %v2724
      %v2767 = vadd.f32 %v2643, %v2726
      %v2768 = vadd.f32 %v2644, %v2729
      %v2769 = vadd.f32 %v2645, %v2731
      %v2770 = vadd.f32 %v2646, %v2734
      %v2771 = vadd.f32 %v2647, %v2736
      %v2772 = vadd.f32 %v2648, %v2739
      %v2773 = vadd.f32 %v2649, %v2741
      %v2774 = vlaneseq
      %v2775 = vshrl.u32 %v2774, 7
      %v2776 = vsub.s32 0, %v2775
      %v2777 = vrot.slane %v583, %v2776
      %v2778 = vmul.f32 %v1147, %v2777
      %v2779 = vmul.f32 %v1148, %v2777
      %v2780 = vmul.f32 %v1150, %v2777
      %v2781 = vmul.f32 %v1151, %v2777
      %v2782 = vmul.f32 %v1153, %v2777
      %v2783 = vmul.f32 %v1154, %v2777
      %v2784 = vmul.f32 %v1156, %v2777
      %v2785 = vmul.f32 %v1157, %v2777
      %v2786 = vmul.f32 %v1159, %v2777
      %v2787 = vmul.f32 %v1160, %v2777
      %v2788 = vmul.f32 %v1162, %v2777
      %v2789 = vmul.f32 %v1163, %v2777
      %v2790 = vmul.f32 %v1165, %v2777
      %v2791 = vmul.f32 %v1166, %v2777
      %v2792 = vmul.f32 %v1168, %v2777
      %v2793 = vmul.f32 %v1169, %v2777
      %v2794 = vadd.f32 %v2758, %v2778
      %v2795 = vadd.f32 %v2759, %v2779
      %v2796 = vadd.f32 %v2760, %v2780
      %v2797 = vadd.f32 %v2761, %v2781
      %v2798 = vadd.f32 %v2762, %v2782
      %v2799 = vadd.f32 %v2763, %v2783
      %v2800 = vadd.f32 %v2764, %v2784
      %v2801 = vadd.f32 %v2765, %v2785
      %v2802 = vadd.f32 %v2766, %v2786
      %v2803 = vadd.f32 %v2767, %v2787
      %v2804 = vadd.f32 %v2768, %v2788
      %v2805 = vadd.f32 %v2769, %v2789
      %v2806 = vadd.f32 %v2770, %v2790
      %v2807 = vadd.f32 %v2771, %v2791
      %v2808 = vadd.f32 %v2772, %v2792
      %v2809 = vadd.f32 %v2773, %v2793
      %v2810 = vlaneseq
      %v2811 = vshrl.u32 %v2810, 7
      %v2812 = vsub.s32 1, %v2811
      %v2813 = vrot.slane %v583, %v2812
      %v2814 = vmul.f32 %v1147, %v2813
      %v2815 = vmul.f32 %v1148, %v2813
      %v2816 = vmul.f32 %v1149, %v2813
      %v2817 = vmul.f32 %v1150, %v2813
      %v2818 = vmul.f32 %v1151, %v2813
      %v2819 = vmul.f32 %v1152, %v2813
      %v2820 = vmul.f32 %v1153, %v2813
      %v2821 = vmul.f32 %v1154, %v2813
      %v2822 = vmul.f32 %v1155, %v2813
      %v2823 = vmul.f32 %v1156, %v2813
      %v2824 = vmul.f32 %v1157, %v2813
      %v2825 = vmul.f32 %v1158, %v2813
      %v2826 = vmul.f32 %v1159, %v2813
      %v2827 = vmul.f32 %v1160, %v2813
      %v2828 = vmul.f32 %v1161, %v2813
      %v2829 = vmul.f32 %v1162, %v2813
      %v2830 = vmul.f32 %v1163, %v2813
      %v2831 = vmul.f32 %v1164, %v2813
      %v2832 = vmul.f32 %v1165, %v2813
      %v2833 = vmul.f32 %v1166, %v2813
      %v2834 = vmul.f32 %v1167, %v2813
      %v2835 = vmul.f32 %v1168, %v2813
      %v2836 = vmul.f32 %v1169, %v2813
      %v2837 = vmul.f32 %v1170, %v2813
      %v2862 = vrot.slane %v2814, 1
      %v2863 = vrot.slane %v2815, 1
      %v2864 = vsel %vm1262, %v2862, %v2863
      %v2865 = vrot.slane %v2816, 1
      %v2866 = vsel %vm1262, %v2863, %v2865
      %v2867 = vrot.slane %v2817, 1
      %v2868 = vrot.slane %v2818, 1
      %v2869 = vsel %vm1262, %v2867, %v2868
      %v2870 = vrot.slane %v2819, 1
      %v2871 = vsel %vm1262, %v2868, %v2870
      %v2872 = vrot.slane %v2820, 1
      %v2873 = vrot.slane %v2821, 1
      %v2874 = vsel %vm1262, %v2872, %v2873
      %v2875 = vrot.slane %v2822, 1
      %v2876 = vsel %vm1262, %v2873, %v2875
      %v2877 = vrot.slane %v2823, 1
      %v2878 = vrot.slane %v2824, 1
      %v2879 = vsel %vm1262, %v2877, %v2878
      %v2880 = vrot.slane %v2825, 1
      %v2881 = vsel %vm1262, %v2878, %v2880
      %v2882 = vrot.slane %v2826, 1
      %v2883 = vrot.slane %v2827, 1
      %v2884 = vsel %vm1262, %v2882, %v2883
      %v2885 = vrot.slane %v2828, 1
      %v2886 = vsel %vm1262, %v2883, %v2885
      %v2887 = vrot.slane %v2829, 1
      %v2888 = vrot.slane %v2830, 1
      %v2889 = vsel %vm1262, %v2887, %v2888
      %v2890 = vrot.slane %v2831, 1
      %v2891 = vsel %vm1262, %v2888, %v2890
      %v2892 = vrot.slane %v2832, 1
      %v2893 = vrot.slane %v2833, 1
      %v2894 = vsel %vm1262, %v2892, %v2893
      %v2895 = vrot.slane %v2834, 1
      %v2896 = vsel %vm1262, %v2893, %v2895
      %v2897 = vrot.slane %v2835, 1
      %v2898 = vrot.slane %v2836, 1
      %v2899 = vsel %vm1262, %v2897, %v2898
      %v2900 = vrot.slane %v2837, 1
      %v2901 = vsel %vm1262, %v2898, %v2900
      %v2918 = vadd.f32 %v2794, %v2864
      %v2919 = vadd.f32 %v2795, %v2866
      %v2920 = vadd.f32 %v2796, %v2869
      %v2921 = vadd.f32 %v2797, %v2871
      %v2922 = vadd.f32 %v2798, %v2874
      %v2923 = vadd.f32 %v2799, %v2876
      %v2924 = vadd.f32 %v2800, %v2879
      %v2925 = vadd.f32 %v2801, %v2881
      %v2926 = vadd.f32 %v2802, %v2884
      %v2927 = vadd.f32 %v2803, %v2886
      %v2928 = vadd.f32 %v2804, %v2889
      %v2929 = vadd.f32 %v2805, %v2891
      %v2930 = vadd.f32 %v2806, %v2894
      %v2931 = vadd.f32 %v2807, %v2896
      %v2932 = vadd.f32 %v2808, %v2899
      %v2933 = vadd.f32 %v2809, %v2901
      %v2934 = vlaneseq
      %v2935 = vshrl.u32 %v2934, 7
      %v2936 = vsub.s32 2, %v2935
      %v2937 = vrot.slane %v583, %v2936
      %v2938 = vmul.f32 %v1147, %v2937
      %v2939 = vmul.f32 %v1148, %v2937
      %v2940 = vmul.f32 %v1149, %v2937
      %v2941 = vmul.f32 %v1150, %v2937
      %v2942 = vmul.f32 %v1151, %v2937
      %v2943 = vmul.f32 %v1152, %v2937
      %v2944 = vmul.f32 %v1153, %v2937
      %v2945 = vmul.f32 %v1154, %v2937
      %v2946 = vmul.f32 %v1155, %v2937
      %v2947 = vmul.f32 %v1156, %v2937
      %v2948 = vmul.f32 %v1157, %v2937
      %v2949 = vmul.f32 %v1158, %v2937
      %v2950 = vmul.f32 %v1159, %v2937
      %v2951 = vmul.f32 %v1160, %v2937
      %v2952 = vmul.f32 %v1161, %v2937
      %v2953 = vmul.f32 %v1162, %v2937
      %v2954 = vmul.f32 %v1163, %v2937
      %v2955 = vmul.f32 %v1164, %v2937
      %v2956 = vmul.f32 %v1165, %v2937
      %v2957 = vmul.f32 %v1166, %v2937
      %v2958 = vmul.f32 %v1167, %v2937
      %v2959 = vmul.f32 %v1168, %v2937
      %v2960 = vmul.f32 %v1169, %v2937
      %v2961 = vmul.f32 %v1170, %v2937
      %v2986 = vrot.slane %v2938, 2
      %v2987 = vrot.slane %v2939, 2
      %v2988 = vsel %vm1387, %v2986, %v2987
      %v2989 = vrot.slane %v2940, 2
      %v2990 = vsel %vm1387, %v2987, %v2989
      %v2991 = vrot.slane %v2941, 2
      %v2992 = vrot.slane %v2942, 2
      %v2993 = vsel %vm1387, %v2991, %v2992
      %v2994 = vrot.slane %v2943, 2
      %v2995 = vsel %vm1387, %v2992, %v2994
      %v2996 = vrot.slane %v2944, 2
      %v2997 = vrot.slane %v2945, 2
      %v2998 = vsel %vm1387, %v2996, %v2997
      %v2999 = vrot.slane %v2946, 2
      %v3000 = vsel %vm1387, %v2997, %v2999
      %v3001 = vrot.slane %v2947, 2
      %v3002 = vrot.slane %v2948, 2
      %v3003 = vsel %vm1387, %v3001, %v3002
      %v3004 = vrot.slane %v2949, 2
      %v3005 = vsel %vm1387, %v3002, %v3004
      %v3006 = vrot.slane %v2950, 2
      %v3007 = vrot.slane %v2951, 2
      %v3008 = vsel %vm1387, %v3006, %v3007
      %v3009 = vrot.slane %v2952, 2
      %v3010 = vsel %vm1387, %v3007, %v3009
      %v3011 = vrot.slane %v2953, 2
      %v3012 = vrot.slane %v2954, 2
      %v3013 = vsel %vm1387, %v3011, %v3012
      %v3014 = vrot.slane %v2955, 2
      %v3015 = vsel %vm1387, %v3012, %v3014
      %v3016 = vrot.slane %v2956, 2
      %v3017 = vrot.slane %v2957, 2
      %v3018 = vsel %vm1387, %v3016, %v3017
      %v3019 = vrot.slane %v2958, 2
      %v3020 = vsel %vm1387, %v3017, %v3019
      %v3021 = vrot.slane %v2959, 2
      %v3022 = vrot.slane %v2960, 2
      %v3023 = vsel %vm1387, %v3021, %v3022
      %v3024 = vrot.slane %v2961, 2
      %v3025 = vsel %vm1387, %v3022, %v3024
      %v3042 = vadd.f32 %v2918, %v2988
      %v3043 = vadd.f32 %v2919, %v2990
      %v3044 = vadd.f32 %v2920, %v2993
      %v3045 = vadd.f32 %v2921, %v2995
      %v3046 = vadd.f32 %v2922, %v2998
      %v3047 = vadd.f32 %v2923, %v3000
      %v3048 = vadd.f32 %v2924, %v3003
      %v3049 = vadd.f32 %v2925, %v3005
      %v3050 = vadd.f32 %v2926, %v3008
      %v3051 = vadd.f32 %v2927, %v3010
      %v3052 = vadd.f32 %v2928, %v3013
      %v3053 = vadd.f32 %v2929, %v3015
      %v3054 = vadd.f32 %v2930, %v3018
      %v3055 = vadd.f32 %v2931, %v3020
      %v3056 = vadd.f32 %v2932, %v3023
      %v3057 = vadd.f32 %v2933, %v3025
      %v3058 = vlaneseq
      %v3059 = vshrl.u32 %v3058, 7
      %v3060 = vsub.s32 3, %v3059
      %v3061 = vrot.slane %v583, %v3060
      %v3062 = vmul.f32 %v1147, %v3061
      %v3063 = vmul.f32 %v1148, %v3061
      %v3064 = vmul.f32 %v1149, %v3061
      %v3065 = vmul.f32 %v1150, %v3061
      %v3066 = vmul.f32 %v1151, %v3061
      %v3067 = vmul.f32 %v1152, %v3061
      %v3068 = vmul.f32 %v1153, %v3061
      %v3069 = vmul.f32 %v1154, %v3061
      %v3070 = vmul.f32 %v1155, %v3061
      %v3071 = vmul.f32 %v1156, %v3061
      %v3072 = vmul.f32 %v1157, %v3061
      %v3073 = vmul.f32 %v1158, %v3061
      %v3074 = vmul.f32 %v1159, %v3061
      %v3075 = vmul.f32 %v1160, %v3061
      %v3076 = vmul.f32 %v1161, %v3061
      %v3077 = vmul.f32 %v1162, %v3061
      %v3078 = vmul.f32 %v1163, %v3061
      %v3079 = vmul.f32 %v1164, %v3061
      %v3080 = vmul.f32 %v1165, %v3061
      %v3081 = vmul.f32 %v1166, %v3061
      %v3082 = vmul.f32 %v1167, %v3061
      %v3083 = vmul.f32 %v1168, %v3061
      %v3084 = vmul.f32 %v1169, %v3061
      %v3085 = vmul.f32 %v1170, %v3061
      %v3110 = vrot.slane %v3062, 3
      %v3111 = vrot.slane %v3063, 3
      %v3112 = vsel %vm1512, %v3110, %v3111
      %v3113 = vrot.slane %v3064, 3
      %v3114 = vsel %vm1512, %v3111, %v3113
      %v3115 = vrot.slane %v3065, 3
      %v3116 = vrot.slane %v3066, 3
      %v3117 = vsel %vm1512, %v3115, %v3116
      %v3118 = vrot.slane %v3067, 3
      %v3119 = vsel %vm1512, %v3116, %v3118
      %v3120 = vrot.slane %v3068, 3
      %v3121 = vrot.slane %v3069, 3
      %v3122 = vsel %vm1512, %v3120, %v3121
      %v3123 = vrot.slane %v3070, 3
      %v3124 = vsel %vm1512, %v3121, %v3123
      %v3125 = vrot.slane %v3071, 3
      %v3126 = vrot.slane %v3072, 3
      %v3127 = vsel %vm1512, %v3125, %v3126
      %v3128 = vrot.slane %v3073, 3
      %v3129 = vsel %vm1512, %v3126, %v3128
      %v3130 = vrot.slane %v3074, 3
      %v3131 = vrot.slane %v3075, 3
      %v3132 = vsel %vm1512, %v3130, %v3131
      %v3133 = vrot.slane %v3076, 3
      %v3134 = vsel %vm1512, %v3131, %v3133
      %v3135 = vrot.slane %v3077, 3
      %v3136 = vrot.slane %v3078, 3
      %v3137 = vsel %vm1512, %v3135, %v3136
      %v3138 = vrot.slane %v3079, 3
      %v3139 = vsel %vm1512, %v3136, %v3138
      %v3140 = vrot.slane %v3080, 3
      %v3141 = vrot.slane %v3081, 3
      %v3142 = vsel %vm1512, %v3140, %v3141
      %v3143 = vrot.slane %v3082, 3
      %v3144 = vsel %vm1512, %v3141, %v3143
      %v3145 = vrot.slane %v3083, 3
      %v3146 = vrot.slane %v3084, 3
      %v3147 = vsel %vm1512, %v3145, %v3146
      %v3148 = vrot.slane %v3085, 3
      %v3149 = vsel %vm1512, %v3146, %v3148
      %v3166 = vadd.f32 %v3042, %v3112
      %v3167 = vadd.f32 %v3043, %v3114
      %v3168 = vadd.f32 %v3044, %v3117
      %v3169 = vadd.f32 %v3045, %v3119
      %v3170 = vadd.f32 %v3046, %v3122
      %v3171 = vadd.f32 %v3047, %v3124
      %v3172 = vadd.f32 %v3048, %v3127
      %v3173 = vadd.f32 %v3049, %v3129
      %v3174 = vadd.f32 %v3050, %v3132
      %v3175 = vadd.f32 %v3051, %v3134
      %v3176 = vadd.f32 %v3052, %v3137
      %v3177 = vadd.f32 %v3053, %v3139
      %v3178 = vadd.f32 %v3054, %v3142
      %v3179 = vadd.f32 %v3055, %v3144
      %v3180 = vadd.f32 %v3056, %v3147
      %v3181 = vadd.f32 %v3057, %v3149
      %v3182 = vlaneseq
      %v3183 = vshrl.u32 %v3182, 7
      %v3184 = vsub.s32 4, %v3183
      %v3185 = vrot.slane %v583, %v3184
      %v3186 = vmul.f32 %v1147, %v3185
      %v3187 = vmul.f32 %v1148, %v3185
      %v3188 = vmul.f32 %v1149, %v3185
      %v3189 = vmul.f32 %v1150, %v3185
      %v3190 = vmul.f32 %v1151, %v3185
      %v3191 = vmul.f32 %v1152, %v3185
      %v3192 = vmul.f32 %v1153, %v3185
      %v3193 = vmul.f32 %v1154, %v3185
      %v3194 = vmul.f32 %v1155, %v3185
      %v3195 = vmul.f32 %v1156, %v3185
      %v3196 = vmul.f32 %v1157, %v3185
      %v3197 = vmul.f32 %v1158, %v3185
      %v3198 = vmul.f32 %v1159, %v3185
      %v3199 = vmul.f32 %v1160, %v3185
      %v3200 = vmul.f32 %v1161, %v3185
      %v3201 = vmul.f32 %v1162, %v3185
      %v3202 = vmul.f32 %v1163, %v3185
      %v3203 = vmul.f32 %v1164, %v3185
      %v3204 = vmul.f32 %v1165, %v3185
      %v3205 = vmul.f32 %v1166, %v3185
      %v3206 = vmul.f32 %v1167, %v3185
      %v3207 = vmul.f32 %v1168, %v3185
      %v3208 = vmul.f32 %v1169, %v3185
      %v3209 = vmul.f32 %v1170, %v3185
      %v3234 = vrot.slane %v3186, 4
      %v3235 = vrot.slane %v3187, 4
      %v3236 = vsel %vm1637, %v3234, %v3235
      %v3237 = vrot.slane %v3188, 4
      %v3238 = vsel %vm1637, %v3235, %v3237
      %v3239 = vrot.slane %v3189, 4
      %v3240 = vrot.slane %v3190, 4
      %v3241 = vsel %vm1637, %v3239, %v3240
      %v3242 = vrot.slane %v3191, 4
      %v3243 = vsel %vm1637, %v3240, %v3242
      %v3244 = vrot.slane %v3192, 4
      %v3245 = vrot.slane %v3193, 4
      %v3246 = vsel %vm1637, %v3244, %v3245
      %v3247 = vrot.slane %v3194, 4
      %v3248 = vsel %vm1637, %v3245, %v3247
      %v3249 = vrot.slane %v3195, 4
      %v3250 = vrot.slane %v3196, 4
      %v3251 = vsel %vm1637, %v3249, %v3250
      %v3252 = vrot.slane %v3197, 4
      %v3253 = vsel %vm1637, %v3250, %v3252
      %v3254 = vrot.slane %v3198, 4
      %v3255 = vrot.slane %v3199, 4
      %v3256 = vsel %vm1637, %v3254, %v3255
      %v3257 = vrot.slane %v3200, 4
      %v3258 = vsel %vm1637, %v3255, %v3257
      %v3259 = vrot.slane %v3201, 4
      %v3260 = vrot.slane %v3202, 4
      %v3261 = vsel %vm1637, %v3259, %v3260
      %v3262 = vrot.slane %v3203, 4
      %v3263 = vsel %vm1637, %v3260, %v3262
      %v3264 = vrot.slane %v3204, 4
      %v3265 = vrot.slane %v3205, 4
      %v3266 = vsel %vm1637, %v3264, %v3265
      %v3267 = vrot.slane %v3206, 4
      %v3268 = vsel %vm1637, %v3265, %v3267
      %v3269 = vrot.slane %v3207, 4
      %v3270 = vrot.slane %v3208, 4
      %v3271 = vsel %vm1637, %v3269, %v3270
      %v3272 = vrot.slane %v3209, 4
      %v3273 = vsel %vm1637, %v3270, %v3272
      %v3290 = vadd.f32 %v3166, %v3236
      %v3291 = vadd.f32 %v3167, %v3238
      %v3292 = vadd.f32 %v3168, %v3241
      %v3293 = vadd.f32 %v3169, %v3243
      %v3294 = vadd.f32 %v3170, %v3246
      %v3295 = vadd.f32 %v3171, %v3248
      %v3296 = vadd.f32 %v3172, %v3251
      %v3297 = vadd.f32 %v3173, %v3253
      %v3298 = vadd.f32 %v3174, %v3256
      %v3299 = vadd.f32 %v3175, %v3258
      %v3300 = vadd.f32 %v3176, %v3261
      %v3301 = vadd.f32 %v3177, %v3263
      %v3302 = vadd.f32 %v3178, %v3266
      %v3303 = vadd.f32 %v3179, %v3268
      %v3304 = vadd.f32 %v3180, %v3271
      %v3305 = vadd.f32 %v3181, %v3273
      %v3306 = vlaneseq
      %v3307 = vshrl.u32 %v3306, 7
      %v3308 = vsub.s32 0, %v3307
      %v3309 = vrot.slane %v584, %v3308
      %v3310 = vmul.f32 %v1150, %v3309
      %v3311 = vmul.f32 %v1151, %v3309
      %v3312 = vmul.f32 %v1153, %v3309
      %v3313 = vmul.f32 %v1154, %v3309
      %v3314 = vmul.f32 %v1156, %v3309
      %v3315 = vmul.f32 %v1157, %v3309
      %v3316 = vmul.f32 %v1159, %v3309
      %v3317 = vmul.f32 %v1160, %v3309
      %v3318 = vmul.f32 %v1162, %v3309
      %v3319 = vmul.f32 %v1163, %v3309
      %v3320 = vmul.f32 %v1165, %v3309
      %v3321 = vmul.f32 %v1166, %v3309
      %v3322 = vmul.f32 %v1168, %v3309
      %v3323 = vmul.f32 %v1169, %v3309
      %v3324 = vmul.f32 %v1171, %v3309
      %v3325 = vmul.f32 %v1172, %v3309
      %v3326 = vadd.f32 %v3290, %v3310
      %v3327 = vadd.f32 %v3291, %v3311
      %v3328 = vadd.f32 %v3292, %v3312
      %v3329 = vadd.f32 %v3293, %v3313
      %v3330 = vadd.f32 %v3294, %v3314
      %v3331 = vadd.f32 %v3295, %v3315
      %v3332 = vadd.f32 %v3296, %v3316
      %v3333 = vadd.f32 %v3297, %v3317
      %v3334 = vadd.f32 %v3298, %v3318
      %v3335 = vadd.f32 %v3299, %v3319
      %v3336 = vadd.f32 %v3300, %v3320
      %v3337 = vadd.f32 %v3301, %v3321
      %v3338 = vadd.f32 %v3302, %v3322
      %v3339 = vadd.f32 %v3303, %v3323
      %v3340 = vadd.f32 %v3304, %v3324
      %v3341 = vadd.f32 %v3305, %v3325
      %v3342 = vlaneseq
      %v3343 = vshrl.u32 %v3342, 7
      %v3344 = vsub.s32 1, %v3343
      %v3345 = vrot.slane %v584, %v3344
      %v3346 = vmul.f32 %v1150, %v3345
      %v3347 = vmul.f32 %v1151, %v3345
      %v3348 = vmul.f32 %v1152, %v3345
      %v3349 = vmul.f32 %v1153, %v3345
      %v3350 = vmul.f32 %v1154, %v3345
      %v3351 = vmul.f32 %v1155, %v3345
      %v3352 = vmul.f32 %v1156, %v3345
      %v3353 = vmul.f32 %v1157, %v3345
      %v3354 = vmul.f32 %v1158, %v3345
      %v3355 = vmul.f32 %v1159, %v3345
      %v3356 = vmul.f32 %v1160, %v3345
      %v3357 = vmul.f32 %v1161, %v3345
      %v3358 = vmul.f32 %v1162, %v3345
      %v3359 = vmul.f32 %v1163, %v3345
      %v3360 = vmul.f32 %v1164, %v3345
      %v3361 = vmul.f32 %v1165, %v3345
      %v3362 = vmul.f32 %v1166, %v3345
      %v3363 = vmul.f32 %v1167, %v3345
      %v3364 = vmul.f32 %v1168, %v3345
      %v3365 = vmul.f32 %v1169, %v3345
      %v3366 = vmul.f32 %v1170, %v3345
      %v3367 = vmul.f32 %v1171, %v3345
      %v3368 = vmul.f32 %v1172, %v3345
      %v3369 = vmul.f32 %v1173, %v3345
      %v3394 = vrot.slane %v3346, 1
      %v3395 = vrot.slane %v3347, 1
      %v3396 = vsel %vm1262, %v3394, %v3395
      %v3397 = vrot.slane %v3348, 1
      %v3398 = vsel %vm1262, %v3395, %v3397
      %v3399 = vrot.slane %v3349, 1
      %v3400 = vrot.slane %v3350, 1
      %v3401 = vsel %vm1262, %v3399, %v3400
      %v3402 = vrot.slane %v3351, 1
      %v3403 = vsel %vm1262, %v3400, %v3402
      %v3404 = vrot.slane %v3352, 1
      %v3405 = vrot.slane %v3353, 1
      %v3406 = vsel %vm1262, %v3404, %v3405
      %v3407 = vrot.slane %v3354, 1
      %v3408 = vsel %vm1262, %v3405, %v3407
      %v3409 = vrot.slane %v3355, 1
      %v3410 = vrot.slane %v3356, 1
      %v3411 = vsel %vm1262, %v3409, %v3410
      %v3412 = vrot.slane %v3357, 1
      %v3413 = vsel %vm1262, %v3410, %v3412
      %v3414 = vrot.slane %v3358, 1
      %v3415 = vrot.slane %v3359, 1
      %v3416 = vsel %vm1262, %v3414, %v3415
      %v3417 = vrot.slane %v3360, 1
      %v3418 = vsel %vm1262, %v3415, %v3417
      %v3419 = vrot.slane %v3361, 1
      %v3420 = vrot.slane %v3362, 1
      %v3421 = vsel %vm1262, %v3419, %v3420
      %v3422 = vrot.slane %v3363, 1
      %v3423 = vsel %vm1262, %v3420, %v3422
      %v3424 = vrot.slane %v3364, 1
      %v3425 = vrot.slane %v3365, 1
      %v3426 = vsel %vm1262, %v3424, %v3425
      %v3427 = vrot.slane %v3366, 1
      %v3428 = vsel %vm1262, %v3425, %v3427
      %v3429 = vrot.slane %v3367, 1
      %v3430 = vrot.slane %v3368, 1
      %v3431 = vsel %vm1262, %v3429, %v3430
      %v3432 = vrot.slane %v3369, 1
      %v3433 = vsel %vm1262, %v3430, %v3432
      %v3450 = vadd.f32 %v3326, %v3396
      %v3451 = vadd.f32 %v3327, %v3398
      %v3452 = vadd.f32 %v3328, %v3401
      %v3453 = vadd.f32 %v3329, %v3403
      %v3454 = vadd.f32 %v3330, %v3406
      %v3455 = vadd.f32 %v3331, %v3408
      %v3456 = vadd.f32 %v3332, %v3411
      %v3457 = vadd.f32 %v3333, %v3413
      %v3458 = vadd.f32 %v3334, %v3416
      %v3459 = vadd.f32 %v3335, %v3418
      %v3460 = vadd.f32 %v3336, %v3421
      %v3461 = vadd.f32 %v3337, %v3423
      %v3462 = vadd.f32 %v3338, %v3426
      %v3463 = vadd.f32 %v3339, %v3428
      %v3464 = vadd.f32 %v3340, %v3431
      %v3465 = vadd.f32 %v3341, %v3433
      %v3466 = vlaneseq
      %v3467 = vshrl.u32 %v3466, 7
      %v3468 = vsub.s32 2, %v3467
      %v3469 = vrot.slane %v584, %v3468
      %v3470 = vmul.f32 %v1150, %v3469
      %v3471 = vmul.f32 %v1151, %v3469
      %v3472 = vmul.f32 %v1152, %v3469
      %v3473 = vmul.f32 %v1153, %v3469
      %v3474 = vmul.f32 %v1154, %v3469
      %v3475 = vmul.f32 %v1155, %v3469
      %v3476 = vmul.f32 %v1156, %v3469
      %v3477 = vmul.f32 %v1157, %v3469
      %v3478 = vmul.f32 %v1158, %v3469
      %v3479 = vmul.f32 %v1159, %v3469
      %v3480 = vmul.f32 %v1160, %v3469
      %v3481 = vmul.f32 %v1161, %v3469
      %v3482 = vmul.f32 %v1162, %v3469
      %v3483 = vmul.f32 %v1163, %v3469
      %v3484 = vmul.f32 %v1164, %v3469
      %v3485 = vmul.f32 %v1165, %v3469
      %v3486 = vmul.f32 %v1166, %v3469
      %v3487 = vmul.f32 %v1167, %v3469
      %v3488 = vmul.f32 %v1168, %v3469
      %v3489 = vmul.f32 %v1169, %v3469
      %v3490 = vmul.f32 %v1170, %v3469
      %v3491 = vmul.f32 %v1171, %v3469
      %v3492 = vmul.f32 %v1172, %v3469
      %v3493 = vmul.f32 %v1173, %v3469
      %v3518 = vrot.slane %v3470, 2
      %v3519 = vrot.slane %v3471, 2
      %v3520 = vsel %vm1387, %v3518, %v3519
      %v3521 = vrot.slane %v3472, 2
      %v3522 = vsel %vm1387, %v3519, %v3521
      %v3523 = vrot.slane %v3473, 2
      %v3524 = vrot.slane %v3474, 2
      %v3525 = vsel %vm1387, %v3523, %v3524
      %v3526 = vrot.slane %v3475, 2
      %v3527 = vsel %vm1387, %v3524, %v3526
      %v3528 = vrot.slane %v3476, 2
      %v3529 = vrot.slane %v3477, 2
      %v3530 = vsel %vm1387, %v3528, %v3529
      %v3531 = vrot.slane %v3478, 2
      %v3532 = vsel %vm1387, %v3529, %v3531
      %v3533 = vrot.slane %v3479, 2
      %v3534 = vrot.slane %v3480, 2
      %v3535 = vsel %vm1387, %v3533, %v3534
      %v3536 = vrot.slane %v3481, 2
      %v3537 = vsel %vm1387, %v3534, %v3536
      %v3538 = vrot.slane %v3482, 2
      %v3539 = vrot.slane %v3483, 2
      %v3540 = vsel %vm1387, %v3538, %v3539
      %v3541 = vrot.slane %v3484, 2
      %v3542 = vsel %vm1387, %v3539, %v3541
      %v3543 = vrot.slane %v3485, 2
      %v3544 = vrot.slane %v3486, 2
      %v3545 = vsel %vm1387, %v3543, %v3544
      %v3546 = vrot.slane %v3487, 2
      %v3547 = vsel %vm1387, %v3544, %v3546
      %v3548 = vrot.slane %v3488, 2
      %v3549 = vrot.slane %v3489, 2
      %v3550 = vsel %vm1387, %v3548, %v3549
      %v3551 = vrot.slane %v3490, 2
      %v3552 = vsel %vm1387, %v3549, %v3551
      %v3553 = vrot.slane %v3491, 2
      %v3554 = vrot.slane %v3492, 2
      %v3555 = vsel %vm1387, %v3553, %v3554
      %v3556 = vrot.slane %v3493, 2
      %v3557 = vsel %vm1387, %v3554, %v3556
      %v3574 = vadd.f32 %v3450, %v3520
      %v3575 = vadd.f32 %v3451, %v3522
      %v3576 = vadd.f32 %v3452, %v3525
      %v3577 = vadd.f32 %v3453, %v3527
      %v3578 = vadd.f32 %v3454, %v3530
      %v3579 = vadd.f32 %v3455, %v3532
      %v3580 = vadd.f32 %v3456, %v3535
      %v3581 = vadd.f32 %v3457, %v3537
      %v3582 = vadd.f32 %v3458, %v3540
      %v3583 = vadd.f32 %v3459, %v3542
      %v3584 = vadd.f32 %v3460, %v3545
      %v3585 = vadd.f32 %v3461, %v3547
      %v3586 = vadd.f32 %v3462, %v3550
      %v3587 = vadd.f32 %v3463, %v3552
      %v3588 = vadd.f32 %v3464, %v3555
      %v3589 = vadd.f32 %v3465, %v3557
      %v3590 = vlaneseq
      %v3591 = vshrl.u32 %v3590, 7
      %v3592 = vsub.s32 3, %v3591
      %v3593 = vrot.slane %v584, %v3592
      %v3594 = vmul.f32 %v1150, %v3593
      %v3595 = vmul.f32 %v1151, %v3593
      %v3596 = vmul.f32 %v1152, %v3593
      %v3597 = vmul.f32 %v1153, %v3593
      %v3598 = vmul.f32 %v1154, %v3593
      %v3599 = vmul.f32 %v1155, %v3593
      %v3600 = vmul.f32 %v1156, %v3593
      %v3601 = vmul.f32 %v1157, %v3593
      %v3602 = vmul.f32 %v1158, %v3593
      %v3603 = vmul.f32 %v1159, %v3593
      %v3604 = vmul.f32 %v1160, %v3593
      %v3605 = vmul.f32 %v1161, %v3593
      %v3606 = vmul.f32 %v1162, %v3593
      %v3607 = vmul.f32 %v1163, %v3593
      %v3608 = vmul.f32 %v1164, %v3593
      %v3609 = vmul.f32 %v1165, %v3593
      %v3610 = vmul.f32 %v1166, %v3593
      %v3611 = vmul.f32 %v1167, %v3593
      %v3612 = vmul.f32 %v1168, %v3593
      %v3613 = vmul.f32 %v1169, %v3593
      %v3614 = vmul.f32 %v1170, %v3593
      %v3615 = vmul.f32 %v1171, %v3593
      %v3616 = vmul.f32 %v1172, %v3593
      %v3617 = vmul.f32 %v1173, %v3593
      %v3642 = vrot.slane %v3594, 3
      %v3643 = vrot.slane %v3595, 3
      %v3644 = vsel %vm1512, %v3642, %v3643
      %v3645 = vrot.slane %v3596, 3
      %v3646 = vsel %vm1512, %v3643, %v3645
      %v3647 = vrot.slane %v3597, 3
      %v3648 = vrot.slane %v3598, 3
      %v3649 = vsel %vm1512, %v3647, %v3648
      %v3650 = vrot.slane %v3599, 3
      %v3651 = vsel %vm1512, %v3648, %v3650
      %v3652 = vrot.slane %v3600, 3
      %v3653 = vrot.slane %v3601, 3
      %v3654 = vsel %vm1512, %v3652, %v3653
      %v3655 = vrot.slane %v3602, 3
      %v3656 = vsel %vm1512, %v3653, %v3655
      %v3657 = vrot.slane %v3603, 3
      %v3658 = vrot.slane %v3604, 3
      %v3659 = vsel %vm1512, %v3657, %v3658
      %v3660 = vrot.slane %v3605, 3
      %v3661 = vsel %vm1512, %v3658, %v3660
      %v3662 = vrot.slane %v3606, 3
      %v3663 = vrot.slane %v3607, 3
      %v3664 = vsel %vm1512, %v3662, %v3663
      %v3665 = vrot.slane %v3608, 3
      %v3666 = vsel %vm1512, %v3663, %v3665
      %v3667 = vrot.slane %v3609, 3
      %v3668 = vrot.slane %v3610, 3
      %v3669 = vsel %vm1512, %v3667, %v3668
      %v3670 = vrot.slane %v3611, 3
      %v3671 = vsel %vm1512, %v3668, %v3670
      %v3672 = vrot.slane %v3612, 3
      %v3673 = vrot.slane %v3613, 3
      %v3674 = vsel %vm1512, %v3672, %v3673
      %v3675 = vrot.slane %v3614, 3
      %v3676 = vsel %vm1512, %v3673, %v3675
      %v3677 = vrot.slane %v3615, 3
      %v3678 = vrot.slane %v3616, 3
      %v3679 = vsel %vm1512, %v3677, %v3678
      %v3680 = vrot.slane %v3617, 3
      %v3681 = vsel %vm1512, %v3678, %v3680
      %v3698 = vadd.f32 %v3574, %v3644
      %v3699 = vadd.f32 %v3575, %v3646
      %v3700 = vadd.f32 %v3576, %v3649
      %v3701 = vadd.f32 %v3577, %v3651
      %v3702 = vadd.f32 %v3578, %v3654
      %v3703 = vadd.f32 %v3579, %v3656
      %v3704 = vadd.f32 %v3580, %v3659
      %v3705 = vadd.f32 %v3581, %v3661
      %v3706 = vadd.f32 %v3582, %v3664
      %v3707 = vadd.f32 %v3583, %v3666
      %v3708 = vadd.f32 %v3584, %v3669
      %v3709 = vadd.f32 %v3585, %v3671
      %v3710 = vadd.f32 %v3586, %v3674
      %v3711 = vadd.f32 %v3587, %v3676
      %v3712 = vadd.f32 %v3588, %v3679
      %v3713 = vadd.f32 %v3589, %v3681
      %v3714 = vlaneseq
      %v3715 = vshrl.u32 %v3714, 7
      %v3716 = vsub.s32 4, %v3715
      %v3717 = vrot.slane %v584, %v3716
      %v3718 = vmul.f32 %v1150, %v3717
      %v3719 = vmul.f32 %v1151, %v3717
      %v3720 = vmul.f32 %v1152, %v3717
      %v3721 = vmul.f32 %v1153, %v3717
      %v3722 = vmul.f32 %v1154, %v3717
      %v3723 = vmul.f32 %v1155, %v3717
      %v3724 = vmul.f32 %v1156, %v3717
      %v3725 = vmul.f32 %v1157, %v3717
      %v3726 = vmul.f32 %v1158, %v3717
      %v3727 = vmul.f32 %v1159, %v3717
      %v3728 = vmul.f32 %v1160, %v3717
      %v3729 = vmul.f32 %v1161, %v3717
      %v3730 = vmul.f32 %v1162, %v3717
      %v3731 = vmul.f32 %v1163, %v3717
      %v3732 = vmul.f32 %v1164, %v3717
      %v3733 = vmul.f32 %v1165, %v3717
      %v3734 = vmul.f32 %v1166, %v3717
      %v3735 = vmul.f32 %v1167, %v3717
      %v3736 = vmul.f32 %v1168, %v3717
      %v3737 = vmul.f32 %v1169, %v3717
      %v3738 = vmul.f32 %v1170, %v3717
      %v3739 = vmul.f32 %v1171, %v3717
      %v3740 = vmul.f32 %v1172, %v3717
      %v3741 = vmul.f32 %v1173, %v3717
      %v3766 = vrot.slane %v3718, 4
      %v3767 = vrot.slane %v3719, 4
      %v3768 = vsel %vm1637, %v3766, %v3767
      %v3769 = vrot.slane %v3720, 4
      %v3770 = vsel %vm1637, %v3767, %v3769
      %v3771 = vrot.slane %v3721, 4
      %v3772 = vrot.slane %v3722, 4
      %v3773 = vsel %vm1637, %v3771, %v3772
      %v3774 = vrot.slane %v3723, 4
      %v3775 = vsel %vm1637, %v3772, %v3774
      %v3776 = vrot.slane %v3724, 4
      %v3777 = vrot.slane %v3725, 4
      %v3778 = vsel %vm1637, %v3776, %v3777
      %v3779 = vrot.slane %v3726, 4
      %v3780 = vsel %vm1637, %v3777, %v3779
      %v3781 = vrot.slane %v3727, 4
      %v3782 = vrot.slane %v3728, 4
      %v3783 = vsel %vm1637, %v3781, %v3782
      %v3784 = vrot.slane %v3729, 4
      %v3785 = vsel %vm1637, %v3782, %v3784
      %v3786 = vrot.slane %v3730, 4
      %v3787 = vrot.slane %v3731, 4
      %v3788 = vsel %vm1637, %v3786, %v3787
      %v3789 = vrot.slane %v3732, 4
      %v3790 = vsel %vm1637, %v3787, %v3789
      %v3791 = vrot.slane %v3733, 4
      %v3792 = vrot.slane %v3734, 4
      %v3793 = vsel %vm1637, %v3791, %v3792
      %v3794 = vrot.slane %v3735, 4
      %v3795 = vsel %vm1637, %v3792, %v3794
      %v3796 = vrot.slane %v3736, 4
      %v3797 = vrot.slane %v3737, 4
      %v3798 = vsel %vm1637, %v3796, %v3797
      %v3799 = vrot.slane %v3738, 4
      %v3800 = vsel %vm1637, %v3797, %v3799
      %v3801 = vrot.slane %v3739, 4
      %v3802 = vrot.slane %v3740, 4
      %v3803 = vsel %vm1637, %v3801, %v3802
      %v3804 = vrot.slane %v3741, 4
      %v3805 = vsel %vm1637, %v3802, %v3804
      %v3822 = vadd.f32 %v3698, %v3768
      %v3823 = vadd.f32 %v3699, %v3770
      %v3824 = vadd.f32 %v3700, %v3773
      %v3825 = vadd.f32 %v3701, %v3775
      %v3826 = vadd.f32 %v3702, %v3778
      %v3827 = vadd.f32 %v3703, %v3780
      %v3828 = vadd.f32 %v3704, %v3783
      %v3829 = vadd.f32 %v3705, %v3785
      %v3830 = vadd.f32 %v3706, %v3788
      %v3831 = vadd.f32 %v3707, %v3790
      %v3832 = vadd.f32 %v3708, %v3793
      %v3833 = vadd.f32 %v3709, %v3795
      %v3834 = vadd.f32 %v3710, %v3798
      %v3835 = vadd.f32 %v3711, %v3800
      %v3836 = vadd.f32 %v3712, %v3803
      %v3837 = vadd.f32 %v3713, %v3805
      %v3839 = vlaneseq
      %v3840 = vshrl.u32 %v3839, 7
      %v3841 = vsub.s32 0, %v3840
      %v3842 = vrot.slane %v585, %v3841
      %v3844 = vmul.f32 %v3822, %v3842
      %v3845 = vmul.f32 %v3823, %v3842
      %v3846 = vmul.f32 %v3824, %v3842
      %v3847 = vmul.f32 %v3825, %v3842
      %v3848 = vmul.f32 %v3826, %v3842
      %v3849 = vmul.f32 %v3827, %v3842
      %v3850 = vmul.f32 %v3828, %v3842
      %v3851 = vmul.f32 %v3829, %v3842
      %v3852 = vmul.f32 %v3830, %v3842
      %v3853 = vmul.f32 %v3831, %v3842
      %v3854 = vmul.f32 %v3832, %v3842
      %v3855 = vmul.f32 %v3833, %v3842
      %v3856 = vmul.f32 %v3834, %v3842
      %v3857 = vmul.f32 %v3835, %v3842
      %v3858 = vmul.f32 %v3836, %v3842
      %v3859 = vmul.f32 %v3837, %v3842
      %v3861 = vlaneseq
      %v3862 = vshrl.u32 %v3861, 7
      %v3863 = vsub.s32 0, %v3862
      %v3864 = vrot.slane %v586, %v3863
      %v3866 = vadd.f32 %v3844, %v3864
      %v3867 = vadd.f32 %v3845, %v3864
      %v3868 = vadd.f32 %v3846, %v3864
      %v3869 = vadd.f32 %v3847, %v3864
      %v3870 = vadd.f32 %v3848, %v3864
      %v3871 = vadd.f32 %v3849, %v3864
      %v3872 = vadd.f32 %v3850, %v3864
      %v3873 = vadd.f32 %v3851, %v3864
      %v3874 = vadd.f32 %v3852, %v3864
      %v3875 = vadd.f32 %v3853, %v3864
      %v3876 = vadd.f32 %v3854, %v3864
      %v3877 = vadd.f32 %v3855, %v3864
      %v3878 = vadd.f32 %v3856, %v3864
      %v3879 = vadd.f32 %v3857, %v3864
      %v3880 = vadd.f32 %v3858, %v3864
      %v3881 = vadd.f32 %v3859, %v3864
      %v3882 = vld [vmem:[%s564] sm:$0xff]
      %v3883 = vld [vmem:[%s564 + $0x8] sm:$0xff]
      %v3884 = vld [vmem:[%s564 + $0x10] sm:$0xff]
      %v3885 = vld [vmem:[%s564 + $0x18] sm:$0xff]
      %v3886 = vld [vmem:[%s564 + $0x20] sm:$0xff]
      %v3887 = vld [vmem:[%s564 + $0x28] sm:$0xff]
      %v3888 = vld [vmem:[%s564 + $0x30] sm:$0xff]
      %v3889 = vld [vmem:[%s564 + $0x38] sm:$0xff]
      %v3890 = vld [vmem:[%s564 + $0x40] sm:$0xff]
      %v3891 = vld [vmem:[%s564 + $0x48] sm:$0xff]
      %v3892 = vld [vmem:[%s564 + $0x50] sm:$0xff]
      %v3893 = vld [vmem:[%s564 + $0x58] sm:$0xff]
      %v3894 = vld [vmem:[%s564 + $0x60] sm:$0xff]
      %v3895 = vld [vmem:[%s564 + $0x68] sm:$0xff]
      %v3896 = vld [vmem:[%s564 + $0x70] sm:$0xff]
      %v3897 = vld [vmem:[%s564 + $0x78] sm:$0xff]
      %v3898 = vadd.f32 %v825, %v3882
      %v3899 = vadd.f32 %v826, %v3883
      %v3900 = vadd.f32 %v827, %v3884
      %v3901 = vadd.f32 %v828, %v3885
      %v3902 = vadd.f32 %v829, %v3886
      %v3903 = vadd.f32 %v830, %v3887
      %v3904 = vadd.f32 %v831, %v3888
      %v3905 = vadd.f32 %v832, %v3889
      %v3906 = vadd.f32 %v833, %v3890
      %v3907 = vadd.f32 %v834, %v3891
      %v3908 = vadd.f32 %v835, %v3892
      %v3909 = vadd.f32 %v836, %v3893
      %v3910 = vadd.f32 %v837, %v3894
      %v3911 = vadd.f32 %v838, %v3895
      %v3912 = vadd.f32 %v839, %v3896
      %v3913 = vadd.f32 %v840, %v3897
      %3930 = vrot.lane.b32.xlu0 %v3882, 120
      %v3931 = vpop.permute.xlu0 %3930
      %3932 = vrot.lane.b32.xlu0 %v3883, 120
      %v3933 = vpop.permute.xlu0 %3932
      %3934 = vrot.lane.b32.xlu0 %v3884, 120
      %v3935 = vpop.permute.xlu0 %3934
      %3936 = vrot.lane.b32.xlu0 %v3885, 120
      %v3937 = vpop.permute.xlu0 %3936
      %3938 = vrot.lane.b32.xlu0 %v3886, 120
      %v3939 = vpop.permute.xlu0 %3938
      %3940 = vrot.lane.b32.xlu0 %v3887, 120
      %v3941 = vpop.permute.xlu0 %3940
      %3942 = vrot.lane.b32.xlu0 %v3888, 120
      %v3943 = vpop.permute.xlu0 %3942
      %3944 = vrot.lane.b32.xlu0 %v3889, 120
      %v3945 = vpop.permute.xlu0 %3944
      %3946 = vrot.lane.b32.xlu0 %v3890, 120
      %v3947 = vpop.permute.xlu0 %3946
      %3948 = vrot.lane.b32.xlu0 %v3891, 120
      %v3949 = vpop.permute.xlu0 %3948
      %3950 = vrot.lane.b32.xlu0 %v3892, 120
      %v3951 = vpop.permute.xlu0 %3950
      %3952 = vrot.lane.b32.xlu0 %v3893, 120
      %v3953 = vpop.permute.xlu0 %3952
      %3954 = vrot.lane.b32.xlu0 %v3894, 120
      %v3955 = vpop.permute.xlu0 %3954
      %3956 = vrot.lane.b32.xlu0 %v3895, 120
      %v3957 = vpop.permute.xlu0 %3956
      %3958 = vrot.lane.b32.xlu0 %v3896, 120
      %v3959 = vpop.permute.xlu0 %3958
      %3960 = vrot.lane.b32.xlu0 %v3897, 120
      %v3961 = vpop.permute.xlu0 %3960
      %v3978 = vadd.f32 %v3866, %v3931
      %v3979 = vadd.f32 %v3867, %v3933
      %v3980 = vadd.f32 %v3868, %v3935
      %v3981 = vadd.f32 %v3869, %v3937
      %v3982 = vadd.f32 %v3870, %v3939
      %v3983 = vadd.f32 %v3871, %v3941
      %v3984 = vadd.f32 %v3872, %v3943
      %v3985 = vadd.f32 %v3873, %v3945
      %v3986 = vadd.f32 %v3874, %v3947
      %v3987 = vadd.f32 %v3875, %v3949
      %v3988 = vadd.f32 %v3876, %v3951
      %v3989 = vadd.f32 %v3877, %v3953
      %v3990 = vadd.f32 %v3878, %v3955
      %v3991 = vadd.f32 %v3879, %v3957
      %v3992 = vadd.f32 %v3880, %v3959
      %v3993 = vadd.f32 %v3881, %v3961
      %3994 = vst.msk [vmem:[%s575] sm:$0xff] %vm603, %v3898
      %3995 = vst.msk [vmem:[%s575 + $0x8] sm:$0xff] %vm603, %v3899
      %3996 = vst.msk [vmem:[%s575 + $0x10] sm:$0xff] %vm603, %v3900
      %3997 = vst.msk [vmem:[%s575 + $0x18] sm:$0xff] %vm603, %v3901
      %3998 = vst.msk [vmem:[%s575 + $0x20] sm:$0xff] %vm603, %v3902
      %3999 = vst.msk [vmem:[%s575 + $0x28] sm:$0xff] %vm603, %v3903
      %4000 = vst.msk [vmem:[%s575 + $0x30] sm:$0xff] %vm603, %v3904
      %4001 = vst.msk [vmem:[%s575 + $0x38] sm:$0xff] %vm603, %v3905
      %4002 = vst.msk [vmem:[%s575 + $0x40] sm:$0xff] %vm603, %v3906
      %4003 = vst.msk [vmem:[%s575 + $0x48] sm:$0xff] %vm603, %v3907
      %4004 = vst.msk [vmem:[%s575 + $0x50] sm:$0xff] %vm603, %v3908
      %4005 = vst.msk [vmem:[%s575 + $0x58] sm:$0xff] %vm603, %v3909
      %4006 = vst.msk [vmem:[%s575 + $0x60] sm:$0xff] %vm603, %v3910
      %4007 = vst.msk [vmem:[%s575 + $0x68] sm:$0xff] %vm603, %v3911
      %4008 = vst.msk [vmem:[%s575 + $0x70] sm:$0xff] %vm603, %v3912
      %4009 = vst.msk [vmem:[%s575 + $0x78] sm:$0xff] %vm603, %v3913
      %4026 = vrot.lane.b32.xlu0 %v3978, 8
      %v4027 = vpop.permute.xlu0 %4026
      %4028 = vrot.lane.b32.xlu0 %v3979, 8
      %v4029 = vpop.permute.xlu0 %4028
      %4030 = vrot.lane.b32.xlu0 %v3980, 8
      %v4031 = vpop.permute.xlu0 %4030
      %4032 = vrot.lane.b32.xlu0 %v3981, 8
      %v4033 = vpop.permute.xlu0 %4032
      %4034 = vrot.lane.b32.xlu0 %v3982, 8
      %v4035 = vpop.permute.xlu0 %4034
      %4036 = vrot.lane.b32.xlu0 %v3983, 8
      %v4037 = vpop.permute.xlu0 %4036
      %4038 = vrot.lane.b32.xlu0 %v3984, 8
      %v4039 = vpop.permute.xlu0 %4038
      %4040 = vrot.lane.b32.xlu0 %v3985, 8
      %v4041 = vpop.permute.xlu0 %4040
      %4042 = vrot.lane.b32.xlu0 %v3986, 8
      %v4043 = vpop.permute.xlu0 %4042
      %4044 = vrot.lane.b32.xlu0 %v3987, 8
      %v4045 = vpop.permute.xlu0 %4044
      %4046 = vrot.lane.b32.xlu0 %v3988, 8
      %v4047 = vpop.permute.xlu0 %4046
      %4048 = vrot.lane.b32.xlu0 %v3989, 8
      %v4049 = vpop.permute.xlu0 %4048
      %4050 = vrot.lane.b32.xlu0 %v3990, 8
      %v4051 = vpop.permute.xlu0 %4050
      %4052 = vrot.lane.b32.xlu0 %v3991, 8
      %v4053 = vpop.permute.xlu0 %4052
      %4054 = vrot.lane.b32.xlu0 %v3992, 8
      %v4055 = vpop.permute.xlu0 %4054
      %4056 = vrot.lane.b32.xlu0 %v3993, 8
      %v4057 = vpop.permute.xlu0 %4056
      %vm4074 = vcmask 130112
      %4075 = vst.msk [vmem:[%s575] sm:$0xff] %vm4074, %v4027
      %4076 = vst.msk [vmem:[%s575 + $0x8] sm:$0xff] %vm4074, %v4029
      %4077 = vst.msk [vmem:[%s575 + $0x10] sm:$0xff] %vm4074, %v4031
      %4078 = vst.msk [vmem:[%s575 + $0x18] sm:$0xff] %vm4074, %v4033
      %4079 = vst.msk [vmem:[%s575 + $0x20] sm:$0xff] %vm4074, %v4035
      %4080 = vst.msk [vmem:[%s575 + $0x28] sm:$0xff] %vm4074, %v4037
      %4081 = vst.msk [vmem:[%s575 + $0x30] sm:$0xff] %vm4074, %v4039
      %4082 = vst.msk [vmem:[%s575 + $0x38] sm:$0xff] %vm4074, %v4041
      %4083 = vst.msk [vmem:[%s575 + $0x40] sm:$0xff] %vm4074, %v4043
      %4084 = vst.msk [vmem:[%s575 + $0x48] sm:$0xff] %vm4074, %v4045
      %4085 = vst.msk [vmem:[%s575 + $0x50] sm:$0xff] %vm4074, %v4047
      %4086 = vst.msk [vmem:[%s575 + $0x58] sm:$0xff] %vm4074, %v4049
      %4087 = vst.msk [vmem:[%s575 + $0x60] sm:$0xff] %vm4074, %v4051
      %4088 = vst.msk [vmem:[%s575 + $0x68] sm:$0xff] %vm4074, %v4053
      %4089 = vst.msk [vmem:[%s575 + $0x70] sm:$0xff] %vm4074, %v4055
      %4090 = vst.msk [vmem:[%s575 + $0x78] sm:$0xff] %vm4074, %v4057
      %s4091 = smul.u32 8, %s26
      %p4092 = scmp.lt.s32.totalorder %s25, 1
      %s4093 = scalar_select %p4092, %s25, 1
      %p4094 = scmp.lt.s32.totalorder %s4091, 15
      %s4095 = scalar_select %p4094, %s4091, 15
      %s4096 = smul.addr %s4095, 2
      %s4097 = smul.addr %s4093, 32
      %s4098 = sadd.s32 %s4096, %s4097
      %s4099 = smul.addr %s4098, 8
      %s4100 = scalar_lea.vmem %s10, %s4099
      // Predicated region
      $region61: #{ghost_bottleneck_forward.3} parent=59 // pred_check
        %p4101 = pneg %p307
      $region62: #{ghost_bottleneck_forward.3} parent=59 // pred_check_branch
        %4103 = sbr.rel (%p4101) target = $region64
      $region63: #{ghost_bottleneck_forward.3} parent=59 // pred_region
        %s4104 = smul.u32 8, %s26
      $region64: #{ghost_bottleneck_forward.3} parent=59 // pred_fallthru
        _
    $region60: #{ghost_bottleneck_forward.3} parent=5 // pred_fallthru
      _
    %p4105 = scmp.le.s32.totalorder 2, %s16
    // Predicated region
    $region65: #{ghost_bottleneck_forward.3} parent=5 // pred_check
      %p4106 = pneg %p4105
    $region66: #{ghost_bottleneck_forward.3} parent=5 // pred_check_branch
      %4108 = sbr.rel (%p4106) target = $region68
    $region67: #{ghost_bottleneck_forward.3} parent=5 // pred_region
      %s4109 = ssub.s32 %s16, 2
      // Predicated region
      $region69: #{ghost_bottleneck_forward.3} parent=67 // pred_check
        %p4110 = pneg %p313
      $region70: #{ghost_bottleneck_forward.3} parent=67 // pred_check_branch
        %4112 = sbr.rel (%p4110) target = $region72
      $region71: #{ghost_bottleneck_forward.3} parent=67 // pred_region
        %s4113 = smul.u32 8, %s28
        %p4114 = scmp.lt.s32.totalorder %s27, 1
        %s4115 = scalar_select %p4114, %s27, 1
        %p4116 = scmp.lt.s32.totalorder %s4113, 15
        %s4117 = scalar_select %p4116, %s4113, 15
        %s4118 = smul.addr %s4117, 2
        %s4119 = smul.addr %s4115, 32
        %s4120 = sadd.s32 %s4118, %s4119
        %s4121 = smul.addr %s4120, 8
        %s4122 = scalar_lea.vmem %s10, %s4121
      $region72: #{ghost_bottleneck_forward.3} parent=67 // pred_fallthru
        _
    $region68: #{ghost_bottleneck_forward.3} parent=5 // pred_fallthru
      _
  $region6: #{ghost_bottleneck_forward.3} parent=0 // loop_footer
    %s20 = sadd.s32 1, %s16
  $region7: #{ghost_bottleneck_forward.3} parent=0 // loop_footer_branch
    %15 = sbr.rel target = $region3
  $region8: #{ghost_bottleneck_forward.3} parent=0 // loop_exit
    _

</llo_original>
